<compile_context>
chip_gen: v6e
topology: v6e:2x2x1
jax: 0.10.0
libtpu: 0.0.40
codegen_flags: <defaults>
</compile_context>

<pallas_src>
import functools

import jax
import jax.numpy as jnp
from jax.experimental import pallas as pl
from jax.experimental.pallas import tpu as pltpu

MLP_SIZE = 2000
MLP_PAD = 2048          # next multiple of 128 >= 2000
IN_FEATURES = 28 * 28   # 784
NUM_CLASSES = 10
OUT_PAD = 128           # lane-dense head output slab (sliced back to 10)
TILE_H = 1024           # hidden-dim tile streamed per reduction step
N_K = MLP_PAD // TILE_H  # 2 reduction steps


# ----------------------------- Pallas kernel -----------------------------
def _fcnet_kernel(x_ref, w1_ref, b1_ref, w2_ref, s2_ref, b2_ref, w3_ref,
                  o_ref, acc_ref):
    # grid = (n_split [parallel, layer-2 output columns], N_K [arbitrary, hidden tiles])
    k = pl.program_id(1)

    @pl.when(k == 0)
    def _init():
        acc_ref[...] = jnp.zeros_like(acc_ref)

    # layer 1, hidden tile k:  h1_k = relu(x @ W1[:, k] + b1[k])      (B, TILE_H) f32
    h1 = jnp.dot(x_ref[...], w1_ref[...], preferred_element_type=jnp.float32)
    h1 = jnp.maximum(h1 + b1_ref[...], 0.0)

    # layer 2 partial sum: W2 streamed as int8, dequantized to bf16 on the VPU
    # (the per-output-channel scale is applied once at finalize, on the f32 acc).
    w2 = w2_ref[...].astype(jnp.bfloat16)
    acc_ref[...] += jnp.dot(h1.astype(jnp.bfloat16), w2,
                            preferred_element_type=jnp.float32)

    # last reduction step: scale + bias + ReLU, then this split's slice of the head.
    @pl.when(k == pl.num_programs(1) - 1)
    def _finish():
        h2 = jnp.maximum(acc_ref[...] * s2_ref[...] + b2_ref[...], 0.0)
        out = jnp.dot(h2.astype(jnp.bfloat16), w3_ref[...],
                      preferred_element_type=jnp.float32)
        o_ref[0] = out.astype(o_ref.dtype)


def fcnet_pallas(x2d, w1t, b1, w2q, w2s, b2, w3, *, n_split):
    """Fused 3-layer MLP body.

    x2d: (B, 784) bf16; w1t: (N_K, 784, TILE_H) bf16; b1/b2/scale: (1, 2048) f32;
    w2q: (2048, 2048) int8; w3: (2048, 128) bf16.
    Returns per-split partial logits (n_split, B, 128) f32 (sum + b3 in wrapper).
    """
    B = x2d.shape[0]
    col = MLP_PAD // n_split

    weight_bytes = (n_split * IN_FEATURES * MLP_PAD * 2   # bf16 W1 (re-streamed per split)
                    + MLP_PAD * MLP_PAD * 1                # int8 W2
                    + MLP_PAD * OUT_PAD * 2)               # bf16 W3
    flops = 2 * B * (n_split * IN_FEATURES * MLP_PAD
                     + MLP_PAD * MLP_PAD + MLP_PAD * OUT_PAD)
    bytes_accessed = (weight_bytes
                      + n_split * x2d.size * 2
                      + (3 * MLP_PAD) * 4                  # b1, b2, scale
                      + n_split * B * OUT_PAD * 4)         # partial logits out

    out = pl.pallas_call(
        _fcnet_kernel,
        out_shape=jax.ShapeDtypeStruct((n_split, B, OUT_PAD), jnp.float32),
        grid_spec=pltpu.PrefetchScalarGridSpec(
            num_scalar_prefetch=0,
            grid=(n_split, N_K),
            in_specs=[
                pl.BlockSpec((B, IN_FEATURES), lambda c, k: (0, 0)),            # x (resident)
                pl.BlockSpec((None, IN_FEATURES, TILE_H), lambda c, k: (k, 0, 0)),  # W1 tile (contiguous)
                pl.BlockSpec((1, TILE_H), lambda c, k: (0, k)),                  # b1 tile
                pl.BlockSpec((TILE_H, col), lambda c, k: (k, c)),                # W2 int8 tile
                pl.BlockSpec((1, col), lambda c, k: (0, c)),                     # W2 per-col scale
                pl.BlockSpec((1, col), lambda c, k: (0, c)),                     # b2 slice
                pl.BlockSpec((col, OUT_PAD), lambda c, k: (c, 0)),               # W3 row slice
            ],
            out_specs=pl.BlockSpec((1, B, OUT_PAD), lambda c, k: (c, 0, 0)),
            scratch_shapes=[pltpu.VMEM((B, col), jnp.float32)],                  # h2 accumulator
        ),
        compiler_params=pltpu.CompilerParams(
            dimension_semantics=("parallel", "arbitrary"),
            vmem_limit_bytes=32 * 1024 * 1024,
        ),
        cost_estimate=pl.CostEstimate(flops=flops, transcendentals=0,
                                      bytes_accessed=bytes_accessed),
    )(x2d, w1t, b1, w2q, w2s, b2, w3)
    return out


# ------------------------- parameter construction ------------------------
def init_params(key):
    """Deterministic init mimicking nn.Linear default (U(-1/sqrt(fan_in), ...)), f32."""
    def linear_init(k, fan_in, fan_out):
        kw, kb = jax.random.split(k)
        bound = 1.0 / jnp.sqrt(jnp.float32(fan_in))
        w = jax.random.uniform(kw, (fan_in, fan_out), jnp.float32, -bound, bound)
        b = jax.random.uniform(kb, (fan_out,), jnp.float32, -bound, bound)
        return w, b

    k1, k2, k3 = jax.random.split(key, 3)
    w1, b1 = linear_init(k1, IN_FEATURES, MLP_SIZE)
    w2, b2 = linear_init(k2, MLP_SIZE, MLP_SIZE)
    w3, b3 = linear_init(k3, MLP_SIZE, NUM_CLASSES)
    return (w1, b1, w2, b2, w3, b3)


def pad_and_quantize(params):
    """Zero-pad hidden 2000->2048 / head 10->128; W1,W3 -> bf16; W2 -> int8 per-channel."""
    w1, b1, w2, b2, w3, b3 = params
    ph = MLP_PAD - MLP_SIZE
    po = OUT_PAD - NUM_CLASSES

    # W1: bf16, pre-tiled to (N_K, 784, TILE_H) so each per-step block is contiguous.
    w1p = jnp.pad(w1, ((0, 0), (0, ph))).astype(jnp.bfloat16)
    w1t = w1p.reshape(IN_FEATURES, N_K, TILE_H).transpose(1, 0, 2)
    b1p = jnp.pad(b1, ((0, ph),)).reshape(1, -1)

    # W2: symmetric int8 with per-output-channel f32 scale (zero pad cols get scale=1, q=0).
    w2p = jnp.pad(w2, ((0, ph), (0, ph)))
    absmax = jnp.max(jnp.abs(w2p), axis=0, keepdims=True)
    w2s = jnp.where(absmax > 0.0, absmax / 127.0, 1.0).astype(jnp.float32)
    w2q = jnp.clip(jnp.round(w2p / w2s), -127, 127).astype(jnp.int8)
    b2p = jnp.pad(b2, ((0, ph),)).reshape(1, -1)

    # W3: bf16, rows padded with zeros (hidden pad), cols padded to lane-dense 128.
    w3p = jnp.pad(w3, ((0, ph), (0, po))).astype(jnp.bfloat16)

    return (w1t, b1p, w2q, w2s, b2p, w3p, b3)   # b3 stays (10,) f32


def default_n_split():
    """2-way column split only where a device exposes 2 TensorCores (v7x); else 1."""
    try:
        kind = jax.devices()[0].device_kind.lower()
    except Exception:
        return 1
    return 2 if "v7" in kind else 1


# ------------------------------- forward ---------------------------------
@functools.partial(jax.jit, static_argnames=("n_split",))
def fcnet_forward(x, padded_params, n_split=1):
    w1t, b1, w2q, w2s, b2, w3, b3 = padded_params
    B = x.shape[0]
    x2d = x.reshape(B, -1).astype(jnp.bfloat16)          # x.view(B, 784), bf16 stream
    partials = fcnet_pallas(x2d, w1t, b1, w2q, w2s, b2, w3, n_split=n_split)
    # Sum the per-split partial logits, add head bias, drop the lane padding.
    return partials.sum(axis=0)[:, :NUM_CLASSES] + b3


def fcnet_reference(x, params):
    """Pure-f32 reference matching the PyTorch module."""
    w1, b1, w2, b2, w3, b3 = params
    h = x.reshape(x.shape[0], -1)
    h = jax.nn.relu(h @ w1 + b1)
    h = jax.nn.relu(h @ w2 + b2)
    return h @ w3 + b3


# --------------------------------- main -----------------------------------
if __name__ == "__main__":
    key = jax.random.PRNGKey(0)
    k_params, k_x = jax.random.split(key)

    params = init_params(k_params)
    padded = pad_and_quantize(params)

    # small batch, MNIST-shaped input (NCHW); the kernel itself is batch-agnostic.
    x = jax.random.normal(k_x, (2, 1, 28, 28), jnp.float32)

    n_split = default_n_split()
    out = fcnet_forward(x, padded, n_split=n_split)
    out = jax.block_until_ready(out)

    ref = fcnet_reference(x, params)
    assert out.shape == (2, NUM_CLASSES), out.shape
    # bf16 W1/W3 + activation casts + per-channel int8 W2 (f32 accumulate everywhere)
    # give a max logit error well below this tolerance in practice (~5e-3).
    err = float(jnp.max(jnp.abs(out - ref)))
    assert jnp.allclose(out, ref, atol=2.5e-2, rtol=2.5e-2), err

    print("KERNEL_OK")
</pallas_src>

<mosaic_0001>
module attributes {stable_mosaic.version = 11 : i64} {
  func.func @_fcnet_kernel(%arg0: i32, %arg1: i32, %arg2: memref<2x784xbf16, #tpu.memory_space<vmem>>, %arg3: memref<1x784x1024xbf16, #tpu.memory_space<vmem>>, %arg4: memref<1x1024xf32, #tpu.memory_space<vmem>>, %arg5: memref<1024x2048xi8, #tpu.memory_space<vmem>>, %arg6: memref<1x2048xf32, #tpu.memory_space<vmem>>, %arg7: memref<1x2048xf32, #tpu.memory_space<vmem>>, %arg8: memref<2048x128xbf16, #tpu.memory_space<vmem>>, %arg9: memref<1x2x128xf32, #tpu.memory_space<vmem>>, %arg10: memref<2x2048xf32, #tpu.memory_space<vmem>>) attributes {dimension_semantics = [#tpu.dimension_semantics<parallel>, #tpu.dimension_semantics<arbitrary>], iteration_bounds = array<i64: 1, 2>, scalar_prefetch = 0 : i64, scratch_operands = 1 : i64, tpu.core_type = #tpu.core_type<tc>, window_params = [{pipeline_mode = #tpu.pipeline_mode<synchronous>, transform_indices = @transform_0, window_bounds = array<i64: 2, 784>}, {transform_indices = @transform_1, window_bounds = array<i64: 1, 784, 1024>}, {transform_indices = @transform_2, window_bounds = array<i64: 1, 1024>}, {transform_indices = @transform_3, window_bounds = array<i64: 1024, 2048>}, {transform_indices = @transform_4, window_bounds = array<i64: 1, 2048>}, {transform_indices = @transform_5, window_bounds = array<i64: 1, 2048>}, {transform_indices = @transform_6, window_bounds = array<i64: 2048, 128>}, {transform_indices = @transform_7, window_bounds = array<i64: 1, 2, 128>}]} {
    %c0_i32 = arith.constant 0 : i32
    %0 = arith.cmpi eq, %arg1, %c0_i32 : i32
    %1 = arith.extui %0 : i1 to i32
    %c0_i32_0 = arith.constant 0 : i32
    %2 = arith.cmpi ne, %1, %c0_i32_0 : i32
    scf.if %2 {
      %cst_16 = arith.constant 0.000000e+00 : f32
      %22 = vector.broadcast %cst_16 : f32 to vector<2x2048xf32>
      %c0_17 = arith.constant 0 : index
      %c0_18 = arith.constant 0 : index
      %23 = vector.load %arg10[%c0_17, %c0_18] : memref<2x2048xf32, #tpu.memory_space<vmem>>, vector<2x2048xf32>
      tpu.vector_store %arg10[%c0_17, %c0_18], %22 {strides = array<i32>} : memref<2x2048xf32, #tpu.memory_space<vmem>>, vector<2x2048xf32>,
    } else {
    }
    %c0 = arith.constant 0 : index
    %c0_1 = arith.constant 0 : index
    %3 = vector.load %arg2[%c0, %c0_1] : memref<2x784xbf16, #tpu.memory_space<vmem>>, vector<2x784xbf16>
    %c0_2 = arith.constant 0 : index
    %c0_3 = arith.constant 0 : index
    %c0_4 = arith.constant 0 : index
    %4 = vector.load %arg3[%c0_2, %c0_3, %c0_4] : memref<1x784x1024xbf16, #tpu.memory_space<vmem>>, vector<1x784x1024xbf16>
    %5 = vector.shape_cast %4 : vector<1x784x1024xbf16> to vector<784x1024xbf16>
    %cst = arith.constant dense<0.000000e+00> : vector<2x1024xf32>
    %6 = tpu.matmul %3, %5, %cst {dimension_numbers = #tpu.dot_dimension_numbers<[1], [0], [0], [1], [0, 0, 1, 1], [], []>} : vector<2x784xbf16>, vector<784x1024xbf16>, vector<2x1024xf32> -> vector<2x1024xf32>
    %c0_5 = arith.constant 0 : index
    %c0_6 = arith.constant 0 : index
    %7 = vector.load %arg4[%c0_5, %c0_6] : memref<1x1024xf32, #tpu.memory_space<vmem>>, vector<1x1024xf32>
    %8 = vector.broadcast %7 : vector<1x1024xf32> to vector<2x1024xf32>
    %9 = arith.addf %6, %8 : vector<2x1024xf32>
    %cst_7 = arith.constant 0.000000e+00 : f32
    %10 = vector.broadcast %cst_7 : f32 to vector<2x1024xf32>
    %11 = arith.maximumf %9, %10 : vector<2x1024xf32>
    %c0_8 = arith.constant 0 : index
    %c0_9 = arith.constant 0 : index
    %12 = vector.load %arg5[%c0_8, %c0_9] : memref<1024x2048xi8, #tpu.memory_space<vmem>>, vector<1024x2048xi8>
    %13 = arith.sitofp %12 : vector<1024x2048xi8> to vector<1024x2048xbf16>
    %c0_10 = arith.constant 0 : index
    %c0_11 = arith.constant 0 : index
    %14 = vector.load %arg10[%c0_10, %c0_11] : memref<2x2048xf32, #tpu.memory_space<vmem>>, vector<2x2048xf32>
    %15 = arith.truncf %11 : vector<2x1024xf32> to vector<2x1024xbf16>
    %cst_12 = arith.constant dense<0.000000e+00> : vector<2x2048xf32>
    %16 = tpu.matmul %15, %13, %cst_12 {dimension_numbers = #tpu.dot_dimension_numbers<[1], [0], [0], [1], [0, 0, 1, 1], [], []>} : vector<2x1024xbf16>, vector<1024x2048xbf16>, vector<2x2048xf32> -> vector<2x2048xf32>
    %17 = arith.addf %14, %16 : vector<2x2048xf32>
    %c0_13 = arith.constant 0 : index
    %c0_14 = arith.constant 0 : index
    %18 = vector.load %arg10[%c0_13, %c0_14] : memref<2x2048xf32, #tpu.memory_space<vmem>>, vector<2x2048xf32>
    tpu.vector_store %arg10[%c0_13, %c0_14], %17 {strides = array<i32>} : memref<2x2048xf32, #tpu.memory_space<vmem>>, vector<2x2048xf32>,
    %c1_i32 = arith.constant 1 : i32
    %19 = arith.cmpi eq, %arg1, %c1_i32 : i32
    %20 = arith.extui %19 : i1 to i32
    %c0_i32_15 = arith.constant 0 : i32
    %21 = arith.cmpi ne, %20, %c0_i32_15 : i32
    scf.if %21 {
      %c0_16 = arith.constant 0 : index
      %c0_17 = arith.constant 0 : index
      %22 = vector.load %arg10[%c0_16, %c0_17] : memref<2x2048xf32, #tpu.memory_space<vmem>>, vector<2x2048xf32>
      %c0_18 = arith.constant 0 : index
      %c0_19 = arith.constant 0 : index
      %23 = vector.load %arg6[%c0_18, %c0_19] : memref<1x2048xf32, #tpu.memory_space<vmem>>, vector<1x2048xf32>
      %24 = vector.broadcast %23 : vector<1x2048xf32> to vector<2x2048xf32>
      %25 = arith.mulf %22, %24 : vector<2x2048xf32>
      %c0_20 = arith.constant 0 : index
      %c0_21 = arith.constant 0 : index
      %26 = vector.load %arg7[%c0_20, %c0_21] : memref<1x2048xf32, #tpu.memory_space<vmem>>, vector<1x2048xf32>
      %27 = vector.broadcast %26 : vector<1x2048xf32> to vector<2x2048xf32>
      %28 = arith.addf %25, %27 : vector<2x2048xf32>
      %cst_22 = arith.constant 0.000000e+00 : f32
      %29 = vector.broadcast %cst_22 : f32 to vector<2x2048xf32>
      %30 = arith.maximumf %28, %29 : vector<2x2048xf32>
      %31 = arith.truncf %30 : vector<2x2048xf32> to vector<2x2048xbf16>
      %c0_23 = arith.constant 0 : index
      %c0_24 = arith.constant 0 : index
      %32 = vector.load %arg8[%c0_23, %c0_24] : memref<2048x128xbf16, #tpu.memory_space<vmem>>, vector<2048x128xbf16>
      %cst_25 = arith.constant dense<0.000000e+00> : vector<2x128xf32>
      %33 = tpu.matmul %31, %32, %cst_25 {dimension_numbers = #tpu.dot_dimension_numbers<[1], [0], [0], [1], [0, 0, 1, 1], [], []>} : vector<2x2048xbf16>, vector<2048x128xbf16>, vector<2x128xf32> -> vector<2x128xf32>
      %c0_26 = arith.constant 0 : index
      %c0_27 = arith.constant 0 : index
      %c0_28 = arith.constant 0 : index
      %34 = vector.load %arg9[%c0_26, %c0_27, %c0_28] : memref<1x2x128xf32, #tpu.memory_space<vmem>>, vector<1x2x128xf32>
      %35 = vector.shape_cast %34 : vector<1x2x128xf32> to vector<2x128xf32>
      %36 = vector.shape_cast %33 : vector<2x128xf32> to vector<1x2x128xf32>
      tpu.vector_store %arg9[%c0_26, %c0_27, %c0_28], %36 {strides = array<i32>} : memref<1x2x128xf32, #tpu.memory_space<vmem>>, vector<1x2x128xf32>,
    } else {
    }
    return
  }
  func.func @transform_0(%arg0: i32, %arg1: i32) -> (i32, i32) {
    %c0_i32 = arith.constant 0 : i32
    %c0_i32_0 = arith.constant 0 : i32
    %c0_i32_1 = arith.constant 0 : i32
    return %c0_i32, %c0_i32_0 : i32, i32
  }
  func.func @transform_1(%arg0: i32, %arg1: i32) -> (i32, i32, i32) {
    %c0_i32 = arith.constant 0 : i32
    %c0_i32_0 = arith.constant 0 : i32
    %c0_i32_1 = arith.constant 0 : i32
    return %arg1, %c0_i32, %c0_i32_0 : i32, i32, i32
  }
  func.func @transform_2(%arg0: i32, %arg1: i32) -> (i32, i32) {
    %c0_i32 = arith.constant 0 : i32
    %c0_i32_0 = arith.constant 0 : i32
    return %c0_i32, %arg1 : i32, i32
  }
  func.func @transform_3(%arg0: i32, %arg1: i32) -> (i32, i32) {
    %c0_i32 = arith.constant 0 : i32
    return %arg1, %arg0 : i32, i32
  }
  func.func @transform_4(%arg0: i32, %arg1: i32) -> (i32, i32) {
    %c0_i32 = arith.constant 0 : i32
    %c0_i32_0 = arith.constant 0 : i32
    return %c0_i32, %arg0 : i32, i32
  }
  func.func @transform_5(%arg0: i32, %arg1: i32) -> (i32, i32) {
    %c0_i32 = arith.constant 0 : i32
    %c0_i32_0 = arith.constant 0 : i32
    return %c0_i32, %arg0 : i32, i32
  }
  func.func @transform_6(%arg0: i32, %arg1: i32) -> (i32, i32) {
    %c0_i32 = arith.constant 0 : i32
    %c0_i32_0 = arith.constant 0 : i32
    return %arg0, %c0_i32 : i32, i32
  }
  func.func @transform_7(%arg0: i32, %arg1: i32) -> (i32, i32, i32) {
    %c0_i32 = arith.constant 0 : i32
    %c0_i32_0 = arith.constant 0 : i32
    %c0_i32_1 = arith.constant 0 : i32
    return %arg0, %c0_i32, %c0_i32_0 : i32, i32, i32
  }
}

</mosaic_0001>

<llo_original>
// kernel: fcnet_forward.1
$region0: #{fcnet_forward.1}
  #allocation0 [shape = 'u32[]', space=smem, size = 0x4, offset = 0x4, fixed_abs, tag = 'smem constant byte address 0x4 - core index']
  #allocation1 [shape = 'u32[144,128]{1,0:T(1,128)}', space=vmem, size = 0x12000, scoped, tag = 'internal scratch']
  #allocation2 [shape = 'f32[2,2048]{1,0:T(2,128)}', space=vmem, size = 0x4000, scoped, tag = 'scratch operand']
  %s0 = inlined_call_operand.vmem [shape: bf16[2,784], index: 0, kind: input, shape index: {}]
  %s1 = inlined_call_operand.hbm [shape: bf16[2,784,1024], index: 1, kind: input, shape index: {}]
  %s2 = inlined_call_operand.hbm [shape: f32[1,2048], index: 2, kind: input, shape index: {}]
  %s3 = inlined_call_operand.hbm [shape: s8[2048,2048], index: 3, kind: input, shape index: {}]
  %s4 = inlined_call_operand.hbm [shape: f32[1,2048], index: 4, kind: input, shape index: {}]
  %s5 = inlined_call_operand.hbm [shape: f32[1,2048], index: 5, kind: input, shape index: {}]
  %s6 = inlined_call_operand.hbm [shape: bf16[2048,128], index: 6, kind: input, shape index: {}]
  %s7 = inlined_call_operand.vmem [shape: f32[1,2,128], index: 7, kind: output, shape index: {}]
  %s8 = sld [smem:[#allocation0]]
  $region93: #{fcnet_forward.1} parent=0
    _
  %s10 = ssub.s32 1, %s8
  %s11 = scalar_select 0, %s10, %s8
  $region1: #{fcnet_forward.1} parent=0
    #allocation3 [shape = 'u8[3211264]{0}', space=vmem, size = 0x310000, scoped, tag = 'input window, operand 1']
    #allocation4 [shape = 's32[2]{0}', space=sflag, size = 0x8, scoped, tag = 'scoped memory for fcnet_forward.1']
    #allocation5 [shape = 'u8[8192]{0}', space=vmem, size = 0x2000, scoped, tag = 'input window, operand 2']
    #allocation6 [shape = 's32[2]{0}', space=sflag, size = 0x8, scoped, tag = 'scoped memory for fcnet_forward.1']
    #allocation7 [shape = 'u8[4194304]{0}', space=vmem, size = 0x400000, scoped, tag = 'input window, operand 3']
    #allocation8 [shape = 'u8[8192]{0}', space=vmem, size = 0x2000, scoped, tag = 'input window, operand 4, single buffered']
    #allocation9 [shape = 's32[1]{0}', space=sflag, size = 0x4, scoped, tag = 'scoped memory for fcnet_forward.1']
    #allocation10 [shape = 'u8[8192]{0}', space=vmem, size = 0x2000, scoped, tag = 'input window, operand 5, single buffered']
    #allocation11 [shape = 'u8[524288]{0}', space=vmem, size = 0x80000, scoped, tag = 'input window, operand 6, single buffered']
    #allocation12 [shape = 's32[1]{0}', space=sflag, size = 0x4, scoped, tag = 'scoped memory for fcnet_forward.1']
    %12 = vsyncpa [#allocation4], 0
    %s13 = scalar_lea.sflag [#allocation4], 1
    %14 = vsyncpa %s13, 0
    %15 = vsyncpa [#allocation6], 0
    %s16 = scalar_lea.sflag [#allocation6], 1
    %17 = vsyncpa %s16, 0
    %18 = vsyncpa [#allocation9], 0
    %19 = vsyncpa [#allocation12], 0
    loop: start=0, step=1, limit=4
    $region2: #{fcnet_forward.1} parent=1 // loop_pre_header
      _
    $region3: #{fcnet_forward.1} parent=1 // loop_header
      %s21 = sphi 0, %s25
      %p22 = scmp.ge.s32.totalorder %s21, 4
      %s28 = sphi 0, %s40
      %s29 = sphi 0, %s36
      %s30 = sphi 0, %s28
      %s31 = sphi 0, %s29
      %s32 = sphi 0, %s30
      %s33 = sphi 0, %s31
      %s41 = sphi 0, %s41
      %s43 = sphi 0, %s41
      %s44 = sphi 0, %s43
      %s58 = sphi 0, %s44
      %s64 = sphi 0, %s66
      %s67 = sphi 0, %s64
      %s68 = sphi 0, %s67
      %s84 = sphi 0, %s68
      %s90 = sphi 0, %s92
      %s93 = sphi 0, %s90
      %s94 = sphi 0, %s93
      %s110 = sphi 0, %s94
      %s118 = sphi 0, %s120
      %s121 = sphi 0, %s118
      %s122 = sphi 0, %s121
      %s138 = sphi 0, %s122
      %s144 = sphi 0, %s146
      %s147 = sphi 0, %s144
      %s148 = sphi 0, %s147
      %s164 = sphi 0, %s148
      %s170 = sphi 0, %s172
      %s173 = sphi 0, %s170
      %s174 = sphi 0, %s173
      %s190 = sphi 0, %s174
      %s196 = sphi 0, %s198
      %s199 = sphi 0, %s196
      %s200 = sphi 0, %s199
      %s216 = sphi 0, %s200
      %s222 = sphi 0, %s224
      %s225 = sphi 0, %s222
      %s226 = sphi 0, %s225
      %s242 = sphi 0, %s226
    $region4: #{fcnet_forward.1} parent=1 // loop_header_branch
      %24 = sbr.rel (%p22) target = $region8
    $region5: #{fcnet_forward.1} parent=1 // loop_body
      %s26 = ssub.s32 %s21, 1
      %s27 = ssub.s32 %s21, 2
      %s34 = sadd.s32 1, %s29
      %p35 = scmp.ge.s32.totalorder %s34, 2
      %s36 = scalar_select %p35, 0, %s34
      %s37 = sadd.s32 1, %s28
      %s38 = scalar_select %p35, %s37, %s28
      %p39 = scmp.ge.s32.totalorder %s38, 1
      %s40 = scalar_select %p39, 0, %s38
      %s42 = sadd.s32 %s41, 1
      %p45 = scmp.eq.s32.totalorder %s21, 1
      %p46 = scmp.ne.s32.totalorder %s41, %s43
      %p47 = scmp.eq.s32.totalorder %s21, 0
      %p48 = por %p46, %p47
      %p49 = scmp.ne.s32.totalorder %s41, %s43
      %p50 = scmp.eq.s32.totalorder %s26, 1
      %p51 = por %p49, %p50
      %p52 = scmp.ne.s32.totalorder %s43, %s44
      %p53 = scmp.eq.s32.totalorder %s26, 0
      %p54 = por %p52, %p53
      %p55 = scmp.ne.s32.totalorder %s43, %s44
      %p56 = scmp.eq.s32.totalorder %s27, 1
      %p57 = por %p55, %p56
      %p59 = scmp.ne.s32.totalorder %s44, %s58
      %p60 = scmp.eq.s32.totalorder %s27, 0
      %p61 = por %p59, %p60
      %s62 = ssub.s32 %s29, %s36
      %p63 = scmp.eq.s32.totalorder %s62, 0
      %s65 = sadd.s32 %s64, 1
      %s66 = scalar_select %p63, %s64, %s65
      %p69 = pneg %p63
      %p70 = scmp.eq.s32.totalorder %s21, 1
      %p71 = por %p69, %p70
      %p72 = scmp.ne.s32.totalorder %s64, %s67
      %p73 = scmp.eq.s32.totalorder %s21, 0
      %p74 = por %p72, %p73
      %p75 = scmp.ne.s32.totalorder %s64, %s67
      %p76 = scmp.eq.s32.totalorder %s26, 1
      %p77 = por %p75, %p76
      %p78 = scmp.ne.s32.totalorder %s67, %s68
      %p79 = scmp.eq.s32.totalorder %s26, 0
      %p80 = por %p78, %p79
      %p81 = scmp.ne.s32.totalorder %s67, %s68
      %p82 = scmp.eq.s32.totalorder %s27, 1
      %p83 = por %p81, %p82
      %p85 = scmp.ne.s32.totalorder %s68, %s84
      %p86 = scmp.eq.s32.totalorder %s27, 0
      %p87 = por %p85, %p86
      %s88 = ssub.s32 %s29, %s36
      %p89 = scmp.eq.s32.totalorder %s88, 0
      %s91 = sadd.s32 %s90, 1
      %s92 = scalar_select %p89, %s90, %s91
      %p95 = pneg %p89
      %p96 = scmp.eq.s32.totalorder %s21, 1
      %p97 = por %p95, %p96
      %p98 = scmp.ne.s32.totalorder %s90, %s93
      %p99 = scmp.eq.s32.totalorder %s21, 0
      %p100 = por %p98, %p99
      %p101 = scmp.ne.s32.totalorder %s90, %s93
      %p102 = scmp.eq.s32.totalorder %s26, 1
      %p103 = por %p101, %p102
      %p104 = scmp.ne.s32.totalorder %s93, %s94
      %p105 = scmp.eq.s32.totalorder %s26, 0
      %p106 = por %p104, %p105
      %p107 = scmp.ne.s32.totalorder %s93, %s94
      %p108 = scmp.eq.s32.totalorder %s27, 1
      %p109 = por %p107, %p108
      %p111 = scmp.ne.s32.totalorder %s94, %s110
      %p112 = scmp.eq.s32.totalorder %s27, 0
      %p113 = por %p111, %p112
      %s114 = ssub.s32 %s29, %s36
      %s115 = ssub.s32 %s28, %s40
      %s116 = sor.u32 %s114, %s115
      %p117 = scmp.eq.s32.totalorder %s116, 0
      %s119 = sadd.s32 %s118, 1
      %s120 = scalar_select %p117, %s118, %s119
      %p123 = pneg %p117
      %p124 = scmp.eq.s32.totalorder %s21, 1
      %p125 = por %p123, %p124
      %p126 = scmp.ne.s32.totalorder %s118, %s121
      %p127 = scmp.eq.s32.totalorder %s21, 0
      %p128 = por %p126, %p127
      %p129 = scmp.ne.s32.totalorder %s118, %s121
      %p130 = scmp.eq.s32.totalorder %s26, 1
      %p131 = por %p129, %p130
      %p132 = scmp.ne.s32.totalorder %s121, %s122
      %p133 = scmp.eq.s32.totalorder %s26, 0
      %p134 = por %p132, %p133
      %p135 = scmp.ne.s32.totalorder %s121, %s122
      %p136 = scmp.eq.s32.totalorder %s27, 1
      %p137 = por %p135, %p136
      %p139 = scmp.ne.s32.totalorder %s122, %s138
      %p140 = scmp.eq.s32.totalorder %s27, 0
      %p141 = por %p139, %p140
      %s142 = ssub.s32 %s28, %s40
      %p143 = scmp.eq.s32.totalorder %s142, 0
      %s145 = sadd.s32 %s144, 1
      %s146 = scalar_select %p143, %s144, %s145
      %p149 = pneg %p143
      %p150 = scmp.eq.s32.totalorder %s21, 1
      %p151 = por %p149, %p150
      %p152 = scmp.ne.s32.totalorder %s144, %s147
      %p153 = scmp.eq.s32.totalorder %s21, 0
      %p154 = por %p152, %p153
      %p155 = scmp.ne.s32.totalorder %s144, %s147
      %p156 = scmp.eq.s32.totalorder %s26, 1
      %p157 = por %p155, %p156
      %p158 = scmp.ne.s32.totalorder %s147, %s148
      %p159 = scmp.eq.s32.totalorder %s26, 0
      %p160 = por %p158, %p159
      %p161 = scmp.ne.s32.totalorder %s147, %s148
      %p162 = scmp.eq.s32.totalorder %s27, 1
      %p163 = por %p161, %p162
      %p165 = scmp.ne.s32.totalorder %s148, %s164
      %p166 = scmp.eq.s32.totalorder %s27, 0
      %p167 = por %p165, %p166
      %s168 = ssub.s32 %s28, %s40
      %p169 = scmp.eq.s32.totalorder %s168, 0
      %s171 = sadd.s32 %s170, 1
      %s172 = scalar_select %p169, %s170, %s171
      %p175 = pneg %p169
      %p176 = scmp.eq.s32.totalorder %s21, 1
      %p177 = por %p175, %p176
      %p178 = scmp.ne.s32.totalorder %s170, %s173
      %p179 = scmp.eq.s32.totalorder %s21, 0
      %p180 = por %p178, %p179
      %p181 = scmp.ne.s32.totalorder %s170, %s173
      %p182 = scmp.eq.s32.totalorder %s26, 1
      %p183 = por %p181, %p182
      %p184 = scmp.ne.s32.totalorder %s173, %s174
      %p185 = scmp.eq.s32.totalorder %s26, 0
      %p186 = por %p184, %p185
      %p187 = scmp.ne.s32.totalorder %s173, %s174
      %p188 = scmp.eq.s32.totalorder %s27, 1
      %p189 = por %p187, %p188
      %p191 = scmp.ne.s32.totalorder %s174, %s190
      %p192 = scmp.eq.s32.totalorder %s27, 0
      %p193 = por %p191, %p192
      %s194 = ssub.s32 %s28, %s40
      %p195 = scmp.eq.s32.totalorder %s194, 0
      %s197 = sadd.s32 %s196, 1
      %s198 = scalar_select %p195, %s196, %s197
      %p201 = pneg %p195
      %p202 = scmp.eq.s32.totalorder %s21, 1
      %p203 = por %p201, %p202
      %p204 = scmp.ne.s32.totalorder %s196, %s199
      %p205 = scmp.eq.s32.totalorder %s21, 0
      %p206 = por %p204, %p205
      %p207 = scmp.ne.s32.totalorder %s196, %s199
      %p208 = scmp.eq.s32.totalorder %s26, 1
      %p209 = por %p207, %p208
      %p210 = scmp.ne.s32.totalorder %s199, %s200
      %p211 = scmp.eq.s32.totalorder %s26, 0
      %p212 = por %p210, %p211
      %p213 = scmp.ne.s32.totalorder %s199, %s200
      %p214 = scmp.eq.s32.totalorder %s27, 1
      %p215 = por %p213, %p214
      %p217 = scmp.ne.s32.totalorder %s200, %s216
      %p218 = scmp.eq.s32.totalorder %s27, 0
      %p219 = por %p217, %p218
      %s220 = ssub.s32 %s28, %s40
      %p221 = scmp.eq.s32.totalorder %s220, 0
      %s223 = sadd.s32 %s222, 1
      %s224 = scalar_select %p221, %s222, %s223
      %p227 = pneg %p221
      %p228 = scmp.eq.s32.totalorder %s21, 1
      %p229 = por %p227, %p228
      %p230 = scmp.ne.s32.totalorder %s222, %s225
      %p231 = scmp.eq.s32.totalorder %s21, 0
      %p232 = por %p230, %p231
      %p233 = scmp.ne.s32.totalorder %s222, %s225
      %p234 = scmp.eq.s32.totalorder %s26, 1
      %p235 = por %p233, %p234
      %p236 = scmp.ne.s32.totalorder %s225, %s226
      %p237 = scmp.eq.s32.totalorder %s26, 0
      %p238 = por %p236, %p237
      %p239 = scmp.ne.s32.totalorder %s225, %s226
      %p240 = scmp.eq.s32.totalorder %s27, 1
      %p241 = por %p239, %p240
      %p243 = scmp.ne.s32.totalorder %s226, %s242
      %p244 = scmp.eq.s32.totalorder %s27, 0
      %p245 = por %p243, %p244
      %p246 = scmp.le.s32.totalorder 1, %s21
      %p247 = scmp.lt.s32.totalorder %s21, 3
      %p248 = pnand %p246, %p247
      %p249 = pneg %p248
      // Predicated region
      $region9: #{fcnet_forward.1} parent=5 // pred_check
        _
      $region10: #{fcnet_forward.1} parent=5 // pred_check_branch
        %251 = sbr.rel (%p248) target = $region12
      $region11: #{fcnet_forward.1} parent=5 // pred_region
        %s252 = ssub.s32 %s21, 1
        // Predicated region
        $region13: #{fcnet_forward.1} parent=11 // pred_check
          %p253 = pneg %p54
        $region14: #{fcnet_forward.1} parent=11 // pred_check_branch
          %255 = sbr.rel (%p253) target = $region16
        $region15: #{fcnet_forward.1} parent=11 // pred_region
          _
        $region16: #{fcnet_forward.1} parent=11 // pred_fallthru
          _
        // Predicated region
        $region17: #{fcnet_forward.1} parent=11 // pred_check
          %p256 = pneg %p160
        $region18: #{fcnet_forward.1} parent=11 // pred_check_branch
          %258 = sbr.rel (%p256) target = $region20
        $region19: #{fcnet_forward.1} parent=11 // pred_region
          %s259 = smul.u32 16, %s30
          %s261 = ssub.s32 256, 256
          %262 = vsyncadd [#allocation9], %s261
          %s263 = smul.addr %s259, 16
          %s264 = scalar_lea.hbm %s4, %s263
          %s266 = sshll.u32 [#allocation8], 4
          %s267 = int_to_ptr.vmem [resolvable:$true] %s266
          %269 = dma.hbm_to_vmem [thread:$0]  %s264, 256, %s267, [#allocation9]
        $region20: #{fcnet_forward.1} parent=11 // pred_fallthru
          _
        // Predicated region
        $region21: #{fcnet_forward.1} parent=11 // pred_check
          %p270 = pneg %p186
        $region22: #{fcnet_forward.1} parent=11 // pred_check_branch
          %272 = sbr.rel (%p270) target = $region24
        $region23: #{fcnet_forward.1} parent=11 // pred_region
          %s273 = smul.u32 16, %s30
          %s275 = ssub.s32 256, 256
          %276 = vsyncadd [#allocation9], %s275
          %s277 = smul.addr %s273, 16
          %s278 = scalar_lea.hbm %s5, %s277
          %s280 = sshll.u32 [#allocation10], 4
          %s281 = int_to_ptr.vmem [resolvable:$true] %s280
          %283 = dma.hbm_to_vmem [thread:$0]  %s278, 256, %s281, [#allocation9]
        $region24: #{fcnet_forward.1} parent=11 // pred_fallthru
          _
        // Predicated region
        $region25: #{fcnet_forward.1} parent=11 // pred_check
          %p284 = pneg %p212
        $region26: #{fcnet_forward.1} parent=11 // pred_check_branch
          %286 = sbr.rel (%p284) target = $region28
        $region27: #{fcnet_forward.1} parent=11 // pred_region
          %s287 = smul.u32 256, %s30
          %s289 = ssub.s32 16384, 16384
          %290 = vsyncadd [#allocation12], %s289
          %s291 = smul.addr %s287, 64
          %s292 = scalar_lea.hbm %s6, %s291
          %s293 = sshll.u32 [#allocation11], 4
          %s294 = int_to_ptr.vmem [resolvable:$true] %s293
          %299 = dma.hbm_to_vmem [thread:$0]  %s292, 16384, %s294, [#allocation12], 64, 64, 4
        $region28: #{fcnet_forward.1} parent=11 // pred_fallthru
          _
      $region12: #{fcnet_forward.1} parent=5 // pred_fallthru
        _
      %p300 = scmp.lt.s32.totalorder %s21, 2
      // Predicated region
      $region29: #{fcnet_forward.1} parent=5 // pred_check
        %p301 = pneg %p300
      $region30: #{fcnet_forward.1} parent=5 // pred_check_branch
        %303 = sbr.rel (%p301) target = $region32
      $region31: #{fcnet_forward.1} parent=5 // pred_region
        // Predicated region
        $region33: #{fcnet_forward.1} parent=31 // pred_check
          %p304 = pneg %p74
        $region34: #{fcnet_forward.1} parent=31 // pred_check_branch
          %306 = sbr.rel (%p304) target = $region36
        $region35: #{fcnet_forward.1} parent=31 // pred_region
          %s307 = sand.u32 %s64, 1
          %s308 = scalar_lea.sflag [#allocation4], %s307
          %s309 = sand.u32 %s64, 1
          %s310 = smul.addr %s309, 3136
          %s311 = scalar_lea.vmem [#allocation3], %s310
          %s313 = ssub.s32 50176, 50176
          %314 = vsyncadd %s308, %s313
          %s315 = smul.addr %s29, 784
          %s316 = smul.addr %s315, 64
          %s317 = scalar_lea.hbm %s1, %s316
          %s318 = sshll.u32 %s311, 4
          %s319 = int_to_ptr.vmem [resolvable:$true] %s318
          %324 = dma.hbm_to_vmem [thread:$0]  %s317, 50176, %s319, %s308, 512, 512, 32
        $region36: #{fcnet_forward.1} parent=31 // pred_fallthru
          _
        // Predicated region
        $region37: #{fcnet_forward.1} parent=31 // pred_check
          %p325 = pneg %p100
        $region38: #{fcnet_forward.1} parent=31 // pred_check_branch
          %327 = sbr.rel (%p325) target = $region40
        $region39: #{fcnet_forward.1} parent=31 // pred_region
          %s328 = sand.u32 %s21, 1
          %s329 = scalar_lea.sflag [#allocation6], %s328
          %s330 = sand.u32 %s90, 1
          %s331 = smul.addr %s330, 8
          %s332 = scalar_lea.vmem [#allocation5], %s331
          %s333 = smul.u32 8, %s29
          %s335 = ssub.s32 128, 128
          %336 = vsyncadd %s329, %s335
          %s337 = smul.addr %s333, 16
          %s338 = scalar_lea.hbm %s2, %s337
          %s340 = sshll.u32 %s332, 4
          %s341 = int_to_ptr.vmem [resolvable:$true] %s340
          %343 = dma.hbm_to_vmem [thread:$0]  %s338, 128, %s341, %s329
        $region40: #{fcnet_forward.1} parent=31 // pred_fallthru
          _
        // Predicated region
        $region41: #{fcnet_forward.1} parent=31 // pred_check
          %p344 = pneg %p128
        $region42: #{fcnet_forward.1} parent=31 // pred_check_branch
          %346 = sbr.rel (%p344) target = $region44
        $region43: #{fcnet_forward.1} parent=31 // pred_region
          %s347 = sand.u32 %s21, 1
          %s348 = scalar_lea.sflag [#allocation6], %s347
          %s349 = sand.u32 %s118, 1
          %s350 = smul.addr %s349, 4096
          %s351 = scalar_lea.vmem [#allocation7], %s350
          %s352 = smul.u32 32, %s29
          %s353 = smul.u32 16, %s28
          %s355 = ssub.s32 65536, 65536
          %356 = vsyncadd %s348, %s355
          %s357 = smul.addr %s352, 16
          %s358 = sadd.s32 %s353, %s357
          %s359 = smul.addr %s358, 128
          %s360 = scalar_lea.hbm %s3, %s359
          %s361 = sshll.u32 %s351, 4
          %s362 = int_to_ptr.vmem [resolvable:$true] %s361
          %367 = dma.hbm_to_vmem [thread:$0]  %s360, 65536, %s362, %s348, 2048, 2048, 128
        $region44: #{fcnet_forward.1} parent=31 // pred_fallthru
          _
      $region32: #{fcnet_forward.1} parent=5 // pred_fallthru
        _
      %p368 = scmp.le.s32.totalorder 1, %s21
      %p369 = scmp.lt.s32.totalorder %s21, 3
      %p370 = pnand %p368, %p369
      %p371 = pneg %p370
      // Predicated region
      $region45: #{fcnet_forward.1} parent=5 // pred_check
        _
      $region46: #{fcnet_forward.1} parent=5 // pred_check_branch
        %373 = sbr.rel (%p370) target = $region48
      $region47: #{fcnet_forward.1} parent=5 // pred_region
        %s374 = ssub.s32 %s21, 1
        %s375 = sand.u32 %s67, 1
        %s376 = scalar_lea.sflag [#allocation4], %s375
        %s377 = sand.u32 %s67, 1
        %s378 = smul.addr %s377, 3136
        %s379 = scalar_lea.vmem [#allocation3], %s378
        // Predicated region
        $region49: #{fcnet_forward.1} parent=47 // pred_check
          %p380 = pneg %p80
        $region50: #{fcnet_forward.1} parent=47 // pred_check_branch
          %382 = sbr.rel (%p380) target = $region52
        $region51: #{fcnet_forward.1} parent=47 // pred_region
          %383 = dma.done %s376, 50176
        $region52: #{fcnet_forward.1} parent=47 // pred_fallthru
          _
        %s384 = sand.u32 %s26, 1
        %s385 = scalar_lea.sflag [#allocation6], %s384
        %s386 = sand.u32 %s93, 1
        %s387 = smul.addr %s386, 8
        %s388 = scalar_lea.vmem [#allocation5], %s387
        // Predicated region
        $region53: #{fcnet_forward.1} parent=47 // pred_check
          %p389 = pneg %p106
        $region54: #{fcnet_forward.1} parent=47 // pred_check_branch
          %391 = sbr.rel (%p389) target = $region56
        $region55: #{fcnet_forward.1} parent=47 // pred_region
          %392 = dma.done %s385, 128
        $region56: #{fcnet_forward.1} parent=47 // pred_fallthru
          _
        %s393 = sand.u32 %s26, 1
        %s394 = scalar_lea.sflag [#allocation6], %s393
        %s395 = sand.u32 %s121, 1
        %s396 = smul.addr %s395, 4096
        %s397 = scalar_lea.vmem [#allocation7], %s396
        // Predicated region
        $region57: #{fcnet_forward.1} parent=47 // pred_check
          %p398 = pneg %p134
        $region58: #{fcnet_forward.1} parent=47 // pred_check_branch
          %400 = sbr.rel (%p398) target = $region60
        $region59: #{fcnet_forward.1} parent=47 // pred_region
          %401 = dma.done %s394, 65536
        $region60: #{fcnet_forward.1} parent=47 // pred_fallthru
          _
        // Predicated region
        $region61: #{fcnet_forward.1} parent=47 // pred_check
          %p402 = pneg %p160
        $region62: #{fcnet_forward.1} parent=47 // pred_check_branch
          %404 = sbr.rel (%p402) target = $region64
        $region63: #{fcnet_forward.1} parent=47 // pred_region
          %405 = dma.done [#allocation9], 256
        $region64: #{fcnet_forward.1} parent=47 // pred_fallthru
          _
        // Predicated region
        $region65: #{fcnet_forward.1} parent=47 // pred_check
          %p406 = pneg %p186
        $region66: #{fcnet_forward.1} parent=47 // pred_check_branch
          %408 = sbr.rel (%p406) target = $region68
        $region67: #{fcnet_forward.1} parent=47 // pred_region
          %409 = dma.done [#allocation9], 256
        $region68: #{fcnet_forward.1} parent=47 // pred_fallthru
          _
        // Predicated region
        $region69: #{fcnet_forward.1} parent=47 // pred_check
          %p410 = pneg %p212
        $region70: #{fcnet_forward.1} parent=47 // pred_check_branch
          %412 = sbr.rel (%p410) target = $region72
        $region71: #{fcnet_forward.1} parent=47 // pred_region
          %413 = dma.done [#allocation12], 16384
        $region72: #{fcnet_forward.1} parent=47 // pred_fallthru
          _
        %p414 = pneg %p54
        %p415 = pneg %p51
        %s416 = sand.u32 %s67, 1
        %s417 = scalar_lea.sflag [#allocation4], %s416
        %s418 = sand.u32 %s67, 1
        %s419 = smul.addr %s418, 3136
        %s420 = scalar_lea.vmem [#allocation3], %s419
        %p421 = pneg %p80
        %p422 = pneg %p77
        %s423 = sand.u32 %s26, 1
        %s424 = scalar_lea.sflag [#allocation6], %s423
        %s425 = sand.u32 %s93, 1
        %s426 = smul.addr %s425, 8
        %s427 = scalar_lea.vmem [#allocation5], %s426
        %p428 = pneg %p106
        %p429 = pneg %p103
        %s430 = sand.u32 %s26, 1
        %s431 = scalar_lea.sflag [#allocation6], %s430
        %s432 = sand.u32 %s121, 1
        %s433 = smul.addr %s432, 4096
        %s434 = scalar_lea.vmem [#allocation7], %s433
        %p435 = pneg %p134
        %p436 = pneg %p131
        %p437 = pneg %p160
        %p438 = pneg %p157
        %p439 = pneg %p186
        %p440 = pneg %p183
        %p441 = pneg %p212
        %p442 = pneg %p209
        %p443 = pneg %p238
        %p444 = pneg %p235
        %p445 = scmp.lt.s32.totalorder %s30, 0
        %s446 = scalar_select %p445, %s30, 0
        %s447 = smul.addr %s446, 2
        %s448 = scalar_lea.vmem %s7, %s447
        %s449 = smul.u32 8, %s31
        %s450 = smul.u32 32, %s31
        %s451 = smul.u32 16, %s30
        %s452 = smul.u32 16, %s30
        %s453 = smul.u32 16, %s30
        %s454 = smul.u32 256, %s30
        %p455 = scmp.lt.s32.totalorder %s30, 0
        %s456 = scalar_select %p455, %s30, 0
        %s457 = smul.addr %s456, 2
        %s458 = scalar_lea.vmem %s7, %s457
        %p460 = scmp.eq.s32.totalorder %s31, 0
        // Predicated region
        $region73: #{fcnet_forward.1} parent=47 // pred_check
          %p461 = pneg %p460
        $region74: #{fcnet_forward.1} parent=47 // pred_check_branch
          %463 = sbr.rel (%p461) target = $region76
        $region75: #{fcnet_forward.1} parent=47 // pred_region
          %464 = vst [vmem:[#allocation2] sm:$0xff] 0.0
          %465 = vst [vmem:[#allocation2 + $0x8] sm:$0xff] 0.0
          %466 = vst [vmem:[#allocation2 + $0x10] sm:$0xff] 0.0
          %467 = vst [vmem:[#allocation2 + $0x18] sm:$0xff] 0.0
        $region76: #{fcnet_forward.1} parent=47 // pred_fallthru
          _
        %v468 = vld [vmem:[%s0] sm:$0x7f]
        %v469 = vld [vmem:[%s379] sm:$0xff]
        %v470 = vld [vmem:[%s379 + $0x8] sm:$0xff]
        %v471 = vld [vmem:[%s379 + $0x10] sm:$0xff]
        %v472 = vld [vmem:[%s379 + $0x18] sm:$0xff]
        %v473 = vld [vmem:[%s379 + $0x20] sm:$0xff]
        %v474 = vld [vmem:[%s379 + $0x28] sm:$0xff]
        %v475 = vld [vmem:[%s379 + $0x30] sm:$0xff]
        %v476 = vld [vmem:[%s379 + $0x38] sm:$0xff]
        %v477 = vld [vmem:[%s379 + $0x40] sm:$0xff]
        %v478 = vld [vmem:[%s379 + $0x48] sm:$0xff]
        %v479 = vld [vmem:[%s379 + $0x50] sm:$0xff]
        %v480 = vld [vmem:[%s379 + $0x58] sm:$0xff]
        %v481 = vld [vmem:[%s379 + $0x60] sm:$0xff]
        %v482 = vld [vmem:[%s379 + $0x68] sm:$0xff]
        %v483 = vld [vmem:[%s379 + $0x70] sm:$0xff]
        %v484 = vld [vmem:[%s379 + $0x78] sm:$0xff]
        %v485 = vld [vmem:[%s379 + $0x80] sm:$0xff]
        %v486 = vld [vmem:[%s379 + $0x88] sm:$0xff]
        %v487 = vld [vmem:[%s379 + $0x90] sm:$0xff]
        %v488 = vld [vmem:[%s379 + $0x98] sm:$0xff]
        %v489 = vld [vmem:[%s379 + $0xa0] sm:$0xff]
        %v490 = vld [vmem:[%s379 + $0xa8] sm:$0xff]
        %v491 = vld [vmem:[%s379 + $0xb0] sm:$0xff]
        %v492 = vld [vmem:[%s379 + $0xb8] sm:$0xff]
        %v493 = vld [vmem:[%s379 + $0xc0] sm:$0xff]
        %v494 = vld [vmem:[%s379 + $0xc8] sm:$0xff]
        %v495 = vld [vmem:[%s379 + $0xd0] sm:$0xff]
        %v496 = vld [vmem:[%s379 + $0xd8] sm:$0xff]
        %v497 = vld [vmem:[%s379 + $0xe0] sm:$0xff]
        %v498 = vld [vmem:[%s379 + $0xe8] sm:$0xff]
        %v499 = vld [vmem:[%s379 + $0xf0] sm:$0xff]
        %v500 = vld [vmem:[%s379 + $0xf8] sm:$0xff]
        %v501 = vld [vmem:[%s379 + $0x100] sm:$0xff]
        %v502 = vld [vmem:[%s379 + $0x108] sm:$0xff]
        %v503 = vld [vmem:[%s379 + $0x110] sm:$0xff]
        %v504 = vld [vmem:[%s379 + $0x118] sm:$0xff]
        %v505 = vld [vmem:[%s379 + $0x120] sm:$0xff]
        %v506 = vld [vmem:[%s379 + $0x128] sm:$0xff]
        %v507 = vld [vmem:[%s379 + $0x130] sm:$0xff]
        %v508 = vld [vmem:[%s379 + $0x138] sm:$0xff]
        %v509 = vld [vmem:[%s379 + $0x140] sm:$0xff]
        %v510 = vld [vmem:[%s379 + $0x148] sm:$0xff]
        %v511 = vld [vmem:[%s379 + $0x150] sm:$0xff]
        %v512 = vld [vmem:[%s379 + $0x158] sm:$0xff]
        %v513 = vld [vmem:[%s379 + $0x160] sm:$0xff]
        %v514 = vld [vmem:[%s379 + $0x168] sm:$0xff]
        %v515 = vld [vmem:[%s379 + $0x170] sm:$0xff]
        %v516 = vld [vmem:[%s379 + $0x178] sm:$0xff]
        %v517 = vld [vmem:[%s379 + $0x180] sm:$0xff]
        %v518 = vld [vmem:[%s379 + $0x188] sm:$0xff]
        %v519 = vld [vmem:[%s379 + $0x190] sm:$0xff]
        %v520 = vld [vmem:[%s379 + $0x198] sm:$0xff]
        %v521 = vld [vmem:[%s379 + $0x1a0] sm:$0xff]
        %v522 = vld [vmem:[%s379 + $0x1a8] sm:$0xff]
        %v523 = vld [vmem:[%s379 + $0x1b0] sm:$0xff]
        %v524 = vld [vmem:[%s379 + $0x1b8] sm:$0xff]
        %v525 = vld [vmem:[%s379 + $0x1c0] sm:$0xff]
        %v526 = vld [vmem:[%s379 + $0x1c8] sm:$0xff]
        %v527 = vld [vmem:[%s379 + $0x1d0] sm:$0xff]
        %v528 = vld [vmem:[%s379 + $0x1d8] sm:$0xff]
        %v529 = vld [vmem:[%s379 + $0x1e0] sm:$0xff]
        %v530 = vld [vmem:[%s379 + $0x1e8] sm:$0xff]
        %v531 = vld [vmem:[%s379 + $0x1f0] sm:$0xff]
        %v532 = vld [vmem:[%s379 + $0x1f8] sm:$0xff]
        %v533 = vld [vmem:[%s379 + $0x200] sm:$0xff]
        %v534 = vld [vmem:[%s379 + $0x208] sm:$0xff]
        %v535 = vld [vmem:[%s379 + $0x210] sm:$0xff]
        %v536 = vld [vmem:[%s379 + $0x218] sm:$0xff]
        %v537 = vld [vmem:[%s379 + $0x220] sm:$0xff]
        %v538 = vld [vmem:[%s379 + $0x228] sm:$0xff]
        %v539 = vld [vmem:[%s379 + $0x230] sm:$0xff]
        %v540 = vld [vmem:[%s379 + $0x238] sm:$0xff]
        %v541 = vld [vmem:[%s379 + $0x240] sm:$0xff]
        %v542 = vld [vmem:[%s379 + $0x248] sm:$0xff]
        %v543 = vld [vmem:[%s379 + $0x250] sm:$0xff]
        %v544 = vld [vmem:[%s379 + $0x258] sm:$0xff]
        %v545 = vld [vmem:[%s379 + $0x260] sm:$0xff]
        %v546 = vld [vmem:[%s379 + $0x268] sm:$0xff]
        %v547 = vld [vmem:[%s379 + $0x270] sm:$0xff]
        %v548 = vld [vmem:[%s379 + $0x278] sm:$0xff]
        %v549 = vld [vmem:[%s379 + $0x280] sm:$0xff]
        %v550 = vld [vmem:[%s379 + $0x288] sm:$0xff]
        %v551 = vld [vmem:[%s379 + $0x290] sm:$0xff]
        %v552 = vld [vmem:[%s379 + $0x298] sm:$0xff]
        %v553 = vld [vmem:[%s379 + $0x2a0] sm:$0xff]
        %v554 = vld [vmem:[%s379 + $0x2a8] sm:$0xff]
        %v555 = vld [vmem:[%s379 + $0x2b0] sm:$0xff]
        %v556 = vld [vmem:[%s379 + $0x2b8] sm:$0xff]
        %v557 = vld [vmem:[%s379 + $0x2c0] sm:$0xff]
        %v558 = vld [vmem:[%s379 + $0x2c8] sm:$0xff]
        %v559 = vld [vmem:[%s379 + $0x2d0] sm:$0xff]
        %v560 = vld [vmem:[%s379 + $0x2d8] sm:$0xff]
        %v561 = vld [vmem:[%s379 + $0x2e0] sm:$0xff]
        %v562 = vld [vmem:[%s379 + $0x2e8] sm:$0xff]
        %v563 = vld [vmem:[%s379 + $0x2f0] sm:$0xff]
        %v564 = vld [vmem:[%s379 + $0x2f8] sm:$0xff]
        %v565 = vld [vmem:[%s379 + $0x300] sm:$0xff]
        %v566 = vld [vmem:[%s379 + $0x308] sm:$0xff]
        %v567 = vld [vmem:[%s379 + $0x310] sm:$0xff]
        %v568 = vld [vmem:[%s379 + $0x318] sm:$0xff]
        %v569 = vld [vmem:[%s379 + $0x320] sm:$0xff]
        %v570 = vld [vmem:[%s379 + $0x328] sm:$0xff]
        %v571 = vld [vmem:[%s379 + $0x330] sm:$0xff]
        %v572 = vld [vmem:[%s379 + $0x338] sm:$0xff]
        %v573 = vld [vmem:[%s379 + $0x340] sm:$0xff]
        %v574 = vld [vmem:[%s379 + $0x348] sm:$0xff]
        %v575 = vld [vmem:[%s379 + $0x350] sm:$0xff]
        %v576 = vld [vmem:[%s379 + $0x358] sm:$0xff]
        %v577 = vld [vmem:[%s379 + $0x360] sm:$0xff]
        %v578 = vld [vmem:[%s379 + $0x368] sm:$0xff]
        %v579 = vld [vmem:[%s379 + $0x370] sm:$0xff]
        %v580 = vld [vmem:[%s379 + $0x378] sm:$0xff]
        %v581 = vld [vmem:[%s379 + $0x380] sm:$0xff]
        %v582 = vld [vmem:[%s379 + $0x388] sm:$0xff]
        %v583 = vld [vmem:[%s379 + $0x390] sm:$0xff]
        %v584 = vld [vmem:[%s379 + $0x398] sm:$0xff]
        %v585 = vld [vmem:[%s379 + $0x3a0] sm:$0xff]
        %v586 = vld [vmem:[%s379 + $0x3a8] sm:$0xff]
        %v587 = vld [vmem:[%s379 + $0x3b0] sm:$0xff]
        %v588 = vld [vmem:[%s379 + $0x3b8] sm:$0xff]
        %v589 = vld [vmem:[%s379 + $0x3c0] sm:$0xff]
        %v590 = vld [vmem:[%s379 + $0x3c8] sm:$0xff]
        %v591 = vld [vmem:[%s379 + $0x3d0] sm:$0xff]
        %v592 = vld [vmem:[%s379 + $0x3d8] sm:$0xff]
        %v593 = vld [vmem:[%s379 + $0x3e0] sm:$0xff]
        %v594 = vld [vmem:[%s379 + $0x3e8] sm:$0xff]
        %v595 = vld [vmem:[%s379 + $0x3f0] sm:$0xff]
        %v596 = vld [vmem:[%s379 + $0x3f8] sm:$0xff]
        %v597 = vld [vmem:[%s379 + $0x400] sm:$0xff]
        %v598 = vld [vmem:[%s379 + $0x408] sm:$0xff]
        %v599 = vld [vmem:[%s379 + $0x410] sm:$0xff]
        %v600 = vld [vmem:[%s379 + $0x418] sm:$0xff]
        %v601 = vld [vmem:[%s379 + $0x420] sm:$0xff]
        %v602 = vld [vmem:[%s379 + $0x428] sm:$0xff]
        %v603 = vld [vmem:[%s379 + $0x430] sm:$0xff]
        %v604 = vld [vmem:[%s379 + $0x438] sm:$0xff]
        %v605 = vld [vmem:[%s379 + $0x440] sm:$0xff]
        %v606 = vld [vmem:[%s379 + $0x448] sm:$0xff]
        %v607 = vld [vmem:[%s379 + $0x450] sm:$0xff]
        %v608 = vld [vmem:[%s379 + $0x458] sm:$0xff]
        %v609 = vld [vmem:[%s379 + $0x460] sm:$0xff]
        %v610 = vld [vmem:[%s379 + $0x468] sm:$0xff]
        %v611 = vld [vmem:[%s379 + $0x470] sm:$0xff]
        %v612 = vld [vmem:[%s379 + $0x478] sm:$0xff]
        %v613 = vld [vmem:[%s379 + $0x480] sm:$0xff]
        %v614 = vld [vmem:[%s379 + $0x488] sm:$0xff]
        %v615 = vld [vmem:[%s379 + $0x490] sm:$0xff]
        %v616 = vld [vmem:[%s379 + $0x498] sm:$0xff]
        %v617 = vld [vmem:[%s379 + $0x4a0] sm:$0xff]
        %v618 = vld [vmem:[%s379 + $0x4a8] sm:$0xff]
        %v619 = vld [vmem:[%s379 + $0x4b0] sm:$0xff]
        %v620 = vld [vmem:[%s379 + $0x4b8] sm:$0xff]
        %v621 = vld [vmem:[%s379 + $0x4c0] sm:$0xff]
        %v622 = vld [vmem:[%s379 + $0x4c8] sm:$0xff]
        %v623 = vld [vmem:[%s379 + $0x4d0] sm:$0xff]
        %v624 = vld [vmem:[%s379 + $0x4d8] sm:$0xff]
        %v625 = vld [vmem:[%s379 + $0x4e0] sm:$0xff]
        %v626 = vld [vmem:[%s379 + $0x4e8] sm:$0xff]
        %v627 = vld [vmem:[%s379 + $0x4f0] sm:$0xff]
        %v628 = vld [vmem:[%s379 + $0x4f8] sm:$0xff]
        %v629 = vld [vmem:[%s379 + $0x500] sm:$0xff]
        %v630 = vld [vmem:[%s379 + $0x508] sm:$0xff]
        %v631 = vld [vmem:[%s379 + $0x510] sm:$0xff]
        %v632 = vld [vmem:[%s379 + $0x518] sm:$0xff]
        %v633 = vld [vmem:[%s379 + $0x520] sm:$0xff]
        %v634 = vld [vmem:[%s379 + $0x528] sm:$0xff]
        %v635 = vld [vmem:[%s379 + $0x530] sm:$0xff]
        %v636 = vld [vmem:[%s379 + $0x538] sm:$0xff]
        %v637 = vld [vmem:[%s379 + $0x540] sm:$0xff]
        %v638 = vld [vmem:[%s379 + $0x548] sm:$0xff]
        %v639 = vld [vmem:[%s379 + $0x550] sm:$0xff]
        %v640 = vld [vmem:[%s379 + $0x558] sm:$0xff]
        %v641 = vld [vmem:[%s379 + $0x560] sm:$0xff]
        %v642 = vld [vmem:[%s379 + $0x568] sm:$0xff]
        %v643 = vld [vmem:[%s379 + $0x570] sm:$0xff]
        %v644 = vld [vmem:[%s379 + $0x578] sm:$0xff]
        %v645 = vld [vmem:[%s379 + $0x580] sm:$0xff]
        %v646 = vld [vmem:[%s379 + $0x588] sm:$0xff]
        %v647 = vld [vmem:[%s379 + $0x590] sm:$0xff]
        %v648 = vld [vmem:[%s379 + $0x598] sm:$0xff]
        %v649 = vld [vmem:[%s379 + $0x5a0] sm:$0xff]
        %v650 = vld [vmem:[%s379 + $0x5a8] sm:$0xff]
        %v651 = vld [vmem:[%s379 + $0x5b0] sm:$0xff]
        %v652 = vld [vmem:[%s379 + $0x5b8] sm:$0xff]
        %v653 = vld [vmem:[%s379 + $0x5c0] sm:$0xff]
        %v654 = vld [vmem:[%s379 + $0x5c8] sm:$0xff]
        %v655 = vld [vmem:[%s379 + $0x5d0] sm:$0xff]
        %v656 = vld [vmem:[%s379 + $0x5d8] sm:$0xff]
        %v657 = vld [vmem:[%s379 + $0x5e0] sm:$0xff]
        %v658 = vld [vmem:[%s379 + $0x5e8] sm:$0xff]
        %v659 = vld [vmem:[%s379 + $0x5f0] sm:$0xff]
        %v660 = vld [vmem:[%s379 + $0x5f8] sm:$0xff]
        %v661 = vld [vmem:[%s379 + $0x600] sm:$0xff]
        %v662 = vld [vmem:[%s379 + $0x608] sm:$0xff]
        %v663 = vld [vmem:[%s379 + $0x610] sm:$0xff]
        %v664 = vld [vmem:[%s379 + $0x618] sm:$0xff]
        %v665 = vld [vmem:[%s379 + $0x620] sm:$0xff]
        %v666 = vld [vmem:[%s379 + $0x628] sm:$0xff]
        %v667 = vld [vmem:[%s379 + $0x630] sm:$0xff]
        %v668 = vld [vmem:[%s379 + $0x638] sm:$0xff]
        %v669 = vld [vmem:[%s379 + $0x640] sm:$0xff]
        %v670 = vld [vmem:[%s379 + $0x648] sm:$0xff]
        %v671 = vld [vmem:[%s379 + $0x650] sm:$0xff]
        %v672 = vld [vmem:[%s379 + $0x658] sm:$0xff]
        %v673 = vld [vmem:[%s379 + $0x660] sm:$0xff]
        %v674 = vld [vmem:[%s379 + $0x668] sm:$0xff]
        %v675 = vld [vmem:[%s379 + $0x670] sm:$0xff]
        %v676 = vld [vmem:[%s379 + $0x678] sm:$0xff]
        %v677 = vld [vmem:[%s379 + $0x680] sm:$0xff]
        %v678 = vld [vmem:[%s379 + $0x688] sm:$0xff]
        %v679 = vld [vmem:[%s379 + $0x690] sm:$0xff]
        %v680 = vld [vmem:[%s379 + $0x698] sm:$0xff]
        %v681 = vld [vmem:[%s379 + $0x6a0] sm:$0xff]
        %v682 = vld [vmem:[%s379 + $0x6a8] sm:$0xff]
        %v683 = vld [vmem:[%s379 + $0x6b0] sm:$0xff]
        %v684 = vld [vmem:[%s379 + $0x6b8] sm:$0xff]
        %v685 = vld [vmem:[%s379 + $0x6c0] sm:$0xff]
        %v686 = vld [vmem:[%s379 + $0x6c8] sm:$0xff]
        %v687 = vld [vmem:[%s379 + $0x6d0] sm:$0xff]
        %v688 = vld [vmem:[%s379 + $0x6d8] sm:$0xff]
        %v689 = vld [vmem:[%s379 + $0x6e0] sm:$0xff]
        %v690 = vld [vmem:[%s379 + $0x6e8] sm:$0xff]
        %v691 = vld [vmem:[%s379 + $0x6f0] sm:$0xff]
        %v692 = vld [vmem:[%s379 + $0x6f8] sm:$0xff]
        %v693 = vld [vmem:[%s379 + $0x700] sm:$0xff]
        %v694 = vld [vmem:[%s379 + $0x708] sm:$0xff]
        %v695 = vld [vmem:[%s379 + $0x710] sm:$0xff]
        %v696 = vld [vmem:[%s379 + $0x718] sm:$0xff]
        %v697 = vld [vmem:[%s379 + $0x720] sm:$0xff]
        %v698 = vld [vmem:[%s379 + $0x728] sm:$0xff]
        %v699 = vld [vmem:[%s379 + $0x730] sm:$0xff]
        %v700 = vld [vmem:[%s379 + $0x738] sm:$0xff]
        %v701 = vld [vmem:[%s379 + $0x740] sm:$0xff]
        %v702 = vld [vmem:[%s379 + $0x748] sm:$0xff]
        %v703 = vld [vmem:[%s379 + $0x750] sm:$0xff]
        %v704 = vld [vmem:[%s379 + $0x758] sm:$0xff]
        %v705 = vld [vmem:[%s379 + $0x760] sm:$0xff]
        %v706 = vld [vmem:[%s379 + $0x768] sm:$0xff]
        %v707 = vld [vmem:[%s379 + $0x770] sm:$0xff]
        %v708 = vld [vmem:[%s379 + $0x778] sm:$0xff]
        %v709 = vld [vmem:[%s379 + $0x780] sm:$0xff]
        %v710 = vld [vmem:[%s379 + $0x788] sm:$0xff]
        %v711 = vld [vmem:[%s379 + $0x790] sm:$0xff]
        %v712 = vld [vmem:[%s379 + $0x798] sm:$0xff]
        %v713 = vld [vmem:[%s379 + $0x7a0] sm:$0xff]
        %v714 = vld [vmem:[%s379 + $0x7a8] sm:$0xff]
        %v715 = vld [vmem:[%s379 + $0x7b0] sm:$0xff]
        %v716 = vld [vmem:[%s379 + $0x7b8] sm:$0xff]
        %v717 = vld [vmem:[%s379 + $0x7c0] sm:$0xff]
        %v718 = vld [vmem:[%s379 + $0x7c8] sm:$0xff]
        %v719 = vld [vmem:[%s379 + $0x7d0] sm:$0xff]
        %v720 = vld [vmem:[%s379 + $0x7d8] sm:$0xff]
        %v721 = vld [vmem:[%s379 + $0x7e0] sm:$0xff]
        %v722 = vld [vmem:[%s379 + $0x7e8] sm:$0xff]
        %v723 = vld [vmem:[%s379 + $0x7f0] sm:$0xff]
        %v724 = vld [vmem:[%s379 + $0x7f8] sm:$0xff]
        %v725 = vld [vmem:[%s379 + $0x800] sm:$0xff]
        %v726 = vld [vmem:[%s379 + $0x808] sm:$0xff]
        %v727 = vld [vmem:[%s379 + $0x810] sm:$0xff]
        %v728 = vld [vmem:[%s379 + $0x818] sm:$0xff]
        %v729 = vld [vmem:[%s379 + $0x820] sm:$0xff]
        %v730 = vld [vmem:[%s379 + $0x828] sm:$0xff]
        %v731 = vld [vmem:[%s379 + $0x830] sm:$0xff]
        %v732 = vld [vmem:[%s379 + $0x838] sm:$0xff]
        %v733 = vld [vmem:[%s379 + $0x840] sm:$0xff]
        %v734 = vld [vmem:[%s379 + $0x848] sm:$0xff]
        %v735 = vld [vmem:[%s379 + $0x850] sm:$0xff]
        %v736 = vld [vmem:[%s379 + $0x858] sm:$0xff]
        %v737 = vld [vmem:[%s379 + $0x860] sm:$0xff]
        %v738 = vld [vmem:[%s379 + $0x868] sm:$0xff]
        %v739 = vld [vmem:[%s379 + $0x870] sm:$0xff]
        %v740 = vld [vmem:[%s379 + $0x878] sm:$0xff]
        %v741 = vld [vmem:[%s379 + $0x880] sm:$0xff]
        %v742 = vld [vmem:[%s379 + $0x888] sm:$0xff]
        %v743 = vld [vmem:[%s379 + $0x890] sm:$0xff]
        %v744 = vld [vmem:[%s379 + $0x898] sm:$0xff]
        %v745 = vld [vmem:[%s379 + $0x8a0] sm:$0xff]
        %v746 = vld [vmem:[%s379 + $0x8a8] sm:$0xff]
        %v747 = vld [vmem:[%s379 + $0x8b0] sm:$0xff]
        %v748 = vld [vmem:[%s379 + $0x8b8] sm:$0xff]
        %v749 = vld [vmem:[%s379 + $0x8c0] sm:$0xff]
        %v750 = vld [vmem:[%s379 + $0x8c8] sm:$0xff]
        %v751 = vld [vmem:[%s379 + $0x8d0] sm:$0xff]
        %v752 = vld [vmem:[%s379 + $0x8d8] sm:$0xff]
        %v753 = vld [vmem:[%s379 + $0x8e0] sm:$0xff]
        %v754 = vld [vmem:[%s379 + $0x8e8] sm:$0xff]
        %v755 = vld [vmem:[%s379 + $0x8f0] sm:$0xff]
        %v756 = vld [vmem:[%s379 + $0x8f8] sm:$0xff]
        %v757 = vld [vmem:[%s379 + $0x900] sm:$0xff]
        %v758 = vld [vmem:[%s379 + $0x908] sm:$0xff]
        %v759 = vld [vmem:[%s379 + $0x910] sm:$0xff]
        %v760 = vld [vmem:[%s379 + $0x918] sm:$0xff]
        %v761 = vld [vmem:[%s379 + $0x920] sm:$0xff]
        %v762 = vld [vmem:[%s379 + $0x928] sm:$0xff]
        %v763 = vld [vmem:[%s379 + $0x930] sm:$0xff]
        %v764 = vld [vmem:[%s379 + $0x938] sm:$0xff]
        %v765 = vld [vmem:[%s379 + $0x940] sm:$0xff]
        %v766 = vld [vmem:[%s379 + $0x948] sm:$0xff]
        %v767 = vld [vmem:[%s379 + $0x950] sm:$0xff]
        %v768 = vld [vmem:[%s379 + $0x958] sm:$0xff]
        %v769 = vld [vmem:[%s379 + $0x960] sm:$0xff]
        %v770 = vld [vmem:[%s379 + $0x968] sm:$0xff]
        %v771 = vld [vmem:[%s379 + $0x970] sm:$0xff]
        %v772 = vld [vmem:[%s379 + $0x978] sm:$0xff]
        %v773 = vld [vmem:[%s379 + $0x980] sm:$0xff]
        %v774 = vld [vmem:[%s379 + $0x988] sm:$0xff]
        %v775 = vld [vmem:[%s379 + $0x990] sm:$0xff]
        %v776 = vld [vmem:[%s379 + $0x998] sm:$0xff]
        %v777 = vld [vmem:[%s379 + $0x9a0] sm:$0xff]
        %v778 = vld [vmem:[%s379 + $0x9a8] sm:$0xff]
        %v779 = vld [vmem:[%s379 + $0x9b0] sm:$0xff]
        %v780 = vld [vmem:[%s379 + $0x9b8] sm:$0xff]
        %v781 = vld [vmem:[%s379 + $0x9c0] sm:$0xff]
        %v782 = vld [vmem:[%s379 + $0x9c8] sm:$0xff]
        %v783 = vld [vmem:[%s379 + $0x9d0] sm:$0xff]
        %v784 = vld [vmem:[%s379 + $0x9d8] sm:$0xff]
        %v785 = vld [vmem:[%s379 + $0x9e0] sm:$0xff]
        %v786 = vld [vmem:[%s379 + $0x9e8] sm:$0xff]
        %v787 = vld [vmem:[%s379 + $0x9f0] sm:$0xff]
        %v788 = vld [vmem:[%s379 + $0x9f8] sm:$0xff]
        %v789 = vld [vmem:[%s379 + $0xa00] sm:$0xff]
        %v790 = vld [vmem:[%s379 + $0xa08] sm:$0xff]
        %v791 = vld [vmem:[%s379 + $0xa10] sm:$0xff]
        %v792 = vld [vmem:[%s379 + $0xa18] sm:$0xff]
        %v793 = vld [vmem:[%s379 + $0xa20] sm:$0xff]
        %v794 = vld [vmem:[%s379 + $0xa28] sm:$0xff]
        %v795 = vld [vmem:[%s379 + $0xa30] sm:$0xff]
        %v796 = vld [vmem:[%s379 + $0xa38] sm:$0xff]
        %v797 = vld [vmem:[%s379 + $0xa40] sm:$0xff]
        %v798 = vld [vmem:[%s379 + $0xa48] sm:$0xff]
        %v799 = vld [vmem:[%s379 + $0xa50] sm:$0xff]
        %v800 = vld [vmem:[%s379 + $0xa58] sm:$0xff]
        %v801 = vld [vmem:[%s379 + $0xa60] sm:$0xff]
        %v802 = vld [vmem:[%s379 + $0xa68] sm:$0xff]
        %v803 = vld [vmem:[%s379 + $0xa70] sm:$0xff]
        %v804 = vld [vmem:[%s379 + $0xa78] sm:$0xff]
        %v805 = vld [vmem:[%s379 + $0xa80] sm:$0xff]
        %v806 = vld [vmem:[%s379 + $0xa88] sm:$0xff]
        %v807 = vld [vmem:[%s379 + $0xa90] sm:$0xff]
        %v808 = vld [vmem:[%s379 + $0xa98] sm:$0xff]
        %v809 = vld [vmem:[%s379 + $0xaa0] sm:$0xff]
        %v810 = vld [vmem:[%s379 + $0xaa8] sm:$0xff]
        %v811 = vld [vmem:[%s379 + $0xab0] sm:$0xff]
        %v812 = vld [vmem:[%s379 + $0xab8] sm:$0xff]
        %v813 = vld [vmem:[%s379 + $0xac0] sm:$0xff]
        %v814 = vld [vmem:[%s379 + $0xac8] sm:$0xff]
        %v815 = vld [vmem:[%s379 + $0xad0] sm:$0xff]
        %v816 = vld [vmem:[%s379 + $0xad8] sm:$0xff]
        %v817 = vld [vmem:[%s379 + $0xae0] sm:$0xff]
        %v818 = vld [vmem:[%s379 + $0xae8] sm:$0xff]
        %v819 = vld [vmem:[%s379 + $0xaf0] sm:$0xff]
        %v820 = vld [vmem:[%s379 + $0xaf8] sm:$0xff]
        %v821 = vld [vmem:[%s379 + $0xb00] sm:$0xff]
        %v822 = vld [vmem:[%s379 + $0xb08] sm:$0xff]
        %v823 = vld [vmem:[%s379 + $0xb10] sm:$0xff]
        %v824 = vld [vmem:[%s379 + $0xb18] sm:$0xff]
        %v825 = vld [vmem:[%s379 + $0xb20] sm:$0xff]
        %v826 = vld [vmem:[%s379 + $0xb28] sm:$0xff]
        %v827 = vld [vmem:[%s379 + $0xb30] sm:$0xff]
        %v828 = vld [vmem:[%s379 + $0xb38] sm:$0xff]
        %v829 = vld [vmem:[%s379 + $0xb40] sm:$0xff]
        %v830 = vld [vmem:[%s379 + $0xb48] sm:$0xff]
        %v831 = vld [vmem:[%s379 + $0xb50] sm:$0xff]
        %v832 = vld [vmem:[%s379 + $0xb58] sm:$0xff]
        %v833 = vld [vmem:[%s379 + $0xb60] sm:$0xff]
        %v834 = vld [vmem:[%s379 + $0xb68] sm:$0xff]
        %v835 = vld [vmem:[%s379 + $0xb70] sm:$0xff]
        %v836 = vld [vmem:[%s379 + $0xb78] sm:$0xff]
        %v837 = vld [vmem:[%s379 + $0xb80] sm:$0xff]
        %v838 = vld [vmem:[%s379 + $0xb88] sm:$0xff]
        %v839 = vld [vmem:[%s379 + $0xb90] sm:$0xff]
        %v840 = vld [vmem:[%s379 + $0xb98] sm:$0xff]
        %v841 = vld [vmem:[%s379 + $0xba0] sm:$0xff]
        %v842 = vld [vmem:[%s379 + $0xba8] sm:$0xff]
        %v843 = vld [vmem:[%s379 + $0xbb0] sm:$0xff]
        %v844 = vld [vmem:[%s379 + $0xbb8] sm:$0xff]
        %v845 = vld [vmem:[%s379 + $0xbc0] sm:$0xff]
        %v846 = vld [vmem:[%s379 + $0xbc8] sm:$0xff]
        %v847 = vld [vmem:[%s379 + $0xbd0] sm:$0xff]
        %v848 = vld [vmem:[%s379 + $0xbd8] sm:$0xff]
        %v849 = vld [vmem:[%s379 + $0xbe0] sm:$0xff]
        %v850 = vld [vmem:[%s379 + $0xbe8] sm:$0xff]
        %v851 = vld [vmem:[%s379 + $0xbf0] sm:$0xff]
        %v852 = vld [vmem:[%s379 + $0xbf8] sm:$0xff]
        %v853 = vld [vmem:[%s379 + $0xc00] sm:$0xff]
        %v854 = vld [vmem:[%s379 + $0xc08] sm:$0xff]
        %v855 = vld [vmem:[%s379 + $0xc10] sm:$0xff]
        %v856 = vld [vmem:[%s379 + $0xc18] sm:$0xff]
        %v857 = vld [vmem:[%s379 + $0xc20] sm:$0xff]
        %v858 = vld [vmem:[%s379 + $0xc28] sm:$0xff]
        %v859 = vld [vmem:[%s379 + $0xc30] sm:$0xff]
        %v860 = vld [vmem:[%s379 + $0xc38] sm:$0xff]
        %v861 = vld [vmem:[%s388] sm:$0xff]
        %v863 = vlaneseq
        %v864 = vshrl.u32 %v863, 7
        %v865 = vsub.s32 0, %v864
        %v866 = vrot.slane %v861, %v865
        %v867 = vlaneseq
        %v868 = vshrl.u32 %v867, 7
        %v869 = vsub.s32 1, %v868
        %v870 = vrot.slane %v861, %v869
        %v871 = vlaneseq
        %v872 = vshrl.u32 %v871, 7
        %v873 = vsub.s32 2, %v872
        %v874 = vrot.slane %v861, %v873
        %v875 = vlaneseq
        %v876 = vshrl.u32 %v875, 7
        %v877 = vsub.s32 3, %v876
        %v878 = vrot.slane %v861, %v877
        %v879 = vlaneseq
        %v880 = vshrl.u32 %v879, 7
        %v881 = vsub.s32 4, %v880
        %v882 = vrot.slane %v861, %v881
        %v883 = vlaneseq
        %v884 = vshrl.u32 %v883, 7
        %v885 = vsub.s32 5, %v884
        %v886 = vrot.slane %v861, %v885
        %v887 = vlaneseq
        %v888 = vshrl.u32 %v887, 7
        %v889 = vsub.s32 6, %v888
        %v890 = vrot.slane %v861, %v889
        %v891 = vlaneseq
        %v892 = vshrl.u32 %v891, 7
        %v893 = vsub.s32 7, %v892
        %v894 = vrot.slane %v861, %v893
        %v904 = vcombine.high %v468, %v468
        %v906 = vunpack.c.l.s4 1966171168
        %v907 = vunpack.c.0.s8 %v906
        %v908 = vlaneseq
        %v909 = vshrl.u32 %v908, 7
        %v910 = vsub.s32 %v907, %v909
        %v911 = vrot.slane %v468, %v910
        %v913 = vunpack.c.l.s4 1966171168
        %v914 = vunpack.c.0.s8 %v913
        %v915 = vlaneseq
        %v916 = vshrl.u32 %v915, 7
        %v917 = vsub.s32 %v914, %v916
        %v918 = vrot.slane %v904, %v917
        %v919 = vcombine.high %v911, %v911
        %v920 = vcombine.high %v918, %v918
        %v922 = vunpack.c.l.s4 1966171168
        %v923 = vunpack.c.0.s8 %v922
        %v924 = vlaneseq
        %v925 = vshrl.u32 %v924, 7
        %v926 = vsub.s32 %v923, %v925
        %v927 = vrot.slane %v911, %v926
        %v929 = vunpack.c.l.s4 1966171168
        %v930 = vunpack.c.0.s8 %v929
        %v931 = vlaneseq
        %v932 = vshrl.u32 %v931, 7
        %v933 = vsub.s32 %v930, %v932
        %v934 = vrot.slane %v918, %v933
        %v936 = vunpack.c.l.s4 1966171168
        %v937 = vunpack.c.0.s8 %v936
        %v938 = vlaneseq
        %v939 = vshrl.u32 %v938, 7
        %v940 = vsub.s32 %v937, %v939
        %v941 = vrot.slane %v919, %v940
        %v943 = vunpack.c.l.s4 1966171168
        %v944 = vunpack.c.0.s8 %v943
        %v945 = vlaneseq
        %v946 = vshrl.u32 %v945, 7
        %v947 = vsub.s32 %v944, %v946
        %v948 = vrot.slane %v920, %v947
        %v949 = vcombine.high %v927, %v927
        %v950 = vcombine.high %v934, %v934
        %v951 = vcombine.high %v941, %v941
        %v1350 = vunpack.c.l.b16 %v469
        %v1351 = vunpack.c.h.b16 %v469
        %v1352 = vunpack.c.l.b16 %v470
        %v1353 = vunpack.c.h.b16 %v470
        %v1354 = vunpack.c.l.b16 %v471
        %v1355 = vunpack.c.h.b16 %v471
        %v1356 = vunpack.c.l.b16 %v472
        %v1357 = vunpack.c.h.b16 %v472
        %v1358 = vunpack.c.l.b16 %v473
        %v1359 = vunpack.c.h.b16 %v473
        %v1360 = vunpack.c.l.b16 %v474
        %v1361 = vunpack.c.h.b16 %v474
        %v1362 = vunpack.c.l.b16 %v475
        %v1363 = vunpack.c.h.b16 %v475
        %v1364 = vunpack.c.l.b16 %v476
        %v1365 = vunpack.c.h.b16 %v476
        %v1366 = vunpack.c.l.b16 %v477
        %v1367 = vunpack.c.h.b16 %v477
        %v1368 = vunpack.c.l.b16 %v478
        %v1369 = vunpack.c.h.b16 %v478
        %v1370 = vunpack.c.l.b16 %v479
        %v1371 = vunpack.c.h.b16 %v479
        %v1372 = vunpack.c.l.b16 %v480
        %v1373 = vunpack.c.h.b16 %v480
        %v1374 = vunpack.c.l.b16 %v481
        %v1375 = vunpack.c.h.b16 %v481
        %v1376 = vunpack.c.l.b16 %v482
        %v1377 = vunpack.c.h.b16 %v482
        %v1378 = vunpack.c.l.b16 %v483
        %v1379 = vunpack.c.h.b16 %v483
        %v1380 = vunpack.c.l.b16 %v484
        %v1381 = vunpack.c.h.b16 %v484
        %v1382 = vunpack.c.l.b16 %v485
        %v1383 = vunpack.c.h.b16 %v485
        %v1384 = vunpack.c.l.b16 %v486
        %v1385 = vunpack.c.h.b16 %v486
        %v1386 = vunpack.c.l.b16 %v487
        %v1387 = vunpack.c.h.b16 %v487
        %v1388 = vunpack.c.l.b16 %v488
        %v1389 = vunpack.c.h.b16 %v488
        %v1390 = vunpack.c.l.b16 %v489
        %v1391 = vunpack.c.h.b16 %v489
        %v1392 = vunpack.c.l.b16 %v490
        %v1393 = vunpack.c.h.b16 %v490
        %v1394 = vunpack.c.l.b16 %v491
        %v1395 = vunpack.c.h.b16 %v491
        %v1396 = vunpack.c.l.b16 %v492
        %v1397 = vunpack.c.h.b16 %v492
        %v1398 = vunpack.c.l.b16 %v493
        %v1399 = vunpack.c.h.b16 %v493
        %v1400 = vunpack.c.l.b16 %v494
        %v1401 = vunpack.c.h.b16 %v494
        %v1402 = vunpack.c.l.b16 %v495
        %v1403 = vunpack.c.h.b16 %v495
        %v1404 = vunpack.c.l.b16 %v496
        %v1405 = vunpack.c.h.b16 %v496
        %v1406 = vunpack.c.l.b16 %v497
        %v1407 = vunpack.c.h.b16 %v497
        %v1408 = vunpack.c.l.b16 %v498
        %v1409 = vunpack.c.h.b16 %v498
        %v1410 = vunpack.c.l.b16 %v499
        %v1411 = vunpack.c.h.b16 %v499
        %v1412 = vunpack.c.l.b16 %v500
        %v1413 = vunpack.c.h.b16 %v500
        %v1414 = vunpack.c.l.b16 %v501
        %v1415 = vunpack.c.h.b16 %v501
        %v1416 = vunpack.c.l.b16 %v502
        %v1417 = vunpack.c.h.b16 %v502
        %v1418 = vunpack.c.l.b16 %v503
        %v1419 = vunpack.c.h.b16 %v503
        %v1420 = vunpack.c.l.b16 %v504
        %v1421 = vunpack.c.h.b16 %v504
        %v1422 = vunpack.c.l.b16 %v505
        %v1423 = vunpack.c.h.b16 %v505
        %v1424 = vunpack.c.l.b16 %v506
        %v1425 = vunpack.c.h.b16 %v506
        %v1426 = vunpack.c.l.b16 %v507
        %v1427 = vunpack.c.h.b16 %v507
        %v1428 = vunpack.c.l.b16 %v508
        %v1429 = vunpack.c.h.b16 %v508
        %v1430 = vunpack.c.l.b16 %v509
        %v1431 = vunpack.c.h.b16 %v509
        %v1432 = vunpack.c.l.b16 %v510
        %v1433 = vunpack.c.h.b16 %v510
        %v1434 = vunpack.c.l.b16 %v511
        %v1435 = vunpack.c.h.b16 %v511
        %v1436 = vunpack.c.l.b16 %v512
        %v1437 = vunpack.c.h.b16 %v512
        %v1438 = vunpack.c.l.b16 %v513
        %v1439 = vunpack.c.h.b16 %v513
        %v1440 = vunpack.c.l.b16 %v514
        %v1441 = vunpack.c.h.b16 %v514
        %v1442 = vunpack.c.l.b16 %v515
        %v1443 = vunpack.c.h.b16 %v515
        %v1444 = vunpack.c.l.b16 %v516
        %v1445 = vunpack.c.h.b16 %v516
        %v1446 = vunpack.c.l.b16 %v517
        %v1447 = vunpack.c.h.b16 %v517
        %v1448 = vunpack.c.l.b16 %v518
        %v1449 = vunpack.c.h.b16 %v518
        %v1450 = vunpack.c.l.b16 %v519
        %v1451 = vunpack.c.h.b16 %v519
        %v1452 = vunpack.c.l.b16 %v520
        %v1453 = vunpack.c.h.b16 %v520
        %v1454 = vunpack.c.l.b16 %v521
        %v1455 = vunpack.c.h.b16 %v521
        %v1456 = vunpack.c.l.b16 %v522
        %v1457 = vunpack.c.h.b16 %v522
        %v1458 = vunpack.c.l.b16 %v523
        %v1459 = vunpack.c.h.b16 %v523
        %v1460 = vunpack.c.l.b16 %v524
        %v1461 = vunpack.c.h.b16 %v524
        %v1462 = vunpack.c.l.b16 %v525
        %v1463 = vunpack.c.h.b16 %v525
        %v1464 = vunpack.c.l.b16 %v526
        %v1465 = vunpack.c.h.b16 %v526
        %v1466 = vunpack.c.l.b16 %v527
        %v1467 = vunpack.c.h.b16 %v527
        %v1468 = vunpack.c.l.b16 %v528
        %v1469 = vunpack.c.h.b16 %v528
        %v1470 = vunpack.c.l.b16 %v529
        %v1471 = vunpack.c.h.b16 %v529
        %v1472 = vunpack.c.l.b16 %v530
        %v1473 = vunpack.c.h.b16 %v530
        %v1474 = vunpack.c.l.b16 %v531
        %v1475 = vunpack.c.h.b16 %v531
        %v1476 = vunpack.c.l.b16 %v532
        %v1477 = vunpack.c.h.b16 %v532
        %v1478 = vunpack.c.l.b16 %v533
        %v1479 = vunpack.c.h.b16 %v533
        %v1480 = vunpack.c.l.b16 %v534
        %v1481 = vunpack.c.h.b16 %v534
        %v1482 = vunpack.c.l.b16 %v535
        %v1483 = vunpack.c.h.b16 %v535
        %v1484 = vunpack.c.l.b16 %v536
        %v1485 = vunpack.c.h.b16 %v536
        %v1486 = vunpack.c.l.b16 %v537
        %v1487 = vunpack.c.h.b16 %v537
        %v1488 = vunpack.c.l.b16 %v538
        %v1489 = vunpack.c.h.b16 %v538
        %v1490 = vunpack.c.l.b16 %v539
        %v1491 = vunpack.c.h.b16 %v539
        %v1492 = vunpack.c.l.b16 %v540
        %v1493 = vunpack.c.h.b16 %v540
        %v1494 = vunpack.c.l.b16 %v541
        %v1495 = vunpack.c.h.b16 %v541
        %v1496 = vunpack.c.l.b16 %v542
        %v1497 = vunpack.c.h.b16 %v542
        %v1498 = vunpack.c.l.b16 %v543
        %v1499 = vunpack.c.h.b16 %v543
        %v1500 = vunpack.c.l.b16 %v544
        %v1501 = vunpack.c.h.b16 %v544
        %v1502 = vunpack.c.l.b16 %v545
        %v1503 = vunpack.c.h.b16 %v545
        %v1504 = vunpack.c.l.b16 %v546
        %v1505 = vunpack.c.h.b16 %v546
        %v1506 = vunpack.c.l.b16 %v547
        %v1507 = vunpack.c.h.b16 %v547
        %v1508 = vunpack.c.l.b16 %v548
        %v1509 = vunpack.c.h.b16 %v548
        %v1510 = vunpack.c.l.b16 %v549
        %v1511 = vunpack.c.h.b16 %v549
        %v1512 = vunpack.c.l.b16 %v550
        %v1513 = vunpack.c.h.b16 %v550
        %v1514 = vunpack.c.l.b16 %v551
        %v1515 = vunpack.c.h.b16 %v551
        %v1516 = vunpack.c.l.b16 %v552
        %v1517 = vunpack.c.h.b16 %v552
        %v1518 = vunpack.c.l.b16 %v553
        %v1519 = vunpack.c.h.b16 %v553
        %v1520 = vunpack.c.l.b16 %v554
        %v1521 = vunpack.c.h.b16 %v554
        %v1522 = vunpack.c.l.b16 %v555
        %v1523 = vunpack.c.h.b16 %v555
        %v1524 = vunpack.c.l.b16 %v556
        %v1525 = vunpack.c.h.b16 %v556
        %v1526 = vunpack.c.l.b16 %v557
        %v1527 = vunpack.c.h.b16 %v557
        %v1528 = vunpack.c.l.b16 %v558
        %v1529 = vunpack.c.h.b16 %v558
        %v1530 = vunpack.c.l.b16 %v559
        %v1531 = vunpack.c.h.b16 %v559
        %v1532 = vunpack.c.l.b16 %v560
        %v1533 = vunpack.c.h.b16 %v560
        %v1534 = vunpack.c.l.b16 %v561
        %v1535 = vunpack.c.h.b16 %v561
        %v1536 = vunpack.c.l.b16 %v562
        %v1537 = vunpack.c.h.b16 %v562
        %v1538 = vunpack.c.l.b16 %v563
        %v1539 = vunpack.c.h.b16 %v563
        %v1540 = vunpack.c.l.b16 %v564
        %v1541 = vunpack.c.h.b16 %v564
        %v1542 = vunpack.c.l.b16 %v565
        %v1543 = vunpack.c.h.b16 %v565
        %v1544 = vunpack.c.l.b16 %v566
        %v1545 = vunpack.c.h.b16 %v566
        %v1546 = vunpack.c.l.b16 %v567
        %v1547 = vunpack.c.h.b16 %v567
        %v1548 = vunpack.c.l.b16 %v568
        %v1549 = vunpack.c.h.b16 %v568
        %v1550 = vunpack.c.l.b16 %v569
        %v1551 = vunpack.c.h.b16 %v569
        %v1552 = vunpack.c.l.b16 %v570
        %v1553 = vunpack.c.h.b16 %v570
        %v1554 = vunpack.c.l.b16 %v571
        %v1555 = vunpack.c.h.b16 %v571
        %v1556 = vunpack.c.l.b16 %v572
        %v1557 = vunpack.c.h.b16 %v572
        %v1558 = vunpack.c.l.b16 %v573
        %v1559 = vunpack.c.h.b16 %v573
        %v1560 = vunpack.c.l.b16 %v574
        %v1561 = vunpack.c.h.b16 %v574
        %v1562 = vunpack.c.l.b16 %v575
        %v1563 = vunpack.c.h.b16 %v575
        %v1564 = vunpack.c.l.b16 %v576
        %v1565 = vunpack.c.h.b16 %v576
        %v1566 = vunpack.c.l.b16 %v577
        %v1567 = vunpack.c.h.b16 %v577
        %v1568 = vunpack.c.l.b16 %v578
        %v1569 = vunpack.c.h.b16 %v578
        %v1570 = vunpack.c.l.b16 %v579
        %v1571 = vunpack.c.h.b16 %v579
        %v1572 = vunpack.c.l.b16 %v580
        %v1573 = vunpack.c.h.b16 %v580
        %v1574 = vunpack.c.l.b16 %v581
        %v1575 = vunpack.c.h.b16 %v581
        %v1576 = vunpack.c.l.b16 %v582
        %v1577 = vunpack.c.h.b16 %v582
        %v1578 = vunpack.c.l.b16 %v583
        %v1579 = vunpack.c.h.b16 %v583
        %v1580 = vunpack.c.l.b16 %v584
        %v1581 = vunpack.c.h.b16 %v584
        %v1582 = vunpack.c.l.b16 %v585
        %v1583 = vunpack.c.h.b16 %v585
        %v1584 = vunpack.c.l.b16 %v586
        %v1585 = vunpack.c.h.b16 %v586
        %v1586 = vunpack.c.l.b16 %v587
        %v1587 = vunpack.c.h.b16 %v587
        %v1588 = vunpack.c.l.b16 %v588
        %v1589 = vunpack.c.h.b16 %v588
        %v1590 = vunpack.c.l.b16 %v589
        %v1591 = vunpack.c.h.b16 %v589
        %v1592 = vunpack.c.l.b16 %v590
        %v1593 = vunpack.c.h.b16 %v590
        %v1594 = vunpack.c.l.b16 %v591
        %v1595 = vunpack.c.h.b16 %v591
        %v1596 = vunpack.c.l.b16 %v592
        %v1597 = vunpack.c.h.b16 %v592
        %v1598 = vunpack.c.l.b16 %v593
        %v1599 = vunpack.c.h.b16 %v593
        %v1600 = vunpack.c.l.b16 %v594
        %v1601 = vunpack.c.h.b16 %v594
        %v1602 = vunpack.c.l.b16 %v595
        %v1603 = vunpack.c.h.b16 %v595
        %v1604 = vunpack.c.l.b16 %v596
        %v1605 = vunpack.c.h.b16 %v596
        %v1606 = vunpack.c.l.b16 %v597
        %v1607 = vunpack.c.h.b16 %v597
        %v1608 = vunpack.c.l.b16 %v598
        %v1609 = vunpack.c.h.b16 %v598
        %v1610 = vunpack.c.l.b16 %v599
        %v1611 = vunpack.c.h.b16 %v599
        %v1612 = vunpack.c.l.b16 %v600
        %v1613 = vunpack.c.h.b16 %v600
        %v1614 = vunpack.c.l.b16 %v601
        %v1615 = vunpack.c.h.b16 %v601
        %v1616 = vunpack.c.l.b16 %v602
        %v1617 = vunpack.c.h.b16 %v602
        %v1618 = vunpack.c.l.b16 %v603
        %v1619 = vunpack.c.h.b16 %v603
        %v1620 = vunpack.c.l.b16 %v604
        %v1621 = vunpack.c.h.b16 %v604
        %v1622 = vunpack.c.l.b16 %v605
        %v1623 = vunpack.c.h.b16 %v605
        %v1624 = vunpack.c.l.b16 %v606
        %v1625 = vunpack.c.h.b16 %v606
        %v1626 = vunpack.c.l.b16 %v607
        %v1627 = vunpack.c.h.b16 %v607
        %v1628 = vunpack.c.l.b16 %v608
        %v1629 = vunpack.c.h.b16 %v608
        %v1630 = vunpack.c.l.b16 %v609
        %v1631 = vunpack.c.h.b16 %v609
        %v1632 = vunpack.c.l.b16 %v610
        %v1633 = vunpack.c.h.b16 %v610
        %v1634 = vunpack.c.l.b16 %v611
        %v1635 = vunpack.c.h.b16 %v611
        %v1636 = vunpack.c.l.b16 %v612
        %v1637 = vunpack.c.h.b16 %v612
        %v1638 = vunpack.c.l.b16 %v613
        %v1639 = vunpack.c.h.b16 %v613
        %v1640 = vunpack.c.l.b16 %v614
        %v1641 = vunpack.c.h.b16 %v614
        %v1642 = vunpack.c.l.b16 %v615
        %v1643 = vunpack.c.h.b16 %v615
        %v1644 = vunpack.c.l.b16 %v616
        %v1645 = vunpack.c.h.b16 %v616
        %v1646 = vunpack.c.l.b16 %v617
        %v1647 = vunpack.c.h.b16 %v617
        %v1648 = vunpack.c.l.b16 %v618
        %v1649 = vunpack.c.h.b16 %v618
        %v1650 = vunpack.c.l.b16 %v619
        %v1651 = vunpack.c.h.b16 %v619
        %v1652 = vunpack.c.l.b16 %v620
        %v1653 = vunpack.c.h.b16 %v620
        %v1654 = vunpack.c.l.b16 %v621
        %v1655 = vunpack.c.h.b16 %v621
        %v1656 = vunpack.c.l.b16 %v622
        %v1657 = vunpack.c.h.b16 %v622
        %v1658 = vunpack.c.l.b16 %v623
        %v1659 = vunpack.c.h.b16 %v623
        %v1660 = vunpack.c.l.b16 %v624
        %v1661 = vunpack.c.h.b16 %v624
        %v1662 = vunpack.c.l.b16 %v625
        %v1663 = vunpack.c.h.b16 %v625
        %v1664 = vunpack.c.l.b16 %v626
        %v1665 = vunpack.c.h.b16 %v626
        %v1666 = vunpack.c.l.b16 %v627
        %v1667 = vunpack.c.h.b16 %v627
        %v1668 = vunpack.c.l.b16 %v628
        %v1669 = vunpack.c.h.b16 %v628
        %v1670 = vunpack.c.l.b16 %v629
        %v1671 = vunpack.c.h.b16 %v629
        %v1672 = vunpack.c.l.b16 %v630
        %v1673 = vunpack.c.h.b16 %v630
        %v1674 = vunpack.c.l.b16 %v631
        %v1675 = vunpack.c.h.b16 %v631
        %v1676 = vunpack.c.l.b16 %v632
        %v1677 = vunpack.c.h.b16 %v632
        %v1678 = vunpack.c.l.b16 %v633
        %v1679 = vunpack.c.h.b16 %v633
        %v1680 = vunpack.c.l.b16 %v634
        %v1681 = vunpack.c.h.b16 %v634
        %v1682 = vunpack.c.l.b16 %v635
        %v1683 = vunpack.c.h.b16 %v635
        %v1684 = vunpack.c.l.b16 %v636
        %v1685 = vunpack.c.h.b16 %v636
        %v1686 = vunpack.c.l.b16 %v637
        %v1687 = vunpack.c.h.b16 %v637
        %v1688 = vunpack.c.l.b16 %v638
        %v1689 = vunpack.c.h.b16 %v638
        %v1690 = vunpack.c.l.b16 %v639
        %v1691 = vunpack.c.h.b16 %v639
        %v1692 = vunpack.c.l.b16 %v640
        %v1693 = vunpack.c.h.b16 %v640
        %v1694 = vunpack.c.l.b16 %v641
        %v1695 = vunpack.c.h.b16 %v641
        %v1696 = vunpack.c.l.b16 %v642
        %v1697 = vunpack.c.h.b16 %v642
        %v1698 = vunpack.c.l.b16 %v643
        %v1699 = vunpack.c.h.b16 %v643
        %v1700 = vunpack.c.l.b16 %v644
        %v1701 = vunpack.c.h.b16 %v644
        %v1702 = vunpack.c.l.b16 %v645
        %v1703 = vunpack.c.h.b16 %v645
        %v1704 = vunpack.c.l.b16 %v646
        %v1705 = vunpack.c.h.b16 %v646
        %v1706 = vunpack.c.l.b16 %v647
        %v1707 = vunpack.c.h.b16 %v647
        %v1708 = vunpack.c.l.b16 %v648
        %v1709 = vunpack.c.h.b16 %v648
        %v1710 = vunpack.c.l.b16 %v649
        %v1711 = vunpack.c.h.b16 %v649
        %v1712 = vunpack.c.l.b16 %v650
        %v1713 = vunpack.c.h.b16 %v650
        %v1714 = vunpack.c.l.b16 %v651
        %v1715 = vunpack.c.h.b16 %v651
        %v1716 = vunpack.c.l.b16 %v652
        %v1717 = vunpack.c.h.b16 %v652
        %v1718 = vunpack.c.l.b16 %v653
        %v1719 = vunpack.c.h.b16 %v653
        %v1720 = vunpack.c.l.b16 %v654
        %v1721 = vunpack.c.h.b16 %v654
        %v1722 = vunpack.c.l.b16 %v655
        %v1723 = vunpack.c.h.b16 %v655
        %v1724 = vunpack.c.l.b16 %v656
        %v1725 = vunpack.c.h.b16 %v656
        %v1726 = vunpack.c.l.b16 %v657
        %v1727 = vunpack.c.h.b16 %v657
        %v1728 = vunpack.c.l.b16 %v658
        %v1729 = vunpack.c.h.b16 %v658
        %v1730 = vunpack.c.l.b16 %v659
        %v1731 = vunpack.c.h.b16 %v659
        %v1732 = vunpack.c.l.b16 %v660
        %v1733 = vunpack.c.h.b16 %v660
        %v1734 = vunpack.c.l.b16 %v661
        %v1735 = vunpack.c.h.b16 %v661
        %v1736 = vunpack.c.l.b16 %v662
        %v1737 = vunpack.c.h.b16 %v662
        %v1738 = vunpack.c.l.b16 %v663
        %v1739 = vunpack.c.h.b16 %v663
        %v1740 = vunpack.c.l.b16 %v664
        %v1741 = vunpack.c.h.b16 %v664
        %v1742 = vunpack.c.l.b16 %v665
        %v1743 = vunpack.c.h.b16 %v665
        %v1744 = vunpack.c.l.b16 %v666
        %v1745 = vunpack.c.h.b16 %v666
        %v1746 = vunpack.c.l.b16 %v667
        %v1747 = vunpack.c.h.b16 %v667
        %v1748 = vunpack.c.l.b16 %v668
        %v1749 = vunpack.c.h.b16 %v668
        %v1750 = vunpack.c.l.b16 %v669
        %v1751 = vunpack.c.h.b16 %v669
        %v1752 = vunpack.c.l.b16 %v670
        %v1753 = vunpack.c.h.b16 %v670
        %v1754 = vunpack.c.l.b16 %v671
        %v1755 = vunpack.c.h.b16 %v671
        %v1756 = vunpack.c.l.b16 %v672
        %v1757 = vunpack.c.h.b16 %v672
        %v1758 = vunpack.c.l.b16 %v673
        %v1759 = vunpack.c.h.b16 %v673
        %v1760 = vunpack.c.l.b16 %v674
        %v1761 = vunpack.c.h.b16 %v674
        %v1762 = vunpack.c.l.b16 %v675
        %v1763 = vunpack.c.h.b16 %v675
        %v1764 = vunpack.c.l.b16 %v676
        %v1765 = vunpack.c.h.b16 %v676
        %v1766 = vunpack.c.l.b16 %v677
        %v1767 = vunpack.c.h.b16 %v677
        %v1768 = vunpack.c.l.b16 %v678
        %v1769 = vunpack.c.h.b16 %v678
        %v1770 = vunpack.c.l.b16 %v679
        %v1771 = vunpack.c.h.b16 %v679
        %v1772 = vunpack.c.l.b16 %v680
        %v1773 = vunpack.c.h.b16 %v680
        %v1774 = vunpack.c.l.b16 %v681
        %v1775 = vunpack.c.h.b16 %v681
        %v1776 = vunpack.c.l.b16 %v682
        %v1777 = vunpack.c.h.b16 %v682
        %v1778 = vunpack.c.l.b16 %v683
        %v1779 = vunpack.c.h.b16 %v683
        %v1780 = vunpack.c.l.b16 %v684
        %v1781 = vunpack.c.h.b16 %v684
        %v1782 = vunpack.c.l.b16 %v685
        %v1783 = vunpack.c.h.b16 %v685
        %v1784 = vunpack.c.l.b16 %v686
        %v1785 = vunpack.c.h.b16 %v686
        %v1786 = vunpack.c.l.b16 %v687
        %v1787 = vunpack.c.h.b16 %v687
        %v1788 = vunpack.c.l.b16 %v688
        %v1789 = vunpack.c.h.b16 %v688
        %v1790 = vunpack.c.l.b16 %v689
        %v1791 = vunpack.c.h.b16 %v689
        %v1792 = vunpack.c.l.b16 %v690
        %v1793 = vunpack.c.h.b16 %v690
        %v1794 = vunpack.c.l.b16 %v691
        %v1795 = vunpack.c.h.b16 %v691
        %v1796 = vunpack.c.l.b16 %v692
        %v1797 = vunpack.c.h.b16 %v692
        %v1798 = vunpack.c.l.b16 %v693
        %v1799 = vunpack.c.h.b16 %v693
        %v1800 = vunpack.c.l.b16 %v694
        %v1801 = vunpack.c.h.b16 %v694
        %v1802 = vunpack.c.l.b16 %v695
        %v1803 = vunpack.c.h.b16 %v695
        %v1804 = vunpack.c.l.b16 %v696
        %v1805 = vunpack.c.h.b16 %v696
        %v1806 = vunpack.c.l.b16 %v697
        %v1807 = vunpack.c.h.b16 %v697
        %v1808 = vunpack.c.l.b16 %v698
        %v1809 = vunpack.c.h.b16 %v698
        %v1810 = vunpack.c.l.b16 %v699
        %v1811 = vunpack.c.h.b16 %v699
        %v1812 = vunpack.c.l.b16 %v700
        %v1813 = vunpack.c.h.b16 %v700
        %v1814 = vunpack.c.l.b16 %v701
        %v1815 = vunpack.c.h.b16 %v701
        %v1816 = vunpack.c.l.b16 %v702
        %v1817 = vunpack.c.h.b16 %v702
        %v1818 = vunpack.c.l.b16 %v703
        %v1819 = vunpack.c.h.b16 %v703
        %v1820 = vunpack.c.l.b16 %v704
        %v1821 = vunpack.c.h.b16 %v704
        %v1822 = vunpack.c.l.b16 %v705
        %v1823 = vunpack.c.h.b16 %v705
        %v1824 = vunpack.c.l.b16 %v706
        %v1825 = vunpack.c.h.b16 %v706
        %v1826 = vunpack.c.l.b16 %v707
        %v1827 = vunpack.c.h.b16 %v707
        %v1828 = vunpack.c.l.b16 %v708
        %v1829 = vunpack.c.h.b16 %v708
        %v1830 = vunpack.c.l.b16 %v709
        %v1831 = vunpack.c.h.b16 %v709
        %v1832 = vunpack.c.l.b16 %v710
        %v1833 = vunpack.c.h.b16 %v710
        %v1834 = vunpack.c.l.b16 %v711
        %v1835 = vunpack.c.h.b16 %v711
        %v1836 = vunpack.c.l.b16 %v712
        %v1837 = vunpack.c.h.b16 %v712
        %v1838 = vunpack.c.l.b16 %v713
        %v1839 = vunpack.c.h.b16 %v713
        %v1840 = vunpack.c.l.b16 %v714
        %v1841 = vunpack.c.h.b16 %v714
        %v1842 = vunpack.c.l.b16 %v715
        %v1843 = vunpack.c.h.b16 %v715
        %v1844 = vunpack.c.l.b16 %v716
        %v1845 = vunpack.c.h.b16 %v716
        %v1846 = vunpack.c.l.b16 %v717
        %v1847 = vunpack.c.h.b16 %v717
        %v1848 = vunpack.c.l.b16 %v718
        %v1849 = vunpack.c.h.b16 %v718
        %v1850 = vunpack.c.l.b16 %v719
        %v1851 = vunpack.c.h.b16 %v719
        %v1852 = vunpack.c.l.b16 %v720
        %v1853 = vunpack.c.h.b16 %v720
        %v1854 = vunpack.c.l.b16 %v721
        %v1855 = vunpack.c.h.b16 %v721
        %v1856 = vunpack.c.l.b16 %v722
        %v1857 = vunpack.c.h.b16 %v722
        %v1858 = vunpack.c.l.b16 %v723
        %v1859 = vunpack.c.h.b16 %v723
        %v1860 = vunpack.c.l.b16 %v724
        %v1861 = vunpack.c.h.b16 %v724
        %v1862 = vunpack.c.l.b16 %v725
        %v1863 = vunpack.c.h.b16 %v725
        %v1864 = vunpack.c.l.b16 %v726
        %v1865 = vunpack.c.h.b16 %v726
        %v1866 = vunpack.c.l.b16 %v727
        %v1867 = vunpack.c.h.b16 %v727
        %v1868 = vunpack.c.l.b16 %v728
        %v1869 = vunpack.c.h.b16 %v728
        %v1870 = vunpack.c.l.b16 %v729
        %v1871 = vunpack.c.h.b16 %v729
        %v1872 = vunpack.c.l.b16 %v730
        %v1873 = vunpack.c.h.b16 %v730
        %v1874 = vunpack.c.l.b16 %v731
        %v1875 = vunpack.c.h.b16 %v731
        %v1876 = vunpack.c.l.b16 %v732
        %v1877 = vunpack.c.h.b16 %v732
        %v1878 = vunpack.c.l.b16 %v733
        %v1879 = vunpack.c.h.b16 %v733
        %v1880 = vunpack.c.l.b16 %v734
        %v1881 = vunpack.c.h.b16 %v734
        %v1882 = vunpack.c.l.b16 %v735
        %v1883 = vunpack.c.h.b16 %v735
        %v1884 = vunpack.c.l.b16 %v736
        %v1885 = vunpack.c.h.b16 %v736
        %v1886 = vunpack.c.l.b16 %v737
        %v1887 = vunpack.c.h.b16 %v737
        %v1888 = vunpack.c.l.b16 %v738
        %v1889 = vunpack.c.h.b16 %v738
        %v1890 = vunpack.c.l.b16 %v739
        %v1891 = vunpack.c.h.b16 %v739
        %v1892 = vunpack.c.l.b16 %v740
        %v1893 = vunpack.c.h.b16 %v740
        %v1894 = vunpack.c.l.b16 %v741
        %v1895 = vunpack.c.h.b16 %v741
        %v1896 = vunpack.c.l.b16 %v742
        %v1897 = vunpack.c.h.b16 %v742
        %v1898 = vunpack.c.l.b16 %v743
        %v1899 = vunpack.c.h.b16 %v743
        %v1900 = vunpack.c.l.b16 %v744
        %v1901 = vunpack.c.h.b16 %v744
        %v1902 = vunpack.c.l.b16 %v745
        %v1903 = vunpack.c.h.b16 %v745
        %v1904 = vunpack.c.l.b16 %v746
        %v1905 = vunpack.c.h.b16 %v746
        %v1906 = vunpack.c.l.b16 %v747
        %v1907 = vunpack.c.h.b16 %v747
        %v1908 = vunpack.c.l.b16 %v748
        %v1909 = vunpack.c.h.b16 %v748
        %v1910 = vunpack.c.l.b16 %v749
        %v1911 = vunpack.c.h.b16 %v749
        %v1912 = vunpack.c.l.b16 %v750
        %v1913 = vunpack.c.h.b16 %v750
        %v1914 = vunpack.c.l.b16 %v751
        %v1915 = vunpack.c.h.b16 %v751
        %v1916 = vunpack.c.l.b16 %v752
        %v1917 = vunpack.c.h.b16 %v752
        %v1918 = vunpack.c.l.b16 %v753
        %v1919 = vunpack.c.h.b16 %v753
        %v1920 = vunpack.c.l.b16 %v754
        %v1921 = vunpack.c.h.b16 %v754
        %v1922 = vunpack.c.l.b16 %v755
        %v1923 = vunpack.c.h.b16 %v755
        %v1924 = vunpack.c.l.b16 %v756
        %v1925 = vunpack.c.h.b16 %v756
        %v1926 = vunpack.c.l.b16 %v757
        %v1927 = vunpack.c.h.b16 %v757
        %v1928 = vunpack.c.l.b16 %v758
        %v1929 = vunpack.c.h.b16 %v758
        %v1930 = vunpack.c.l.b16 %v759
        %v1931 = vunpack.c.h.b16 %v759
        %v1932 = vunpack.c.l.b16 %v760
        %v1933 = vunpack.c.h.b16 %v760
        %v1934 = vunpack.c.l.b16 %v761
        %v1935 = vunpack.c.h.b16 %v761
        %v1936 = vunpack.c.l.b16 %v762
        %v1937 = vunpack.c.h.b16 %v762
        %v1938 = vunpack.c.l.b16 %v763
        %v1939 = vunpack.c.h.b16 %v763
        %v1940 = vunpack.c.l.b16 %v764
        %v1941 = vunpack.c.h.b16 %v764
        %v1942 = vunpack.c.l.b16 %v765
        %v1943 = vunpack.c.h.b16 %v765
        %v1944 = vunpack.c.l.b16 %v766
        %v1945 = vunpack.c.h.b16 %v766
        %v1946 = vunpack.c.l.b16 %v767
        %v1947 = vunpack.c.h.b16 %v767
        %v1948 = vunpack.c.l.b16 %v768
        %v1949 = vunpack.c.h.b16 %v768
        %v1950 = vunpack.c.l.b16 %v769
        %v1951 = vunpack.c.h.b16 %v769
        %v1952 = vunpack.c.l.b16 %v770
        %v1953 = vunpack.c.h.b16 %v770
        %v1954 = vunpack.c.l.b16 %v771
        %v1955 = vunpack.c.h.b16 %v771
        %v1956 = vunpack.c.l.b16 %v772
        %v1957 = vunpack.c.h.b16 %v772
        %v1958 = vunpack.c.l.b16 %v773
        %v1959 = vunpack.c.h.b16 %v773
        %v1960 = vunpack.c.l.b16 %v774
        %v1961 = vunpack.c.h.b16 %v774
        %v1962 = vunpack.c.l.b16 %v775
        %v1963 = vunpack.c.h.b16 %v775
        %v1964 = vunpack.c.l.b16 %v776
        %v1965 = vunpack.c.h.b16 %v776
        %v1966 = vunpack.c.l.b16 %v777
        %v1967 = vunpack.c.h.b16 %v777
        %v1968 = vunpack.c.l.b16 %v778
        %v1969 = vunpack.c.h.b16 %v778
        %v1970 = vunpack.c.l.b16 %v779
        %v1971 = vunpack.c.h.b16 %v779
        %v1972 = vunpack.c.l.b16 %v780
        %v1973 = vunpack.c.h.b16 %v780
        %v1974 = vunpack.c.l.b16 %v781
        %v1975 = vunpack.c.h.b16 %v781
        %v1976 = vunpack.c.l.b16 %v782
        %v1977 = vunpack.c.h.b16 %v782
        %v1978 = vunpack.c.l.b16 %v783
        %v1979 = vunpack.c.h.b16 %v783
        %v1980 = vunpack.c.l.b16 %v784
        %v1981 = vunpack.c.h.b16 %v784
        %v1982 = vunpack.c.l.b16 %v785
        %v1983 = vunpack.c.h.b16 %v785
        %v1984 = vunpack.c.l.b16 %v786
        %v1985 = vunpack.c.h.b16 %v786
        %v1986 = vunpack.c.l.b16 %v787
        %v1987 = vunpack.c.h.b16 %v787
        %v1988 = vunpack.c.l.b16 %v788
        %v1989 = vunpack.c.h.b16 %v788
        %v1990 = vunpack.c.l.b16 %v789
        %v1991 = vunpack.c.h.b16 %v789
        %v1992 = vunpack.c.l.b16 %v790
        %v1993 = vunpack.c.h.b16 %v790
        %v1994 = vunpack.c.l.b16 %v791
        %v1995 = vunpack.c.h.b16 %v791
        %v1996 = vunpack.c.l.b16 %v792
        %v1997 = vunpack.c.h.b16 %v792
        %v1998 = vunpack.c.l.b16 %v793
        %v1999 = vunpack.c.h.b16 %v793
        %v2000 = vunpack.c.l.b16 %v794
        %v2001 = vunpack.c.h.b16 %v794
        %v2002 = vunpack.c.l.b16 %v795
        %v2003 = vunpack.c.h.b16 %v795
        %v2004 = vunpack.c.l.b16 %v796
        %v2005 = vunpack.c.h.b16 %v796
        %v2006 = vunpack.c.l.b16 %v797
        %v2007 = vunpack.c.h.b16 %v797
        %v2008 = vunpack.c.l.b16 %v798
        %v2009 = vunpack.c.h.b16 %v798
        %v2010 = vunpack.c.l.b16 %v799
        %v2011 = vunpack.c.h.b16 %v799
        %v2012 = vunpack.c.l.b16 %v800
        %v2013 = vunpack.c.h.b16 %v800
        %v2014 = vunpack.c.l.b16 %v801
        %v2015 = vunpack.c.h.b16 %v801
        %v2016 = vunpack.c.l.b16 %v802
        %v2017 = vunpack.c.h.b16 %v802
        %v2018 = vunpack.c.l.b16 %v803
        %v2019 = vunpack.c.h.b16 %v803
        %v2020 = vunpack.c.l.b16 %v804
        %v2021 = vunpack.c.h.b16 %v804
        %v2022 = vunpack.c.l.b16 %v805
        %v2023 = vunpack.c.h.b16 %v805
        %v2024 = vunpack.c.l.b16 %v806
        %v2025 = vunpack.c.h.b16 %v806
        %v2026 = vunpack.c.l.b16 %v807
        %v2027 = vunpack.c.h.b16 %v807
        %v2028 = vunpack.c.l.b16 %v808
        %v2029 = vunpack.c.h.b16 %v808
        %v2030 = vunpack.c.l.b16 %v809
        %v2031 = vunpack.c.h.b16 %v809
        %v2032 = vunpack.c.l.b16 %v810
        %v2033 = vunpack.c.h.b16 %v810
        %v2034 = vunpack.c.l.b16 %v811
        %v2035 = vunpack.c.h.b16 %v811
        %v2036 = vunpack.c.l.b16 %v812
        %v2037 = vunpack.c.h.b16 %v812
        %v2038 = vunpack.c.l.b16 %v813
        %v2039 = vunpack.c.h.b16 %v813
        %v2040 = vunpack.c.l.b16 %v814
        %v2041 = vunpack.c.h.b16 %v814
        %v2042 = vunpack.c.l.b16 %v815
        %v2043 = vunpack.c.h.b16 %v815
        %v2044 = vunpack.c.l.b16 %v816
        %v2045 = vunpack.c.h.b16 %v816
        %v2046 = vunpack.c.l.b16 %v817
        %v2047 = vunpack.c.h.b16 %v817
        %v2048 = vunpack.c.l.b16 %v818
        %v2049 = vunpack.c.h.b16 %v818
        %v2050 = vunpack.c.l.b16 %v819
        %v2051 = vunpack.c.h.b16 %v819
        %v2052 = vunpack.c.l.b16 %v820
        %v2053 = vunpack.c.h.b16 %v820
        %v2054 = vunpack.c.l.b16 %v821
        %v2055 = vunpack.c.h.b16 %v821
        %v2056 = vunpack.c.l.b16 %v822
        %v2057 = vunpack.c.h.b16 %v822
        %v2058 = vunpack.c.l.b16 %v823
        %v2059 = vunpack.c.h.b16 %v823
        %v2060 = vunpack.c.l.b16 %v824
        %v2061 = vunpack.c.h.b16 %v824
        %v2062 = vunpack.c.l.b16 %v825
        %v2063 = vunpack.c.h.b16 %v825
        %v2064 = vunpack.c.l.b16 %v826
        %v2065 = vunpack.c.h.b16 %v826
        %v2066 = vunpack.c.l.b16 %v827
        %v2067 = vunpack.c.h.b16 %v827
        %v2068 = vunpack.c.l.b16 %v828
        %v2069 = vunpack.c.h.b16 %v828
        %v2070 = vunpack.c.l.b16 %v829
        %v2071 = vunpack.c.h.b16 %v829
        %v2072 = vunpack.c.l.b16 %v830
        %v2073 = vunpack.c.h.b16 %v830
        %v2074 = vunpack.c.l.b16 %v831
        %v2075 = vunpack.c.h.b16 %v831
        %v2076 = vunpack.c.l.b16 %v832
        %v2077 = vunpack.c.h.b16 %v832
        %v2078 = vunpack.c.l.b16 %v833
        %v2079 = vunpack.c.h.b16 %v833
        %v2080 = vunpack.c.l.b16 %v834
        %v2081 = vunpack.c.h.b16 %v834
        %v2082 = vunpack.c.l.b16 %v835
        %v2083 = vunpack.c.h.b16 %v835
        %v2084 = vunpack.c.l.b16 %v836
        %v2085 = vunpack.c.h.b16 %v836
        %v2086 = vunpack.c.l.b16 %v837
        %v2087 = vunpack.c.h.b16 %v837
        %v2088 = vunpack.c.l.b16 %v838
        %v2089 = vunpack.c.h.b16 %v838
        %v2090 = vunpack.c.l.b16 %v839
        %v2091 = vunpack.c.h.b16 %v839
        %v2092 = vunpack.c.l.b16 %v840
        %v2093 = vunpack.c.h.b16 %v840
        %v2094 = vunpack.c.l.b16 %v841
        %v2095 = vunpack.c.h.b16 %v841
        %v2096 = vunpack.c.l.b16 %v842
        %v2097 = vunpack.c.h.b16 %v842
        %v2098 = vunpack.c.l.b16 %v843
        %v2099 = vunpack.c.h.b16 %v843
        %v2100 = vunpack.c.l.b16 %v844
        %v2101 = vunpack.c.h.b16 %v844
        %v2102 = vunpack.c.l.b16 %v845
        %v2103 = vunpack.c.h.b16 %v845
        %v2104 = vunpack.c.l.b16 %v846
        %v2105 = vunpack.c.h.b16 %v846
        %v2106 = vunpack.c.l.b16 %v847
        %v2107 = vunpack.c.h.b16 %v847
        %v2108 = vunpack.c.l.b16 %v848
        %v2109 = vunpack.c.h.b16 %v848
        %v2110 = vunpack.c.l.b16 %v849
        %v2111 = vunpack.c.h.b16 %v849
        %v2112 = vunpack.c.l.b16 %v850
        %v2113 = vunpack.c.h.b16 %v850
        %v2114 = vunpack.c.l.b16 %v851
        %v2115 = vunpack.c.h.b16 %v851
        %v2116 = vunpack.c.l.b16 %v852
        %v2117 = vunpack.c.h.b16 %v852
        %v2118 = vunpack.c.l.b16 %v853
        %v2119 = vunpack.c.h.b16 %v853
        %v2120 = vunpack.c.l.b16 %v854
        %v2121 = vunpack.c.h.b16 %v854
        %v2122 = vunpack.c.l.b16 %v855
        %v2123 = vunpack.c.h.b16 %v855
        %v2124 = vunpack.c.l.b16 %v856
        %v2125 = vunpack.c.h.b16 %v856
        %v2126 = vunpack.c.l.b16 %v857
        %v2127 = vunpack.c.h.b16 %v857
        %v2128 = vunpack.c.l.b16 %v858
        %v2129 = vunpack.c.h.b16 %v858
        %v2130 = vunpack.c.l.b16 %v859
        %v2131 = vunpack.c.h.b16 %v859
        %v2132 = vunpack.c.l.b16 %v860
        %v2133 = vunpack.c.h.b16 %v860
        %v2134 = vpack.c.b16 %v1358, %v1350
        %v2135 = vpack.c.b16 %v1359, %v1351
        %v2136 = vpack.c.b16 %v1360, %v1352
        %v2137 = vpack.c.b16 %v1361, %v1353
        %v2138 = vpack.c.b16 %v1362, %v1354
        %v2139 = vpack.c.b16 %v1363, %v1355
        %v2140 = vpack.c.b16 %v1364, %v1356
        %v2141 = vpack.c.b16 %v1365, %v1357
        %v2142 = vpack.c.b16 %v1374, %v1366
        %v2143 = vpack.c.b16 %v1375, %v1367
        %v2144 = vpack.c.b16 %v1376, %v1368
        %v2145 = vpack.c.b16 %v1377, %v1369
        %v2146 = vpack.c.b16 %v1378, %v1370
        %v2147 = vpack.c.b16 %v1379, %v1371
        %v2148 = vpack.c.b16 %v1380, %v1372
        %v2149 = vpack.c.b16 %v1381, %v1373
        %v2150 = vpack.c.b16 %v1390, %v1382
        %v2151 = vpack.c.b16 %v1391, %v1383
        %v2152 = vpack.c.b16 %v1392, %v1384
        %v2153 = vpack.c.b16 %v1393, %v1385
        %v2154 = vpack.c.b16 %v1394, %v1386
        %v2155 = vpack.c.b16 %v1395, %v1387
        %v2156 = vpack.c.b16 %v1396, %v1388
        %v2157 = vpack.c.b16 %v1397, %v1389
        %v2158 = vpack.c.b16 %v1406, %v1398
        %v2159 = vpack.c.b16 %v1407, %v1399
        %v2160 = vpack.c.b16 %v1408, %v1400
        %v2161 = vpack.c.b16 %v1409, %v1401
        %v2162 = vpack.c.b16 %v1410, %v1402
        %v2163 = vpack.c.b16 %v1411, %v1403
        %v2164 = vpack.c.b16 %v1412, %v1404
        %v2165 = vpack.c.b16 %v1413, %v1405
        %v2166 = vpack.c.b16 %v1422, %v1414
        %v2167 = vpack.c.b16 %v1423, %v1415
        %v2168 = vpack.c.b16 %v1424, %v1416
        %v2169 = vpack.c.b16 %v1425, %v1417
        %v2170 = vpack.c.b16 %v1426, %v1418
        %v2171 = vpack.c.b16 %v1427, %v1419
        %v2172 = vpack.c.b16 %v1428, %v1420
        %v2173 = vpack.c.b16 %v1429, %v1421
        %v2174 = vpack.c.b16 %v1438, %v1430
        %v2175 = vpack.c.b16 %v1439, %v1431
        %v2176 = vpack.c.b16 %v1440, %v1432
        %v2177 = vpack.c.b16 %v1441, %v1433
        %v2178 = vpack.c.b16 %v1442, %v1434
        %v2179 = vpack.c.b16 %v1443, %v1435
        %v2180 = vpack.c.b16 %v1444, %v1436
        %v2181 = vpack.c.b16 %v1445, %v1437
        %v2182 = vpack.c.b16 %v1454, %v1446
        %v2183 = vpack.c.b16 %v1455, %v1447
        %v2184 = vpack.c.b16 %v1456, %v1448
        %v2185 = vpack.c.b16 %v1457, %v1449
        %v2186 = vpack.c.b16 %v1458, %v1450
        %v2187 = vpack.c.b16 %v1459, %v1451
        %v2188 = vpack.c.b16 %v1460, %v1452
        %v2189 = vpack.c.b16 %v1461, %v1453
        %v2190 = vpack.c.b16 %v1470, %v1462
        %v2191 = vpack.c.b16 %v1471, %v1463
        %v2192 = vpack.c.b16 %v1472, %v1464
        %v2193 = vpack.c.b16 %v1473, %v1465
        %v2194 = vpack.c.b16 %v1474, %v1466
        %v2195 = vpack.c.b16 %v1475, %v1467
        %v2196 = vpack.c.b16 %v1476, %v1468
        %v2197 = vpack.c.b16 %v1477, %v1469
        %v2198 = vpack.c.b16 %v1486, %v1478
        %v2199 = vpack.c.b16 %v1487, %v1479
        %v2200 = vpack.c.b16 %v1488, %v1480
        %v2201 = vpack.c.b16 %v1489, %v1481
        %v2202 = vpack.c.b16 %v1490, %v1482
        %v2203 = vpack.c.b16 %v1491, %v1483
        %v2204 = vpack.c.b16 %v1492, %v1484
        %v2205 = vpack.c.b16 %v1493, %v1485
        %v2206 = vpack.c.b16 %v1502, %v1494
        %v2207 = vpack.c.b16 %v1503, %v1495
        %v2208 = vpack.c.b16 %v1504, %v1496
        %v2209 = vpack.c.b16 %v1505, %v1497
        %v2210 = vpack.c.b16 %v1506, %v1498
        %v2211 = vpack.c.b16 %v1507, %v1499
        %v2212 = vpack.c.b16 %v1508, %v1500
        %v2213 = vpack.c.b16 %v1509, %v1501
        %v2214 = vpack.c.b16 %v1518, %v1510
        %v2215 = vpack.c.b16 %v1519, %v1511
        %v2216 = vpack.c.b16 %v1520, %v1512
        %v2217 = vpack.c.b16 %v1521, %v1513
        %v2218 = vpack.c.b16 %v1522, %v1514
        %v2219 = vpack.c.b16 %v1523, %v1515
        %v2220 = vpack.c.b16 %v1524, %v1516
        %v2221 = vpack.c.b16 %v1525, %v1517
        %v2222 = vpack.c.b16 %v1534, %v1526
        %v2223 = vpack.c.b16 %v1535, %v1527
        %v2224 = vpack.c.b16 %v1536, %v1528
        %v2225 = vpack.c.b16 %v1537, %v1529
        %v2226 = vpack.c.b16 %v1538, %v1530
        %v2227 = vpack.c.b16 %v1539, %v1531
        %v2228 = vpack.c.b16 %v1540, %v1532
        %v2229 = vpack.c.b16 %v1541, %v1533
        %v2230 = vpack.c.b16 %v1550, %v1542
        %v2231 = vpack.c.b16 %v1551, %v1543
        %v2232 = vpack.c.b16 %v1552, %v1544
        %v2233 = vpack.c.b16 %v1553, %v1545
        %v2234 = vpack.c.b16 %v1554, %v1546
        %v2235 = vpack.c.b16 %v1555, %v1547
        %v2236 = vpack.c.b16 %v1556, %v1548
        %v2237 = vpack.c.b16 %v1557, %v1549
        %v2238 = vpack.c.b16 %v1566, %v1558
        %v2239 = vpack.c.b16 %v1567, %v1559
        %v2240 = vpack.c.b16 %v1568, %v1560
        %v2241 = vpack.c.b16 %v1569, %v1561
        %v2242 = vpack.c.b16 %v1570, %v1562
        %v2243 = vpack.c.b16 %v1571, %v1563
        %v2244 = vpack.c.b16 %v1572, %v1564
        %v2245 = vpack.c.b16 %v1573, %v1565
        %v2246 = vpack.c.b16 %v1582, %v1574
        %v2247 = vpack.c.b16 %v1583, %v1575
        %v2248 = vpack.c.b16 %v1584, %v1576
        %v2249 = vpack.c.b16 %v1585, %v1577
        %v2250 = vpack.c.b16 %v1586, %v1578
        %v2251 = vpack.c.b16 %v1587, %v1579
        %v2252 = vpack.c.b16 %v1588, %v1580
        %v2253 = vpack.c.b16 %v1589, %v1581
        %v2254 = vpack.c.b16 %v1598, %v1590
        %v2255 = vpack.c.b16 %v1599, %v1591
        %v2256 = vpack.c.b16 %v1600, %v1592
        %v2257 = vpack.c.b16 %v1601, %v1593
        %v2258 = vpack.c.b16 %v1602, %v1594
        %v2259 = vpack.c.b16 %v1603, %v1595
        %v2260 = vpack.c.b16 %v1604, %v1596
        %v2261 = vpack.c.b16 %v1605, %v1597
        %v2262 = vpack.c.b16 %v1614, %v1606
        %v2263 = vpack.c.b16 %v1615, %v1607
        %v2264 = vpack.c.b16 %v1616, %v1608
        %v2265 = vpack.c.b16 %v1617, %v1609
        %v2266 = vpack.c.b16 %v1618, %v1610
        %v2267 = vpack.c.b16 %v1619, %v1611
        %v2268 = vpack.c.b16 %v1620, %v1612
        %v2269 = vpack.c.b16 %v1621, %v1613
        %v2270 = vpack.c.b16 %v1630, %v1622
        %v2271 = vpack.c.b16 %v1631, %v1623
        %v2272 = vpack.c.b16 %v1632, %v1624
        %v2273 = vpack.c.b16 %v1633, %v1625
        %v2274 = vpack.c.b16 %v1634, %v1626
        %v2275 = vpack.c.b16 %v1635, %v1627
        %v2276 = vpack.c.b16 %v1636, %v1628
        %v2277 = vpack.c.b16 %v1637, %v1629
        %v2278 = vpack.c.b16 %v1646, %v1638
        %v2279 = vpack.c.b16 %v1647, %v1639
        %v2280 = vpack.c.b16 %v1648, %v1640
        %v2281 = vpack.c.b16 %v1649, %v1641
        %v2282 = vpack.c.b16 %v1650, %v1642
        %v2283 = vpack.c.b16 %v1651, %v1643
        %v2284 = vpack.c.b16 %v1652, %v1644
        %v2285 = vpack.c.b16 %v1653, %v1645
        %v2286 = vpack.c.b16 %v1662, %v1654
        %v2287 = vpack.c.b16 %v1663, %v1655
        %v2288 = vpack.c.b16 %v1664, %v1656
        %v2289 = vpack.c.b16 %v1665, %v1657
        %v2290 = vpack.c.b16 %v1666, %v1658
        %v2291 = vpack.c.b16 %v1667, %v1659
        %v2292 = vpack.c.b16 %v1668, %v1660
        %v2293 = vpack.c.b16 %v1669, %v1661
        %v2294 = vpack.c.b16 %v1678, %v1670
        %v2295 = vpack.c.b16 %v1679, %v1671
        %v2296 = vpack.c.b16 %v1680, %v1672
        %v2297 = vpack.c.b16 %v1681, %v1673
        %v2298 = vpack.c.b16 %v1682, %v1674
        %v2299 = vpack.c.b16 %v1683, %v1675
        %v2300 = vpack.c.b16 %v1684, %v1676
        %v2301 = vpack.c.b16 %v1685, %v1677
        %v2302 = vpack.c.b16 %v1694, %v1686
        %v2303 = vpack.c.b16 %v1695, %v1687
        %v2304 = vpack.c.b16 %v1696, %v1688
        %v2305 = vpack.c.b16 %v1697, %v1689
        %v2306 = vpack.c.b16 %v1698, %v1690
        %v2307 = vpack.c.b16 %v1699, %v1691
        %v2308 = vpack.c.b16 %v1700, %v1692
        %v2309 = vpack.c.b16 %v1701, %v1693
        %v2310 = vpack.c.b16 %v1710, %v1702
        %v2311 = vpack.c.b16 %v1711, %v1703
        %v2312 = vpack.c.b16 %v1712, %v1704
        %v2313 = vpack.c.b16 %v1713, %v1705
        %v2314 = vpack.c.b16 %v1714, %v1706
        %v2315 = vpack.c.b16 %v1715, %v1707
        %v2316 = vpack.c.b16 %v1716, %v1708
        %v2317 = vpack.c.b16 %v1717, %v1709
        %v2318 = vpack.c.b16 %v1726, %v1718
        %v2319 = vpack.c.b16 %v1727, %v1719
        %v2320 = vpack.c.b16 %v1728, %v1720
        %v2321 = vpack.c.b16 %v1729, %v1721
        %v2322 = vpack.c.b16 %v1730, %v1722
        %v2323 = vpack.c.b16 %v1731, %v1723
        %v2324 = vpack.c.b16 %v1732, %v1724
        %v2325 = vpack.c.b16 %v1733, %v1725
        %v2326 = vpack.c.b16 %v1742, %v1734
        %v2327 = vpack.c.b16 %v1743, %v1735
        %v2328 = vpack.c.b16 %v1744, %v1736
        %v2329 = vpack.c.b16 %v1745, %v1737
        %v2330 = vpack.c.b16 %v1746, %v1738
        %v2331 = vpack.c.b16 %v1747, %v1739
        %v2332 = vpack.c.b16 %v1748, %v1740
        %v2333 = vpack.c.b16 %v1749, %v1741
        %v2334 = vpack.c.b16 %v1758, %v1750
        %v2335 = vpack.c.b16 %v1759, %v1751
        %v2336 = vpack.c.b16 %v1760, %v1752
        %v2337 = vpack.c.b16 %v1761, %v1753
        %v2338 = vpack.c.b16 %v1762, %v1754
        %v2339 = vpack.c.b16 %v1763, %v1755
        %v2340 = vpack.c.b16 %v1764, %v1756
        %v2341 = vpack.c.b16 %v1765, %v1757
        %v2342 = vpack.c.b16 %v1774, %v1766
        %v2343 = vpack.c.b16 %v1775, %v1767
        %v2344 = vpack.c.b16 %v1776, %v1768
        %v2345 = vpack.c.b16 %v1777, %v1769
        %v2346 = vpack.c.b16 %v1778, %v1770
        %v2347 = vpack.c.b16 %v1779, %v1771
        %v2348 = vpack.c.b16 %v1780, %v1772
        %v2349 = vpack.c.b16 %v1781, %v1773
        %v2350 = vpack.c.b16 %v1790, %v1782
        %v2351 = vpack.c.b16 %v1791, %v1783
        %v2352 = vpack.c.b16 %v1792, %v1784
        %v2353 = vpack.c.b16 %v1793, %v1785
        %v2354 = vpack.c.b16 %v1794, %v1786
        %v2355 = vpack.c.b16 %v1795, %v1787
        %v2356 = vpack.c.b16 %v1796, %v1788
        %v2357 = vpack.c.b16 %v1797, %v1789
        %v2358 = vpack.c.b16 %v1806, %v1798
        %v2359 = vpack.c.b16 %v1807, %v1799
        %v2360 = vpack.c.b16 %v1808, %v1800
        %v2361 = vpack.c.b16 %v1809, %v1801
        %v2362 = vpack.c.b16 %v1810, %v1802
        %v2363 = vpack.c.b16 %v1811, %v1803
        %v2364 = vpack.c.b16 %v1812, %v1804
        %v2365 = vpack.c.b16 %v1813, %v1805
        %v2366 = vpack.c.b16 %v1822, %v1814
        %v2367 = vpack.c.b16 %v1823, %v1815
        %v2368 = vpack.c.b16 %v1824, %v1816
        %v2369 = vpack.c.b16 %v1825, %v1817
        %v2370 = vpack.c.b16 %v1826, %v1818
        %v2371 = vpack.c.b16 %v1827, %v1819
        %v2372 = vpack.c.b16 %v1828, %v1820
        %v2373 = vpack.c.b16 %v1829, %v1821
        %v2374 = vpack.c.b16 %v1838, %v1830
        %v2375 = vpack.c.b16 %v1839, %v1831
        %v2376 = vpack.c.b16 %v1840, %v1832
        %v2377 = vpack.c.b16 %v1841, %v1833
        %v2378 = vpack.c.b16 %v1842, %v1834
        %v2379 = vpack.c.b16 %v1843, %v1835
        %v2380 = vpack.c.b16 %v1844, %v1836
        %v2381 = vpack.c.b16 %v1845, %v1837
        %v2382 = vpack.c.b16 %v1854, %v1846
        %v2383 = vpack.c.b16 %v1855, %v1847
        %v2384 = vpack.c.b16 %v1856, %v1848
        %v2385 = vpack.c.b16 %v1857, %v1849
        %v2386 = vpack.c.b16 %v1858, %v1850
        %v2387 = vpack.c.b16 %v1859, %v1851
        %v2388 = vpack.c.b16 %v1860, %v1852
        %v2389 = vpack.c.b16 %v1861, %v1853
        %v2390 = vpack.c.b16 %v1870, %v1862
        %v2391 = vpack.c.b16 %v1871, %v1863
        %v2392 = vpack.c.b16 %v1872, %v1864
        %v2393 = vpack.c.b16 %v1873, %v1865
        %v2394 = vpack.c.b16 %v1874, %v1866
        %v2395 = vpack.c.b16 %v1875, %v1867
        %v2396 = vpack.c.b16 %v1876, %v1868
        %v2397 = vpack.c.b16 %v1877, %v1869
        %v2398 = vpack.c.b16 %v1886, %v1878
        %v2399 = vpack.c.b16 %v1887, %v1879
        %v2400 = vpack.c.b16 %v1888, %v1880
        %v2401 = vpack.c.b16 %v1889, %v1881
        %v2402 = vpack.c.b16 %v1890, %v1882
        %v2403 = vpack.c.b16 %v1891, %v1883
        %v2404 = vpack.c.b16 %v1892, %v1884
        %v2405 = vpack.c.b16 %v1893, %v1885
        %v2406 = vpack.c.b16 %v1902, %v1894
        %v2407 = vpack.c.b16 %v1903, %v1895
        %v2408 = vpack.c.b16 %v1904, %v1896
        %v2409 = vpack.c.b16 %v1905, %v1897
        %v2410 = vpack.c.b16 %v1906, %v1898
        %v2411 = vpack.c.b16 %v1907, %v1899
        %v2412 = vpack.c.b16 %v1908, %v1900
        %v2413 = vpack.c.b16 %v1909, %v1901
        %v2414 = vpack.c.b16 %v1918, %v1910
        %v2415 = vpack.c.b16 %v1919, %v1911
        %v2416 = vpack.c.b16 %v1920, %v1912
        %v2417 = vpack.c.b16 %v1921, %v1913
        %v2418 = vpack.c.b16 %v1922, %v1914
        %v2419 = vpack.c.b16 %v1923, %v1915
        %v2420 = vpack.c.b16 %v1924, %v1916
        %v2421 = vpack.c.b16 %v1925, %v1917
        %v2422 = vpack.c.b16 %v1934, %v1926
        %v2423 = vpack.c.b16 %v1935, %v1927
        %v2424 = vpack.c.b16 %v1936, %v1928
        %v2425 = vpack.c.b16 %v1937, %v1929
        %v2426 = vpack.c.b16 %v1938, %v1930
        %v2427 = vpack.c.b16 %v1939, %v1931
        %v2428 = vpack.c.b16 %v1940, %v1932
        %v2429 = vpack.c.b16 %v1941, %v1933
        %v2430 = vpack.c.b16 %v1950, %v1942
        %v2431 = vpack.c.b16 %v1951, %v1943
        %v2432 = vpack.c.b16 %v1952, %v1944
        %v2433 = vpack.c.b16 %v1953, %v1945
        %v2434 = vpack.c.b16 %v1954, %v1946
        %v2435 = vpack.c.b16 %v1955, %v1947
        %v2436 = vpack.c.b16 %v1956, %v1948
        %v2437 = vpack.c.b16 %v1957, %v1949
        %v2438 = vpack.c.b16 %v1966, %v1958
        %v2439 = vpack.c.b16 %v1967, %v1959
        %v2440 = vpack.c.b16 %v1968, %v1960
        %v2441 = vpack.c.b16 %v1969, %v1961
        %v2442 = vpack.c.b16 %v1970, %v1962
        %v2443 = vpack.c.b16 %v1971, %v1963
        %v2444 = vpack.c.b16 %v1972, %v1964
        %v2445 = vpack.c.b16 %v1973, %v1965
        %v2446 = vpack.c.b16 %v1982, %v1974
        %v2447 = vpack.c.b16 %v1983, %v1975
        %v2448 = vpack.c.b16 %v1984, %v1976
        %v2449 = vpack.c.b16 %v1985, %v1977
        %v2450 = vpack.c.b16 %v1986, %v1978
        %v2451 = vpack.c.b16 %v1987, %v1979
        %v2452 = vpack.c.b16 %v1988, %v1980
        %v2453 = vpack.c.b16 %v1989, %v1981
        %v2454 = vpack.c.b16 %v1998, %v1990
        %v2455 = vpack.c.b16 %v1999, %v1991
        %v2456 = vpack.c.b16 %v2000, %v1992
        %v2457 = vpack.c.b16 %v2001, %v1993
        %v2458 = vpack.c.b16 %v2002, %v1994
        %v2459 = vpack.c.b16 %v2003, %v1995
        %v2460 = vpack.c.b16 %v2004, %v1996
        %v2461 = vpack.c.b16 %v2005, %v1997
        %v2462 = vpack.c.b16 %v2014, %v2006
        %v2463 = vpack.c.b16 %v2015, %v2007
        %v2464 = vpack.c.b16 %v2016, %v2008
        %v2465 = vpack.c.b16 %v2017, %v2009
        %v2466 = vpack.c.b16 %v2018, %v2010
        %v2467 = vpack.c.b16 %v2019, %v2011
        %v2468 = vpack.c.b16 %v2020, %v2012
        %v2469 = vpack.c.b16 %v2021, %v2013
        %v2470 = vpack.c.b16 %v2030, %v2022
        %v2471 = vpack.c.b16 %v2031, %v2023
        %v2472 = vpack.c.b16 %v2032, %v2024
        %v2473 = vpack.c.b16 %v2033, %v2025
        %v2474 = vpack.c.b16 %v2034, %v2026
        %v2475 = vpack.c.b16 %v2035, %v2027
        %v2476 = vpack.c.b16 %v2036, %v2028
        %v2477 = vpack.c.b16 %v2037, %v2029
        %v2478 = vpack.c.b16 %v2046, %v2038
        %v2479 = vpack.c.b16 %v2047, %v2039
        %v2480 = vpack.c.b16 %v2048, %v2040
        %v2481 = vpack.c.b16 %v2049, %v2041
        %v2482 = vpack.c.b16 %v2050, %v2042
        %v2483 = vpack.c.b16 %v2051, %v2043
        %v2484 = vpack.c.b16 %v2052, %v2044
        %v2485 = vpack.c.b16 %v2053, %v2045
        %v2486 = vpack.c.b16 %v2062, %v2054
        %v2487 = vpack.c.b16 %v2063, %v2055
        %v2488 = vpack.c.b16 %v2064, %v2056
        %v2489 = vpack.c.b16 %v2065, %v2057
        %v2490 = vpack.c.b16 %v2066, %v2058
        %v2491 = vpack.c.b16 %v2067, %v2059
        %v2492 = vpack.c.b16 %v2068, %v2060
        %v2493 = vpack.c.b16 %v2069, %v2061
        %v2494 = vpack.c.b16 %v2078, %v2070
        %v2495 = vpack.c.b16 %v2079, %v2071
        %v2496 = vpack.c.b16 %v2080, %v2072
        %v2497 = vpack.c.b16 %v2081, %v2073
        %v2498 = vpack.c.b16 %v2082, %v2074
        %v2499 = vpack.c.b16 %v2083, %v2075
        %v2500 = vpack.c.b16 %v2084, %v2076
        %v2501 = vpack.c.b16 %v2085, %v2077
        %v2502 = vpack.c.b16 %v2094, %v2086
        %v2503 = vpack.c.b16 %v2095, %v2087
        %v2504 = vpack.c.b16 %v2096, %v2088
        %v2505 = vpack.c.b16 %v2097, %v2089
        %v2506 = vpack.c.b16 %v2098, %v2090
        %v2507 = vpack.c.b16 %v2099, %v2091
        %v2508 = vpack.c.b16 %v2100, %v2092
        %v2509 = vpack.c.b16 %v2101, %v2093
        %v2510 = vpack.c.b16 %v2110, %v2102
        %v2511 = vpack.c.b16 %v2111, %v2103
        %v2512 = vpack.c.b16 %v2112, %v2104
        %v2513 = vpack.c.b16 %v2113, %v2105
        %v2514 = vpack.c.b16 %v2114, %v2106
        %v2515 = vpack.c.b16 %v2115, %v2107
        %v2516 = vpack.c.b16 %v2116, %v2108
        %v2517 = vpack.c.b16 %v2117, %v2109
        %v2518 = vpack.c.b16 %v2126, %v2118
        %v2519 = vpack.c.b16 %v2127, %v2119
        %v2520 = vpack.c.b16 %v2128, %v2120
        %v2521 = vpack.c.b16 %v2129, %v2121
        %v2522 = vpack.c.b16 %v2130, %v2122
        %v2523 = vpack.c.b16 %v2131, %v2123
        %v2524 = vpack.c.b16 %v2132, %v2124
        %v2525 = vpack.c.b16 %v2133, %v2125
        %vm2918 = vcmask 130048
        %v2920 = vsel %vm2918, %v950, 0
        %2922 = vmatprep.subr.bf16.mxu0 %v2191
        %2923 = vmatpush1.bf16.msra.mxu0 %v2190
        %2924 = vmatprep.subr.bf16.mxu0 %v2183
        %2925 = vmatpush1.bf16.msra.mxu0 %v2182
        %2926 = vmatprep.subr.bf16.mxu0 %v2175
        %2927 = vmatpush1.bf16.msra.mxu0 %v2174
        %2928 = vmatprep.subr.bf16.mxu0 %v2167
        %2929 = vmatpush1.bf16.msra.mxu0 %v2166
        %2930 = vmatprep.subr.bf16.mxu0 %v2159
        %2931 = vmatpush1.bf16.msra.mxu0 %v2158
        %2932 = vmatprep.subr.bf16.mxu0 %v2151
        %2933 = vmatpush1.bf16.msra.mxu0 %v2150
        %2934 = vmatprep.subr.bf16.mxu0 %v2143
        %2935 = vmatpush1.bf16.msra.mxu0 %v2142
        %2936 = vmatprep.subr.bf16.mxu0 %v2135
        %2937 = vmatpush1.bf16.msra.mxu0 %v2134
        %2938 = vmatprep.subr.bf16.mxu0 %v2255
        %2939 = vmatpush2.bf16.msra.mxu0 %v2254
        %2940 = vmatprep.subr.bf16.mxu0 %v2247
        %2941 = vmatpush2.bf16.msra.mxu0 %v2246
        %2942 = vmatprep.subr.bf16.mxu0 %v2239
        %2943 = vmatpush2.bf16.msra.mxu0 %v2238
        %2944 = vmatprep.subr.bf16.mxu0 %v2231
        %2945 = vmatpush2.bf16.msra.mxu0 %v2230
        %2946 = vmatprep.subr.bf16.mxu0 %v2223
        %2947 = vmatpush2.bf16.msra.mxu0 %v2222
        %2948 = vmatprep.subr.bf16.mxu0 %v2215
        %2949 = vmatpush2.bf16.msra.mxu0 %v2214
        %2950 = vmatprep.subr.bf16.mxu0 %v2207
        %2951 = vmatpush2.bf16.msra.mxu0 %v2206
        %2952 = vmatprep.subr.bf16.mxu0 %v2199
        %2953 = vmatpush2.bf16.msra.mxu0 %v2198
        %2954 = vmatprep.mubr.bf16.mxu0 %v941
        %2955 = vmatmul.mubr.bf16.gmra.mxu0 %v927
        %v2956 = vpop.f32.mrf.mxu0
        %v2957 = vadd.f32 %v866, %v2956
        %v2958 = vpop.f32.mrf.mxu0
        %v2959 = vadd.f32 %v870, %v2958
        %v2960 = vpop.f32.mrf.mxu0
        %v2961 = vpop.f32.mrf.mxu0
        %2962 = vdwg.mxu0
        %2963 = vmatprep.subr.bf16.mxu0 %v2319
        %2964 = vmatpush1.bf16.msra.mxu0 %v2318
        %2965 = vmatprep.subr.bf16.mxu0 %v2311
        %2966 = vmatpush1.bf16.msra.mxu0 %v2310
        %2967 = vmatprep.subr.bf16.mxu0 %v2303
        %2968 = vmatpush1.bf16.msra.mxu0 %v2302
        %2969 = vmatprep.subr.bf16.mxu0 %v2295
        %2970 = vmatpush1.bf16.msra.mxu0 %v2294
        %2971 = vmatprep.subr.bf16.mxu0 %v2287
        %2972 = vmatpush1.bf16.msra.mxu0 %v2286
        %2973 = vmatprep.subr.bf16.mxu0 %v2279
        %2974 = vmatpush1.bf16.msra.mxu0 %v2278
        %2975 = vmatprep.subr.bf16.mxu0 %v2271
        %2976 = vmatpush1.bf16.msra.mxu0 %v2270
        %2977 = vmatprep.subr.bf16.mxu0 %v2263
        %2978 = vmatpush1.bf16.msra.mxu0 %v2262
        %2979 = vmatprep.subr.bf16.mxu0 %v2383
        %2980 = vmatpush2.bf16.msra.mxu0 %v2382
        %2981 = vmatprep.subr.bf16.mxu0 %v2375
        %2982 = vmatpush2.bf16.msra.mxu0 %v2374
        %2983 = vmatprep.subr.bf16.mxu0 %v2367
        %2984 = vmatpush2.bf16.msra.mxu0 %v2366
        %2985 = vmatprep.subr.bf16.mxu0 %v2359
        %2986 = vmatpush2.bf16.msra.mxu0 %v2358
        %2987 = vmatprep.subr.bf16.mxu0 %v2351
        %2988 = vmatpush2.bf16.msra.mxu0 %v2350
        %2989 = vmatprep.subr.bf16.mxu0 %v2343
        %2990 = vmatpush2.bf16.msra.mxu0 %v2342
        %2991 = vmatprep.subr.bf16.mxu0 %v2335
        %2992 = vmatpush2.bf16.msra.mxu0 %v2334
        %2993 = vmatprep.subr.bf16.mxu0 %v2327
        %2994 = vmatpush2.bf16.msra.mxu0 %v2326
        %2995 = vmatprep.mubr.bf16.mxu0 %v951
        %2996 = vmatmul.mubr.bf16.gmra.mxu0 %v949
        %v2997 = vpop.f32.mrf.mxu0
        %v2998 = vadd.f32 %v2957, %v2997
        %v2999 = vpop.f32.mrf.mxu0
        %v3000 = vadd.f32 %v2959, %v2999
        %v3001 = vpop.f32.mrf.mxu0
        %v3002 = vpop.f32.mrf.mxu0
        %3003 = vdwg.mxu0
        %3004 = vmatprep.subr.bf16.mxu0 %v2447
        %3005 = vmatpush1.bf16.msra.mxu0 %v2446
        %3006 = vmatprep.subr.bf16.mxu0 %v2439
        %3007 = vmatpush1.bf16.msra.mxu0 %v2438
        %3008 = vmatprep.subr.bf16.mxu0 %v2431
        %3009 = vmatpush1.bf16.msra.mxu0 %v2430
        %3010 = vmatprep.subr.bf16.mxu0 %v2423
        %3011 = vmatpush1.bf16.msra.mxu0 %v2422
        %3012 = vmatprep.subr.bf16.mxu0 %v2415
        %3013 = vmatpush1.bf16.msra.mxu0 %v2414
        %3014 = vmatprep.subr.bf16.mxu0 %v2407
        %3015 = vmatpush1.bf16.msra.mxu0 %v2406
        %3016 = vmatprep.subr.bf16.mxu0 %v2399
        %3017 = vmatpush1.bf16.msra.mxu0 %v2398
        %3018 = vmatprep.subr.bf16.mxu0 %v2391
        %3019 = vmatpush1.bf16.msra.mxu0 %v2390
        %3020 = vmatprep.subr.bf16.mxu0 %v2511
        %3021 = vmatpush2.bf16.msra.mxu0 %v2510
        %3022 = vmatprep.subr.bf16.mxu0 %v2503
        %3023 = vmatpush2.bf16.msra.mxu0 %v2502
        %3024 = vmatprep.subr.bf16.mxu0 %v2495
        %3025 = vmatpush2.bf16.msra.mxu0 %v2494
        %3026 = vmatprep.subr.bf16.mxu0 %v2487
        %3027 = vmatpush2.bf16.msra.mxu0 %v2486
        %3028 = vmatprep.subr.bf16.mxu0 %v2479
        %3029 = vmatpush2.bf16.msra.mxu0 %v2478
        %3030 = vmatprep.subr.bf16.mxu0 %v2471
        %3031 = vmatpush2.bf16.msra.mxu0 %v2470
        %3032 = vmatprep.subr.bf16.mxu0 %v2463
        %3033 = vmatpush2.bf16.msra.mxu0 %v2462
        %3034 = vmatprep.subr.bf16.mxu0 %v2455
        %3035 = vmatpush2.bf16.msra.mxu0 %v2454
        %3036 = vmatprep.mubr.bf16.mxu0 %v948
        %3037 = vmatmul.mubr.bf16.gmra.mxu0 %v934
        %v3038 = vpop.f32.mrf.mxu0
        %v3039 = vadd.f32 %v2998, %v3038
        %v3040 = vpop.f32.mrf.mxu0
        %v3041 = vadd.f32 %v3000, %v3040
        %v3042 = vpop.f32.mrf.mxu0
        %v3043 = vpop.f32.mrf.mxu0
        %3044 = vdwg.mxu0
        %3045 = vmatprep.subr.bf16.mxu0 0
        %3046 = vmatpush1.bf16.msra.mxu0 0
        %3047 = vmatprep.subr.bf16.mxu0 0
        %3048 = vmatpush1.bf16.msra.mxu0 0
        %3049 = vmatprep.subr.bf16.mxu0 0
        %3050 = vmatpush1.bf16.msra.mxu0 0
        %3051 = vmatprep.subr.bf16.mxu0 0
        %3052 = vmatpush1.bf16.msra.mxu0 0
        %3053 = vmatprep.subr.bf16.mxu0 0
        %3054 = vmatpush1.bf16.msra.mxu0 0
        %3055 = vmatprep.subr.bf16.mxu0 0
        %3056 = vmatpush1.bf16.msra.mxu0 0
        %3057 = vmatprep.subr.bf16.mxu0 0
        %3058 = vmatpush1.bf16.msra.mxu0 0
        %3059 = vmatprep.subr.bf16.mxu0 %v2519
        %3060 = vmatpush1.bf16.msra.mxu0 %v2518
        %3061 = vmatprep.subr.bf16.mxu0 0
        %3062 = vmatpush2.bf16.msra.mxu0 0
        %3063 = vmatprep.subr.bf16.mxu0 0
        %3064 = vmatpush2.bf16.msra.mxu0 0
        %3065 = vmatprep.subr.bf16.mxu0 0
        %3066 = vmatpush2.bf16.msra.mxu0 0
        %3067 = vmatprep.subr.bf16.mxu0 0
        %3068 = vmatpush2.bf16.msra.mxu0 0
        %3069 = vmatprep.subr.bf16.mxu0 0
        %3070 = vmatpush2.bf16.msra.mxu0 0
        %3071 = vmatprep.subr.bf16.mxu0 0
        %3072 = vmatpush2.bf16.msra.mxu0 0
        %3073 = vmatprep.subr.bf16.mxu0 0
        %3074 = vmatpush2.bf16.msra.mxu0 0
        %3075 = vmatprep.subr.bf16.mxu0 0
        %3076 = vmatpush2.bf16.msra.mxu0 0
        %3077 = vmatprep.mubr.bf16.mxu0 0
        %3078 = vmatmul.mubr.bf16.gmra.mxu0 %v2920
        %v3079 = vpop.f32.mrf.mxu0
        %v3080 = vadd.f32 %v3039, %v3079
        %v3081 = vpop.f32.mrf.mxu0
        %v3082 = vadd.f32 %v3041, %v3081
        %v3083 = vpop.f32.mrf.mxu0
        %v3084 = vpop.f32.mrf.mxu0
        %3085 = vdwg.mxu0
        %3086 = vmatprep.subr.bf16.mxu0 %v2193
        %3087 = vmatpush1.bf16.msra.mxu0 %v2192
        %3088 = vmatprep.subr.bf16.mxu0 %v2185
        %3089 = vmatpush1.bf16.msra.mxu0 %v2184
        %3090 = vmatprep.subr.bf16.mxu0 %v2177
        %3091 = vmatpush1.bf16.msra.mxu0 %v2176
        %3092 = vmatprep.subr.bf16.mxu0 %v2169
        %3093 = vmatpush1.bf16.msra.mxu0 %v2168
        %3094 = vmatprep.subr.bf16.mxu0 %v2161
        %3095 = vmatpush1.bf16.msra.mxu0 %v2160
        %3096 = vmatprep.subr.bf16.mxu0 %v2153
        %3097 = vmatpush1.bf16.msra.mxu0 %v2152
        %3098 = vmatprep.subr.bf16.mxu0 %v2145
        %3099 = vmatpush1.bf16.msra.mxu0 %v2144
        %3100 = vmatprep.subr.bf16.mxu0 %v2137
        %3101 = vmatpush1.bf16.msra.mxu0 %v2136
        %3102 = vmatprep.subr.bf16.mxu0 %v2257
        %3103 = vmatpush2.bf16.msra.mxu0 %v2256
        %3104 = vmatprep.subr.bf16.mxu0 %v2249
        %3105 = vmatpush2.bf16.msra.mxu0 %v2248
        %3106 = vmatprep.subr.bf16.mxu0 %v2241
        %3107 = vmatpush2.bf16.msra.mxu0 %v2240
        %3108 = vmatprep.subr.bf16.mxu0 %v2233
        %3109 = vmatpush2.bf16.msra.mxu0 %v2232
        %3110 = vmatprep.subr.bf16.mxu0 %v2225
        %3111 = vmatpush2.bf16.msra.mxu0 %v2224
        %3112 = vmatprep.subr.bf16.mxu0 %v2217
        %3113 = vmatpush2.bf16.msra.mxu0 %v2216
        %3114 = vmatprep.subr.bf16.mxu0 %v2209
        %3115 = vmatpush2.bf16.msra.mxu0 %v2208
        %3116 = vmatprep.subr.bf16.mxu0 %v2201
        %3117 = vmatpush2.bf16.msra.mxu0 %v2200
        %3118 = vmatprep.mubr.bf16.mxu0 %v941
        %3119 = vmatmul.mubr.bf16.gmra.mxu0 %v927
        %v3120 = vpop.f32.mrf.mxu0
        %v3121 = vadd.f32 %v874, %v3120
        %v3122 = vpop.f32.mrf.mxu0
        %v3123 = vadd.f32 %v878, %v3122
        %v3124 = vpop.f32.mrf.mxu0
        %v3125 = vpop.f32.mrf.mxu0
        %3126 = vdwg.mxu0
        %3127 = vmatprep.subr.bf16.mxu0 %v2321
        %3128 = vmatpush1.bf16.msra.mxu0 %v2320
        %3129 = vmatprep.subr.bf16.mxu0 %v2313
        %3130 = vmatpush1.bf16.msra.mxu0 %v2312
        %3131 = vmatprep.subr.bf16.mxu0 %v2305
        %3132 = vmatpush1.bf16.msra.mxu0 %v2304
        %3133 = vmatprep.subr.bf16.mxu0 %v2297
        %3134 = vmatpush1.bf16.msra.mxu0 %v2296
        %3135 = vmatprep.subr.bf16.mxu0 %v2289
        %3136 = vmatpush1.bf16.msra.mxu0 %v2288
        %3137 = vmatprep.subr.bf16.mxu0 %v2281
        %3138 = vmatpush1.bf16.msra.mxu0 %v2280
        %3139 = vmatprep.subr.bf16.mxu0 %v2273
        %3140 = vmatpush1.bf16.msra.mxu0 %v2272
        %3141 = vmatprep.subr.bf16.mxu0 %v2265
        %3142 = vmatpush1.bf16.msra.mxu0 %v2264
        %3143 = vmatprep.subr.bf16.mxu0 %v2385
        %3144 = vmatpush2.bf16.msra.mxu0 %v2384
        %3145 = vmatprep.subr.bf16.mxu0 %v2377
        %3146 = vmatpush2.bf16.msra.mxu0 %v2376
        %3147 = vmatprep.subr.bf16.mxu0 %v2369
        %3148 = vmatpush2.bf16.msra.mxu0 %v2368
        %3149 = vmatprep.subr.bf16.mxu0 %v2361
        %3150 = vmatpush2.bf16.msra.mxu0 %v2360
        %3151 = vmatprep.subr.bf16.mxu0 %v2353
        %3152 = vmatpush2.bf16.msra.mxu0 %v2352
        %3153 = vmatprep.subr.bf16.mxu0 %v2345
        %3154 = vmatpush2.bf16.msra.mxu0 %v2344
        %3155 = vmatprep.subr.bf16.mxu0 %v2337
        %3156 = vmatpush2.bf16.msra.mxu0 %v2336
        %3157 = vmatprep.subr.bf16.mxu0 %v2329
        %3158 = vmatpush2.bf16.msra.mxu0 %v2328
        %3159 = vmatprep.mubr.bf16.mxu0 %v951
        %3160 = vmatmul.mubr.bf16.gmra.mxu0 %v949
        %v3161 = vpop.f32.mrf.mxu0
        %v3162 = vadd.f32 %v3121, %v3161
        %v3163 = vpop.f32.mrf.mxu0
        %v3164 = vadd.f32 %v3123, %v3163
        %v3165 = vpop.f32.mrf.mxu0
        %v3166 = vpop.f32.mrf.mxu0
        %3167 = vdwg.mxu0
        %3168 = vmatprep.subr.bf16.mxu0 %v2449
        %3169 = vmatpush1.bf16.msra.mxu0 %v2448
        %3170 = vmatprep.subr.bf16.mxu0 %v2441
        %3171 = vmatpush1.bf16.msra.mxu0 %v2440
        %3172 = vmatprep.subr.bf16.mxu0 %v2433
        %3173 = vmatpush1.bf16.msra.mxu0 %v2432
        %3174 = vmatprep.subr.bf16.mxu0 %v2425
        %3175 = vmatpush1.bf16.msra.mxu0 %v2424
        %3176 = vmatprep.subr.bf16.mxu0 %v2417
        %3177 = vmatpush1.bf16.msra.mxu0 %v2416
        %3178 = vmatprep.subr.bf16.mxu0 %v2409
        %3179 = vmatpush1.bf16.msra.mxu0 %v2408
        %3180 = vmatprep.subr.bf16.mxu0 %v2401
        %3181 = vmatpush1.bf16.msra.mxu0 %v2400
        %3182 = vmatprep.subr.bf16.mxu0 %v2393
        %3183 = vmatpush1.bf16.msra.mxu0 %v2392
        %3184 = vmatprep.subr.bf16.mxu0 %v2513
        %3185 = vmatpush2.bf16.msra.mxu0 %v2512
        %3186 = vmatprep.subr.bf16.mxu0 %v2505
        %3187 = vmatpush2.bf16.msra.mxu0 %v2504
        %3188 = vmatprep.subr.bf16.mxu0 %v2497
        %3189 = vmatpush2.bf16.msra.mxu0 %v2496
        %3190 = vmatprep.subr.bf16.mxu0 %v2489
        %3191 = vmatpush2.bf16.msra.mxu0 %v2488
        %3192 = vmatprep.subr.bf16.mxu0 %v2481
        %3193 = vmatpush2.bf16.msra.mxu0 %v2480
        %3194 = vmatprep.subr.bf16.mxu0 %v2473
        %3195 = vmatpush2.bf16.msra.mxu0 %v2472
        %3196 = vmatprep.subr.bf16.mxu0 %v2465
        %3197 = vmatpush2.bf16.msra.mxu0 %v2464
        %3198 = vmatprep.subr.bf16.mxu0 %v2457
        %3199 = vmatpush2.bf16.msra.mxu0 %v2456
        %3200 = vmatprep.mubr.bf16.mxu0 %v948
        %3201 = vmatmul.mubr.bf16.gmra.mxu0 %v934
        %v3202 = vpop.f32.mrf.mxu0
        %v3203 = vadd.f32 %v3162, %v3202
        %v3204 = vpop.f32.mrf.mxu0
        %v3205 = vadd.f32 %v3164, %v3204
        %v3206 = vpop.f32.mrf.mxu0
        %v3207 = vpop.f32.mrf.mxu0
        %3208 = vdwg.mxu0
        %3209 = vmatprep.subr.bf16.mxu0 0
        %3210 = vmatpush1.bf16.msra.mxu0 0
        %3211 = vmatprep.subr.bf16.mxu0 0
        %3212 = vmatpush1.bf16.msra.mxu0 0
        %3213 = vmatprep.subr.bf16.mxu0 0
        %3214 = vmatpush1.bf16.msra.mxu0 0
        %3215 = vmatprep.subr.bf16.mxu0 0
        %3216 = vmatpush1.bf16.msra.mxu0 0
        %3217 = vmatprep.subr.bf16.mxu0 0
        %3218 = vmatpush1.bf16.msra.mxu0 0
        %3219 = vmatprep.subr.bf16.mxu0 0
        %3220 = vmatpush1.bf16.msra.mxu0 0
        %3221 = vmatprep.subr.bf16.mxu0 0
        %3222 = vmatpush1.bf16.msra.mxu0 0
        %3223 = vmatprep.subr.bf16.mxu0 %v2521
        %3224 = vmatpush1.bf16.msra.mxu0 %v2520
        %3225 = vmatprep.subr.bf16.mxu0 0
        %3226 = vmatpush2.bf16.msra.mxu0 0
        %3227 = vmatprep.subr.bf16.mxu0 0
        %3228 = vmatpush2.bf16.msra.mxu0 0
        %3229 = vmatprep.subr.bf16.mxu0 0
        %3230 = vmatpush2.bf16.msra.mxu0 0
        %3231 = vmatprep.subr.bf16.mxu0 0
        %3232 = vmatpush2.bf16.msra.mxu0 0
        %3233 = vmatprep.subr.bf16.mxu0 0
        %3234 = vmatpush2.bf16.msra.mxu0 0
        %3235 = vmatprep.subr.bf16.mxu0 0
        %3236 = vmatpush2.bf16.msra.mxu0 0
        %3237 = vmatprep.subr.bf16.mxu0 0
        %3238 = vmatpush2.bf16.msra.mxu0 0
        %3239 = vmatprep.subr.bf16.mxu0 0
        %3240 = vmatpush2.bf16.msra.mxu0 0
        %3241 = vmatprep.mubr.bf16.mxu0 0
        %3242 = vmatmul.mubr.bf16.gmra.mxu0 %v2920
        %v3243 = vpop.f32.mrf.mxu0
        %v3244 = vadd.f32 %v3203, %v3243
        %v3245 = vpop.f32.mrf.mxu0
        %v3246 = vadd.f32 %v3205, %v3245
        %v3247 = vpop.f32.mrf.mxu0
        %v3248 = vpop.f32.mrf.mxu0
        %3249 = vdwg.mxu0
        %3250 = vmatprep.subr.bf16.mxu0 %v2195
        %3251 = vmatpush1.bf16.msra.mxu0 %v2194
        %3252 = vmatprep.subr.bf16.mxu0 %v2187
        %3253 = vmatpush1.bf16.msra.mxu0 %v2186
        %3254 = vmatprep.subr.bf16.mxu0 %v2179
        %3255 = vmatpush1.bf16.msra.mxu0 %v2178
        %3256 = vmatprep.subr.bf16.mxu0 %v2171
        %3257 = vmatpush1.bf16.msra.mxu0 %v2170
        %3258 = vmatprep.subr.bf16.mxu0 %v2163
        %3259 = vmatpush1.bf16.msra.mxu0 %v2162
        %3260 = vmatprep.subr.bf16.mxu0 %v2155
        %3261 = vmatpush1.bf16.msra.mxu0 %v2154
        %3262 = vmatprep.subr.bf16.mxu0 %v2147
        %3263 = vmatpush1.bf16.msra.mxu0 %v2146
        %3264 = vmatprep.subr.bf16.mxu0 %v2139
        %3265 = vmatpush1.bf16.msra.mxu0 %v2138
        %3266 = vmatprep.subr.bf16.mxu0 %v2259
        %3267 = vmatpush2.bf16.msra.mxu0 %v2258
        %3268 = vmatprep.subr.bf16.mxu0 %v2251
        %3269 = vmatpush2.bf16.msra.mxu0 %v2250
        %3270 = vmatprep.subr.bf16.mxu0 %v2243
        %3271 = vmatpush2.bf16.msra.mxu0 %v2242
        %3272 = vmatprep.subr.bf16.mxu0 %v2235
        %3273 = vmatpush2.bf16.msra.mxu0 %v2234
        %3274 = vmatprep.subr.bf16.mxu0 %v2227
        %3275 = vmatpush2.bf16.msra.mxu0 %v2226
        %3276 = vmatprep.subr.bf16.mxu0 %v2219
        %3277 = vmatpush2.bf16.msra.mxu0 %v2218
        %3278 = vmatprep.subr.bf16.mxu0 %v2211
        %3279 = vmatpush2.bf16.msra.mxu0 %v2210
        %3280 = vmatprep.subr.bf16.mxu0 %v2203
        %3281 = vmatpush2.bf16.msra.mxu0 %v2202
        %3282 = vmatprep.mubr.bf16.mxu0 %v941
        %3283 = vmatmul.mubr.bf16.gmra.mxu0 %v927
        %v3284 = vpop.f32.mrf.mxu0
        %v3285 = vadd.f32 %v882, %v3284
        %v3286 = vpop.f32.mrf.mxu0
        %v3287 = vadd.f32 %v886, %v3286
        %v3288 = vpop.f32.mrf.mxu0
        %v3289 = vpop.f32.mrf.mxu0
        %3290 = vdwg.mxu0
        %3291 = vmatprep.subr.bf16.mxu0 %v2323
        %3292 = vmatpush1.bf16.msra.mxu0 %v2322
        %3293 = vmatprep.subr.bf16.mxu0 %v2315
        %3294 = vmatpush1.bf16.msra.mxu0 %v2314
        %3295 = vmatprep.subr.bf16.mxu0 %v2307
        %3296 = vmatpush1.bf16.msra.mxu0 %v2306
        %3297 = vmatprep.subr.bf16.mxu0 %v2299
        %3298 = vmatpush1.bf16.msra.mxu0 %v2298
        %3299 = vmatprep.subr.bf16.mxu0 %v2291
        %3300 = vmatpush1.bf16.msra.mxu0 %v2290
        %3301 = vmatprep.subr.bf16.mxu0 %v2283
        %3302 = vmatpush1.bf16.msra.mxu0 %v2282
        %3303 = vmatprep.subr.bf16.mxu0 %v2275
        %3304 = vmatpush1.bf16.msra.mxu0 %v2274
        %3305 = vmatprep.subr.bf16.mxu0 %v2267
        %3306 = vmatpush1.bf16.msra.mxu0 %v2266
        %3307 = vmatprep.subr.bf16.mxu0 %v2387
        %3308 = vmatpush2.bf16.msra.mxu0 %v2386
        %3309 = vmatprep.subr.bf16.mxu0 %v2379
        %3310 = vmatpush2.bf16.msra.mxu0 %v2378
        %3311 = vmatprep.subr.bf16.mxu0 %v2371
        %3312 = vmatpush2.bf16.msra.mxu0 %v2370
        %3313 = vmatprep.subr.bf16.mxu0 %v2363
        %3314 = vmatpush2.bf16.msra.mxu0 %v2362
        %3315 = vmatprep.subr.bf16.mxu0 %v2355
        %3316 = vmatpush2.bf16.msra.mxu0 %v2354
        %3317 = vmatprep.subr.bf16.mxu0 %v2347
        %3318 = vmatpush2.bf16.msra.mxu0 %v2346
        %3319 = vmatprep.subr.bf16.mxu0 %v2339
        %3320 = vmatpush2.bf16.msra.mxu0 %v2338
        %3321 = vmatprep.subr.bf16.mxu0 %v2331
        %3322 = vmatpush2.bf16.msra.mxu0 %v2330
        %3323 = vmatprep.mubr.bf16.mxu0 %v951
        %3324 = vmatmul.mubr.bf16.gmra.mxu0 %v949
        %v3325 = vpop.f32.mrf.mxu0
        %v3326 = vadd.f32 %v3285, %v3325
        %v3327 = vpop.f32.mrf.mxu0
        %v3328 = vadd.f32 %v3287, %v3327
        %v3329 = vpop.f32.mrf.mxu0
        %v3330 = vpop.f32.mrf.mxu0
        %3331 = vdwg.mxu0
        %3332 = vmatprep.subr.bf16.mxu0 %v2451
        %3333 = vmatpush1.bf16.msra.mxu0 %v2450
        %3334 = vmatprep.subr.bf16.mxu0 %v2443
        %3335 = vmatpush1.bf16.msra.mxu0 %v2442
        %3336 = vmatprep.subr.bf16.mxu0 %v2435
        %3337 = vmatpush1.bf16.msra.mxu0 %v2434
        %3338 = vmatprep.subr.bf16.mxu0 %v2427
        %3339 = vmatpush1.bf16.msra.mxu0 %v2426
        %3340 = vmatprep.subr.bf16.mxu0 %v2419
        %3341 = vmatpush1.bf16.msra.mxu0 %v2418
        %3342 = vmatprep.subr.bf16.mxu0 %v2411
        %3343 = vmatpush1.bf16.msra.mxu0 %v2410
        %3344 = vmatprep.subr.bf16.mxu0 %v2403
        %3345 = vmatpush1.bf16.msra.mxu0 %v2402
        %3346 = vmatprep.subr.bf16.mxu0 %v2395
        %3347 = vmatpush1.bf16.msra.mxu0 %v2394
        %3348 = vmatprep.subr.bf16.mxu0 %v2515
        %3349 = vmatpush2.bf16.msra.mxu0 %v2514
        %3350 = vmatprep.subr.bf16.mxu0 %v2507
        %3351 = vmatpush2.bf16.msra.mxu0 %v2506
        %3352 = vmatprep.subr.bf16.mxu0 %v2499
        %3353 = vmatpush2.bf16.msra.mxu0 %v2498
        %3354 = vmatprep.subr.bf16.mxu0 %v2491
        %3355 = vmatpush2.bf16.msra.mxu0 %v2490
        %3356 = vmatprep.subr.bf16.mxu0 %v2483
        %3357 = vmatpush2.bf16.msra.mxu0 %v2482
        %3358 = vmatprep.subr.bf16.mxu0 %v2475
        %3359 = vmatpush2.bf16.msra.mxu0 %v2474
        %3360 = vmatprep.subr.bf16.mxu0 %v2467
        %3361 = vmatpush2.bf16.msra.mxu0 %v2466
        %3362 = vmatprep.subr.bf16.mxu0 %v2459
        %3363 = vmatpush2.bf16.msra.mxu0 %v2458
        %3364 = vmatprep.mubr.bf16.mxu0 %v948
        %3365 = vmatmul.mubr.bf16.gmra.mxu0 %v934
        %v3366 = vpop.f32.mrf.mxu0
        %v3367 = vadd.f32 %v3326, %v3366
        %v3368 = vpop.f32.mrf.mxu0
        %v3369 = vadd.f32 %v3328, %v3368
        %v3370 = vpop.f32.mrf.mxu0
        %v3371 = vpop.f32.mrf.mxu0
        %3372 = vdwg.mxu0
        %3373 = vmatprep.subr.bf16.mxu0 0
        %3374 = vmatpush1.bf16.msra.mxu0 0
        %3375 = vmatprep.subr.bf16.mxu0 0
        %3376 = vmatpush1.bf16.msra.mxu0 0
        %3377 = vmatprep.subr.bf16.mxu0 0
        %3378 = vmatpush1.bf16.msra.mxu0 0
        %3379 = vmatprep.subr.bf16.mxu0 0
        %3380 = vmatpush1.bf16.msra.mxu0 0
        %3381 = vmatprep.subr.bf16.mxu0 0
        %3382 = vmatpush1.bf16.msra.mxu0 0
        %3383 = vmatprep.subr.bf16.mxu0 0
        %3384 = vmatpush1.bf16.msra.mxu0 0
        %3385 = vmatprep.subr.bf16.mxu0 0
        %3386 = vmatpush1.bf16.msra.mxu0 0
        %3387 = vmatprep.subr.bf16.mxu0 %v2523
        %3388 = vmatpush1.bf16.msra.mxu0 %v2522
        %3389 = vmatprep.subr.bf16.mxu0 0
        %3390 = vmatpush2.bf16.msra.mxu0 0
        %3391 = vmatprep.subr.bf16.mxu0 0
        %3392 = vmatpush2.bf16.msra.mxu0 0
        %3393 = vmatprep.subr.bf16.mxu0 0
        %3394 = vmatpush2.bf16.msra.mxu0 0
        %3395 = vmatprep.subr.bf16.mxu0 0
        %3396 = vmatpush2.bf16.msra.mxu0 0
        %3397 = vmatprep.subr.bf16.mxu0 0
        %3398 = vmatpush2.bf16.msra.mxu0 0
        %3399 = vmatprep.subr.bf16.mxu0 0
        %3400 = vmatpush2.bf16.msra.mxu0 0
        %3401 = vmatprep.subr.bf16.mxu0 0
        %3402 = vmatpush2.bf16.msra.mxu0 0
        %3403 = vmatprep.subr.bf16.mxu0 0
        %3404 = vmatpush2.bf16.msra.mxu0 0
        %3405 = vmatprep.mubr.bf16.mxu0 0
        %3406 = vmatmul.mubr.bf16.gmra.mxu0 %v2920
        %v3407 = vpop.f32.mrf.mxu0
        %v3408 = vadd.f32 %v3367, %v3407
        %v3409 = vpop.f32.mrf.mxu0
        %v3410 = vadd.f32 %v3369, %v3409
        %v3411 = vpop.f32.mrf.mxu0
        %v3412 = vpop.f32.mrf.mxu0
        %3413 = vdwg.mxu0
        %3414 = vmatprep.subr.bf16.mxu0 %v2197
        %3415 = vmatpush1.bf16.msra.mxu0 %v2196
        %3416 = vmatprep.subr.bf16.mxu0 %v2189
        %3417 = vmatpush1.bf16.msra.mxu0 %v2188
        %3418 = vmatprep.subr.bf16.mxu0 %v2181
        %3419 = vmatpush1.bf16.msra.mxu0 %v2180
        %3420 = vmatprep.subr.bf16.mxu0 %v2173
        %3421 = vmatpush1.bf16.msra.mxu0 %v2172
        %3422 = vmatprep.subr.bf16.mxu0 %v2165
        %3423 = vmatpush1.bf16.msra.mxu0 %v2164
        %3424 = vmatprep.subr.bf16.mxu0 %v2157
        %3425 = vmatpush1.bf16.msra.mxu0 %v2156
        %3426 = vmatprep.subr.bf16.mxu0 %v2149
        %3427 = vmatpush1.bf16.msra.mxu0 %v2148
        %3428 = vmatprep.subr.bf16.mxu0 %v2141
        %3429 = vmatpush1.bf16.msra.mxu0 %v2140
        %3430 = vmatprep.subr.bf16.mxu0 %v2261
        %3431 = vmatpush2.bf16.msra.mxu0 %v2260
        %3432 = vmatprep.subr.bf16.mxu0 %v2253
        %3433 = vmatpush2.bf16.msra.mxu0 %v2252
        %3434 = vmatprep.subr.bf16.mxu0 %v2245
        %3435 = vmatpush2.bf16.msra.mxu0 %v2244
        %3436 = vmatprep.subr.bf16.mxu0 %v2237
        %3437 = vmatpush2.bf16.msra.mxu0 %v2236
        %3438 = vmatprep.subr.bf16.mxu0 %v2229
        %3439 = vmatpush2.bf16.msra.mxu0 %v2228
        %3440 = vmatprep.subr.bf16.mxu0 %v2221
        %3441 = vmatpush2.bf16.msra.mxu0 %v2220
        %3442 = vmatprep.subr.bf16.mxu0 %v2213
        %3443 = vmatpush2.bf16.msra.mxu0 %v2212
        %3444 = vmatprep.subr.bf16.mxu0 %v2205
        %3445 = vmatpush2.bf16.msra.mxu0 %v2204
        %3446 = vmatprep.mubr.bf16.mxu0 %v941
        %3447 = vmatmul.mubr.bf16.gmra.mxu0 %v927
        %v3448 = vpop.f32.mrf.mxu0
        %v3449 = vadd.f32 %v890, %v3448
        %v3450 = vpop.f32.mrf.mxu0
        %v3451 = vadd.f32 %v894, %v3450
        %v3452 = vpop.f32.mrf.mxu0
        %v3453 = vpop.f32.mrf.mxu0
        %3454 = vdwg.mxu0
        %3455 = vmatprep.subr.bf16.mxu0 %v2325
        %3456 = vmatpush1.bf16.msra.mxu0 %v2324
        %3457 = vmatprep.subr.bf16.mxu0 %v2317
        %3458 = vmatpush1.bf16.msra.mxu0 %v2316
        %3459 = vmatprep.subr.bf16.mxu0 %v2309
        %3460 = vmatpush1.bf16.msra.mxu0 %v2308
        %3461 = vmatprep.subr.bf16.mxu0 %v2301
        %3462 = vmatpush1.bf16.msra.mxu0 %v2300
        %3463 = vmatprep.subr.bf16.mxu0 %v2293
        %3464 = vmatpush1.bf16.msra.mxu0 %v2292
        %3465 = vmatprep.subr.bf16.mxu0 %v2285
        %3466 = vmatpush1.bf16.msra.mxu0 %v2284
        %3467 = vmatprep.subr.bf16.mxu0 %v2277
        %3468 = vmatpush1.bf16.msra.mxu0 %v2276
        %3469 = vmatprep.subr.bf16.mxu0 %v2269
        %3470 = vmatpush1.bf16.msra.mxu0 %v2268
        %3471 = vmatprep.subr.bf16.mxu0 %v2389
        %3472 = vmatpush2.bf16.msra.mxu0 %v2388
        %3473 = vmatprep.subr.bf16.mxu0 %v2381
        %3474 = vmatpush2.bf16.msra.mxu0 %v2380
        %3475 = vmatprep.subr.bf16.mxu0 %v2373
        %3476 = vmatpush2.bf16.msra.mxu0 %v2372
        %3477 = vmatprep.subr.bf16.mxu0 %v2365
        %3478 = vmatpush2.bf16.msra.mxu0 %v2364
        %3479 = vmatprep.subr.bf16.mxu0 %v2357
        %3480 = vmatpush2.bf16.msra.mxu0 %v2356
        %3481 = vmatprep.subr.bf16.mxu0 %v2349
        %3482 = vmatpush2.bf16.msra.mxu0 %v2348
        %3483 = vmatprep.subr.bf16.mxu0 %v2341
        %3484 = vmatpush2.bf16.msra.mxu0 %v2340
        %3485 = vmatprep.subr.bf16.mxu0 %v2333
        %3486 = vmatpush2.bf16.msra.mxu0 %v2332
        %3487 = vmatprep.mubr.bf16.mxu0 %v951
        %3488 = vmatmul.mubr.bf16.gmra.mxu0 %v949
        %v3489 = vpop.f32.mrf.mxu0
        %v3490 = vadd.f32 %v3449, %v3489
        %v3491 = vpop.f32.mrf.mxu0
        %v3492 = vadd.f32 %v3451, %v3491
        %v3493 = vpop.f32.mrf.mxu0
        %v3494 = vpop.f32.mrf.mxu0
        %3495 = vdwg.mxu0
        %3496 = vmatprep.subr.bf16.mxu0 %v2453
        %3497 = vmatpush1.bf16.msra.mxu0 %v2452
        %3498 = vmatprep.subr.bf16.mxu0 %v2445
        %3499 = vmatpush1.bf16.msra.mxu0 %v2444
        %3500 = vmatprep.subr.bf16.mxu0 %v2437
        %3501 = vmatpush1.bf16.msra.mxu0 %v2436
        %3502 = vmatprep.subr.bf16.mxu0 %v2429
        %3503 = vmatpush1.bf16.msra.mxu0 %v2428
        %3504 = vmatprep.subr.bf16.mxu0 %v2421
        %3505 = vmatpush1.bf16.msra.mxu0 %v2420
        %3506 = vmatprep.subr.bf16.mxu0 %v2413
        %3507 = vmatpush1.bf16.msra.mxu0 %v2412
        %3508 = vmatprep.subr.bf16.mxu0 %v2405
        %3509 = vmatpush1.bf16.msra.mxu0 %v2404
        %3510 = vmatprep.subr.bf16.mxu0 %v2397
        %3511 = vmatpush1.bf16.msra.mxu0 %v2396
        %3512 = vmatprep.subr.bf16.mxu0 %v2517
        %3513 = vmatpush2.bf16.msra.mxu0 %v2516
        %3514 = vmatprep.subr.bf16.mxu0 %v2509
        %3515 = vmatpush2.bf16.msra.mxu0 %v2508
        %3516 = vmatprep.subr.bf16.mxu0 %v2501
        %3517 = vmatpush2.bf16.msra.mxu0 %v2500
        %3518 = vmatprep.subr.bf16.mxu0 %v2493
        %3519 = vmatpush2.bf16.msra.mxu0 %v2492
        %3520 = vmatprep.subr.bf16.mxu0 %v2485
        %3521 = vmatpush2.bf16.msra.mxu0 %v2484
        %3522 = vmatprep.subr.bf16.mxu0 %v2477
        %3523 = vmatpush2.bf16.msra.mxu0 %v2476
        %3524 = vmatprep.subr.bf16.mxu0 %v2469
        %3525 = vmatpush2.bf16.msra.mxu0 %v2468
        %3526 = vmatprep.subr.bf16.mxu0 %v2461
        %3527 = vmatpush2.bf16.msra.mxu0 %v2460
        %3528 = vmatprep.mubr.bf16.mxu0 %v948
        %3529 = vmatmul.mubr.bf16.gmra.mxu0 %v934
        %v3530 = vpop.f32.mrf.mxu0
        %v3531 = vadd.f32 %v3490, %v3530
        %v3532 = vpop.f32.mrf.mxu0
        %v3533 = vadd.f32 %v3492, %v3532
        %v3534 = vpop.f32.mrf.mxu0
        %v3535 = vpop.f32.mrf.mxu0
        %3536 = vdwg.mxu0
        %3537 = vmatprep.subr.bf16.mxu0 0
        %3538 = vmatpush1.bf16.msra.mxu0 0
        %3539 = vmatprep.subr.bf16.mxu0 0
        %3540 = vmatpush1.bf16.msra.mxu0 0
        %3541 = vmatprep.subr.bf16.mxu0 0
        %3542 = vmatpush1.bf16.msra.mxu0 0
        %3543 = vmatprep.subr.bf16.mxu0 0
        %3544 = vmatpush1.bf16.msra.mxu0 0
        %3545 = vmatprep.subr.bf16.mxu0 0
        %3546 = vmatpush1.bf16.msra.mxu0 0
        %3547 = vmatprep.subr.bf16.mxu0 0
        %3548 = vmatpush1.bf16.msra.mxu0 0
        %3549 = vmatprep.subr.bf16.mxu0 0
        %3550 = vmatpush1.bf16.msra.mxu0 0
        %3551 = vmatprep.subr.bf16.mxu0 %v2525
        %3552 = vmatpush1.bf16.msra.mxu0 %v2524
        %3553 = vmatprep.subr.bf16.mxu0 0
        %3554 = vmatpush2.bf16.msra.mxu0 0
        %3555 = vmatprep.subr.bf16.mxu0 0
        %3556 = vmatpush2.bf16.msra.mxu0 0
        %3557 = vmatprep.subr.bf16.mxu0 0
        %3558 = vmatpush2.bf16.msra.mxu0 0
        %3559 = vmatprep.subr.bf16.mxu0 0
        %3560 = vmatpush2.bf16.msra.mxu0 0
        %3561 = vmatprep.subr.bf16.mxu0 0
        %3562 = vmatpush2.bf16.msra.mxu0 0
        %3563 = vmatprep.subr.bf16.mxu0 0
        %3564 = vmatpush2.bf16.msra.mxu0 0
        %3565 = vmatprep.subr.bf16.mxu0 0
        %3566 = vmatpush2.bf16.msra.mxu0 0
        %3567 = vmatprep.subr.bf16.mxu0 0
        %3568 = vmatpush2.bf16.msra.mxu0 0
        %3569 = vmatprep.mubr.bf16.mxu0 0
        %3570 = vmatmul.mubr.bf16.gmra.mxu0 %v2920
        %v3571 = vpop.f32.mrf.mxu0
        %v3572 = vadd.f32 %v3531, %v3571
        %v3573 = vpop.f32.mrf.mxu0
        %v3574 = vadd.f32 %v3533, %v3573
        %v3575 = vpop.f32.mrf.mxu0
        %v3576 = vpop.f32.mrf.mxu0
        %3577 = vdwg.mxu0
        %v3578 = vmax.f32 %v3080, 0.0
        %v3579 = vmax.f32 %v3082, 0.0
        %v3580 = vmax.f32 %v3244, 0.0
        %v3581 = vmax.f32 %v3246, 0.0
        %v3582 = vmax.f32 %v3408, 0.0
        %v3583 = vmax.f32 %v3410, 0.0
        %v3584 = vmax.f32 %v3572, 0.0
        %v3585 = vmax.f32 %v3574, 0.0
        %v3586 = vld [vmem:[%s397] sm:$0xff]
        %v3587 = vld [vmem:[%s397 + $0x8] sm:$0xff]
        %v3588 = vld [vmem:[%s397 + $0x10] sm:$0xff]
        %v3589 = vld [vmem:[%s397 + $0x18] sm:$0xff]
        %v3590 = vld [vmem:[%s397 + $0x20] sm:$0xff]
        %v3591 = vld [vmem:[%s397 + $0x28] sm:$0xff]
        %v3592 = vld [vmem:[%s397 + $0x30] sm:$0xff]
        %v3593 = vld [vmem:[%s397 + $0x38] sm:$0xff]
        %v3594 = vld [vmem:[%s397 + $0x40] sm:$0xff]
        %v3595 = vld [vmem:[%s397 + $0x48] sm:$0xff]
        %v3596 = vld [vmem:[%s397 + $0x50] sm:$0xff]
        %v3597 = vld [vmem:[%s397 + $0x58] sm:$0xff]
        %v3598 = vld [vmem:[%s397 + $0x60] sm:$0xff]
        %v3599 = vld [vmem:[%s397 + $0x68] sm:$0xff]
        %v3600 = vld [vmem:[%s397 + $0x70] sm:$0xff]
        %v3601 = vld [vmem:[%s397 + $0x78] sm:$0xff]
        %v3602 = vld [vmem:[%s397 + $0x80] sm:$0xff]
        %v3603 = vld [vmem:[%s397 + $0x88] sm:$0xff]
        %v3604 = vld [vmem:[%s397 + $0x90] sm:$0xff]
        %v3605 = vld [vmem:[%s397 + $0x98] sm:$0xff]
        %v3606 = vld [vmem:[%s397 + $0xa0] sm:$0xff]
        %v3607 = vld [vmem:[%s397 + $0xa8] sm:$0xff]
        %v3608 = vld [vmem:[%s397 + $0xb0] sm:$0xff]
        %v3609 = vld [vmem:[%s397 + $0xb8] sm:$0xff]
        %v3610 = vld [vmem:[%s397 + $0xc0] sm:$0xff]
        %v3611 = vld [vmem:[%s397 + $0xc8] sm:$0xff]
        %v3612 = vld [vmem:[%s397 + $0xd0] sm:$0xff]
        %v3613 = vld [vmem:[%s397 + $0xd8] sm:$0xff]
        %v3614 = vld [vmem:[%s397 + $0xe0] sm:$0xff]
        %v3615 = vld [vmem:[%s397 + $0xe8] sm:$0xff]
        %v3616 = vld [vmem:[%s397 + $0xf0] sm:$0xff]
        %v3617 = vld [vmem:[%s397 + $0xf8] sm:$0xff]
        %v3618 = vld [vmem:[%s397 + $0x100] sm:$0xff]
        %v3619 = vld [vmem:[%s397 + $0x108] sm:$0xff]
        %v3620 = vld [vmem:[%s397 + $0x110] sm:$0xff]
        %v3621 = vld [vmem:[%s397 + $0x118] sm:$0xff]
        %v3622 = vld [vmem:[%s397 + $0x120] sm:$0xff]
        %v3623 = vld [vmem:[%s397 + $0x128] sm:$0xff]
        %v3624 = vld [vmem:[%s397 + $0x130] sm:$0xff]
        %v3625 = vld [vmem:[%s397 + $0x138] sm:$0xff]
        %v3626 = vld [vmem:[%s397 + $0x140] sm:$0xff]
        %v3627 = vld [vmem:[%s397 + $0x148] sm:$0xff]
        %v3628 = vld [vmem:[%s397 + $0x150] sm:$0xff]
        %v3629 = vld [vmem:[%s397 + $0x158] sm:$0xff]
        %v3630 = vld [vmem:[%s397 + $0x160] sm:$0xff]
        %v3631 = vld [vmem:[%s397 + $0x168] sm:$0xff]
        %v3632 = vld [vmem:[%s397 + $0x170] sm:$0xff]
        %v3633 = vld [vmem:[%s397 + $0x178] sm:$0xff]
        %v3634 = vld [vmem:[%s397 + $0x180] sm:$0xff]
        %v3635 = vld [vmem:[%s397 + $0x188] sm:$0xff]
        %v3636 = vld [vmem:[%s397 + $0x190] sm:$0xff]
        %v3637 = vld [vmem:[%s397 + $0x198] sm:$0xff]
        %v3638 = vld [vmem:[%s397 + $0x1a0] sm:$0xff]
        %v3639 = vld [vmem:[%s397 + $0x1a8] sm:$0xff]
        %v3640 = vld [vmem:[%s397 + $0x1b0] sm:$0xff]
        %v3641 = vld [vmem:[%s397 + $0x1b8] sm:$0xff]
        %v3642 = vld [vmem:[%s397 + $0x1c0] sm:$0xff]
        %v3643 = vld [vmem:[%s397 + $0x1c8] sm:$0xff]
        %v3644 = vld [vmem:[%s397 + $0x1d0] sm:$0xff]
        %v3645 = vld [vmem:[%s397 + $0x1d8] sm:$0xff]
        %v3646 = vld [vmem:[%s397 + $0x1e0] sm:$0xff]
        %v3647 = vld [vmem:[%s397 + $0x1e8] sm:$0xff]
        %v3648 = vld [vmem:[%s397 + $0x1f0] sm:$0xff]
        %v3649 = vld [vmem:[%s397 + $0x1f8] sm:$0xff]
        %v3650 = vld [vmem:[%s397 + $0x200] sm:$0xff]
        %v3651 = vld [vmem:[%s397 + $0x208] sm:$0xff]
        %v3652 = vld [vmem:[%s397 + $0x210] sm:$0xff]
        %v3653 = vld [vmem:[%s397 + $0x218] sm:$0xff]
        %v3654 = vld [vmem:[%s397 + $0x220] sm:$0xff]
        %v3655 = vld [vmem:[%s397 + $0x228] sm:$0xff]
        %v3656 = vld [vmem:[%s397 + $0x230] sm:$0xff]
        %v3657 = vld [vmem:[%s397 + $0x238] sm:$0xff]
        %v3658 = vld [vmem:[%s397 + $0x240] sm:$0xff]
        %v3659 = vld [vmem:[%s397 + $0x248] sm:$0xff]
        %v3660 = vld [vmem:[%s397 + $0x250] sm:$0xff]
        %v3661 = vld [vmem:[%s397 + $0x258] sm:$0xff]
        %v3662 = vld [vmem:[%s397 + $0x260] sm:$0xff]
        %v3663 = vld [vmem:[%s397 + $0x268] sm:$0xff]
        %v3664 = vld [vmem:[%s397 + $0x270] sm:$0xff]
        %v3665 = vld [vmem:[%s397 + $0x278] sm:$0xff]
        %v3666 = vld [vmem:[%s397 + $0x280] sm:$0xff]
        %v3667 = vld [vmem:[%s397 + $0x288] sm:$0xff]
        %v3668 = vld [vmem:[%s397 + $0x290] sm:$0xff]
        %v3669 = vld [vmem:[%s397 + $0x298] sm:$0xff]
        %v3670 = vld [vmem:[%s397 + $0x2a0] sm:$0xff]
        %v3671 = vld [vmem:[%s397 + $0x2a8] sm:$0xff]
        %v3672 = vld [vmem:[%s397 + $0x2b0] sm:$0xff]
        %v3673 = vld [vmem:[%s397 + $0x2b8] sm:$0xff]
        %v3674 = vld [vmem:[%s397 + $0x2c0] sm:$0xff]
        %v3675 = vld [vmem:[%s397 + $0x2c8] sm:$0xff]
        %v3676 = vld [vmem:[%s397 + $0x2d0] sm:$0xff]
        %v3677 = vld [vmem:[%s397 + $0x2d8] sm:$0xff]
        %v3678 = vld [vmem:[%s397 + $0x2e0] sm:$0xff]
        %v3679 = vld [vmem:[%s397 + $0x2e8] sm:$0xff]
        %v3680 = vld [vmem:[%s397 + $0x2f0] sm:$0xff]
        %v3681 = vld [vmem:[%s397 + $0x2f8] sm:$0xff]
        %v3682 = vld [vmem:[%s397 + $0x300] sm:$0xff]
        %v3683 = vld [vmem:[%s397 + $0x308] sm:$0xff]
        %v3684 = vld [vmem:[%s397 + $0x310] sm:$0xff]
        %v3685 = vld [vmem:[%s397 + $0x318] sm:$0xff]
        %v3686 = vld [vmem:[%s397 + $0x320] sm:$0xff]
        %v3687 = vld [vmem:[%s397 + $0x328] sm:$0xff]
        %v3688 = vld [vmem:[%s397 + $0x330] sm:$0xff]
        %v3689 = vld [vmem:[%s397 + $0x338] sm:$0xff]
        %v3690 = vld [vmem:[%s397 + $0x340] sm:$0xff]
        %v3691 = vld [vmem:[%s397 + $0x348] sm:$0xff]
        %v3692 = vld [vmem:[%s397 + $0x350] sm:$0xff]
        %v3693 = vld [vmem:[%s397 + $0x358] sm:$0xff]
        %v3694 = vld [vmem:[%s397 + $0x360] sm:$0xff]
        %v3695 = vld [vmem:[%s397 + $0x368] sm:$0xff]
        %v3696 = vld [vmem:[%s397 + $0x370] sm:$0xff]
        %v3697 = vld [vmem:[%s397 + $0x378] sm:$0xff]
        %v3698 = vld [vmem:[%s397 + $0x380] sm:$0xff]
        %v3699 = vld [vmem:[%s397 + $0x388] sm:$0xff]
        %v3700 = vld [vmem:[%s397 + $0x390] sm:$0xff]
        %v3701 = vld [vmem:[%s397 + $0x398] sm:$0xff]
        %v3702 = vld [vmem:[%s397 + $0x3a0] sm:$0xff]
        %v3703 = vld [vmem:[%s397 + $0x3a8] sm:$0xff]
        %v3704 = vld [vmem:[%s397 + $0x3b0] sm:$0xff]
        %v3705 = vld [vmem:[%s397 + $0x3b8] sm:$0xff]
        %v3706 = vld [vmem:[%s397 + $0x3c0] sm:$0xff]
        %v3707 = vld [vmem:[%s397 + $0x3c8] sm:$0xff]
        %v3708 = vld [vmem:[%s397 + $0x3d0] sm:$0xff]
        %v3709 = vld [vmem:[%s397 + $0x3d8] sm:$0xff]
        %v3710 = vld [vmem:[%s397 + $0x3e0] sm:$0xff]
        %v3711 = vld [vmem:[%s397 + $0x3e8] sm:$0xff]
        %v3712 = vld [vmem:[%s397 + $0x3f0] sm:$0xff]
        %v3713 = vld [vmem:[%s397 + $0x3f8] sm:$0xff]
        %v3714 = vld [vmem:[%s397 + $0x400] sm:$0xff]
        %v3715 = vld [vmem:[%s397 + $0x408] sm:$0xff]
        %v3716 = vld [vmem:[%s397 + $0x410] sm:$0xff]
        %v3717 = vld [vmem:[%s397 + $0x418] sm:$0xff]
        %v3718 = vld [vmem:[%s397 + $0x420] sm:$0xff]
        %v3719 = vld [vmem:[%s397 + $0x428] sm:$0xff]
        %v3720 = vld [vmem:[%s397 + $0x430] sm:$0xff]
        %v3721 = vld [vmem:[%s397 + $0x438] sm:$0xff]
        %v3722 = vld [vmem:[%s397 + $0x440] sm:$0xff]
        %v3723 = vld [vmem:[%s397 + $0x448] sm:$0xff]
        %v3724 = vld [vmem:[%s397 + $0x450] sm:$0xff]
        %v3725 = vld [vmem:[%s397 + $0x458] sm:$0xff]
        %v3726 = vld [vmem:[%s397 + $0x460] sm:$0xff]
        %v3727 = vld [vmem:[%s397 + $0x468] sm:$0xff]
        %v3728 = vld [vmem:[%s397 + $0x470] sm:$0xff]
        %v3729 = vld [vmem:[%s397 + $0x478] sm:$0xff]
        %v3730 = vld [vmem:[%s397 + $0x480] sm:$0xff]
        %v3731 = vld [vmem:[%s397 + $0x488] sm:$0xff]
        %v3732 = vld [vmem:[%s397 + $0x490] sm:$0xff]
        %v3733 = vld [vmem:[%s397 + $0x498] sm:$0xff]
        %v3734 = vld [vmem:[%s397 + $0x4a0] sm:$0xff]
        %v3735 = vld [vmem:[%s397 + $0x4a8] sm:$0xff]
        %v3736 = vld [vmem:[%s397 + $0x4b0] sm:$0xff]
        %v3737 = vld [vmem:[%s397 + $0x4b8] sm:$0xff]
        %v3738 = vld [vmem:[%s397 + $0x4c0] sm:$0xff]
        %v3739 = vld [vmem:[%s397 + $0x4c8] sm:$0xff]
        %v3740 = vld [vmem:[%s397 + $0x4d0] sm:$0xff]
        %v3741 = vld [vmem:[%s397 + $0x4d8] sm:$0xff]
        %v3742 = vld [vmem:[%s397 + $0x4e0] sm:$0xff]
        %v3743 = vld [vmem:[%s397 + $0x4e8] sm:$0xff]
        %v3744 = vld [vmem:[%s397 + $0x4f0] sm:$0xff]
        %v3745 = vld [vmem:[%s397 + $0x4f8] sm:$0xff]
        %v3746 = vld [vmem:[%s397 + $0x500] sm:$0xff]
        %v3747 = vld [vmem:[%s397 + $0x508] sm:$0xff]
        %v3748 = vld [vmem:[%s397 + $0x510] sm:$0xff]
        %v3749 = vld [vmem:[%s397 + $0x518] sm:$0xff]
        %v3750 = vld [vmem:[%s397 + $0x520] sm:$0xff]
        %v3751 = vld [vmem:[%s397 + $0x528] sm:$0xff]
        %v3752 = vld [vmem:[%s397 + $0x530] sm:$0xff]
        %v3753 = vld [vmem:[%s397 + $0x538] sm:$0xff]
        %v3754 = vld [vmem:[%s397 + $0x540] sm:$0xff]
        %v3755 = vld [vmem:[%s397 + $0x548] sm:$0xff]
        %v3756 = vld [vmem:[%s397 + $0x550] sm:$0xff]
        %v3757 = vld [vmem:[%s397 + $0x558] sm:$0xff]
        %v3758 = vld [vmem:[%s397 + $0x560] sm:$0xff]
        %v3759 = vld [vmem:[%s397 + $0x568] sm:$0xff]
        %v3760 = vld [vmem:[%s397 + $0x570] sm:$0xff]
        %v3761 = vld [vmem:[%s397 + $0x578] sm:$0xff]
        %v3762 = vld [vmem:[%s397 + $0x580] sm:$0xff]
        %v3763 = vld [vmem:[%s397 + $0x588] sm:$0xff]
        %v3764 = vld [vmem:[%s397 + $0x590] sm:$0xff]
        %v3765 = vld [vmem:[%s397 + $0x598] sm:$0xff]
        %v3766 = vld [vmem:[%s397 + $0x5a0] sm:$0xff]
        %v3767 = vld [vmem:[%s397 + $0x5a8] sm:$0xff]
        %v3768 = vld [vmem:[%s397 + $0x5b0] sm:$0xff]
        %v3769 = vld [vmem:[%s397 + $0x5b8] sm:$0xff]
        %v3770 = vld [vmem:[%s397 + $0x5c0] sm:$0xff]
        %v3771 = vld [vmem:[%s397 + $0x5c8] sm:$0xff]
        %v3772 = vld [vmem:[%s397 + $0x5d0] sm:$0xff]
        %v3773 = vld [vmem:[%s397 + $0x5d8] sm:$0xff]
        %v3774 = vld [vmem:[%s397 + $0x5e0] sm:$0xff]
        %v3775 = vld [vmem:[%s397 + $0x5e8] sm:$0xff]
        %v3776 = vld [vmem:[%s397 + $0x5f0] sm:$0xff]
        %v3777 = vld [vmem:[%s397 + $0x5f8] sm:$0xff]
        %v3778 = vld [vmem:[%s397 + $0x600] sm:$0xff]
        %v3779 = vld [vmem:[%s397 + $0x608] sm:$0xff]
        %v3780 = vld [vmem:[%s397 + $0x610] sm:$0xff]
        %v3781 = vld [vmem:[%s397 + $0x618] sm:$0xff]
        %v3782 = vld [vmem:[%s397 + $0x620] sm:$0xff]
        %v3783 = vld [vmem:[%s397 + $0x628] sm:$0xff]
        %v3784 = vld [vmem:[%s397 + $0x630] sm:$0xff]
        %v3785 = vld [vmem:[%s397 + $0x638] sm:$0xff]
        %v3786 = vld [vmem:[%s397 + $0x640] sm:$0xff]
        %v3787 = vld [vmem:[%s397 + $0x648] sm:$0xff]
        %v3788 = vld [vmem:[%s397 + $0x650] sm:$0xff]
        %v3789 = vld [vmem:[%s397 + $0x658] sm:$0xff]
        %v3790 = vld [vmem:[%s397 + $0x660] sm:$0xff]
        %v3791 = vld [vmem:[%s397 + $0x668] sm:$0xff]
        %v3792 = vld [vmem:[%s397 + $0x670] sm:$0xff]
        %v3793 = vld [vmem:[%s397 + $0x678] sm:$0xff]
        %v3794 = vld [vmem:[%s397 + $0x680] sm:$0xff]
        %v3795 = vld [vmem:[%s397 + $0x688] sm:$0xff]
        %v3796 = vld [vmem:[%s397 + $0x690] sm:$0xff]
        %v3797 = vld [vmem:[%s397 + $0x698] sm:$0xff]
        %v3798 = vld [vmem:[%s397 + $0x6a0] sm:$0xff]
        %v3799 = vld [vmem:[%s397 + $0x6a8] sm:$0xff]
        %v3800 = vld [vmem:[%s397 + $0x6b0] sm:$0xff]
        %v3801 = vld [vmem:[%s397 + $0x6b8] sm:$0xff]
        %v3802 = vld [vmem:[%s397 + $0x6c0] sm:$0xff]
        %v3803 = vld [vmem:[%s397 + $0x6c8] sm:$0xff]
        %v3804 = vld [vmem:[%s397 + $0x6d0] sm:$0xff]
        %v3805 = vld [vmem:[%s397 + $0x6d8] sm:$0xff]
        %v3806 = vld [vmem:[%s397 + $0x6e0] sm:$0xff]
        %v3807 = vld [vmem:[%s397 + $0x6e8] sm:$0xff]
        %v3808 = vld [vmem:[%s397 + $0x6f0] sm:$0xff]
        %v3809 = vld [vmem:[%s397 + $0x6f8] sm:$0xff]
        %v3810 = vld [vmem:[%s397 + $0x700] sm:$0xff]
        %v3811 = vld [vmem:[%s397 + $0x708] sm:$0xff]
        %v3812 = vld [vmem:[%s397 + $0x710] sm:$0xff]
        %v3813 = vld [vmem:[%s397 + $0x718] sm:$0xff]
        %v3814 = vld [vmem:[%s397 + $0x720] sm:$0xff]
        %v3815 = vld [vmem:[%s397 + $0x728] sm:$0xff]
        %v3816 = vld [vmem:[%s397 + $0x730] sm:$0xff]
        %v3817 = vld [vmem:[%s397 + $0x738] sm:$0xff]
        %v3818 = vld [vmem:[%s397 + $0x740] sm:$0xff]
        %v3819 = vld [vmem:[%s397 + $0x748] sm:$0xff]
        %v3820 = vld [vmem:[%s397 + $0x750] sm:$0xff]
        %v3821 = vld [vmem:[%s397 + $0x758] sm:$0xff]
        %v3822 = vld [vmem:[%s397 + $0x760] sm:$0xff]
        %v3823 = vld [vmem:[%s397 + $0x768] sm:$0xff]
        %v3824 = vld [vmem:[%s397 + $0x770] sm:$0xff]
        %v3825 = vld [vmem:[%s397 + $0x778] sm:$0xff]
        %v3826 = vld [vmem:[%s397 + $0x780] sm:$0xff]
        %v3827 = vld [vmem:[%s397 + $0x788] sm:$0xff]
        %v3828 = vld [vmem:[%s397 + $0x790] sm:$0xff]
        %v3829 = vld [vmem:[%s397 + $0x798] sm:$0xff]
        %v3830 = vld [vmem:[%s397 + $0x7a0] sm:$0xff]
        %v3831 = vld [vmem:[%s397 + $0x7a8] sm:$0xff]
        %v3832 = vld [vmem:[%s397 + $0x7b0] sm:$0xff]
        %v3833 = vld [vmem:[%s397 + $0x7b8] sm:$0xff]
        %v3834 = vld [vmem:[%s397 + $0x7c0] sm:$0xff]
        %v3835 = vld [vmem:[%s397 + $0x7c8] sm:$0xff]
        %v3836 = vld [vmem:[%s397 + $0x7d0] sm:$0xff]
        %v3837 = vld [vmem:[%s397 + $0x7d8] sm:$0xff]
        %v3838 = vld [vmem:[%s397 + $0x7e0] sm:$0xff]
        %v3839 = vld [vmem:[%s397 + $0x7e8] sm:$0xff]
        %v3840 = vld [vmem:[%s397 + $0x7f0] sm:$0xff]
        %v3841 = vld [vmem:[%s397 + $0x7f8] sm:$0xff]
        %v3842 = vld [vmem:[%s397 + $0x800] sm:$0xff]
        %v3843 = vld [vmem:[%s397 + $0x808] sm:$0xff]
        %v3844 = vld [vmem:[%s397 + $0x810] sm:$0xff]
        %v3845 = vld [vmem:[%s397 + $0x818] sm:$0xff]
        %v3846 = vld [vmem:[%s397 + $0x820] sm:$0xff]
        %v3847 = vld [vmem:[%s397 + $0x828] sm:$0xff]
        %v3848 = vld [vmem:[%s397 + $0x830] sm:$0xff]
        %v3849 = vld [vmem:[%s397 + $0x838] sm:$0xff]
        %v3850 = vld [vmem:[%s397 + $0x840] sm:$0xff]
        %v3851 = vld [vmem:[%s397 + $0x848] sm:$0xff]
        %v3852 = vld [vmem:[%s397 + $0x850] sm:$0xff]
        %v3853 = vld [vmem:[%s397 + $0x858] sm:$0xff]
        %v3854 = vld [vmem:[%s397 + $0x860] sm:$0xff]
        %v3855 = vld [vmem:[%s397 + $0x868] sm:$0xff]
        %v3856 = vld [vmem:[%s397 + $0x870] sm:$0xff]
        %v3857 = vld [vmem:[%s397 + $0x878] sm:$0xff]
        %v3858 = vld [vmem:[%s397 + $0x880] sm:$0xff]
        %v3859 = vld [vmem:[%s397 + $0x888] sm:$0xff]
        %v3860 = vld [vmem:[%s397 + $0x890] sm:$0xff]
        %v3861 = vld [vmem:[%s397 + $0x898] sm:$0xff]
        %v3862 = vld [vmem:[%s397 + $0x8a0] sm:$0xff]
        %v3863 = vld [vmem:[%s397 + $0x8a8] sm:$0xff]
        %v3864 = vld [vmem:[%s397 + $0x8b0] sm:$0xff]
        %v3865 = vld [vmem:[%s397 + $0x8b8] sm:$0xff]
        %v3866 = vld [vmem:[%s397 + $0x8c0] sm:$0xff]
        %v3867 = vld [vmem:[%s397 + $0x8c8] sm:$0xff]
        %v3868 = vld [vmem:[%s397 + $0x8d0] sm:$0xff]
        %v3869 = vld [vmem:[%s397 + $0x8d8] sm:$0xff]
        %v3870 = vld [vmem:[%s397 + $0x8e0] sm:$0xff]
        %v3871 = vld [vmem:[%s397 + $0x8e8] sm:$0xff]
        %v3872 = vld [vmem:[%s397 + $0x8f0] sm:$0xff]
        %v3873 = vld [vmem:[%s397 + $0x8f8] sm:$0xff]
        %v3874 = vld [vmem:[%s397 + $0x900] sm:$0xff]
        %v3875 = vld [vmem:[%s397 + $0x908] sm:$0xff]
        %v3876 = vld [vmem:[%s397 + $0x910] sm:$0xff]
        %v3877 = vld [vmem:[%s397 + $0x918] sm:$0xff]
        %v3878 = vld [vmem:[%s397 + $0x920] sm:$0xff]
        %v3879 = vld [vmem:[%s397 + $0x928] sm:$0xff]
        %v3880 = vld [vmem:[%s397 + $0x930] sm:$0xff]
        %v3881 = vld [vmem:[%s397 + $0x938] sm:$0xff]
        %v3882 = vld [vmem:[%s397 + $0x940] sm:$0xff]
        %v3883 = vld [vmem:[%s397 + $0x948] sm:$0xff]
        %v3884 = vld [vmem:[%s397 + $0x950] sm:$0xff]
        %v3885 = vld [vmem:[%s397 + $0x958] sm:$0xff]
        %v3886 = vld [vmem:[%s397 + $0x960] sm:$0xff]
        %v3887 = vld [vmem:[%s397 + $0x968] sm:$0xff]
        %v3888 = vld [vmem:[%s397 + $0x970] sm:$0xff]
        %v3889 = vld [vmem:[%s397 + $0x978] sm:$0xff]
        %v3890 = vld [vmem:[%s397 + $0x980] sm:$0xff]
        %v3891 = vld [vmem:[%s397 + $0x988] sm:$0xff]
        %v3892 = vld [vmem:[%s397 + $0x990] sm:$0xff]
        %v3893 = vld [vmem:[%s397 + $0x998] sm:$0xff]
        %v3894 = vld [vmem:[%s397 + $0x9a0] sm:$0xff]
        %v3895 = vld [vmem:[%s397 + $0x9a8] sm:$0xff]
        %v3896 = vld [vmem:[%s397 + $0x9b0] sm:$0xff]
        %v3897 = vld [vmem:[%s397 + $0x9b8] sm:$0xff]
        %v3898 = vld [vmem:[%s397 + $0x9c0] sm:$0xff]
        %v3899 = vld [vmem:[%s397 + $0x9c8] sm:$0xff]
        %v3900 = vld [vmem:[%s397 + $0x9d0] sm:$0xff]
        %v3901 = vld [vmem:[%s397 + $0x9d8] sm:$0xff]
        %v3902 = vld [vmem:[%s397 + $0x9e0] sm:$0xff]
        %v3903 = vld [vmem:[%s397 + $0x9e8] sm:$0xff]
        %v3904 = vld [vmem:[%s397 + $0x9f0] sm:$0xff]
        %v3905 = vld [vmem:[%s397 + $0x9f8] sm:$0xff]
        %v3906 = vld [vmem:[%s397 + $0xa00] sm:$0xff]
        %v3907 = vld [vmem:[%s397 + $0xa08] sm:$0xff]
        %v3908 = vld [vmem:[%s397 + $0xa10] sm:$0xff]
        %v3909 = vld [vmem:[%s397 + $0xa18] sm:$0xff]
        %v3910 = vld [vmem:[%s397 + $0xa20] sm:$0xff]
        %v3911 = vld [vmem:[%s397 + $0xa28] sm:$0xff]
        %v3912 = vld [vmem:[%s397 + $0xa30] sm:$0xff]
        %v3913 = vld [vmem:[%s397 + $0xa38] sm:$0xff]
        %v3914 = vld [vmem:[%s397 + $0xa40] sm:$0xff]
        %v3915 = vld [vmem:[%s397 + $0xa48] sm:$0xff]
        %v3916 = vld [vmem:[%s397 + $0xa50] sm:$0xff]
        %v3917 = vld [vmem:[%s397 + $0xa58] sm:$0xff]
        %v3918 = vld [vmem:[%s397 + $0xa60] sm:$0xff]
        %v3919 = vld [vmem:[%s397 + $0xa68] sm:$0xff]
        %v3920 = vld [vmem:[%s397 + $0xa70] sm:$0xff]
        %v3921 = vld [vmem:[%s397 + $0xa78] sm:$0xff]
        %v3922 = vld [vmem:[%s397 + $0xa80] sm:$0xff]
        %v3923 = vld [vmem:[%s397 + $0xa88] sm:$0xff]
        %v3924 = vld [vmem:[%s397 + $0xa90] sm:$0xff]
        %v3925 = vld [vmem:[%s397 + $0xa98] sm:$0xff]
        %v3926 = vld [vmem:[%s397 + $0xaa0] sm:$0xff]
        %v3927 = vld [vmem:[%s397 + $0xaa8] sm:$0xff]
        %v3928 = vld [vmem:[%s397 + $0xab0] sm:$0xff]
        %v3929 = vld [vmem:[%s397 + $0xab8] sm:$0xff]
        %v3930 = vld [vmem:[%s397 + $0xac0] sm:$0xff]
        %v3931 = vld [vmem:[%s397 + $0xac8] sm:$0xff]
        %v3932 = vld [vmem:[%s397 + $0xad0] sm:$0xff]
        %v3933 = vld [vmem:[%s397 + $0xad8] sm:$0xff]
        %v3934 = vld [vmem:[%s397 + $0xae0] sm:$0xff]
        %v3935 = vld [vmem:[%s397 + $0xae8] sm:$0xff]
        %v3936 = vld [vmem:[%s397 + $0xaf0] sm:$0xff]
        %v3937 = vld [vmem:[%s397 + $0xaf8] sm:$0xff]
        %v3938 = vld [vmem:[%s397 + $0xb00] sm:$0xff]
        %v3939 = vld [vmem:[%s397 + $0xb08] sm:$0xff]
        %v3940 = vld [vmem:[%s397 + $0xb10] sm:$0xff]
        %v3941 = vld [vmem:[%s397 + $0xb18] sm:$0xff]
        %v3942 = vld [vmem:[%s397 + $0xb20] sm:$0xff]
        %v3943 = vld [vmem:[%s397 + $0xb28] sm:$0xff]
        %v3944 = vld [vmem:[%s397 + $0xb30] sm:$0xff]
        %v3945 = vld [vmem:[%s397 + $0xb38] sm:$0xff]
        %v3946 = vld [vmem:[%s397 + $0xb40] sm:$0xff]
        %v3947 = vld [vmem:[%s397 + $0xb48] sm:$0xff]
        %v3948 = vld [vmem:[%s397 + $0xb50] sm:$0xff]
        %v3949 = vld [vmem:[%s397 + $0xb58] sm:$0xff]
        %v3950 = vld [vmem:[%s397 + $0xb60] sm:$0xff]
        %v3951 = vld [vmem:[%s397 + $0xb68] sm:$0xff]
        %v3952 = vld [vmem:[%s397 + $0xb70] sm:$0xff]
        %v3953 = vld [vmem:[%s397 + $0xb78] sm:$0xff]
        %v3954 = vld [vmem:[%s397 + $0xb80] sm:$0xff]
        %v3955 = vld [vmem:[%s397 + $0xb88] sm:$0xff]
        %v3956 = vld [vmem:[%s397 + $0xb90] sm:$0xff]
        %v3957 = vld [vmem:[%s397 + $0xb98] sm:$0xff]
        %v3958 = vld [vmem:[%s397 + $0xba0] sm:$0xff]
        %v3959 = vld [vmem:[%s397 + $0xba8] sm:$0xff]
        %v3960 = vld [vmem:[%s397 + $0xbb0] sm:$0xff]
        %v3961 = vld [vmem:[%s397 + $0xbb8] sm:$0xff]
        %v3962 = vld [vmem:[%s397 + $0xbc0] sm:$0xff]
        %v3963 = vld [vmem:[%s397 + $0xbc8] sm:$0xff]
        %v3964 = vld [vmem:[%s397 + $0xbd0] sm:$0xff]
        %v3965 = vld [vmem:[%s397 + $0xbd8] sm:$0xff]
        %v3966 = vld [vmem:[%s397 + $0xbe0] sm:$0xff]
        %v3967 = vld [vmem:[%s397 + $0xbe8] sm:$0xff]
        %v3968 = vld [vmem:[%s397 + $0xbf0] sm:$0xff]
        %v3969 = vld [vmem:[%s397 + $0xbf8] sm:$0xff]
        %v3970 = vld [vmem:[%s397 + $0xc00] sm:$0xff]
        %v3971 = vld [vmem:[%s397 + $0xc08] sm:$0xff]
        %v3972 = vld [vmem:[%s397 + $0xc10] sm:$0xff]
        %v3973 = vld [vmem:[%s397 + $0xc18] sm:$0xff]
        %v3974 = vld [vmem:[%s397 + $0xc20] sm:$0xff]
        %v3975 = vld [vmem:[%s397 + $0xc28] sm:$0xff]
        %v3976 = vld [vmem:[%s397 + $0xc30] sm:$0xff]
        %v3977 = vld [vmem:[%s397 + $0xc38] sm:$0xff]
        %v3978 = vld [vmem:[%s397 + $0xc40] sm:$0xff]
        %v3979 = vld [vmem:[%s397 + $0xc48] sm:$0xff]
        %v3980 = vld [vmem:[%s397 + $0xc50] sm:$0xff]
        %v3981 = vld [vmem:[%s397 + $0xc58] sm:$0xff]
        %v3982 = vld [vmem:[%s397 + $0xc60] sm:$0xff]
        %v3983 = vld [vmem:[%s397 + $0xc68] sm:$0xff]
        %v3984 = vld [vmem:[%s397 + $0xc70] sm:$0xff]
        %v3985 = vld [vmem:[%s397 + $0xc78] sm:$0xff]
        %v3986 = vld [vmem:[%s397 + $0xc80] sm:$0xff]
        %v3987 = vld [vmem:[%s397 + $0xc88] sm:$0xff]
        %v3988 = vld [vmem:[%s397 + $0xc90] sm:$0xff]
        %v3989 = vld [vmem:[%s397 + $0xc98] sm:$0xff]
        %v3990 = vld [vmem:[%s397 + $0xca0] sm:$0xff]
        %v3991 = vld [vmem:[%s397 + $0xca8] sm:$0xff]
        %v3992 = vld [vmem:[%s397 + $0xcb0] sm:$0xff]
        %v3993 = vld [vmem:[%s397 + $0xcb8] sm:$0xff]
        %v3994 = vld [vmem:[%s397 + $0xcc0] sm:$0xff]
        %v3995 = vld [vmem:[%s397 + $0xcc8] sm:$0xff]
        %v3996 = vld [vmem:[%s397 + $0xcd0] sm:$0xff]
        %v3997 = vld [vmem:[%s397 + $0xcd8] sm:$0xff]
        %v3998 = vld [vmem:[%s397 + $0xce0] sm:$0xff]
        %v3999 = vld [vmem:[%s397 + $0xce8] sm:$0xff]
        %v4000 = vld [vmem:[%s397 + $0xcf0] sm:$0xff]
        %v4001 = vld [vmem:[%s397 + $0xcf8] sm:$0xff]
        %v4002 = vld [vmem:[%s397 + $0xd00] sm:$0xff]
        %v4003 = vld [vmem:[%s397 + $0xd08] sm:$0xff]
        %v4004 = vld [vmem:[%s397 + $0xd10] sm:$0xff]
        %v4005 = vld [vmem:[%s397 + $0xd18] sm:$0xff]
        %v4006 = vld [vmem:[%s397 + $0xd20] sm:$0xff]
        %v4007 = vld [vmem:[%s397 + $0xd28] sm:$0xff]
        %v4008 = vld [vmem:[%s397 + $0xd30] sm:$0xff]
        %v4009 = vld [vmem:[%s397 + $0xd38] sm:$0xff]
        %v4010 = vld [vmem:[%s397 + $0xd40] sm:$0xff]
        %v4011 = vld [vmem:[%s397 + $0xd48] sm:$0xff]
        %v4012 = vld [vmem:[%s397 + $0xd50] sm:$0xff]
        %v4013 = vld [vmem:[%s397 + $0xd58] sm:$0xff]
        %v4014 = vld [vmem:[%s397 + $0xd60] sm:$0xff]
        %v4015 = vld [vmem:[%s397 + $0xd68] sm:$0xff]
        %v4016 = vld [vmem:[%s397 + $0xd70] sm:$0xff]
        %v4017 = vld [vmem:[%s397 + $0xd78] sm:$0xff]
        %v4018 = vld [vmem:[%s397 + $0xd80] sm:$0xff]
        %v4019 = vld [vmem:[%s397 + $0xd88] sm:$0xff]
        %v4020 = vld [vmem:[%s397 + $0xd90] sm:$0xff]
        %v4021 = vld [vmem:[%s397 + $0xd98] sm:$0xff]
        %v4022 = vld [vmem:[%s397 + $0xda0] sm:$0xff]
        %v4023 = vld [vmem:[%s397 + $0xda8] sm:$0xff]
        %v4024 = vld [vmem:[%s397 + $0xdb0] sm:$0xff]
        %v4025 = vld [vmem:[%s397 + $0xdb8] sm:$0xff]
        %v4026 = vld [vmem:[%s397 + $0xdc0] sm:$0xff]
        %v4027 = vld [vmem:[%s397 + $0xdc8] sm:$0xff]
        %v4028 = vld [vmem:[%s397 + $0xdd0] sm:$0xff]
        %v4029 = vld [vmem:[%s397 + $0xdd8] sm:$0xff]
        %v4030 = vld [vmem:[%s397 + $0xde0] sm:$0xff]
        %v4031 = vld [vmem:[%s397 + $0xde8] sm:$0xff]
        %v4032 = vld [vmem:[%s397 + $0xdf0] sm:$0xff]
        %v4033 = vld [vmem:[%s397 + $0xdf8] sm:$0xff]
        %v4034 = vld [vmem:[%s397 + $0xe00] sm:$0xff]
        %v4035 = vld [vmem:[%s397 + $0xe08] sm:$0xff]
        %v4036 = vld [vmem:[%s397 + $0xe10] sm:$0xff]
        %v4037 = vld [vmem:[%s397 + $0xe18] sm:$0xff]
        %v4038 = vld [vmem:[%s397 + $0xe20] sm:$0xff]
        %v4039 = vld [vmem:[%s397 + $0xe28] sm:$0xff]
        %v4040 = vld [vmem:[%s397 + $0xe30] sm:$0xff]
        %v4041 = vld [vmem:[%s397 + $0xe38] sm:$0xff]
        %v4042 = vld [vmem:[%s397 + $0xe40] sm:$0xff]
        %v4043 = vld [vmem:[%s397 + $0xe48] sm:$0xff]
        %v4044 = vld [vmem:[%s397 + $0xe50] sm:$0xff]
        %v4045 = vld [vmem:[%s397 + $0xe58] sm:$0xff]
        %v4046 = vld [vmem:[%s397 + $0xe60] sm:$0xff]
        %v4047 = vld [vmem:[%s397 + $0xe68] sm:$0xff]
        %v4048 = vld [vmem:[%s397 + $0xe70] sm:$0xff]
        %v4049 = vld [vmem:[%s397 + $0xe78] sm:$0xff]
        %v4050 = vld [vmem:[%s397 + $0xe80] sm:$0xff]
        %v4051 = vld [vmem:[%s397 + $0xe88] sm:$0xff]
        %v4052 = vld [vmem:[%s397 + $0xe90] sm:$0xff]
        %v4053 = vld [vmem:[%s397 + $0xe98] sm:$0xff]
        %v4054 = vld [vmem:[%s397 + $0xea0] sm:$0xff]
        %v4055 = vld [vmem:[%s397 + $0xea8] sm:$0xff]
        %v4056 = vld [vmem:[%s397 + $0xeb0] sm:$0xff]
        %v4057 = vld [vmem:[%s397 + $0xeb8] sm:$0xff]
        %v4058 = vld [vmem:[%s397 + $0xec0] sm:$0xff]
        %v4059 = vld [vmem:[%s397 + $0xec8] sm:$0xff]
        %v4060 = vld [vmem:[%s397 + $0xed0] sm:$0xff]
        %v4061 = vld [vmem:[%s397 + $0xed8] sm:$0xff]
        %v4062 = vld [vmem:[%s397 + $0xee0] sm:$0xff]
        %v4063 = vld [vmem:[%s397 + $0xee8] sm:$0xff]
        %v4064 = vld [vmem:[%s397 + $0xef0] sm:$0xff]
        %v4065 = vld [vmem:[%s397 + $0xef8] sm:$0xff]
        %v4066 = vld [vmem:[%s397 + $0xf00] sm:$0xff]
        %v4067 = vld [vmem:[%s397 + $0xf08] sm:$0xff]
        %v4068 = vld [vmem:[%s397 + $0xf10] sm:$0xff]
        %v4069 = vld [vmem:[%s397 + $0xf18] sm:$0xff]
        %v4070 = vld [vmem:[%s397 + $0xf20] sm:$0xff]
        %v4071 = vld [vmem:[%s397 + $0xf28] sm:$0xff]
        %v4072 = vld [vmem:[%s397 + $0xf30] sm:$0xff]
        %v4073 = vld [vmem:[%s397 + $0xf38] sm:$0xff]
        %v4074 = vld [vmem:[%s397 + $0xf40] sm:$0xff]
        %v4075 = vld [vmem:[%s397 + $0xf48] sm:$0xff]
        %v4076 = vld [vmem:[%s397 + $0xf50] sm:$0xff]
        %v4077 = vld [vmem:[%s397 + $0xf58] sm:$0xff]
        %v4078 = vld [vmem:[%s397 + $0xf60] sm:$0xff]
        %v4079 = vld [vmem:[%s397 + $0xf68] sm:$0xff]
        %v4080 = vld [vmem:[%s397 + $0xf70] sm:$0xff]
        %v4081 = vld [vmem:[%s397 + $0xf78] sm:$0xff]
        %v4082 = vld [vmem:[%s397 + $0xf80] sm:$0xff]
        %v4083 = vld [vmem:[%s397 + $0xf88] sm:$0xff]
        %v4084 = vld [vmem:[%s397 + $0xf90] sm:$0xff]
        %v4085 = vld [vmem:[%s397 + $0xf98] sm:$0xff]
        %v4086 = vld [vmem:[%s397 + $0xfa0] sm:$0xff]
        %v4087 = vld [vmem:[%s397 + $0xfa8] sm:$0xff]
        %v4088 = vld [vmem:[%s397 + $0xfb0] sm:$0xff]
        %v4089 = vld [vmem:[%s397 + $0xfb8] sm:$0xff]
        %v4090 = vld [vmem:[%s397 + $0xfc0] sm:$0xff]
        %v4091 = vld [vmem:[%s397 + $0xfc8] sm:$0xff]
        %v4092 = vld [vmem:[%s397 + $0xfd0] sm:$0xff]
        %v4093 = vld [vmem:[%s397 + $0xfd8] sm:$0xff]
        %v4094 = vld [vmem:[%s397 + $0xfe0] sm:$0xff]
        %v4095 = vld [vmem:[%s397 + $0xfe8] sm:$0xff]
        %v4096 = vld [vmem:[%s397 + $0xff0] sm:$0xff]
        %v4097 = vld [vmem:[%s397 + $0xff8] sm:$0xff]
        %v4098 = vunpack.c.l.s8.bf16 %v3586
        %v4099 = vunpack.c.l.s8.bf16 %v3587
        %v4100 = vunpack.c.l.s8.bf16 %v3588
        %v4101 = vunpack.c.l.s8.bf16 %v3589
        %v4102 = vunpack.c.l.s8.bf16 %v3590
        %v4103 = vunpack.c.l.s8.bf16 %v3591
        %v4104 = vunpack.c.l.s8.bf16 %v3592
        %v4105 = vunpack.c.l.s8.bf16 %v3593
        %v4106 = vunpack.c.l.s8.bf16 %v3594
        %v4107 = vunpack.c.l.s8.bf16 %v3595
        %v4108 = vunpack.c.l.s8.bf16 %v3596
        %v4109 = vunpack.c.l.s8.bf16 %v3597
        %v4110 = vunpack.c.l.s8.bf16 %v3598
        %v4111 = vunpack.c.l.s8.bf16 %v3599
        %v4112 = vunpack.c.l.s8.bf16 %v3600
        %v4113 = vunpack.c.l.s8.bf16 %v3601
        %v4114 = vunpack.c.h.s8.bf16 %v3586
        %v4115 = vunpack.c.h.s8.bf16 %v3587
        %v4116 = vunpack.c.h.s8.bf16 %v3588
        %v4117 = vunpack.c.h.s8.bf16 %v3589
        %v4118 = vunpack.c.h.s8.bf16 %v3590
        %v4119 = vunpack.c.h.s8.bf16 %v3591
        %v4120 = vunpack.c.h.s8.bf16 %v3592
        %v4121 = vunpack.c.h.s8.bf16 %v3593
        %v4122 = vunpack.c.h.s8.bf16 %v3594
        %v4123 = vunpack.c.h.s8.bf16 %v3595
        %v4124 = vunpack.c.h.s8.bf16 %v3596
        %v4125 = vunpack.c.h.s8.bf16 %v3597
        %v4126 = vunpack.c.h.s8.bf16 %v3598
        %v4127 = vunpack.c.h.s8.bf16 %v3599
        %v4128 = vunpack.c.h.s8.bf16 %v3600
        %v4129 = vunpack.c.h.s8.bf16 %v3601
        %v4130 = vunpack.c.l.s8.bf16 %v3602
        %v4131 = vunpack.c.l.s8.bf16 %v3603
        %v4132 = vunpack.c.l.s8.bf16 %v3604
        %v4133 = vunpack.c.l.s8.bf16 %v3605
        %v4134 = vunpack.c.l.s8.bf16 %v3606
        %v4135 = vunpack.c.l.s8.bf16 %v3607
        %v4136 = vunpack.c.l.s8.bf16 %v3608
        %v4137 = vunpack.c.l.s8.bf16 %v3609
        %v4138 = vunpack.c.l.s8.bf16 %v3610
        %v4139 = vunpack.c.l.s8.bf16 %v3611
        %v4140 = vunpack.c.l.s8.bf16 %v3612
        %v4141 = vunpack.c.l.s8.bf16 %v3613
        %v4142 = vunpack.c.l.s8.bf16 %v3614
        %v4143 = vunpack.c.l.s8.bf16 %v3615
        %v4144 = vunpack.c.l.s8.bf16 %v3616
        %v4145 = vunpack.c.l.s8.bf16 %v3617
        %v4146 = vunpack.c.h.s8.bf16 %v3602
        %v4147 = vunpack.c.h.s8.bf16 %v3603
        %v4148 = vunpack.c.h.s8.bf16 %v3604
        %v4149 = vunpack.c.h.s8.bf16 %v3605
        %v4150 = vunpack.c.h.s8.bf16 %v3606
        %v4151 = vunpack.c.h.s8.bf16 %v3607
        %v4152 = vunpack.c.h.s8.bf16 %v3608
        %v4153 = vunpack.c.h.s8.bf16 %v3609
        %v4154 = vunpack.c.h.s8.bf16 %v3610
        %v4155 = vunpack.c.h.s8.bf16 %v3611
        %v4156 = vunpack.c.h.s8.bf16 %v3612
        %v4157 = vunpack.c.h.s8.bf16 %v3613
        %v4158 = vunpack.c.h.s8.bf16 %v3614
        %v4159 = vunpack.c.h.s8.bf16 %v3615
        %v4160 = vunpack.c.h.s8.bf16 %v3616
        %v4161 = vunpack.c.h.s8.bf16 %v3617
        %v4162 = vunpack.c.l.s8.bf16 %v3618
        %v4163 = vunpack.c.l.s8.bf16 %v3619
        %v4164 = vunpack.c.l.s8.bf16 %v3620
        %v4165 = vunpack.c.l.s8.bf16 %v3621
        %v4166 = vunpack.c.l.s8.bf16 %v3622
        %v4167 = vunpack.c.l.s8.bf16 %v3623
        %v4168 = vunpack.c.l.s8.bf16 %v3624
        %v4169 = vunpack.c.l.s8.bf16 %v3625
        %v4170 = vunpack.c.l.s8.bf16 %v3626
        %v4171 = vunpack.c.l.s8.bf16 %v3627
        %v4172 = vunpack.c.l.s8.bf16 %v3628
        %v4173 = vunpack.c.l.s8.bf16 %v3629
        %v4174 = vunpack.c.l.s8.bf16 %v3630
        %v4175 = vunpack.c.l.s8.bf16 %v3631
        %v4176 = vunpack.c.l.s8.bf16 %v3632
        %v4177 = vunpack.c.l.s8.bf16 %v3633
        %v4178 = vunpack.c.h.s8.bf16 %v3618
        %v4179 = vunpack.c.h.s8.bf16 %v3619
        %v4180 = vunpack.c.h.s8.bf16 %v3620
        %v4181 = vunpack.c.h.s8.bf16 %v3621
        %v4182 = vunpack.c.h.s8.bf16 %v3622
        %v4183 = vunpack.c.h.s8.bf16 %v3623
        %v4184 = vunpack.c.h.s8.bf16 %v3624
        %v4185 = vunpack.c.h.s8.bf16 %v3625
        %v4186 = vunpack.c.h.s8.bf16 %v3626
        %v4187 = vunpack.c.h.s8.bf16 %v3627
        %v4188 = vunpack.c.h.s8.bf16 %v3628
        %v4189 = vunpack.c.h.s8.bf16 %v3629
        %v4190 = vunpack.c.h.s8.bf16 %v3630
        %v4191 = vunpack.c.h.s8.bf16 %v3631
        %v4192 = vunpack.c.h.s8.bf16 %v3632
        %v4193 = vunpack.c.h.s8.bf16 %v3633
        %v4194 = vunpack.c.l.s8.bf16 %v3634
        %v4195 = vunpack.c.l.s8.bf16 %v3635
        %v4196 = vunpack.c.l.s8.bf16 %v3636
        %v4197 = vunpack.c.l.s8.bf16 %v3637
        %v4198 = vunpack.c.l.s8.bf16 %v3638
        %v4199 = vunpack.c.l.s8.bf16 %v3639
        %v4200 = vunpack.c.l.s8.bf16 %v3640
        %v4201 = vunpack.c.l.s8.bf16 %v3641
        %v4202 = vunpack.c.l.s8.bf16 %v3642
        %v4203 = vunpack.c.l.s8.bf16 %v3643
        %v4204 = vunpack.c.l.s8.bf16 %v3644
        %v4205 = vunpack.c.l.s8.bf16 %v3645
        %v4206 = vunpack.c.l.s8.bf16 %v3646
        %v4207 = vunpack.c.l.s8.bf16 %v3647
        %v4208 = vunpack.c.l.s8.bf16 %v3648
        %v4209 = vunpack.c.l.s8.bf16 %v3649
        %v4210 = vunpack.c.h.s8.bf16 %v3634
        %v4211 = vunpack.c.h.s8.bf16 %v3635
        %v4212 = vunpack.c.h.s8.bf16 %v3636
        %v4213 = vunpack.c.h.s8.bf16 %v3637
        %v4214 = vunpack.c.h.s8.bf16 %v3638
        %v4215 = vunpack.c.h.s8.bf16 %v3639
        %v4216 = vunpack.c.h.s8.bf16 %v3640
        %v4217 = vunpack.c.h.s8.bf16 %v3641
        %v4218 = vunpack.c.h.s8.bf16 %v3642
        %v4219 = vunpack.c.h.s8.bf16 %v3643
        %v4220 = vunpack.c.h.s8.bf16 %v3644
        %v4221 = vunpack.c.h.s8.bf16 %v3645
        %v4222 = vunpack.c.h.s8.bf16 %v3646
        %v4223 = vunpack.c.h.s8.bf16 %v3647
        %v4224 = vunpack.c.h.s8.bf16 %v3648
        %v4225 = vunpack.c.h.s8.bf16 %v3649
        %v4226 = vunpack.c.l.s8.bf16 %v3650
        %v4227 = vunpack.c.l.s8.bf16 %v3651
        %v4228 = vunpack.c.l.s8.bf16 %v3652
        %v4229 = vunpack.c.l.s8.bf16 %v3653
        %v4230 = vunpack.c.l.s8.bf16 %v3654
        %v4231 = vunpack.c.l.s8.bf16 %v3655
        %v4232 = vunpack.c.l.s8.bf16 %v3656
        %v4233 = vunpack.c.l.s8.bf16 %v3657
        %v4234 = vunpack.c.l.s8.bf16 %v3658
        %v4235 = vunpack.c.l.s8.bf16 %v3659
        %v4236 = vunpack.c.l.s8.bf16 %v3660
        %v4237 = vunpack.c.l.s8.bf16 %v3661
        %v4238 = vunpack.c.l.s8.bf16 %v3662
        %v4239 = vunpack.c.l.s8.bf16 %v3663
        %v4240 = vunpack.c.l.s8.bf16 %v3664
        %v4241 = vunpack.c.l.s8.bf16 %v3665
        %v4242 = vunpack.c.h.s8.bf16 %v3650
        %v4243 = vunpack.c.h.s8.bf16 %v3651
        %v4244 = vunpack.c.h.s8.bf16 %v3652
        %v4245 = vunpack.c.h.s8.bf16 %v3653
        %v4246 = vunpack.c.h.s8.bf16 %v3654
        %v4247 = vunpack.c.h.s8.bf16 %v3655
        %v4248 = vunpack.c.h.s8.bf16 %v3656
        %v4249 = vunpack.c.h.s8.bf16 %v3657
        %v4250 = vunpack.c.h.s8.bf16 %v3658
        %v4251 = vunpack.c.h.s8.bf16 %v3659
        %v4252 = vunpack.c.h.s8.bf16 %v3660
        %v4253 = vunpack.c.h.s8.bf16 %v3661
        %v4254 = vunpack.c.h.s8.bf16 %v3662
        %v4255 = vunpack.c.h.s8.bf16 %v3663
        %v4256 = vunpack.c.h.s8.bf16 %v3664
        %v4257 = vunpack.c.h.s8.bf16 %v3665
        %v4258 = vunpack.c.l.s8.bf16 %v3666
        %v4259 = vunpack.c.l.s8.bf16 %v3667
        %v4260 = vunpack.c.l.s8.bf16 %v3668
        %v4261 = vunpack.c.l.s8.bf16 %v3669
        %v4262 = vunpack.c.l.s8.bf16 %v3670
        %v4263 = vunpack.c.l.s8.bf16 %v3671
        %v4264 = vunpack.c.l.s8.bf16 %v3672
        %v4265 = vunpack.c.l.s8.bf16 %v3673
        %v4266 = vunpack.c.l.s8.bf16 %v3674
        %v4267 = vunpack.c.l.s8.bf16 %v3675
        %v4268 = vunpack.c.l.s8.bf16 %v3676
        %v4269 = vunpack.c.l.s8.bf16 %v3677
        %v4270 = vunpack.c.l.s8.bf16 %v3678
        %v4271 = vunpack.c.l.s8.bf16 %v3679
        %v4272 = vunpack.c.l.s8.bf16 %v3680
        %v4273 = vunpack.c.l.s8.bf16 %v3681
        %v4274 = vunpack.c.h.s8.bf16 %v3666
        %v4275 = vunpack.c.h.s8.bf16 %v3667
        %v4276 = vunpack.c.h.s8.bf16 %v3668
        %v4277 = vunpack.c.h.s8.bf16 %v3669
        %v4278 = vunpack.c.h.s8.bf16 %v3670
        %v4279 = vunpack.c.h.s8.bf16 %v3671
        %v4280 = vunpack.c.h.s8.bf16 %v3672
        %v4281 = vunpack.c.h.s8.bf16 %v3673
        %v4282 = vunpack.c.h.s8.bf16 %v3674
        %v4283 = vunpack.c.h.s8.bf16 %v3675
        %v4284 = vunpack.c.h.s8.bf16 %v3676
        %v4285 = vunpack.c.h.s8.bf16 %v3677
        %v4286 = vunpack.c.h.s8.bf16 %v3678
        %v4287 = vunpack.c.h.s8.bf16 %v3679
        %v4288 = vunpack.c.h.s8.bf16 %v3680
        %v4289 = vunpack.c.h.s8.bf16 %v3681
        %v4290 = vunpack.c.l.s8.bf16 %v3682
        %v4291 = vunpack.c.l.s8.bf16 %v3683
        %v4292 = vunpack.c.l.s8.bf16 %v3684
        %v4293 = vunpack.c.l.s8.bf16 %v3685
        %v4294 = vunpack.c.l.s8.bf16 %v3686
        %v4295 = vunpack.c.l.s8.bf16 %v3687
        %v4296 = vunpack.c.l.s8.bf16 %v3688
        %v4297 = vunpack.c.l.s8.bf16 %v3689
        %v4298 = vunpack.c.l.s8.bf16 %v3690
        %v4299 = vunpack.c.l.s8.bf16 %v3691
        %v4300 = vunpack.c.l.s8.bf16 %v3692
        %v4301 = vunpack.c.l.s8.bf16 %v3693
        %v4302 = vunpack.c.l.s8.bf16 %v3694
        %v4303 = vunpack.c.l.s8.bf16 %v3695
        %v4304 = vunpack.c.l.s8.bf16 %v3696
        %v4305 = vunpack.c.l.s8.bf16 %v3697
        %v4306 = vunpack.c.h.s8.bf16 %v3682
        %v4307 = vunpack.c.h.s8.bf16 %v3683
        %v4308 = vunpack.c.h.s8.bf16 %v3684
        %v4309 = vunpack.c.h.s8.bf16 %v3685
        %v4310 = vunpack.c.h.s8.bf16 %v3686
        %v4311 = vunpack.c.h.s8.bf16 %v3687
        %v4312 = vunpack.c.h.s8.bf16 %v3688
        %v4313 = vunpack.c.h.s8.bf16 %v3689
        %v4314 = vunpack.c.h.s8.bf16 %v3690
        %v4315 = vunpack.c.h.s8.bf16 %v3691
        %v4316 = vunpack.c.h.s8.bf16 %v3692
        %v4317 = vunpack.c.h.s8.bf16 %v3693
        %v4318 = vunpack.c.h.s8.bf16 %v3694
        %v4319 = vunpack.c.h.s8.bf16 %v3695
        %v4320 = vunpack.c.h.s8.bf16 %v3696
        %v4321 = vunpack.c.h.s8.bf16 %v3697
        %v4322 = vunpack.c.l.s8.bf16 %v3698
        %v4323 = vunpack.c.l.s8.bf16 %v3699
        %v4324 = vunpack.c.l.s8.bf16 %v3700
        %v4325 = vunpack.c.l.s8.bf16 %v3701
        %v4326 = vunpack.c.l.s8.bf16 %v3702
        %v4327 = vunpack.c.l.s8.bf16 %v3703
        %v4328 = vunpack.c.l.s8.bf16 %v3704
        %v4329 = vunpack.c.l.s8.bf16 %v3705
        %v4330 = vunpack.c.l.s8.bf16 %v3706
        %v4331 = vunpack.c.l.s8.bf16 %v3707
        %v4332 = vunpack.c.l.s8.bf16 %v3708
        %v4333 = vunpack.c.l.s8.bf16 %v3709
        %v4334 = vunpack.c.l.s8.bf16 %v3710
        %v4335 = vunpack.c.l.s8.bf16 %v3711
        %v4336 = vunpack.c.l.s8.bf16 %v3712
        %v4337 = vunpack.c.l.s8.bf16 %v3713
        %v4338 = vunpack.c.h.s8.bf16 %v3698
        %v4339 = vunpack.c.h.s8.bf16 %v3699
        %v4340 = vunpack.c.h.s8.bf16 %v3700
        %v4341 = vunpack.c.h.s8.bf16 %v3701
        %v4342 = vunpack.c.h.s8.bf16 %v3702
        %v4343 = vunpack.c.h.s8.bf16 %v3703
        %v4344 = vunpack.c.h.s8.bf16 %v3704
        %v4345 = vunpack.c.h.s8.bf16 %v3705
        %v4346 = vunpack.c.h.s8.bf16 %v3706
        %v4347 = vunpack.c.h.s8.bf16 %v3707
        %v4348 = vunpack.c.h.s8.bf16 %v3708
        %v4349 = vunpack.c.h.s8.bf16 %v3709
        %v4350 = vunpack.c.h.s8.bf16 %v3710
        %v4351 = vunpack.c.h.s8.bf16 %v3711
        %v4352 = vunpack.c.h.s8.bf16 %v3712
        %v4353 = vunpack.c.h.s8.bf16 %v3713
        %v4354 = vunpack.c.l.s8.bf16 %v3714
        %v4355 = vunpack.c.l.s8.bf16 %v3715
        %v4356 = vunpack.c.l.s8.bf16 %v3716
        %v4357 = vunpack.c.l.s8.bf16 %v3717
        %v4358 = vunpack.c.l.s8.bf16 %v3718
        %v4359 = vunpack.c.l.s8.bf16 %v3719
        %v4360 = vunpack.c.l.s8.bf16 %v3720
        %v4361 = vunpack.c.l.s8.bf16 %v3721
        %v4362 = vunpack.c.l.s8.bf16 %v3722
        %v4363 = vunpack.c.l.s8.bf16 %v3723
        %v4364 = vunpack.c.l.s8.bf16 %v3724
        %v4365 = vunpack.c.l.s8.bf16 %v3725
        %v4366 = vunpack.c.l.s8.bf16 %v3726
        %v4367 = vunpack.c.l.s8.bf16 %v3727
        %v4368 = vunpack.c.l.s8.bf16 %v3728
        %v4369 = vunpack.c.l.s8.bf16 %v3729
        %v4370 = vunpack.c.h.s8.bf16 %v3714
        %v4371 = vunpack.c.h.s8.bf16 %v3715
        %v4372 = vunpack.c.h.s8.bf16 %v3716
        %v4373 = vunpack.c.h.s8.bf16 %v3717
        %v4374 = vunpack.c.h.s8.bf16 %v3718
        %v4375 = vunpack.c.h.s8.bf16 %v3719
        %v4376 = vunpack.c.h.s8.bf16 %v3720
        %v4377 = vunpack.c.h.s8.bf16 %v3721
        %v4378 = vunpack.c.h.s8.bf16 %v3722
        %v4379 = vunpack.c.h.s8.bf16 %v3723
        %v4380 = vunpack.c.h.s8.bf16 %v3724
        %v4381 = vunpack.c.h.s8.bf16 %v3725
        %v4382 = vunpack.c.h.s8.bf16 %v3726
        %v4383 = vunpack.c.h.s8.bf16 %v3727
        %v4384 = vunpack.c.h.s8.bf16 %v3728
        %v4385 = vunpack.c.h.s8.bf16 %v3729
        %v4386 = vunpack.c.l.s8.bf16 %v3730
        %v4387 = vunpack.c.l.s8.bf16 %v3731
        %v4388 = vunpack.c.l.s8.bf16 %v3732
        %v4389 = vunpack.c.l.s8.bf16 %v3733
        %v4390 = vunpack.c.l.s8.bf16 %v3734
        %v4391 = vunpack.c.l.s8.bf16 %v3735
        %v4392 = vunpack.c.l.s8.bf16 %v3736
        %v4393 = vunpack.c.l.s8.bf16 %v3737
        %v4394 = vunpack.c.l.s8.bf16 %v3738
        %v4395 = vunpack.c.l.s8.bf16 %v3739
        %v4396 = vunpack.c.l.s8.bf16 %v3740
        %v4397 = vunpack.c.l.s8.bf16 %v3741
        %v4398 = vunpack.c.l.s8.bf16 %v3742
        %v4399 = vunpack.c.l.s8.bf16 %v3743
        %v4400 = vunpack.c.l.s8.bf16 %v3744
        %v4401 = vunpack.c.l.s8.bf16 %v3745
        %v4402 = vunpack.c.h.s8.bf16 %v3730
        %v4403 = vunpack.c.h.s8.bf16 %v3731
        %v4404 = vunpack.c.h.s8.bf16 %v3732
        %v4405 = vunpack.c.h.s8.bf16 %v3733
        %v4406 = vunpack.c.h.s8.bf16 %v3734
        %v4407 = vunpack.c.h.s8.bf16 %v3735
        %v4408 = vunpack.c.h.s8.bf16 %v3736
        %v4409 = vunpack.c.h.s8.bf16 %v3737
        %v4410 = vunpack.c.h.s8.bf16 %v3738
        %v4411 = vunpack.c.h.s8.bf16 %v3739
        %v4412 = vunpack.c.h.s8.bf16 %v3740
        %v4413 = vunpack.c.h.s8.bf16 %v3741
        %v4414 = vunpack.c.h.s8.bf16 %v3742
        %v4415 = vunpack.c.h.s8.bf16 %v3743
        %v4416 = vunpack.c.h.s8.bf16 %v3744
        %v4417 = vunpack.c.h.s8.bf16 %v3745
        %v4418 = vunpack.c.l.s8.bf16 %v3746
        %v4419 = vunpack.c.l.s8.bf16 %v3747
        %v4420 = vunpack.c.l.s8.bf16 %v3748
        %v4421 = vunpack.c.l.s8.bf16 %v3749
        %v4422 = vunpack.c.l.s8.bf16 %v3750
        %v4423 = vunpack.c.l.s8.bf16 %v3751
        %v4424 = vunpack.c.l.s8.bf16 %v3752
        %v4425 = vunpack.c.l.s8.bf16 %v3753
        %v4426 = vunpack.c.l.s8.bf16 %v3754
        %v4427 = vunpack.c.l.s8.bf16 %v3755
        %v4428 = vunpack.c.l.s8.bf16 %v3756
        %v4429 = vunpack.c.l.s8.bf16 %v3757
        %v4430 = vunpack.c.l.s8.bf16 %v3758
        %v4431 = vunpack.c.l.s8.bf16 %v3759
        %v4432 = vunpack.c.l.s8.bf16 %v3760
        %v4433 = vunpack.c.l.s8.bf16 %v3761
        %v4434 = vunpack.c.h.s8.bf16 %v3746
        %v4435 = vunpack.c.h.s8.bf16 %v3747
        %v4436 = vunpack.c.h.s8.bf16 %v3748
        %v4437 = vunpack.c.h.s8.bf16 %v3749
        %v4438 = vunpack.c.h.s8.bf16 %v3750
        %v4439 = vunpack.c.h.s8.bf16 %v3751
        %v4440 = vunpack.c.h.s8.bf16 %v3752
        %v4441 = vunpack.c.h.s8.bf16 %v3753
        %v4442 = vunpack.c.h.s8.bf16 %v3754
        %v4443 = vunpack.c.h.s8.bf16 %v3755
        %v4444 = vunpack.c.h.s8.bf16 %v3756
        %v4445 = vunpack.c.h.s8.bf16 %v3757
        %v4446 = vunpack.c.h.s8.bf16 %v3758
        %v4447 = vunpack.c.h.s8.bf16 %v3759
        %v4448 = vunpack.c.h.s8.bf16 %v3760
        %v4449 = vunpack.c.h.s8.bf16 %v3761
        %v4450 = vunpack.c.l.s8.bf16 %v3762
        %v4451 = vunpack.c.l.s8.bf16 %v3763
        %v4452 = vunpack.c.l.s8.bf16 %v3764
        %v4453 = vunpack.c.l.s8.bf16 %v3765
        %v4454 = vunpack.c.l.s8.bf16 %v3766
        %v4455 = vunpack.c.l.s8.bf16 %v3767
        %v4456 = vunpack.c.l.s8.bf16 %v3768
        %v4457 = vunpack.c.l.s8.bf16 %v3769
        %v4458 = vunpack.c.l.s8.bf16 %v3770
        %v4459 = vunpack.c.l.s8.bf16 %v3771
        %v4460 = vunpack.c.l.s8.bf16 %v3772
        %v4461 = vunpack.c.l.s8.bf16 %v3773
        %v4462 = vunpack.c.l.s8.bf16 %v3774
        %v4463 = vunpack.c.l.s8.bf16 %v3775
        %v4464 = vunpack.c.l.s8.bf16 %v3776
        %v4465 = vunpack.c.l.s8.bf16 %v3777
        %v4466 = vunpack.c.h.s8.bf16 %v3762
        %v4467 = vunpack.c.h.s8.bf16 %v3763
        %v4468 = vunpack.c.h.s8.bf16 %v3764
        %v4469 = vunpack.c.h.s8.bf16 %v3765
        %v4470 = vunpack.c.h.s8.bf16 %v3766
        %v4471 = vunpack.c.h.s8.bf16 %v3767
        %v4472 = vunpack.c.h.s8.bf16 %v3768
        %v4473 = vunpack.c.h.s8.bf16 %v3769
        %v4474 = vunpack.c.h.s8.bf16 %v3770
        %v4475 = vunpack.c.h.s8.bf16 %v3771
        %v4476 = vunpack.c.h.s8.bf16 %v3772
        %v4477 = vunpack.c.h.s8.bf16 %v3773
        %v4478 = vunpack.c.h.s8.bf16 %v3774
        %v4479 = vunpack.c.h.s8.bf16 %v3775
        %v4480 = vunpack.c.h.s8.bf16 %v3776
        %v4481 = vunpack.c.h.s8.bf16 %v3777
        %v4482 = vunpack.c.l.s8.bf16 %v3778
        %v4483 = vunpack.c.l.s8.bf16 %v3779
        %v4484 = vunpack.c.l.s8.bf16 %v3780
        %v4485 = vunpack.c.l.s8.bf16 %v3781
        %v4486 = vunpack.c.l.s8.bf16 %v3782
        %v4487 = vunpack.c.l.s8.bf16 %v3783
        %v4488 = vunpack.c.l.s8.bf16 %v3784
        %v4489 = vunpack.c.l.s8.bf16 %v3785
        %v4490 = vunpack.c.l.s8.bf16 %v3786
        %v4491 = vunpack.c.l.s8.bf16 %v3787
        %v4492 = vunpack.c.l.s8.bf16 %v3788
        %v4493 = vunpack.c.l.s8.bf16 %v3789
        %v4494 = vunpack.c.l.s8.bf16 %v3790
        %v4495 = vunpack.c.l.s8.bf16 %v3791
        %v4496 = vunpack.c.l.s8.bf16 %v3792
        %v4497 = vunpack.c.l.s8.bf16 %v3793
        %v4498 = vunpack.c.h.s8.bf16 %v3778
        %v4499 = vunpack.c.h.s8.bf16 %v3779
        %v4500 = vunpack.c.h.s8.bf16 %v3780
        %v4501 = vunpack.c.h.s8.bf16 %v3781
        %v4502 = vunpack.c.h.s8.bf16 %v3782
        %v4503 = vunpack.c.h.s8.bf16 %v3783
        %v4504 = vunpack.c.h.s8.bf16 %v3784
        %v4505 = vunpack.c.h.s8.bf16 %v3785
        %v4506 = vunpack.c.h.s8.bf16 %v3786
        %v4507 = vunpack.c.h.s8.bf16 %v3787
        %v4508 = vunpack.c.h.s8.bf16 %v3788
        %v4509 = vunpack.c.h.s8.bf16 %v3789
        %v4510 = vunpack.c.h.s8.bf16 %v3790
        %v4511 = vunpack.c.h.s8.bf16 %v3791
        %v4512 = vunpack.c.h.s8.bf16 %v3792
        %v4513 = vunpack.c.h.s8.bf16 %v3793
        %v4514 = vunpack.c.l.s8.bf16 %v3794
        %v4515 = vunpack.c.l.s8.bf16 %v3795
        %v4516 = vunpack.c.l.s8.bf16 %v3796
        %v4517 = vunpack.c.l.s8.bf16 %v3797
        %v4518 = vunpack.c.l.s8.bf16 %v3798
        %v4519 = vunpack.c.l.s8.bf16 %v3799
        %v4520 = vunpack.c.l.s8.bf16 %v3800
        %v4521 = vunpack.c.l.s8.bf16 %v3801
        %v4522 = vunpack.c.l.s8.bf16 %v3802
        %v4523 = vunpack.c.l.s8.bf16 %v3803
        %v4524 = vunpack.c.l.s8.bf16 %v3804
        %v4525 = vunpack.c.l.s8.bf16 %v3805
        %v4526 = vunpack.c.l.s8.bf16 %v3806
        %v4527 = vunpack.c.l.s8.bf16 %v3807
        %v4528 = vunpack.c.l.s8.bf16 %v3808
        %v4529 = vunpack.c.l.s8.bf16 %v3809
        %v4530 = vunpack.c.h.s8.bf16 %v3794
        %v4531 = vunpack.c.h.s8.bf16 %v3795
        %v4532 = vunpack.c.h.s8.bf16 %v3796
        %v4533 = vunpack.c.h.s8.bf16 %v3797
        %v4534 = vunpack.c.h.s8.bf16 %v3798
        %v4535 = vunpack.c.h.s8.bf16 %v3799
        %v4536 = vunpack.c.h.s8.bf16 %v3800
        %v4537 = vunpack.c.h.s8.bf16 %v3801
        %v4538 = vunpack.c.h.s8.bf16 %v3802
        %v4539 = vunpack.c.h.s8.bf16 %v3803
        %v4540 = vunpack.c.h.s8.bf16 %v3804
        %v4541 = vunpack.c.h.s8.bf16 %v3805
        %v4542 = vunpack.c.h.s8.bf16 %v3806
        %v4543 = vunpack.c.h.s8.bf16 %v3807
        %v4544 = vunpack.c.h.s8.bf16 %v3808
        %v4545 = vunpack.c.h.s8.bf16 %v3809
        %v4546 = vunpack.c.l.s8.bf16 %v3810
        %v4547 = vunpack.c.l.s8.bf16 %v3811
        %v4548 = vunpack.c.l.s8.bf16 %v3812
        %v4549 = vunpack.c.l.s8.bf16 %v3813
        %v4550 = vunpack.c.l.s8.bf16 %v3814
        %v4551 = vunpack.c.l.s8.bf16 %v3815
        %v4552 = vunpack.c.l.s8.bf16 %v3816
        %v4553 = vunpack.c.l.s8.bf16 %v3817
        %v4554 = vunpack.c.l.s8.bf16 %v3818
        %v4555 = vunpack.c.l.s8.bf16 %v3819
        %v4556 = vunpack.c.l.s8.bf16 %v3820
        %v4557 = vunpack.c.l.s8.bf16 %v3821
        %v4558 = vunpack.c.l.s8.bf16 %v3822
        %v4559 = vunpack.c.l.s8.bf16 %v3823
        %v4560 = vunpack.c.l.s8.bf16 %v3824
        %v4561 = vunpack.c.l.s8.bf16 %v3825
        %v4562 = vunpack.c.h.s8.bf16 %v3810
        %v4563 = vunpack.c.h.s8.bf16 %v3811
        %v4564 = vunpack.c.h.s8.bf16 %v3812
        %v4565 = vunpack.c.h.s8.bf16 %v3813
        %v4566 = vunpack.c.h.s8.bf16 %v3814
        %v4567 = vunpack.c.h.s8.bf16 %v3815
        %v4568 = vunpack.c.h.s8.bf16 %v3816
        %v4569 = vunpack.c.h.s8.bf16 %v3817
        %v4570 = vunpack.c.h.s8.bf16 %v3818
        %v4571 = vunpack.c.h.s8.bf16 %v3819
        %v4572 = vunpack.c.h.s8.bf16 %v3820
        %v4573 = vunpack.c.h.s8.bf16 %v3821
        %v4574 = vunpack.c.h.s8.bf16 %v3822
        %v4575 = vunpack.c.h.s8.bf16 %v3823
        %v4576 = vunpack.c.h.s8.bf16 %v3824
        %v4577 = vunpack.c.h.s8.bf16 %v3825
        %v4578 = vunpack.c.l.s8.bf16 %v3826
        %v4579 = vunpack.c.l.s8.bf16 %v3827
        %v4580 = vunpack.c.l.s8.bf16 %v3828
        %v4581 = vunpack.c.l.s8.bf16 %v3829
        %v4582 = vunpack.c.l.s8.bf16 %v3830
        %v4583 = vunpack.c.l.s8.bf16 %v3831
        %v4584 = vunpack.c.l.s8.bf16 %v3832
        %v4585 = vunpack.c.l.s8.bf16 %v3833
        %v4586 = vunpack.c.l.s8.bf16 %v3834
        %v4587 = vunpack.c.l.s8.bf16 %v3835
        %v4588 = vunpack.c.l.s8.bf16 %v3836
        %v4589 = vunpack.c.l.s8.bf16 %v3837
        %v4590 = vunpack.c.l.s8.bf16 %v3838
        %v4591 = vunpack.c.l.s8.bf16 %v3839
        %v4592 = vunpack.c.l.s8.bf16 %v3840
        %v4593 = vunpack.c.l.s8.bf16 %v3841
        %v4594 = vunpack.c.h.s8.bf16 %v3826
        %v4595 = vunpack.c.h.s8.bf16 %v3827
        %v4596 = vunpack.c.h.s8.bf16 %v3828
        %v4597 = vunpack.c.h.s8.bf16 %v3829
        %v4598 = vunpack.c.h.s8.bf16 %v3830
        %v4599 = vunpack.c.h.s8.bf16 %v3831
        %v4600 = vunpack.c.h.s8.bf16 %v3832
        %v4601 = vunpack.c.h.s8.bf16 %v3833
        %v4602 = vunpack.c.h.s8.bf16 %v3834
        %v4603 = vunpack.c.h.s8.bf16 %v3835
        %v4604 = vunpack.c.h.s8.bf16 %v3836
        %v4605 = vunpack.c.h.s8.bf16 %v3837
        %v4606 = vunpack.c.h.s8.bf16 %v3838
        %v4607 = vunpack.c.h.s8.bf16 %v3839
        %v4608 = vunpack.c.h.s8.bf16 %v3840
        %v4609 = vunpack.c.h.s8.bf16 %v3841
        %v4610 = vunpack.c.l.s8.bf16 %v3842
        %v4611 = vunpack.c.l.s8.bf16 %v3843
        %v4612 = vunpack.c.l.s8.bf16 %v3844
        %v4613 = vunpack.c.l.s8.bf16 %v3845
        %v4614 = vunpack.c.l.s8.bf16 %v3846
        %v4615 = vunpack.c.l.s8.bf16 %v3847
        %v4616 = vunpack.c.l.s8.bf16 %v3848
        %v4617 = vunpack.c.l.s8.bf16 %v3849
        %v4618 = vunpack.c.l.s8.bf16 %v3850
        %v4619 = vunpack.c.l.s8.bf16 %v3851
        %v4620 = vunpack.c.l.s8.bf16 %v3852
        %v4621 = vunpack.c.l.s8.bf16 %v3853
        %v4622 = vunpack.c.l.s8.bf16 %v3854
        %v4623 = vunpack.c.l.s8.bf16 %v3855
        %v4624 = vunpack.c.l.s8.bf16 %v3856
        %v4625 = vunpack.c.l.s8.bf16 %v3857
        %v4626 = vunpack.c.h.s8.bf16 %v3842
        %v4627 = vunpack.c.h.s8.bf16 %v3843
        %v4628 = vunpack.c.h.s8.bf16 %v3844
        %v4629 = vunpack.c.h.s8.bf16 %v3845
        %v4630 = vunpack.c.h.s8.bf16 %v3846
        %v4631 = vunpack.c.h.s8.bf16 %v3847
        %v4632 = vunpack.c.h.s8.bf16 %v3848
        %v4633 = vunpack.c.h.s8.bf16 %v3849
        %v4634 = vunpack.c.h.s8.bf16 %v3850
        %v4635 = vunpack.c.h.s8.bf16 %v3851
        %v4636 = vunpack.c.h.s8.bf16 %v3852
        %v4637 = vunpack.c.h.s8.bf16 %v3853
        %v4638 = vunpack.c.h.s8.bf16 %v3854
        %v4639 = vunpack.c.h.s8.bf16 %v3855
        %v4640 = vunpack.c.h.s8.bf16 %v3856
        %v4641 = vunpack.c.h.s8.bf16 %v3857
        %v4642 = vunpack.c.l.s8.bf16 %v3858
        %v4643 = vunpack.c.l.s8.bf16 %v3859
        %v4644 = vunpack.c.l.s8.bf16 %v3860
        %v4645 = vunpack.c.l.s8.bf16 %v3861
        %v4646 = vunpack.c.l.s8.bf16 %v3862
        %v4647 = vunpack.c.l.s8.bf16 %v3863
        %v4648 = vunpack.c.l.s8.bf16 %v3864
        %v4649 = vunpack.c.l.s8.bf16 %v3865
        %v4650 = vunpack.c.l.s8.bf16 %v3866
        %v4651 = vunpack.c.l.s8.bf16 %v3867
        %v4652 = vunpack.c.l.s8.bf16 %v3868
        %v4653 = vunpack.c.l.s8.bf16 %v3869
        %v4654 = vunpack.c.l.s8.bf16 %v3870
        %v4655 = vunpack.c.l.s8.bf16 %v3871
        %v4656 = vunpack.c.l.s8.bf16 %v3872
        %v4657 = vunpack.c.l.s8.bf16 %v3873
        %v4658 = vunpack.c.h.s8.bf16 %v3858
        %v4659 = vunpack.c.h.s8.bf16 %v3859
        %v4660 = vunpack.c.h.s8.bf16 %v3860
        %v4661 = vunpack.c.h.s8.bf16 %v3861
        %v4662 = vunpack.c.h.s8.bf16 %v3862
        %v4663 = vunpack.c.h.s8.bf16 %v3863
        %v4664 = vunpack.c.h.s8.bf16 %v3864
        %v4665 = vunpack.c.h.s8.bf16 %v3865
        %v4666 = vunpack.c.h.s8.bf16 %v3866
        %v4667 = vunpack.c.h.s8.bf16 %v3867
        %v4668 = vunpack.c.h.s8.bf16 %v3868
        %v4669 = vunpack.c.h.s8.bf16 %v3869
        %v4670 = vunpack.c.h.s8.bf16 %v3870
        %v4671 = vunpack.c.h.s8.bf16 %v3871
        %v4672 = vunpack.c.h.s8.bf16 %v3872
        %v4673 = vunpack.c.h.s8.bf16 %v3873
        %v4674 = vunpack.c.l.s8.bf16 %v3874
        %v4675 = vunpack.c.l.s8.bf16 %v3875
        %v4676 = vunpack.c.l.s8.bf16 %v3876
        %v4677 = vunpack.c.l.s8.bf16 %v3877
        %v4678 = vunpack.c.l.s8.bf16 %v3878
        %v4679 = vunpack.c.l.s8.bf16 %v3879
        %v4680 = vunpack.c.l.s8.bf16 %v3880
        %v4681 = vunpack.c.l.s8.bf16 %v3881
        %v4682 = vunpack.c.l.s8.bf16 %v3882
        %v4683 = vunpack.c.l.s8.bf16 %v3883
        %v4684 = vunpack.c.l.s8.bf16 %v3884
        %v4685 = vunpack.c.l.s8.bf16 %v3885
        %v4686 = vunpack.c.l.s8.bf16 %v3886
        %v4687 = vunpack.c.l.s8.bf16 %v3887
        %v4688 = vunpack.c.l.s8.bf16 %v3888
        %v4689 = vunpack.c.l.s8.bf16 %v3889
        %v4690 = vunpack.c.h.s8.bf16 %v3874
        %v4691 = vunpack.c.h.s8.bf16 %v3875
        %v4692 = vunpack.c.h.s8.bf16 %v3876
        %v4693 = vunpack.c.h.s8.bf16 %v3877
        %v4694 = vunpack.c.h.s8.bf16 %v3878
        %v4695 = vunpack.c.h.s8.bf16 %v3879
        %v4696 = vunpack.c.h.s8.bf16 %v3880
        %v4697 = vunpack.c.h.s8.bf16 %v3881
        %v4698 = vunpack.c.h.s8.bf16 %v3882
        %v4699 = vunpack.c.h.s8.bf16 %v3883
        %v4700 = vunpack.c.h.s8.bf16 %v3884
        %v4701 = vunpack.c.h.s8.bf16 %v3885
        %v4702 = vunpack.c.h.s8.bf16 %v3886
        %v4703 = vunpack.c.h.s8.bf16 %v3887
        %v4704 = vunpack.c.h.s8.bf16 %v3888
        %v4705 = vunpack.c.h.s8.bf16 %v3889
        %v4706 = vunpack.c.l.s8.bf16 %v3890
        %v4707 = vunpack.c.l.s8.bf16 %v3891
        %v4708 = vunpack.c.l.s8.bf16 %v3892
        %v4709 = vunpack.c.l.s8.bf16 %v3893
        %v4710 = vunpack.c.l.s8.bf16 %v3894
        %v4711 = vunpack.c.l.s8.bf16 %v3895
        %v4712 = vunpack.c.l.s8.bf16 %v3896
        %v4713 = vunpack.c.l.s8.bf16 %v3897
        %v4714 = vunpack.c.l.s8.bf16 %v3898
        %v4715 = vunpack.c.l.s8.bf16 %v3899
        %v4716 = vunpack.c.l.s8.bf16 %v3900
        %v4717 = vunpack.c.l.s8.bf16 %v3901
        %v4718 = vunpack.c.l.s8.bf16 %v3902
        %v4719 = vunpack.c.l.s8.bf16 %v3903
        %v4720 = vunpack.c.l.s8.bf16 %v3904
        %v4721 = vunpack.c.l.s8.bf16 %v3905
        %v4722 = vunpack.c.h.s8.bf16 %v3890
        %v4723 = vunpack.c.h.s8.bf16 %v3891
        %v4724 = vunpack.c.h.s8.bf16 %v3892
        %v4725 = vunpack.c.h.s8.bf16 %v3893
        %v4726 = vunpack.c.h.s8.bf16 %v3894
        %v4727 = vunpack.c.h.s8.bf16 %v3895
        %v4728 = vunpack.c.h.s8.bf16 %v3896
        %v4729 = vunpack.c.h.s8.bf16 %v3897
        %v4730 = vunpack.c.h.s8.bf16 %v3898
        %v4731 = vunpack.c.h.s8.bf16 %v3899
        %v4732 = vunpack.c.h.s8.bf16 %v3900
        %v4733 = vunpack.c.h.s8.bf16 %v3901
        %v4734 = vunpack.c.h.s8.bf16 %v3902
        %v4735 = vunpack.c.h.s8.bf16 %v3903
        %v4736 = vunpack.c.h.s8.bf16 %v3904
        %v4737 = vunpack.c.h.s8.bf16 %v3905
        %v4738 = vunpack.c.l.s8.bf16 %v3906
        %v4739 = vunpack.c.l.s8.bf16 %v3907
        %v4740 = vunpack.c.l.s8.bf16 %v3908
        %v4741 = vunpack.c.l.s8.bf16 %v3909
        %v4742 = vunpack.c.l.s8.bf16 %v3910
        %v4743 = vunpack.c.l.s8.bf16 %v3911
        %v4744 = vunpack.c.l.s8.bf16 %v3912
        %v4745 = vunpack.c.l.s8.bf16 %v3913
        %v4746 = vunpack.c.l.s8.bf16 %v3914
        %v4747 = vunpack.c.l.s8.bf16 %v3915
        %v4748 = vunpack.c.l.s8.bf16 %v3916
        %v4749 = vunpack.c.l.s8.bf16 %v3917
        %v4750 = vunpack.c.l.s8.bf16 %v3918
        %v4751 = vunpack.c.l.s8.bf16 %v3919
        %v4752 = vunpack.c.l.s8.bf16 %v3920
        %v4753 = vunpack.c.l.s8.bf16 %v3921
        %v4754 = vunpack.c.h.s8.bf16 %v3906
        %v4755 = vunpack.c.h.s8.bf16 %v3907
        %v4756 = vunpack.c.h.s8.bf16 %v3908
        %v4757 = vunpack.c.h.s8.bf16 %v3909
        %v4758 = vunpack.c.h.s8.bf16 %v3910
        %v4759 = vunpack.c.h.s8.bf16 %v3911
        %v4760 = vunpack.c.h.s8.bf16 %v3912
        %v4761 = vunpack.c.h.s8.bf16 %v3913
        %v4762 = vunpack.c.h.s8.bf16 %v3914
        %v4763 = vunpack.c.h.s8.bf16 %v3915
        %v4764 = vunpack.c.h.s8.bf16 %v3916
        %v4765 = vunpack.c.h.s8.bf16 %v3917
        %v4766 = vunpack.c.h.s8.bf16 %v3918
        %v4767 = vunpack.c.h.s8.bf16 %v3919
        %v4768 = vunpack.c.h.s8.bf16 %v3920
        %v4769 = vunpack.c.h.s8.bf16 %v3921
        %v4770 = vunpack.c.l.s8.bf16 %v3922
        %v4771 = vunpack.c.l.s8.bf16 %v3923
        %v4772 = vunpack.c.l.s8.bf16 %v3924
        %v4773 = vunpack.c.l.s8.bf16 %v3925
        %v4774 = vunpack.c.l.s8.bf16 %v3926
        %v4775 = vunpack.c.l.s8.bf16 %v3927
        %v4776 = vunpack.c.l.s8.bf16 %v3928
        %v4777 = vunpack.c.l.s8.bf16 %v3929
        %v4778 = vunpack.c.l.s8.bf16 %v3930
        %v4779 = vunpack.c.l.s8.bf16 %v3931
        %v4780 = vunpack.c.l.s8.bf16 %v3932
        %v4781 = vunpack.c.l.s8.bf16 %v3933
        %v4782 = vunpack.c.l.s8.bf16 %v3934
        %v4783 = vunpack.c.l.s8.bf16 %v3935
        %v4784 = vunpack.c.l.s8.bf16 %v3936
        %v4785 = vunpack.c.l.s8.bf16 %v3937
        %v4786 = vunpack.c.h.s8.bf16 %v3922
        %v4787 = vunpack.c.h.s8.bf16 %v3923
        %v4788 = vunpack.c.h.s8.bf16 %v3924
        %v4789 = vunpack.c.h.s8.bf16 %v3925
        %v4790 = vunpack.c.h.s8.bf16 %v3926
        %v4791 = vunpack.c.h.s8.bf16 %v3927
        %v4792 = vunpack.c.h.s8.bf16 %v3928
        %v4793 = vunpack.c.h.s8.bf16 %v3929
        %v4794 = vunpack.c.h.s8.bf16 %v3930
        %v4795 = vunpack.c.h.s8.bf16 %v3931
        %v4796 = vunpack.c.h.s8.bf16 %v3932
        %v4797 = vunpack.c.h.s8.bf16 %v3933
        %v4798 = vunpack.c.h.s8.bf16 %v3934
        %v4799 = vunpack.c.h.s8.bf16 %v3935
        %v4800 = vunpack.c.h.s8.bf16 %v3936
        %v4801 = vunpack.c.h.s8.bf16 %v3937
        %v4802 = vunpack.c.l.s8.bf16 %v3938
        %v4803 = vunpack.c.l.s8.bf16 %v3939
        %v4804 = vunpack.c.l.s8.bf16 %v3940
        %v4805 = vunpack.c.l.s8.bf16 %v3941
        %v4806 = vunpack.c.l.s8.bf16 %v3942
        %v4807 = vunpack.c.l.s8.bf16 %v3943
        %v4808 = vunpack.c.l.s8.bf16 %v3944
        %v4809 = vunpack.c.l.s8.bf16 %v3945
        %v4810 = vunpack.c.l.s8.bf16 %v3946
        %v4811 = vunpack.c.l.s8.bf16 %v3947
        %v4812 = vunpack.c.l.s8.bf16 %v3948
        %v4813 = vunpack.c.l.s8.bf16 %v3949
        %v4814 = vunpack.c.l.s8.bf16 %v3950
        %v4815 = vunpack.c.l.s8.bf16 %v3951
        %v4816 = vunpack.c.l.s8.bf16 %v3952
        %v4817 = vunpack.c.l.s8.bf16 %v3953
        %v4818 = vunpack.c.h.s8.bf16 %v3938
        %v4819 = vunpack.c.h.s8.bf16 %v3939
        %v4820 = vunpack.c.h.s8.bf16 %v3940
        %v4821 = vunpack.c.h.s8.bf16 %v3941
        %v4822 = vunpack.c.h.s8.bf16 %v3942
        %v4823 = vunpack.c.h.s8.bf16 %v3943
        %v4824 = vunpack.c.h.s8.bf16 %v3944
        %v4825 = vunpack.c.h.s8.bf16 %v3945
        %v4826 = vunpack.c.h.s8.bf16 %v3946
        %v4827 = vunpack.c.h.s8.bf16 %v3947
        %v4828 = vunpack.c.h.s8.bf16 %v3948
        %v4829 = vunpack.c.h.s8.bf16 %v3949
        %v4830 = vunpack.c.h.s8.bf16 %v3950
        %v4831 = vunpack.c.h.s8.bf16 %v3951
        %v4832 = vunpack.c.h.s8.bf16 %v3952
        %v4833 = vunpack.c.h.s8.bf16 %v3953
        %v4834 = vunpack.c.l.s8.bf16 %v3954
        %v4835 = vunpack.c.l.s8.bf16 %v3955
        %v4836 = vunpack.c.l.s8.bf16 %v3956
        %v4837 = vunpack.c.l.s8.bf16 %v3957
        %v4838 = vunpack.c.l.s8.bf16 %v3958
        %v4839 = vunpack.c.l.s8.bf16 %v3959
        %v4840 = vunpack.c.l.s8.bf16 %v3960
        %v4841 = vunpack.c.l.s8.bf16 %v3961
        %v4842 = vunpack.c.l.s8.bf16 %v3962
        %v4843 = vunpack.c.l.s8.bf16 %v3963
        %v4844 = vunpack.c.l.s8.bf16 %v3964
        %v4845 = vunpack.c.l.s8.bf16 %v3965
        %v4846 = vunpack.c.l.s8.bf16 %v3966
        %v4847 = vunpack.c.l.s8.bf16 %v3967
        %v4848 = vunpack.c.l.s8.bf16 %v3968
        %v4849 = vunpack.c.l.s8.bf16 %v3969
        %v4850 = vunpack.c.h.s8.bf16 %v3954
        %v4851 = vunpack.c.h.s8.bf16 %v3955
        %v4852 = vunpack.c.h.s8.bf16 %v3956
        %v4853 = vunpack.c.h.s8.bf16 %v3957
        %v4854 = vunpack.c.h.s8.bf16 %v3958
        %v4855 = vunpack.c.h.s8.bf16 %v3959
        %v4856 = vunpack.c.h.s8.bf16 %v3960
        %v4857 = vunpack.c.h.s8.bf16 %v3961
        %v4858 = vunpack.c.h.s8.bf16 %v3962
        %v4859 = vunpack.c.h.s8.bf16 %v3963
        %v4860 = vunpack.c.h.s8.bf16 %v3964
        %v4861 = vunpack.c.h.s8.bf16 %v3965
        %v4862 = vunpack.c.h.s8.bf16 %v3966
        %v4863 = vunpack.c.h.s8.bf16 %v3967
        %v4864 = vunpack.c.h.s8.bf16 %v3968
        %v4865 = vunpack.c.h.s8.bf16 %v3969
        %v4866 = vunpack.c.l.s8.bf16 %v3970
        %v4867 = vunpack.c.l.s8.bf16 %v3971
        %v4868 = vunpack.c.l.s8.bf16 %v3972
        %v4869 = vunpack.c.l.s8.bf16 %v3973
        %v4870 = vunpack.c.l.s8.bf16 %v3974
        %v4871 = vunpack.c.l.s8.bf16 %v3975
        %v4872 = vunpack.c.l.s8.bf16 %v3976
        %v4873 = vunpack.c.l.s8.bf16 %v3977
        %v4874 = vunpack.c.l.s8.bf16 %v3978
        %v4875 = vunpack.c.l.s8.bf16 %v3979
        %v4876 = vunpack.c.l.s8.bf16 %v3980
        %v4877 = vunpack.c.l.s8.bf16 %v3981
        %v4878 = vunpack.c.l.s8.bf16 %v3982
        %v4879 = vunpack.c.l.s8.bf16 %v3983
        %v4880 = vunpack.c.l.s8.bf16 %v3984
        %v4881 = vunpack.c.l.s8.bf16 %v3985
        %v4882 = vunpack.c.h.s8.bf16 %v3970
        %v4883 = vunpack.c.h.s8.bf16 %v3971
        %v4884 = vunpack.c.h.s8.bf16 %v3972
        %v4885 = vunpack.c.h.s8.bf16 %v3973
        %v4886 = vunpack.c.h.s8.bf16 %v3974
        %v4887 = vunpack.c.h.s8.bf16 %v3975
        %v4888 = vunpack.c.h.s8.bf16 %v3976
        %v4889 = vunpack.c.h.s8.bf16 %v3977
        %v4890 = vunpack.c.h.s8.bf16 %v3978
        %v4891 = vunpack.c.h.s8.bf16 %v3979
        %v4892 = vunpack.c.h.s8.bf16 %v3980
        %v4893 = vunpack.c.h.s8.bf16 %v3981
        %v4894 = vunpack.c.h.s8.bf16 %v3982
        %v4895 = vunpack.c.h.s8.bf16 %v3983
        %v4896 = vunpack.c.h.s8.bf16 %v3984
        %v4897 = vunpack.c.h.s8.bf16 %v3985
        %v4898 = vunpack.c.l.s8.bf16 %v3986
        %v4899 = vunpack.c.l.s8.bf16 %v3987
        %v4900 = vunpack.c.l.s8.bf16 %v3988
        %v4901 = vunpack.c.l.s8.bf16 %v3989
        %v4902 = vunpack.c.l.s8.bf16 %v3990
        %v4903 = vunpack.c.l.s8.bf16 %v3991
        %v4904 = vunpack.c.l.s8.bf16 %v3992
        %v4905 = vunpack.c.l.s8.bf16 %v3993
        %v4906 = vunpack.c.l.s8.bf16 %v3994
        %v4907 = vunpack.c.l.s8.bf16 %v3995
        %v4908 = vunpack.c.l.s8.bf16 %v3996
        %v4909 = vunpack.c.l.s8.bf16 %v3997
        %v4910 = vunpack.c.l.s8.bf16 %v3998
        %v4911 = vunpack.c.l.s8.bf16 %v3999
        %v4912 = vunpack.c.l.s8.bf16 %v4000
        %v4913 = vunpack.c.l.s8.bf16 %v4001
        %v4914 = vunpack.c.h.s8.bf16 %v3986
        %v4915 = vunpack.c.h.s8.bf16 %v3987
        %v4916 = vunpack.c.h.s8.bf16 %v3988
        %v4917 = vunpack.c.h.s8.bf16 %v3989
        %v4918 = vunpack.c.h.s8.bf16 %v3990
        %v4919 = vunpack.c.h.s8.bf16 %v3991
        %v4920 = vunpack.c.h.s8.bf16 %v3992
        %v4921 = vunpack.c.h.s8.bf16 %v3993
        %v4922 = vunpack.c.h.s8.bf16 %v3994
        %v4923 = vunpack.c.h.s8.bf16 %v3995
        %v4924 = vunpack.c.h.s8.bf16 %v3996
        %v4925 = vunpack.c.h.s8.bf16 %v3997
        %v4926 = vunpack.c.h.s8.bf16 %v3998
        %v4927 = vunpack.c.h.s8.bf16 %v3999
        %v4928 = vunpack.c.h.s8.bf16 %v4000
        %v4929 = vunpack.c.h.s8.bf16 %v4001
        %v4930 = vunpack.c.l.s8.bf16 %v4002
        %v4931 = vunpack.c.l.s8.bf16 %v4003
        %v4932 = vunpack.c.l.s8.bf16 %v4004
        %v4933 = vunpack.c.l.s8.bf16 %v4005
        %v4934 = vunpack.c.l.s8.bf16 %v4006
        %v4935 = vunpack.c.l.s8.bf16 %v4007
        %v4936 = vunpack.c.l.s8.bf16 %v4008
        %v4937 = vunpack.c.l.s8.bf16 %v4009
        %v4938 = vunpack.c.l.s8.bf16 %v4010
        %v4939 = vunpack.c.l.s8.bf16 %v4011
        %v4940 = vunpack.c.l.s8.bf16 %v4012
        %v4941 = vunpack.c.l.s8.bf16 %v4013
        %v4942 = vunpack.c.l.s8.bf16 %v4014
        %v4943 = vunpack.c.l.s8.bf16 %v4015
        %v4944 = vunpack.c.l.s8.bf16 %v4016
        %v4945 = vunpack.c.l.s8.bf16 %v4017
        %v4946 = vunpack.c.h.s8.bf16 %v4002
        %v4947 = vunpack.c.h.s8.bf16 %v4003
        %v4948 = vunpack.c.h.s8.bf16 %v4004
        %v4949 = vunpack.c.h.s8.bf16 %v4005
        %v4950 = vunpack.c.h.s8.bf16 %v4006
        %v4951 = vunpack.c.h.s8.bf16 %v4007
        %v4952 = vunpack.c.h.s8.bf16 %v4008
        %v4953 = vunpack.c.h.s8.bf16 %v4009
        %v4954 = vunpack.c.h.s8.bf16 %v4010
        %v4955 = vunpack.c.h.s8.bf16 %v4011
        %v4956 = vunpack.c.h.s8.bf16 %v4012
        %v4957 = vunpack.c.h.s8.bf16 %v4013
        %v4958 = vunpack.c.h.s8.bf16 %v4014
        %v4959 = vunpack.c.h.s8.bf16 %v4015
        %v4960 = vunpack.c.h.s8.bf16 %v4016
        %v4961 = vunpack.c.h.s8.bf16 %v4017
        %v4962 = vunpack.c.l.s8.bf16 %v4018
        %v4963 = vunpack.c.l.s8.bf16 %v4019
        %v4964 = vunpack.c.l.s8.bf16 %v4020
        %v4965 = vunpack.c.l.s8.bf16 %v4021
        %v4966 = vunpack.c.l.s8.bf16 %v4022
        %v4967 = vunpack.c.l.s8.bf16 %v4023
        %v4968 = vunpack.c.l.s8.bf16 %v4024
        %v4969 = vunpack.c.l.s8.bf16 %v4025
        %v4970 = vunpack.c.l.s8.bf16 %v4026
        %v4971 = vunpack.c.l.s8.bf16 %v4027
        %v4972 = vunpack.c.l.s8.bf16 %v4028
        %v4973 = vunpack.c.l.s8.bf16 %v4029
        %v4974 = vunpack.c.l.s8.bf16 %v4030
        %v4975 = vunpack.c.l.s8.bf16 %v4031
        %v4976 = vunpack.c.l.s8.bf16 %v4032
        %v4977 = vunpack.c.l.s8.bf16 %v4033
        %v4978 = vunpack.c.h.s8.bf16 %v4018
        %v4979 = vunpack.c.h.s8.bf16 %v4019
        %v4980 = vunpack.c.h.s8.bf16 %v4020
        %v4981 = vunpack.c.h.s8.bf16 %v4021
        %v4982 = vunpack.c.h.s8.bf16 %v4022
        %v4983 = vunpack.c.h.s8.bf16 %v4023
        %v4984 = vunpack.c.h.s8.bf16 %v4024
        %v4985 = vunpack.c.h.s8.bf16 %v4025
        %v4986 = vunpack.c.h.s8.bf16 %v4026
        %v4987 = vunpack.c.h.s8.bf16 %v4027
        %v4988 = vunpack.c.h.s8.bf16 %v4028
        %v4989 = vunpack.c.h.s8.bf16 %v4029
        %v4990 = vunpack.c.h.s8.bf16 %v4030
        %v4991 = vunpack.c.h.s8.bf16 %v4031
        %v4992 = vunpack.c.h.s8.bf16 %v4032
        %v4993 = vunpack.c.h.s8.bf16 %v4033
        %v4994 = vunpack.c.l.s8.bf16 %v4034
        %v4995 = vunpack.c.l.s8.bf16 %v4035
        %v4996 = vunpack.c.l.s8.bf16 %v4036
        %v4997 = vunpack.c.l.s8.bf16 %v4037
        %v4998 = vunpack.c.l.s8.bf16 %v4038
        %v4999 = vunpack.c.l.s8.bf16 %v4039
        %v5000 = vunpack.c.l.s8.bf16 %v4040
        %v5001 = vunpack.c.l.s8.bf16 %v4041
        %v5002 = vunpack.c.l.s8.bf16 %v4042
        %v5003 = vunpack.c.l.s8.bf16 %v4043
        %v5004 = vunpack.c.l.s8.bf16 %v4044
        %v5005 = vunpack.c.l.s8.bf16 %v4045
        %v5006 = vunpack.c.l.s8.bf16 %v4046
        %v5007 = vunpack.c.l.s8.bf16 %v4047
        %v5008 = vunpack.c.l.s8.bf16 %v4048
        %v5009 = vunpack.c.l.s8.bf16 %v4049
        %v5010 = vunpack.c.h.s8.bf16 %v4034
        %v5011 = vunpack.c.h.s8.bf16 %v4035
        %v5012 = vunpack.c.h.s8.bf16 %v4036
        %v5013 = vunpack.c.h.s8.bf16 %v4037
        %v5014 = vunpack.c.h.s8.bf16 %v4038
        %v5015 = vunpack.c.h.s8.bf16 %v4039
        %v5016 = vunpack.c.h.s8.bf16 %v4040
        %v5017 = vunpack.c.h.s8.bf16 %v4041
        %v5018 = vunpack.c.h.s8.bf16 %v4042
        %v5019 = vunpack.c.h.s8.bf16 %v4043
        %v5020 = vunpack.c.h.s8.bf16 %v4044
        %v5021 = vunpack.c.h.s8.bf16 %v4045
        %v5022 = vunpack.c.h.s8.bf16 %v4046
        %v5023 = vunpack.c.h.s8.bf16 %v4047
        %v5024 = vunpack.c.h.s8.bf16 %v4048
        %v5025 = vunpack.c.h.s8.bf16 %v4049
        %v5026 = vunpack.c.l.s8.bf16 %v4050
        %v5027 = vunpack.c.l.s8.bf16 %v4051
        %v5028 = vunpack.c.l.s8.bf16 %v4052
        %v5029 = vunpack.c.l.s8.bf16 %v4053
        %v5030 = vunpack.c.l.s8.bf16 %v4054
        %v5031 = vunpack.c.l.s8.bf16 %v4055
        %v5032 = vunpack.c.l.s8.bf16 %v4056
        %v5033 = vunpack.c.l.s8.bf16 %v4057
        %v5034 = vunpack.c.l.s8.bf16 %v4058
        %v5035 = vunpack.c.l.s8.bf16 %v4059
        %v5036 = vunpack.c.l.s8.bf16 %v4060
        %v5037 = vunpack.c.l.s8.bf16 %v4061
        %v5038 = vunpack.c.l.s8.bf16 %v4062
        %v5039 = vunpack.c.l.s8.bf16 %v4063
        %v5040 = vunpack.c.l.s8.bf16 %v4064
        %v5041 = vunpack.c.l.s8.bf16 %v4065
        %v5042 = vunpack.c.h.s8.bf16 %v4050
        %v5043 = vunpack.c.h.s8.bf16 %v4051
        %v5044 = vunpack.c.h.s8.bf16 %v4052
        %v5045 = vunpack.c.h.s8.bf16 %v4053
        %v5046 = vunpack.c.h.s8.bf16 %v4054
        %v5047 = vunpack.c.h.s8.bf16 %v4055
        %v5048 = vunpack.c.h.s8.bf16 %v4056
        %v5049 = vunpack.c.h.s8.bf16 %v4057
        %v5050 = vunpack.c.h.s8.bf16 %v4058
        %v5051 = vunpack.c.h.s8.bf16 %v4059
        %v5052 = vunpack.c.h.s8.bf16 %v4060
        %v5053 = vunpack.c.h.s8.bf16 %v4061
        %v5054 = vunpack.c.h.s8.bf16 %v4062
        %v5055 = vunpack.c.h.s8.bf16 %v4063
        %v5056 = vunpack.c.h.s8.bf16 %v4064
        %v5057 = vunpack.c.h.s8.bf16 %v4065
        %v5058 = vunpack.c.l.s8.bf16 %v4066
        %v5059 = vunpack.c.l.s8.bf16 %v4067
        %v5060 = vunpack.c.l.s8.bf16 %v4068
        %v5061 = vunpack.c.l.s8.bf16 %v4069
        %v5062 = vunpack.c.l.s8.bf16 %v4070
        %v5063 = vunpack.c.l.s8.bf16 %v4071
        %v5064 = vunpack.c.l.s8.bf16 %v4072
        %v5065 = vunpack.c.l.s8.bf16 %v4073
        %v5066 = vunpack.c.l.s8.bf16 %v4074
        %v5067 = vunpack.c.l.s8.bf16 %v4075
        %v5068 = vunpack.c.l.s8.bf16 %v4076
        %v5069 = vunpack.c.l.s8.bf16 %v4077
        %v5070 = vunpack.c.l.s8.bf16 %v4078
        %v5071 = vunpack.c.l.s8.bf16 %v4079
        %v5072 = vunpack.c.l.s8.bf16 %v4080
        %v5073 = vunpack.c.l.s8.bf16 %v4081
        %v5074 = vunpack.c.h.s8.bf16 %v4066
        %v5075 = vunpack.c.h.s8.bf16 %v4067
        %v5076 = vunpack.c.h.s8.bf16 %v4068
        %v5077 = vunpack.c.h.s8.bf16 %v4069
        %v5078 = vunpack.c.h.s8.bf16 %v4070
        %v5079 = vunpack.c.h.s8.bf16 %v4071
        %v5080 = vunpack.c.h.s8.bf16 %v4072
        %v5081 = vunpack.c.h.s8.bf16 %v4073
        %v5082 = vunpack.c.h.s8.bf16 %v4074
        %v5083 = vunpack.c.h.s8.bf16 %v4075
        %v5084 = vunpack.c.h.s8.bf16 %v4076
        %v5085 = vunpack.c.h.s8.bf16 %v4077
        %v5086 = vunpack.c.h.s8.bf16 %v4078
        %v5087 = vunpack.c.h.s8.bf16 %v4079
        %v5088 = vunpack.c.h.s8.bf16 %v4080
        %v5089 = vunpack.c.h.s8.bf16 %v4081
        %v5090 = vunpack.c.l.s8.bf16 %v4082
        %v5091 = vunpack.c.l.s8.bf16 %v4083
        %v5092 = vunpack.c.l.s8.bf16 %v4084
        %v5093 = vunpack.c.l.s8.bf16 %v4085
        %v5094 = vunpack.c.l.s8.bf16 %v4086
        %v5095 = vunpack.c.l.s8.bf16 %v4087
        %v5096 = vunpack.c.l.s8.bf16 %v4088
        %v5097 = vunpack.c.l.s8.bf16 %v4089
        %v5098 = vunpack.c.l.s8.bf16 %v4090
        %v5099 = vunpack.c.l.s8.bf16 %v4091
        %v5100 = vunpack.c.l.s8.bf16 %v4092
        %v5101 = vunpack.c.l.s8.bf16 %v4093
        %v5102 = vunpack.c.l.s8.bf16 %v4094
        %v5103 = vunpack.c.l.s8.bf16 %v4095
        %v5104 = vunpack.c.l.s8.bf16 %v4096
        %v5105 = vunpack.c.l.s8.bf16 %v4097
        %v5106 = vunpack.c.h.s8.bf16 %v4082
        %v5107 = vunpack.c.h.s8.bf16 %v4083
        %v5108 = vunpack.c.h.s8.bf16 %v4084
        %v5109 = vunpack.c.h.s8.bf16 %v4085
        %v5110 = vunpack.c.h.s8.bf16 %v4086
        %v5111 = vunpack.c.h.s8.bf16 %v4087
        %v5112 = vunpack.c.h.s8.bf16 %v4088
        %v5113 = vunpack.c.h.s8.bf16 %v4089
        %v5114 = vunpack.c.h.s8.bf16 %v4090
        %v5115 = vunpack.c.h.s8.bf16 %v4091
        %v5116 = vunpack.c.h.s8.bf16 %v4092
        %v5117 = vunpack.c.h.s8.bf16 %v4093
        %v5118 = vunpack.c.h.s8.bf16 %v4094
        %v5119 = vunpack.c.h.s8.bf16 %v4095
        %v5120 = vunpack.c.h.s8.bf16 %v4096
        %v5121 = vunpack.c.h.s8.bf16 %v4097
        %v5122 = vld [vmem:[#allocation2] sm:$0xff]
        %v5123 = vld [vmem:[#allocation2 + $0x8] sm:$0xff]
        %v5124 = vld [vmem:[#allocation2 + $0x10] sm:$0xff]
        %v5125 = vld [vmem:[#allocation2 + $0x18] sm:$0xff]
        %v5126 = vpack.c.bf16 %v3578, %v3578
        %v5127 = vpack.c.bf16 %v3579, %v3579
        %v5128 = vpack.c.bf16 %v3580, %v3580
        %v5129 = vpack.c.bf16 %v3581, %v3581
        %v5130 = vpack.c.bf16 %v3582, %v3582
        %v5131 = vpack.c.bf16 %v3583, %v3583
        %v5132 = vpack.c.bf16 %v3584, %v3584
        %v5133 = vpack.c.bf16 %v3585, %v3585
        %5134 = vmatprep.subr.bf16.mxu0 %v4211
        %5135 = vmatpush1.bf16.msra.mxu0 %v4210
        %5136 = vmatprep.subr.bf16.mxu0 %v4195
        %5137 = vmatpush1.bf16.msra.mxu0 %v4194
        %5138 = vmatprep.subr.bf16.mxu0 %v4179
        %5139 = vmatpush1.bf16.msra.mxu0 %v4178
        %5140 = vmatprep.subr.bf16.mxu0 %v4163
        %5141 = vmatpush1.bf16.msra.mxu0 %v4162
        %5142 = vmatprep.subr.bf16.mxu0 %v4147
        %5143 = vmatpush1.bf16.msra.mxu0 %v4146
        %5144 = vmatprep.subr.bf16.mxu0 %v4131
        %5145 = vmatpush1.bf16.msra.mxu0 %v4130
        %5146 = vmatprep.subr.bf16.mxu0 %v4115
        %5147 = vmatpush1.bf16.msra.mxu0 %v4114
        %5148 = vmatprep.subr.bf16.mxu0 %v4099
        %5149 = vmatpush1.bf16.msra.mxu0 %v4098
        %5150 = vmatprep.subr.bf16.mxu0 %v4339
        %5151 = vmatpush2.bf16.msra.mxu0 %v4338
        %5152 = vmatprep.subr.bf16.mxu0 %v4323
        %5153 = vmatpush2.bf16.msra.mxu0 %v4322
        %5154 = vmatprep.subr.bf16.mxu0 %v4307
        %5155 = vmatpush2.bf16.msra.mxu0 %v4306
        %5156 = vmatprep.subr.bf16.mxu0 %v4291
        %5157 = vmatpush2.bf16.msra.mxu0 %v4290
        %5158 = vmatprep.subr.bf16.mxu0 %v4275
        %5159 = vmatpush2.bf16.msra.mxu0 %v4274
        %5160 = vmatprep.subr.bf16.mxu0 %v4259
        %5161 = vmatpush2.bf16.msra.mxu0 %v4258
        %5162 = vmatprep.subr.bf16.mxu0 %v4243
        %5163 = vmatpush2.bf16.msra.mxu0 %v4242
        %5164 = vmatprep.subr.bf16.mxu0 %v4227
        %5165 = vmatpush2.bf16.msra.mxu0 %v4226
        %5166 = vmatprep.mubr.bf16.mxu0 %v5127
        %5167 = vmatmul.mubr.bf16.gmra.mxu0 %v5126
        %v5168 = vpop.f32.mrf.mxu0
        %v5169 = vadd.f32 0.0, %v5168
        %v5170 = vpop.f32.mrf.mxu0
        %v5171 = vadd.f32 0.0, %v5170
        %v5172 = vpop.f32.mrf.mxu0
        %v5173 = vpop.f32.mrf.mxu0
        %5174 = vdwg.mxu0
        %5175 = vmatprep.subr.bf16.mxu0 %v4467
        %5176 = vmatpush1.bf16.msra.mxu0 %v4466
        %5177 = vmatprep.subr.bf16.mxu0 %v4451
        %5178 = vmatpush1.bf16.msra.mxu0 %v4450
        %5179 = vmatprep.subr.bf16.mxu0 %v4435
        %5180 = vmatpush1.bf16.msra.mxu0 %v4434
        %5181 = vmatprep.subr.bf16.mxu0 %v4419
        %5182 = vmatpush1.bf16.msra.mxu0 %v4418
        %5183 = vmatprep.subr.bf16.mxu0 %v4403
        %5184 = vmatpush1.bf16.msra.mxu0 %v4402
        %5185 = vmatprep.subr.bf16.mxu0 %v4387
        %5186 = vmatpush1.bf16.msra.mxu0 %v4386
        %5187 = vmatprep.subr.bf16.mxu0 %v4371
        %5188 = vmatpush1.bf16.msra.mxu0 %v4370
        %5189 = vmatprep.subr.bf16.mxu0 %v4355
        %5190 = vmatpush1.bf16.msra.mxu0 %v4354
        %5191 = vmatprep.subr.bf16.mxu0 %v4595
        %5192 = vmatpush2.bf16.msra.mxu0 %v4594
        %5193 = vmatprep.subr.bf16.mxu0 %v4579
        %5194 = vmatpush2.bf16.msra.mxu0 %v4578
        %5195 = vmatprep.subr.bf16.mxu0 %v4563
        %5196 = vmatpush2.bf16.msra.mxu0 %v4562
        %5197 = vmatprep.subr.bf16.mxu0 %v4547
        %5198 = vmatpush2.bf16.msra.mxu0 %v4546
        %5199 = vmatprep.subr.bf16.mxu0 %v4531
        %5200 = vmatpush2.bf16.msra.mxu0 %v4530
        %5201 = vmatprep.subr.bf16.mxu0 %v4515
        %5202 = vmatpush2.bf16.msra.mxu0 %v4514
        %5203 = vmatprep.subr.bf16.mxu0 %v4499
        %5204 = vmatpush2.bf16.msra.mxu0 %v4498
        %5205 = vmatprep.subr.bf16.mxu0 %v4483
        %5206 = vmatpush2.bf16.msra.mxu0 %v4482
        %5207 = vmatprep.mubr.bf16.mxu0 %v5129
        %5208 = vmatmul.mubr.bf16.gmra.mxu0 %v5128
        %v5209 = vpop.f32.mrf.mxu0
        %v5210 = vadd.f32 %v5169, %v5209
        %v5211 = vpop.f32.mrf.mxu0
        %v5212 = vadd.f32 %v5171, %v5211
        %v5213 = vpop.f32.mrf.mxu0
        %v5214 = vpop.f32.mrf.mxu0
        %5215 = vdwg.mxu0
        %5216 = vmatprep.subr.bf16.mxu0 %v4723
        %5217 = vmatpush1.bf16.msra.mxu0 %v4722
        %5218 = vmatprep.subr.bf16.mxu0 %v4707
        %5219 = vmatpush1.bf16.msra.mxu0 %v4706
        %5220 = vmatprep.subr.bf16.mxu0 %v4691
        %5221 = vmatpush1.bf16.msra.mxu0 %v4690
        %5222 = vmatprep.subr.bf16.mxu0 %v4675
        %5223 = vmatpush1.bf16.msra.mxu0 %v4674
        %5224 = vmatprep.subr.bf16.mxu0 %v4659
        %5225 = vmatpush1.bf16.msra.mxu0 %v4658
        %5226 = vmatprep.subr.bf16.mxu0 %v4643
        %5227 = vmatpush1.bf16.msra.mxu0 %v4642
        %5228 = vmatprep.subr.bf16.mxu0 %v4627
        %5229 = vmatpush1.bf16.msra.mxu0 %v4626
        %5230 = vmatprep.subr.bf16.mxu0 %v4611
        %5231 = vmatpush1.bf16.msra.mxu0 %v4610
        %5232 = vmatprep.subr.bf16.mxu0 %v4851
        %5233 = vmatpush2.bf16.msra.mxu0 %v4850
        %5234 = vmatprep.subr.bf16.mxu0 %v4835
        %5235 = vmatpush2.bf16.msra.mxu0 %v4834
        %5236 = vmatprep.subr.bf16.mxu0 %v4819
        %5237 = vmatpush2.bf16.msra.mxu0 %v4818
        %5238 = vmatprep.subr.bf16.mxu0 %v4803
        %5239 = vmatpush2.bf16.msra.mxu0 %v4802
        %5240 = vmatprep.subr.bf16.mxu0 %v4787
        %5241 = vmatpush2.bf16.msra.mxu0 %v4786
        %5242 = vmatprep.subr.bf16.mxu0 %v4771
        %5243 = vmatpush2.bf16.msra.mxu0 %v4770
        %5244 = vmatprep.subr.bf16.mxu0 %v4755
        %5245 = vmatpush2.bf16.msra.mxu0 %v4754
        %5246 = vmatprep.subr.bf16.mxu0 %v4739
        %5247 = vmatpush2.bf16.msra.mxu0 %v4738
        %5248 = vmatprep.mubr.bf16.mxu0 %v5131
        %5249 = vmatmul.mubr.bf16.gmra.mxu0 %v5130
        %v5250 = vpop.f32.mrf.mxu0
        %v5251 = vadd.f32 %v5210, %v5250
        %v5252 = vpop.f32.mrf.mxu0
        %v5253 = vadd.f32 %v5212, %v5252
        %v5254 = vpop.f32.mrf.mxu0
        %v5255 = vpop.f32.mrf.mxu0
        %5256 = vdwg.mxu0
        %5257 = vmatprep.subr.bf16.mxu0 %v4979
        %5258 = vmatpush1.bf16.msra.mxu0 %v4978
        %5259 = vmatprep.subr.bf16.mxu0 %v4963
        %5260 = vmatpush1.bf16.msra.mxu0 %v4962
        %5261 = vmatprep.subr.bf16.mxu0 %v4947
        %5262 = vmatpush1.bf16.msra.mxu0 %v4946
        %5263 = vmatprep.subr.bf16.mxu0 %v4931
        %5264 = vmatpush1.bf16.msra.mxu0 %v4930
        %5265 = vmatprep.subr.bf16.mxu0 %v4915
        %5266 = vmatpush1.bf16.msra.mxu0 %v4914
        %5267 = vmatprep.subr.bf16.mxu0 %v4899
        %5268 = vmatpush1.bf16.msra.mxu0 %v4898
        %5269 = vmatprep.subr.bf16.mxu0 %v4883
        %5270 = vmatpush1.bf16.msra.mxu0 %v4882
        %5271 = vmatprep.subr.bf16.mxu0 %v4867
        %5272 = vmatpush1.bf16.msra.mxu0 %v4866
        %5273 = vmatprep.subr.bf16.mxu0 %v5107
        %5274 = vmatpush2.bf16.msra.mxu0 %v5106
        %5275 = vmatprep.subr.bf16.mxu0 %v5091
        %5276 = vmatpush2.bf16.msra.mxu0 %v5090
        %5277 = vmatprep.subr.bf16.mxu0 %v5075
        %5278 = vmatpush2.bf16.msra.mxu0 %v5074
        %5279 = vmatprep.subr.bf16.mxu0 %v5059
        %5280 = vmatpush2.bf16.msra.mxu0 %v5058
        %5281 = vmatprep.subr.bf16.mxu0 %v5043
        %5282 = vmatpush2.bf16.msra.mxu0 %v5042
        %5283 = vmatprep.subr.bf16.mxu0 %v5027
        %5284 = vmatpush2.bf16.msra.mxu0 %v5026
        %5285 = vmatprep.subr.bf16.mxu0 %v5011
        %5286 = vmatpush2.bf16.msra.mxu0 %v5010
        %5287 = vmatprep.subr.bf16.mxu0 %v4995
        %5288 = vmatpush2.bf16.msra.mxu0 %v4994
        %5289 = vmatprep.mubr.bf16.mxu0 %v5133
        %5290 = vmatmul.mubr.bf16.gmra.mxu0 %v5132
        %v5291 = vpop.f32.mrf.mxu0
        %v5292 = vadd.f32 %v5251, %v5291
        %v5293 = vpop.f32.mrf.mxu0
        %v5294 = vadd.f32 %v5253, %v5293
        %v5295 = vpop.f32.mrf.mxu0
        %v5296 = vpop.f32.mrf.mxu0
        %5297 = vdwg.mxu0
        %5298 = vmatprep.subr.bf16.mxu0 %v4213
        %5299 = vmatpush1.bf16.msra.mxu0 %v4212
        %5300 = vmatprep.subr.bf16.mxu0 %v4197
        %5301 = vmatpush1.bf16.msra.mxu0 %v4196
        %5302 = vmatprep.subr.bf16.mxu0 %v4181
        %5303 = vmatpush1.bf16.msra.mxu0 %v4180
        %5304 = vmatprep.subr.bf16.mxu0 %v4165
        %5305 = vmatpush1.bf16.msra.mxu0 %v4164
        %5306 = vmatprep.subr.bf16.mxu0 %v4149
        %5307 = vmatpush1.bf16.msra.mxu0 %v4148
        %5308 = vmatprep.subr.bf16.mxu0 %v4133
        %5309 = vmatpush1.bf16.msra.mxu0 %v4132
        %5310 = vmatprep.subr.bf16.mxu0 %v4117
        %5311 = vmatpush1.bf16.msra.mxu0 %v4116
        %5312 = vmatprep.subr.bf16.mxu0 %v4101
        %5313 = vmatpush1.bf16.msra.mxu0 %v4100
        %5314 = vmatprep.subr.bf16.mxu0 %v4341
        %5315 = vmatpush2.bf16.msra.mxu0 %v4340
        %5316 = vmatprep.subr.bf16.mxu0 %v4325
        %5317 = vmatpush2.bf16.msra.mxu0 %v4324
        %5318 = vmatprep.subr.bf16.mxu0 %v4309
        %5319 = vmatpush2.bf16.msra.mxu0 %v4308
        %5320 = vmatprep.subr.bf16.mxu0 %v4293
        %5321 = vmatpush2.bf16.msra.mxu0 %v4292
        %5322 = vmatprep.subr.bf16.mxu0 %v4277
        %5323 = vmatpush2.bf16.msra.mxu0 %v4276
        %5324 = vmatprep.subr.bf16.mxu0 %v4261
        %5325 = vmatpush2.bf16.msra.mxu0 %v4260
        %5326 = vmatprep.subr.bf16.mxu0 %v4245
        %5327 = vmatpush2.bf16.msra.mxu0 %v4244
        %5328 = vmatprep.subr.bf16.mxu0 %v4229
        %5329 = vmatpush2.bf16.msra.mxu0 %v4228
        %5330 = vmatprep.mubr.bf16.mxu0 %v5127
        %5331 = vmatmul.mubr.bf16.gmra.mxu0 %v5126
        %v5332 = vpop.f32.mrf.mxu0
        %v5333 = vadd.f32 0.0, %v5332
        %v5334 = vpop.f32.mrf.mxu0
        %v5335 = vadd.f32 0.0, %v5334
        %v5336 = vpop.f32.mrf.mxu0
        %v5337 = vpop.f32.mrf.mxu0
        %5338 = vdwg.mxu0
        %5339 = vmatprep.subr.bf16.mxu0 %v4469
        %5340 = vmatpush1.bf16.msra.mxu0 %v4468
        %5341 = vmatprep.subr.bf16.mxu0 %v4453
        %5342 = vmatpush1.bf16.msra.mxu0 %v4452
        %5343 = vmatprep.subr.bf16.mxu0 %v4437
        %5344 = vmatpush1.bf16.msra.mxu0 %v4436
        %5345 = vmatprep.subr.bf16.mxu0 %v4421
        %5346 = vmatpush1.bf16.msra.mxu0 %v4420
        %5347 = vmatprep.subr.bf16.mxu0 %v4405
        %5348 = vmatpush1.bf16.msra.mxu0 %v4404
        %5349 = vmatprep.subr.bf16.mxu0 %v4389
        %5350 = vmatpush1.bf16.msra.mxu0 %v4388
        %5351 = vmatprep.subr.bf16.mxu0 %v4373
        %5352 = vmatpush1.bf16.msra.mxu0 %v4372
        %5353 = vmatprep.subr.bf16.mxu0 %v4357
        %5354 = vmatpush1.bf16.msra.mxu0 %v4356
        %5355 = vmatprep.subr.bf16.mxu0 %v4597
        %5356 = vmatpush2.bf16.msra.mxu0 %v4596
        %5357 = vmatprep.subr.bf16.mxu0 %v4581
        %5358 = vmatpush2.bf16.msra.mxu0 %v4580
        %5359 = vmatprep.subr.bf16.mxu0 %v4565
        %5360 = vmatpush2.bf16.msra.mxu0 %v4564
        %5361 = vmatprep.subr.bf16.mxu0 %v4549
        %5362 = vmatpush2.bf16.msra.mxu0 %v4548
        %5363 = vmatprep.subr.bf16.mxu0 %v4533
        %5364 = vmatpush2.bf16.msra.mxu0 %v4532
        %5365 = vmatprep.subr.bf16.mxu0 %v4517
        %5366 = vmatpush2.bf16.msra.mxu0 %v4516
        %5367 = vmatprep.subr.bf16.mxu0 %v4501
        %5368 = vmatpush2.bf16.msra.mxu0 %v4500
        %5369 = vmatprep.subr.bf16.mxu0 %v4485
        %5370 = vmatpush2.bf16.msra.mxu0 %v4484
        %5371 = vmatprep.mubr.bf16.mxu0 %v5129
        %5372 = vmatmul.mubr.bf16.gmra.mxu0 %v5128
        %v5373 = vpop.f32.mrf.mxu0
        %v5374 = vadd.f32 %v5333, %v5373
        %v5375 = vpop.f32.mrf.mxu0
        %v5376 = vadd.f32 %v5335, %v5375
        %v5377 = vpop.f32.mrf.mxu0
        %v5378 = vpop.f32.mrf.mxu0
        %5379 = vdwg.mxu0
        %5380 = vmatprep.subr.bf16.mxu0 %v4725
        %5381 = vmatpush1.bf16.msra.mxu0 %v4724
        %5382 = vmatprep.subr.bf16.mxu0 %v4709
        %5383 = vmatpush1.bf16.msra.mxu0 %v4708
        %5384 = vmatprep.subr.bf16.mxu0 %v4693
        %5385 = vmatpush1.bf16.msra.mxu0 %v4692
        %5386 = vmatprep.subr.bf16.mxu0 %v4677
        %5387 = vmatpush1.bf16.msra.mxu0 %v4676
        %5388 = vmatprep.subr.bf16.mxu0 %v4661
        %5389 = vmatpush1.bf16.msra.mxu0 %v4660
        %5390 = vmatprep.subr.bf16.mxu0 %v4645
        %5391 = vmatpush1.bf16.msra.mxu0 %v4644
        %5392 = vmatprep.subr.bf16.mxu0 %v4629
        %5393 = vmatpush1.bf16.msra.mxu0 %v4628
        %5394 = vmatprep.subr.bf16.mxu0 %v4613
        %5395 = vmatpush1.bf16.msra.mxu0 %v4612
        %5396 = vmatprep.subr.bf16.mxu0 %v4853
        %5397 = vmatpush2.bf16.msra.mxu0 %v4852
        %5398 = vmatprep.subr.bf16.mxu0 %v4837
        %5399 = vmatpush2.bf16.msra.mxu0 %v4836
        %5400 = vmatprep.subr.bf16.mxu0 %v4821
        %5401 = vmatpush2.bf16.msra.mxu0 %v4820
        %5402 = vmatprep.subr.bf16.mxu0 %v4805
        %5403 = vmatpush2.bf16.msra.mxu0 %v4804
        %5404 = vmatprep.subr.bf16.mxu0 %v4789
        %5405 = vmatpush2.bf16.msra.mxu0 %v4788
        %5406 = vmatprep.subr.bf16.mxu0 %v4773
        %5407 = vmatpush2.bf16.msra.mxu0 %v4772
        %5408 = vmatprep.subr.bf16.mxu0 %v4757
        %5409 = vmatpush2.bf16.msra.mxu0 %v4756
        %5410 = vmatprep.subr.bf16.mxu0 %v4741
        %5411 = vmatpush2.bf16.msra.mxu0 %v4740
        %5412 = vmatprep.mubr.bf16.mxu0 %v5131
        %5413 = vmatmul.mubr.bf16.gmra.mxu0 %v5130
        %v5414 = vpop.f32.mrf.mxu0
        %v5415 = vadd.f32 %v5374, %v5414
        %v5416 = vpop.f32.mrf.mxu0
        %v5417 = vadd.f32 %v5376, %v5416
        %v5418 = vpop.f32.mrf.mxu0
        %v5419 = vpop.f32.mrf.mxu0
        %5420 = vdwg.mxu0
        %5421 = vmatprep.subr.bf16.mxu0 %v4981
        %5422 = vmatpush1.bf16.msra.mxu0 %v4980
        %5423 = vmatprep.subr.bf16.mxu0 %v4965
        %5424 = vmatpush1.bf16.msra.mxu0 %v4964
        %5425 = vmatprep.subr.bf16.mxu0 %v4949
        %5426 = vmatpush1.bf16.msra.mxu0 %v4948
        %5427 = vmatprep.subr.bf16.mxu0 %v4933
        %5428 = vmatpush1.bf16.msra.mxu0 %v4932
        %5429 = vmatprep.subr.bf16.mxu0 %v4917
        %5430 = vmatpush1.bf16.msra.mxu0 %v4916
        %5431 = vmatprep.subr.bf16.mxu0 %v4901
        %5432 = vmatpush1.bf16.msra.mxu0 %v4900
        %5433 = vmatprep.subr.bf16.mxu0 %v4885
        %5434 = vmatpush1.bf16.msra.mxu0 %v4884
        %5435 = vmatprep.subr.bf16.mxu0 %v4869
        %5436 = vmatpush1.bf16.msra.mxu0 %v4868
        %5437 = vmatprep.subr.bf16.mxu0 %v5109
        %5438 = vmatpush2.bf16.msra.mxu0 %v5108
        %5439 = vmatprep.subr.bf16.mxu0 %v5093
        %5440 = vmatpush2.bf16.msra.mxu0 %v5092
        %5441 = vmatprep.subr.bf16.mxu0 %v5077
        %5442 = vmatpush2.bf16.msra.mxu0 %v5076
        %5443 = vmatprep.subr.bf16.mxu0 %v5061
        %5444 = vmatpush2.bf16.msra.mxu0 %v5060
        %5445 = vmatprep.subr.bf16.mxu0 %v5045
        %5446 = vmatpush2.bf16.msra.mxu0 %v5044
        %5447 = vmatprep.subr.bf16.mxu0 %v5029
        %5448 = vmatpush2.bf16.msra.mxu0 %v5028
        %5449 = vmatprep.subr.bf16.mxu0 %v5013
        %5450 = vmatpush2.bf16.msra.mxu0 %v5012
        %5451 = vmatprep.subr.bf16.mxu0 %v4997
        %5452 = vmatpush2.bf16.msra.mxu0 %v4996
        %5453 = vmatprep.mubr.bf16.mxu0 %v5133
        %5454 = vmatmul.mubr.bf16.gmra.mxu0 %v5132
        %v5455 = vpop.f32.mrf.mxu0
        %v5456 = vadd.f32 %v5415, %v5455
        %v5457 = vpop.f32.mrf.mxu0
        %v5458 = vadd.f32 %v5417, %v5457
        %v5459 = vpop.f32.mrf.mxu0
        %v5460 = vpop.f32.mrf.mxu0
        %5461 = vdwg.mxu0
        %5462 = vmatprep.subr.bf16.mxu0 %v4215
        %5463 = vmatpush1.bf16.msra.mxu0 %v4214
        %5464 = vmatprep.subr.bf16.mxu0 %v4199
        %5465 = vmatpush1.bf16.msra.mxu0 %v4198
        %5466 = vmatprep.subr.bf16.mxu0 %v4183
        %5467 = vmatpush1.bf16.msra.mxu0 %v4182
        %5468 = vmatprep.subr.bf16.mxu0 %v4167
        %5469 = vmatpush1.bf16.msra.mxu0 %v4166
        %5470 = vmatprep.subr.bf16.mxu0 %v4151
        %5471 = vmatpush1.bf16.msra.mxu0 %v4150
        %5472 = vmatprep.subr.bf16.mxu0 %v4135
        %5473 = vmatpush1.bf16.msra.mxu0 %v4134
        %5474 = vmatprep.subr.bf16.mxu0 %v4119
        %5475 = vmatpush1.bf16.msra.mxu0 %v4118
        %5476 = vmatprep.subr.bf16.mxu0 %v4103
        %5477 = vmatpush1.bf16.msra.mxu0 %v4102
        %5478 = vmatprep.subr.bf16.mxu0 %v4343
        %5479 = vmatpush2.bf16.msra.mxu0 %v4342
        %5480 = vmatprep.subr.bf16.mxu0 %v4327
        %5481 = vmatpush2.bf16.msra.mxu0 %v4326
        %5482 = vmatprep.subr.bf16.mxu0 %v4311
        %5483 = vmatpush2.bf16.msra.mxu0 %v4310
        %5484 = vmatprep.subr.bf16.mxu0 %v4295
        %5485 = vmatpush2.bf16.msra.mxu0 %v4294
        %5486 = vmatprep.subr.bf16.mxu0 %v4279
        %5487 = vmatpush2.bf16.msra.mxu0 %v4278
        %5488 = vmatprep.subr.bf16.mxu0 %v4263
        %5489 = vmatpush2.bf16.msra.mxu0 %v4262
        %5490 = vmatprep.subr.bf16.mxu0 %v4247
        %5491 = vmatpush2.bf16.msra.mxu0 %v4246
        %5492 = vmatprep.subr.bf16.mxu0 %v4231
        %5493 = vmatpush2.bf16.msra.mxu0 %v4230
        %5494 = vmatprep.mubr.bf16.mxu0 %v5127
        %5495 = vmatmul.mubr.bf16.gmra.mxu0 %v5126
        %v5496 = vpop.f32.mrf.mxu0
        %v5497 = vadd.f32 0.0, %v5496
        %v5498 = vpop.f32.mrf.mxu0
        %v5499 = vadd.f32 0.0, %v5498
        %v5500 = vpop.f32.mrf.mxu0
        %v5501 = vpop.f32.mrf.mxu0
        %5502 = vdwg.mxu0
        %5503 = vmatprep.subr.bf16.mxu0 %v4471
        %5504 = vmatpush1.bf16.msra.mxu0 %v4470
        %5505 = vmatprep.subr.bf16.mxu0 %v4455
        %5506 = vmatpush1.bf16.msra.mxu0 %v4454
        %5507 = vmatprep.subr.bf16.mxu0 %v4439
        %5508 = vmatpush1.bf16.msra.mxu0 %v4438
        %5509 = vmatprep.subr.bf16.mxu0 %v4423
        %5510 = vmatpush1.bf16.msra.mxu0 %v4422
        %5511 = vmatprep.subr.bf16.mxu0 %v4407
        %5512 = vmatpush1.bf16.msra.mxu0 %v4406
        %5513 = vmatprep.subr.bf16.mxu0 %v4391
        %5514 = vmatpush1.bf16.msra.mxu0 %v4390
        %5515 = vmatprep.subr.bf16.mxu0 %v4375
        %5516 = vmatpush1.bf16.msra.mxu0 %v4374
        %5517 = vmatprep.subr.bf16.mxu0 %v4359
        %5518 = vmatpush1.bf16.msra.mxu0 %v4358
        %5519 = vmatprep.subr.bf16.mxu0 %v4599
        %5520 = vmatpush2.bf16.msra.mxu0 %v4598
        %5521 = vmatprep.subr.bf16.mxu0 %v4583
        %5522 = vmatpush2.bf16.msra.mxu0 %v4582
        %5523 = vmatprep.subr.bf16.mxu0 %v4567
        %5524 = vmatpush2.bf16.msra.mxu0 %v4566
        %5525 = vmatprep.subr.bf16.mxu0 %v4551
        %5526 = vmatpush2.bf16.msra.mxu0 %v4550
        %5527 = vmatprep.subr.bf16.mxu0 %v4535
        %5528 = vmatpush2.bf16.msra.mxu0 %v4534
        %5529 = vmatprep.subr.bf16.mxu0 %v4519
        %5530 = vmatpush2.bf16.msra.mxu0 %v4518
        %5531 = vmatprep.subr.bf16.mxu0 %v4503
        %5532 = vmatpush2.bf16.msra.mxu0 %v4502
        %5533 = vmatprep.subr.bf16.mxu0 %v4487
        %5534 = vmatpush2.bf16.msra.mxu0 %v4486
        %5535 = vmatprep.mubr.bf16.mxu0 %v5129
        %5536 = vmatmul.mubr.bf16.gmra.mxu0 %v5128
        %v5537 = vpop.f32.mrf.mxu0
        %v5538 = vadd.f32 %v5497, %v5537
        %v5539 = vpop.f32.mrf.mxu0
        %v5540 = vadd.f32 %v5499, %v5539
        %v5541 = vpop.f32.mrf.mxu0
        %v5542 = vpop.f32.mrf.mxu0
        %5543 = vdwg.mxu0
        %5544 = vmatprep.subr.bf16.mxu0 %v4727
        %5545 = vmatpush1.bf16.msra.mxu0 %v4726
        %5546 = vmatprep.subr.bf16.mxu0 %v4711
        %5547 = vmatpush1.bf16.msra.mxu0 %v4710
        %5548 = vmatprep.subr.bf16.mxu0 %v4695
        %5549 = vmatpush1.bf16.msra.mxu0 %v4694
        %5550 = vmatprep.subr.bf16.mxu0 %v4679
        %5551 = vmatpush1.bf16.msra.mxu0 %v4678
        %5552 = vmatprep.subr.bf16.mxu0 %v4663
        %5553 = vmatpush1.bf16.msra.mxu0 %v4662
        %5554 = vmatprep.subr.bf16.mxu0 %v4647
        %5555 = vmatpush1.bf16.msra.mxu0 %v4646
        %5556 = vmatprep.subr.bf16.mxu0 %v4631
        %5557 = vmatpush1.bf16.msra.mxu0 %v4630
        %5558 = vmatprep.subr.bf16.mxu0 %v4615
        %5559 = vmatpush1.bf16.msra.mxu0 %v4614
        %5560 = vmatprep.subr.bf16.mxu0 %v4855
        %5561 = vmatpush2.bf16.msra.mxu0 %v4854
        %5562 = vmatprep.subr.bf16.mxu0 %v4839
        %5563 = vmatpush2.bf16.msra.mxu0 %v4838
        %5564 = vmatprep.subr.bf16.mxu0 %v4823
        %5565 = vmatpush2.bf16.msra.mxu0 %v4822
        %5566 = vmatprep.subr.bf16.mxu0 %v4807
        %5567 = vmatpush2.bf16.msra.mxu0 %v4806
        %5568 = vmatprep.subr.bf16.mxu0 %v4791
        %5569 = vmatpush2.bf16.msra.mxu0 %v4790
        %5570 = vmatprep.subr.bf16.mxu0 %v4775
        %5571 = vmatpush2.bf16.msra.mxu0 %v4774
        %5572 = vmatprep.subr.bf16.mxu0 %v4759
        %5573 = vmatpush2.bf16.msra.mxu0 %v4758
        %5574 = vmatprep.subr.bf16.mxu0 %v4743
        %5575 = vmatpush2.bf16.msra.mxu0 %v4742
        %5576 = vmatprep.mubr.bf16.mxu0 %v5131
        %5577 = vmatmul.mubr.bf16.gmra.mxu0 %v5130
        %v5578 = vpop.f32.mrf.mxu0
        %v5579 = vadd.f32 %v5538, %v5578
        %v5580 = vpop.f32.mrf.mxu0
        %v5581 = vadd.f32 %v5540, %v5580
        %v5582 = vpop.f32.mrf.mxu0
        %v5583 = vpop.f32.mrf.mxu0
        %5584 = vdwg.mxu0
        %5585 = vmatprep.subr.bf16.mxu0 %v4983
        %5586 = vmatpush1.bf16.msra.mxu0 %v4982
        %5587 = vmatprep.subr.bf16.mxu0 %v4967
        %5588 = vmatpush1.bf16.msra.mxu0 %v4966
        %5589 = vmatprep.subr.bf16.mxu0 %v4951
        %5590 = vmatpush1.bf16.msra.mxu0 %v4950
        %5591 = vmatprep.subr.bf16.mxu0 %v4935
        %5592 = vmatpush1.bf16.msra.mxu0 %v4934
        %5593 = vmatprep.subr.bf16.mxu0 %v4919
        %5594 = vmatpush1.bf16.msra.mxu0 %v4918
        %5595 = vmatprep.subr.bf16.mxu0 %v4903
        %5596 = vmatpush1.bf16.msra.mxu0 %v4902
        %5597 = vmatprep.subr.bf16.mxu0 %v4887
        %5598 = vmatpush1.bf16.msra.mxu0 %v4886
        %5599 = vmatprep.subr.bf16.mxu0 %v4871
        %5600 = vmatpush1.bf16.msra.mxu0 %v4870
        %5601 = vmatprep.subr.bf16.mxu0 %v5111
        %5602 = vmatpush2.bf16.msra.mxu0 %v5110
        %5603 = vmatprep.subr.bf16.mxu0 %v5095
        %5604 = vmatpush2.bf16.msra.mxu0 %v5094
        %5605 = vmatprep.subr.bf16.mxu0 %v5079
        %5606 = vmatpush2.bf16.msra.mxu0 %v5078
        %5607 = vmatprep.subr.bf16.mxu0 %v5063
        %5608 = vmatpush2.bf16.msra.mxu0 %v5062
        %5609 = vmatprep.subr.bf16.mxu0 %v5047
        %5610 = vmatpush2.bf16.msra.mxu0 %v5046
        %5611 = vmatprep.subr.bf16.mxu0 %v5031
        %5612 = vmatpush2.bf16.msra.mxu0 %v5030
        %5613 = vmatprep.subr.bf16.mxu0 %v5015
        %5614 = vmatpush2.bf16.msra.mxu0 %v5014
        %5615 = vmatprep.subr.bf16.mxu0 %v4999
        %5616 = vmatpush2.bf16.msra.mxu0 %v4998
        %5617 = vmatprep.mubr.bf16.mxu0 %v5133
        %5618 = vmatmul.mubr.bf16.gmra.mxu0 %v5132
        %v5619 = vpop.f32.mrf.mxu0
        %v5620 = vadd.f32 %v5579, %v5619
        %v5621 = vpop.f32.mrf.mxu0
        %v5622 = vadd.f32 %v5581, %v5621
        %v5623 = vpop.f32.mrf.mxu0
        %v5624 = vpop.f32.mrf.mxu0
        %5625 = vdwg.mxu0
        %5626 = vmatprep.subr.bf16.mxu0 %v4217
        %5627 = vmatpush1.bf16.msra.mxu0 %v4216
        %5628 = vmatprep.subr.bf16.mxu0 %v4201
        %5629 = vmatpush1.bf16.msra.mxu0 %v4200
        %5630 = vmatprep.subr.bf16.mxu0 %v4185
        %5631 = vmatpush1.bf16.msra.mxu0 %v4184
        %5632 = vmatprep.subr.bf16.mxu0 %v4169
        %5633 = vmatpush1.bf16.msra.mxu0 %v4168
        %5634 = vmatprep.subr.bf16.mxu0 %v4153
        %5635 = vmatpush1.bf16.msra.mxu0 %v4152
        %5636 = vmatprep.subr.bf16.mxu0 %v4137
        %5637 = vmatpush1.bf16.msra.mxu0 %v4136
        %5638 = vmatprep.subr.bf16.mxu0 %v4121
        %5639 = vmatpush1.bf16.msra.mxu0 %v4120
        %5640 = vmatprep.subr.bf16.mxu0 %v4105
        %5641 = vmatpush1.bf16.msra.mxu0 %v4104
        %5642 = vmatprep.subr.bf16.mxu0 %v4345
        %5643 = vmatpush2.bf16.msra.mxu0 %v4344
        %5644 = vmatprep.subr.bf16.mxu0 %v4329
        %5645 = vmatpush2.bf16.msra.mxu0 %v4328
        %5646 = vmatprep.subr.bf16.mxu0 %v4313
        %5647 = vmatpush2.bf16.msra.mxu0 %v4312
        %5648 = vmatprep.subr.bf16.mxu0 %v4297
        %5649 = vmatpush2.bf16.msra.mxu0 %v4296
        %5650 = vmatprep.subr.bf16.mxu0 %v4281
        %5651 = vmatpush2.bf16.msra.mxu0 %v4280
        %5652 = vmatprep.subr.bf16.mxu0 %v4265
        %5653 = vmatpush2.bf16.msra.mxu0 %v4264
        %5654 = vmatprep.subr.bf16.mxu0 %v4249
        %5655 = vmatpush2.bf16.msra.mxu0 %v4248
        %5656 = vmatprep.subr.bf16.mxu0 %v4233
        %5657 = vmatpush2.bf16.msra.mxu0 %v4232
        %5658 = vmatprep.mubr.bf16.mxu0 %v5127
        %5659 = vmatmul.mubr.bf16.gmra.mxu0 %v5126
        %v5660 = vpop.f32.mrf.mxu0
        %v5661 = vadd.f32 0.0, %v5660
        %v5662 = vpop.f32.mrf.mxu0
        %v5663 = vadd.f32 0.0, %v5662
        %v5664 = vpop.f32.mrf.mxu0
        %v5665 = vpop.f32.mrf.mxu0
        %5666 = vdwg.mxu0
        %5667 = vmatprep.subr.bf16.mxu0 %v4473
        %5668 = vmatpush1.bf16.msra.mxu0 %v4472
        %5669 = vmatprep.subr.bf16.mxu0 %v4457
        %5670 = vmatpush1.bf16.msra.mxu0 %v4456
        %5671 = vmatprep.subr.bf16.mxu0 %v4441
        %5672 = vmatpush1.bf16.msra.mxu0 %v4440
        %5673 = vmatprep.subr.bf16.mxu0 %v4425
        %5674 = vmatpush1.bf16.msra.mxu0 %v4424
        %5675 = vmatprep.subr.bf16.mxu0 %v4409
        %5676 = vmatpush1.bf16.msra.mxu0 %v4408
        %5677 = vmatprep.subr.bf16.mxu0 %v4393
        %5678 = vmatpush1.bf16.msra.mxu0 %v4392
        %5679 = vmatprep.subr.bf16.mxu0 %v4377
        %5680 = vmatpush1.bf16.msra.mxu0 %v4376
        %5681 = vmatprep.subr.bf16.mxu0 %v4361
        %5682 = vmatpush1.bf16.msra.mxu0 %v4360
        %5683 = vmatprep.subr.bf16.mxu0 %v4601
        %5684 = vmatpush2.bf16.msra.mxu0 %v4600
        %5685 = vmatprep.subr.bf16.mxu0 %v4585
        %5686 = vmatpush2.bf16.msra.mxu0 %v4584
        %5687 = vmatprep.subr.bf16.mxu0 %v4569
        %5688 = vmatpush2.bf16.msra.mxu0 %v4568
        %5689 = vmatprep.subr.bf16.mxu0 %v4553
        %5690 = vmatpush2.bf16.msra.mxu0 %v4552
        %5691 = vmatprep.subr.bf16.mxu0 %v4537
        %5692 = vmatpush2.bf16.msra.mxu0 %v4536
        %5693 = vmatprep.subr.bf16.mxu0 %v4521
        %5694 = vmatpush2.bf16.msra.mxu0 %v4520
        %5695 = vmatprep.subr.bf16.mxu0 %v4505
        %5696 = vmatpush2.bf16.msra.mxu0 %v4504
        %5697 = vmatprep.subr.bf16.mxu0 %v4489
        %5698 = vmatpush2.bf16.msra.mxu0 %v4488
        %5699 = vmatprep.mubr.bf16.mxu0 %v5129
        %5700 = vmatmul.mubr.bf16.gmra.mxu0 %v5128
        %v5701 = vpop.f32.mrf.mxu0
        %v5702 = vadd.f32 %v5661, %v5701
        %v5703 = vpop.f32.mrf.mxu0
        %v5704 = vadd.f32 %v5663, %v5703
        %v5705 = vpop.f32.mrf.mxu0
        %v5706 = vpop.f32.mrf.mxu0
        %5707 = vdwg.mxu0
        %5708 = vmatprep.subr.bf16.mxu0 %v4729
        %5709 = vmatpush1.bf16.msra.mxu0 %v4728
        %5710 = vmatprep.subr.bf16.mxu0 %v4713
        %5711 = vmatpush1.bf16.msra.mxu0 %v4712
        %5712 = vmatprep.subr.bf16.mxu0 %v4697
        %5713 = vmatpush1.bf16.msra.mxu0 %v4696
        %5714 = vmatprep.subr.bf16.mxu0 %v4681
        %5715 = vmatpush1.bf16.msra.mxu0 %v4680
        %5716 = vmatprep.subr.bf16.mxu0 %v4665
        %5717 = vmatpush1.bf16.msra.mxu0 %v4664
        %5718 = vmatprep.subr.bf16.mxu0 %v4649
        %5719 = vmatpush1.bf16.msra.mxu0 %v4648
        %5720 = vmatprep.subr.bf16.mxu0 %v4633
        %5721 = vmatpush1.bf16.msra.mxu0 %v4632
        %5722 = vmatprep.subr.bf16.mxu0 %v4617
        %5723 = vmatpush1.bf16.msra.mxu0 %v4616
        %5724 = vmatprep.subr.bf16.mxu0 %v4857
        %5725 = vmatpush2.bf16.msra.mxu0 %v4856
        %5726 = vmatprep.subr.bf16.mxu0 %v4841
        %5727 = vmatpush2.bf16.msra.mxu0 %v4840
        %5728 = vmatprep.subr.bf16.mxu0 %v4825
        %5729 = vmatpush2.bf16.msra.mxu0 %v4824
        %5730 = vmatprep.subr.bf16.mxu0 %v4809
        %5731 = vmatpush2.bf16.msra.mxu0 %v4808
        %5732 = vmatprep.subr.bf16.mxu0 %v4793
        %5733 = vmatpush2.bf16.msra.mxu0 %v4792
        %5734 = vmatprep.subr.bf16.mxu0 %v4777
        %5735 = vmatpush2.bf16.msra.mxu0 %v4776
        %5736 = vmatprep.subr.bf16.mxu0 %v4761
        %5737 = vmatpush2.bf16.msra.mxu0 %v4760
        %5738 = vmatprep.subr.bf16.mxu0 %v4745
        %5739 = vmatpush2.bf16.msra.mxu0 %v4744
        %5740 = vmatprep.mubr.bf16.mxu0 %v5131
        %5741 = vmatmul.mubr.bf16.gmra.mxu0 %v5130
        %v5742 = vpop.f32.mrf.mxu0
        %v5743 = vadd.f32 %v5702, %v5742
        %v5744 = vpop.f32.mrf.mxu0
        %v5745 = vadd.f32 %v5704, %v5744
        %v5746 = vpop.f32.mrf.mxu0
        %v5747 = vpop.f32.mrf.mxu0
        %5748 = vdwg.mxu0
        %5749 = vmatprep.subr.bf16.mxu0 %v4985
        %5750 = vmatpush1.bf16.msra.mxu0 %v4984
        %5751 = vmatprep.subr.bf16.mxu0 %v4969
        %5752 = vmatpush1.bf16.msra.mxu0 %v4968
        %5753 = vmatprep.subr.bf16.mxu0 %v4953
        %5754 = vmatpush1.bf16.msra.mxu0 %v4952
        %5755 = vmatprep.subr.bf16.mxu0 %v4937
        %5756 = vmatpush1.bf16.msra.mxu0 %v4936
        %5757 = vmatprep.subr.bf16.mxu0 %v4921
        %5758 = vmatpush1.bf16.msra.mxu0 %v4920
        %5759 = vmatprep.subr.bf16.mxu0 %v4905
        %5760 = vmatpush1.bf16.msra.mxu0 %v4904
        %5761 = vmatprep.subr.bf16.mxu0 %v4889
        %5762 = vmatpush1.bf16.msra.mxu0 %v4888
        %5763 = vmatprep.subr.bf16.mxu0 %v4873
        %5764 = vmatpush1.bf16.msra.mxu0 %v4872
        %5765 = vmatprep.subr.bf16.mxu0 %v5113
        %5766 = vmatpush2.bf16.msra.mxu0 %v5112
        %5767 = vmatprep.subr.bf16.mxu0 %v5097
        %5768 = vmatpush2.bf16.msra.mxu0 %v5096
        %5769 = vmatprep.subr.bf16.mxu0 %v5081
        %5770 = vmatpush2.bf16.msra.mxu0 %v5080
        %5771 = vmatprep.subr.bf16.mxu0 %v5065
        %5772 = vmatpush2.bf16.msra.mxu0 %v5064
        %5773 = vmatprep.subr.bf16.mxu0 %v5049
        %5774 = vmatpush2.bf16.msra.mxu0 %v5048
        %5775 = vmatprep.subr.bf16.mxu0 %v5033
        %5776 = vmatpush2.bf16.msra.mxu0 %v5032
        %5777 = vmatprep.subr.bf16.mxu0 %v5017
        %5778 = vmatpush2.bf16.msra.mxu0 %v5016
        %5779 = vmatprep.subr.bf16.mxu0 %v5001
        %5780 = vmatpush2.bf16.msra.mxu0 %v5000
        %5781 = vmatprep.mubr.bf16.mxu0 %v5133
        %5782 = vmatmul.mubr.bf16.gmra.mxu0 %v5132
        %v5783 = vpop.f32.mrf.mxu0
        %v5784 = vadd.f32 %v5743, %v5783
        %v5785 = vpop.f32.mrf.mxu0
        %v5786 = vadd.f32 %v5745, %v5785
        %v5787 = vpop.f32.mrf.mxu0
        %v5788 = vpop.f32.mrf.mxu0
        %5789 = vdwg.mxu0
        %5790 = vmatprep.subr.bf16.mxu0 %v4219
        %5791 = vmatpush1.bf16.msra.mxu0 %v4218
        %5792 = vmatprep.subr.bf16.mxu0 %v4203
        %5793 = vmatpush1.bf16.msra.mxu0 %v4202
        %5794 = vmatprep.subr.bf16.mxu0 %v4187
        %5795 = vmatpush1.bf16.msra.mxu0 %v4186
        %5796 = vmatprep.subr.bf16.mxu0 %v4171
        %5797 = vmatpush1.bf16.msra.mxu0 %v4170
        %5798 = vmatprep.subr.bf16.mxu0 %v4155
        %5799 = vmatpush1.bf16.msra.mxu0 %v4154
        %5800 = vmatprep.subr.bf16.mxu0 %v4139
        %5801 = vmatpush1.bf16.msra.mxu0 %v4138
        %5802 = vmatprep.subr.bf16.mxu0 %v4123
        %5803 = vmatpush1.bf16.msra.mxu0 %v4122
        %5804 = vmatprep.subr.bf16.mxu0 %v4107
        %5805 = vmatpush1.bf16.msra.mxu0 %v4106
        %5806 = vmatprep.subr.bf16.mxu0 %v4347
        %5807 = vmatpush2.bf16.msra.mxu0 %v4346
        %5808 = vmatprep.subr.bf16.mxu0 %v4331
        %5809 = vmatpush2.bf16.msra.mxu0 %v4330
        %5810 = vmatprep.subr.bf16.mxu0 %v4315
        %5811 = vmatpush2.bf16.msra.mxu0 %v4314
        %5812 = vmatprep.subr.bf16.mxu0 %v4299
        %5813 = vmatpush2.bf16.msra.mxu0 %v4298
        %5814 = vmatprep.subr.bf16.mxu0 %v4283
        %5815 = vmatpush2.bf16.msra.mxu0 %v4282
        %5816 = vmatprep.subr.bf16.mxu0 %v4267
        %5817 = vmatpush2.bf16.msra.mxu0 %v4266
        %5818 = vmatprep.subr.bf16.mxu0 %v4251
        %5819 = vmatpush2.bf16.msra.mxu0 %v4250
        %5820 = vmatprep.subr.bf16.mxu0 %v4235
        %5821 = vmatpush2.bf16.msra.mxu0 %v4234
        %5822 = vmatprep.mubr.bf16.mxu0 %v5127
        %5823 = vmatmul.mubr.bf16.gmra.mxu0 %v5126
        %v5824 = vpop.f32.mrf.mxu0
        %v5825 = vadd.f32 0.0, %v5824
        %v5826 = vpop.f32.mrf.mxu0
        %v5827 = vadd.f32 0.0, %v5826
        %v5828 = vpop.f32.mrf.mxu0
        %v5829 = vpop.f32.mrf.mxu0
        %5830 = vdwg.mxu0
        %5831 = vmatprep.subr.bf16.mxu0 %v4475
        %5832 = vmatpush1.bf16.msra.mxu0 %v4474
        %5833 = vmatprep.subr.bf16.mxu0 %v4459
        %5834 = vmatpush1.bf16.msra.mxu0 %v4458
        %5835 = vmatprep.subr.bf16.mxu0 %v4443
        %5836 = vmatpush1.bf16.msra.mxu0 %v4442
        %5837 = vmatprep.subr.bf16.mxu0 %v4427
        %5838 = vmatpush1.bf16.msra.mxu0 %v4426
        %5839 = vmatprep.subr.bf16.mxu0 %v4411
        %5840 = vmatpush1.bf16.msra.mxu0 %v4410
        %5841 = vmatprep.subr.bf16.mxu0 %v4395
        %5842 = vmatpush1.bf16.msra.mxu0 %v4394
        %5843 = vmatprep.subr.bf16.mxu0 %v4379
        %5844 = vmatpush1.bf16.msra.mxu0 %v4378
        %5845 = vmatprep.subr.bf16.mxu0 %v4363
        %5846 = vmatpush1.bf16.msra.mxu0 %v4362
        %5847 = vmatprep.subr.bf16.mxu0 %v4603
        %5848 = vmatpush2.bf16.msra.mxu0 %v4602
        %5849 = vmatprep.subr.bf16.mxu0 %v4587
        %5850 = vmatpush2.bf16.msra.mxu0 %v4586
        %5851 = vmatprep.subr.bf16.mxu0 %v4571
        %5852 = vmatpush2.bf16.msra.mxu0 %v4570
        %5853 = vmatprep.subr.bf16.mxu0 %v4555
        %5854 = vmatpush2.bf16.msra.mxu0 %v4554
        %5855 = vmatprep.subr.bf16.mxu0 %v4539
        %5856 = vmatpush2.bf16.msra.mxu0 %v4538
        %5857 = vmatprep.subr.bf16.mxu0 %v4523
        %5858 = vmatpush2.bf16.msra.mxu0 %v4522
        %5859 = vmatprep.subr.bf16.mxu0 %v4507
        %5860 = vmatpush2.bf16.msra.mxu0 %v4506
        %5861 = vmatprep.subr.bf16.mxu0 %v4491
        %5862 = vmatpush2.bf16.msra.mxu0 %v4490
        %5863 = vmatprep.mubr.bf16.mxu0 %v5129
        %5864 = vmatmul.mubr.bf16.gmra.mxu0 %v5128
        %v5865 = vpop.f32.mrf.mxu0
        %v5866 = vadd.f32 %v5825, %v5865
        %v5867 = vpop.f32.mrf.mxu0
        %v5868 = vadd.f32 %v5827, %v5867
        %v5869 = vpop.f32.mrf.mxu0
        %v5870 = vpop.f32.mrf.mxu0
        %5871 = vdwg.mxu0
        %5872 = vmatprep.subr.bf16.mxu0 %v4731
        %5873 = vmatpush1.bf16.msra.mxu0 %v4730
        %5874 = vmatprep.subr.bf16.mxu0 %v4715
        %5875 = vmatpush1.bf16.msra.mxu0 %v4714
        %5876 = vmatprep.subr.bf16.mxu0 %v4699
        %5877 = vmatpush1.bf16.msra.mxu0 %v4698
        %5878 = vmatprep.subr.bf16.mxu0 %v4683
        %5879 = vmatpush1.bf16.msra.mxu0 %v4682
        %5880 = vmatprep.subr.bf16.mxu0 %v4667
        %5881 = vmatpush1.bf16.msra.mxu0 %v4666
        %5882 = vmatprep.subr.bf16.mxu0 %v4651
        %5883 = vmatpush1.bf16.msra.mxu0 %v4650
        %5884 = vmatprep.subr.bf16.mxu0 %v4635
        %5885 = vmatpush1.bf16.msra.mxu0 %v4634
        %5886 = vmatprep.subr.bf16.mxu0 %v4619
        %5887 = vmatpush1.bf16.msra.mxu0 %v4618
        %5888 = vmatprep.subr.bf16.mxu0 %v4859
        %5889 = vmatpush2.bf16.msra.mxu0 %v4858
        %5890 = vmatprep.subr.bf16.mxu0 %v4843
        %5891 = vmatpush2.bf16.msra.mxu0 %v4842
        %5892 = vmatprep.subr.bf16.mxu0 %v4827
        %5893 = vmatpush2.bf16.msra.mxu0 %v4826
        %5894 = vmatprep.subr.bf16.mxu0 %v4811
        %5895 = vmatpush2.bf16.msra.mxu0 %v4810
        %5896 = vmatprep.subr.bf16.mxu0 %v4795
        %5897 = vmatpush2.bf16.msra.mxu0 %v4794
        %5898 = vmatprep.subr.bf16.mxu0 %v4779
        %5899 = vmatpush2.bf16.msra.mxu0 %v4778
        %5900 = vmatprep.subr.bf16.mxu0 %v4763
        %5901 = vmatpush2.bf16.msra.mxu0 %v4762
        %5902 = vmatprep.subr.bf16.mxu0 %v4747
        %5903 = vmatpush2.bf16.msra.mxu0 %v4746
        %5904 = vmatprep.mubr.bf16.mxu0 %v5131
        %5905 = vmatmul.mubr.bf16.gmra.mxu0 %v5130
        %v5906 = vpop.f32.mrf.mxu0
        %v5907 = vadd.f32 %v5866, %v5906
        %v5908 = vpop.f32.mrf.mxu0
        %v5909 = vadd.f32 %v5868, %v5908
        %v5910 = vpop.f32.mrf.mxu0
        %v5911 = vpop.f32.mrf.mxu0
        %5912 = vdwg.mxu0
        %5913 = vmatprep.subr.bf16.mxu0 %v4987
        %5914 = vmatpush1.bf16.msra.mxu0 %v4986
        %5915 = vmatprep.subr.bf16.mxu0 %v4971
        %5916 = vmatpush1.bf16.msra.mxu0 %v4970
        %5917 = vmatprep.subr.bf16.mxu0 %v4955
        %5918 = vmatpush1.bf16.msra.mxu0 %v4954
        %5919 = vmatprep.subr.bf16.mxu0 %v4939
        %5920 = vmatpush1.bf16.msra.mxu0 %v4938
        %5921 = vmatprep.subr.bf16.mxu0 %v4923
        %5922 = vmatpush1.bf16.msra.mxu0 %v4922
        %5923 = vmatprep.subr.bf16.mxu0 %v4907
        %5924 = vmatpush1.bf16.msra.mxu0 %v4906
        %5925 = vmatprep.subr.bf16.mxu0 %v4891
        %5926 = vmatpush1.bf16.msra.mxu0 %v4890
        %5927 = vmatprep.subr.bf16.mxu0 %v4875
        %5928 = vmatpush1.bf16.msra.mxu0 %v4874
        %5929 = vmatprep.subr.bf16.mxu0 %v5115
        %5930 = vmatpush2.bf16.msra.mxu0 %v5114
        %5931 = vmatprep.subr.bf16.mxu0 %v5099
        %5932 = vmatpush2.bf16.msra.mxu0 %v5098
        %5933 = vmatprep.subr.bf16.mxu0 %v5083
        %5934 = vmatpush2.bf16.msra.mxu0 %v5082
        %5935 = vmatprep.subr.bf16.mxu0 %v5067
        %5936 = vmatpush2.bf16.msra.mxu0 %v5066
        %5937 = vmatprep.subr.bf16.mxu0 %v5051
        %5938 = vmatpush2.bf16.msra.mxu0 %v5050
        %5939 = vmatprep.subr.bf16.mxu0 %v5035
        %5940 = vmatpush2.bf16.msra.mxu0 %v5034
        %5941 = vmatprep.subr.bf16.mxu0 %v5019
        %5942 = vmatpush2.bf16.msra.mxu0 %v5018
        %5943 = vmatprep.subr.bf16.mxu0 %v5003
        %5944 = vmatpush2.bf16.msra.mxu0 %v5002
        %5945 = vmatprep.mubr.bf16.mxu0 %v5133
        %5946 = vmatmul.mubr.bf16.gmra.mxu0 %v5132
        %v5947 = vpop.f32.mrf.mxu0
        %v5948 = vadd.f32 %v5907, %v5947
        %v5949 = vpop.f32.mrf.mxu0
        %v5950 = vadd.f32 %v5909, %v5949
        %v5951 = vpop.f32.mrf.mxu0
        %v5952 = vpop.f32.mrf.mxu0
        %5953 = vdwg.mxu0
        %5954 = vmatprep.subr.bf16.mxu0 %v4221
        %5955 = vmatpush1.bf16.msra.mxu0 %v4220
        %5956 = vmatprep.subr.bf16.mxu0 %v4205
        %5957 = vmatpush1.bf16.msra.mxu0 %v4204
        %5958 = vmatprep.subr.bf16.mxu0 %v4189
        %5959 = vmatpush1.bf16.msra.mxu0 %v4188
        %5960 = vmatprep.subr.bf16.mxu0 %v4173
        %5961 = vmatpush1.bf16.msra.mxu0 %v4172
        %5962 = vmatprep.subr.bf16.mxu0 %v4157
        %5963 = vmatpush1.bf16.msra.mxu0 %v4156
        %5964 = vmatprep.subr.bf16.mxu0 %v4141
        %5965 = vmatpush1.bf16.msra.mxu0 %v4140
        %5966 = vmatprep.subr.bf16.mxu0 %v4125
        %5967 = vmatpush1.bf16.msra.mxu0 %v4124
        %5968 = vmatprep.subr.bf16.mxu0 %v4109
        %5969 = vmatpush1.bf16.msra.mxu0 %v4108
        %5970 = vmatprep.subr.bf16.mxu0 %v4349
        %5971 = vmatpush2.bf16.msra.mxu0 %v4348
        %5972 = vmatprep.subr.bf16.mxu0 %v4333
        %5973 = vmatpush2.bf16.msra.mxu0 %v4332
        %5974 = vmatprep.subr.bf16.mxu0 %v4317
        %5975 = vmatpush2.bf16.msra.mxu0 %v4316
        %5976 = vmatprep.subr.bf16.mxu0 %v4301
        %5977 = vmatpush2.bf16.msra.mxu0 %v4300
        %5978 = vmatprep.subr.bf16.mxu0 %v4285
        %5979 = vmatpush2.bf16.msra.mxu0 %v4284
        %5980 = vmatprep.subr.bf16.mxu0 %v4269
        %5981 = vmatpush2.bf16.msra.mxu0 %v4268
        %5982 = vmatprep.subr.bf16.mxu0 %v4253
        %5983 = vmatpush2.bf16.msra.mxu0 %v4252
        %5984 = vmatprep.subr.bf16.mxu0 %v4237
        %5985 = vmatpush2.bf16.msra.mxu0 %v4236
        %5986 = vmatprep.mubr.bf16.mxu0 %v5127
        %5987 = vmatmul.mubr.bf16.gmra.mxu0 %v5126
        %v5988 = vpop.f32.mrf.mxu0
        %v5989 = vadd.f32 0.0, %v5988
        %v5990 = vpop.f32.mrf.mxu0
        %v5991 = vadd.f32 0.0, %v5990
        %v5992 = vpop.f32.mrf.mxu0
        %v5993 = vpop.f32.mrf.mxu0
        %5994 = vdwg.mxu0
        %5995 = vmatprep.subr.bf16.mxu0 %v4477
        %5996 = vmatpush1.bf16.msra.mxu0 %v4476
        %5997 = vmatprep.subr.bf16.mxu0 %v4461
        %5998 = vmatpush1.bf16.msra.mxu0 %v4460
        %5999 = vmatprep.subr.bf16.mxu0 %v4445
        %6000 = vmatpush1.bf16.msra.mxu0 %v4444
        %6001 = vmatprep.subr.bf16.mxu0 %v4429
        %6002 = vmatpush1.bf16.msra.mxu0 %v4428
        %6003 = vmatprep.subr.bf16.mxu0 %v4413
        %6004 = vmatpush1.bf16.msra.mxu0 %v4412
        %6005 = vmatprep.subr.bf16.mxu0 %v4397
        %6006 = vmatpush1.bf16.msra.mxu0 %v4396
        %6007 = vmatprep.subr.bf16.mxu0 %v4381
        %6008 = vmatpush1.bf16.msra.mxu0 %v4380
        %6009 = vmatprep.subr.bf16.mxu0 %v4365
        %6010 = vmatpush1.bf16.msra.mxu0 %v4364
        %6011 = vmatprep.subr.bf16.mxu0 %v4605
        %6012 = vmatpush2.bf16.msra.mxu0 %v4604
        %6013 = vmatprep.subr.bf16.mxu0 %v4589
        %6014 = vmatpush2.bf16.msra.mxu0 %v4588
        %6015 = vmatprep.subr.bf16.mxu0 %v4573
        %6016 = vmatpush2.bf16.msra.mxu0 %v4572
        %6017 = vmatprep.subr.bf16.mxu0 %v4557
        %6018 = vmatpush2.bf16.msra.mxu0 %v4556
        %6019 = vmatprep.subr.bf16.mxu0 %v4541
        %6020 = vmatpush2.bf16.msra.mxu0 %v4540
        %6021 = vmatprep.subr.bf16.mxu0 %v4525
        %6022 = vmatpush2.bf16.msra.mxu0 %v4524
        %6023 = vmatprep.subr.bf16.mxu0 %v4509
        %6024 = vmatpush2.bf16.msra.mxu0 %v4508
        %6025 = vmatprep.subr.bf16.mxu0 %v4493
        %6026 = vmatpush2.bf16.msra.mxu0 %v4492
        %6027 = vmatprep.mubr.bf16.mxu0 %v5129
        %6028 = vmatmul.mubr.bf16.gmra.mxu0 %v5128
        %v6029 = vpop.f32.mrf.mxu0
        %v6030 = vadd.f32 %v5989, %v6029
        %v6031 = vpop.f32.mrf.mxu0
        %v6032 = vadd.f32 %v5991, %v6031
        %v6033 = vpop.f32.mrf.mxu0
        %v6034 = vpop.f32.mrf.mxu0
        %6035 = vdwg.mxu0
        %6036 = vmatprep.subr.bf16.mxu0 %v4733
        %6037 = vmatpush1.bf16.msra.mxu0 %v4732
        %6038 = vmatprep.subr.bf16.mxu0 %v4717
        %6039 = vmatpush1.bf16.msra.mxu0 %v4716
        %6040 = vmatprep.subr.bf16.mxu0 %v4701
        %6041 = vmatpush1.bf16.msra.mxu0 %v4700
        %6042 = vmatprep.subr.bf16.mxu0 %v4685
        %6043 = vmatpush1.bf16.msra.mxu0 %v4684
        %6044 = vmatprep.subr.bf16.mxu0 %v4669
        %6045 = vmatpush1.bf16.msra.mxu0 %v4668
        %6046 = vmatprep.subr.bf16.mxu0 %v4653
        %6047 = vmatpush1.bf16.msra.mxu0 %v4652
        %6048 = vmatprep.subr.bf16.mxu0 %v4637
        %6049 = vmatpush1.bf16.msra.mxu0 %v4636
        %6050 = vmatprep.subr.bf16.mxu0 %v4621
        %6051 = vmatpush1.bf16.msra.mxu0 %v4620
        %6052 = vmatprep.subr.bf16.mxu0 %v4861
        %6053 = vmatpush2.bf16.msra.mxu0 %v4860
        %6054 = vmatprep.subr.bf16.mxu0 %v4845
        %6055 = vmatpush2.bf16.msra.mxu0 %v4844
        %6056 = vmatprep.subr.bf16.mxu0 %v4829
        %6057 = vmatpush2.bf16.msra.mxu0 %v4828
        %6058 = vmatprep.subr.bf16.mxu0 %v4813
        %6059 = vmatpush2.bf16.msra.mxu0 %v4812
        %6060 = vmatprep.subr.bf16.mxu0 %v4797
        %6061 = vmatpush2.bf16.msra.mxu0 %v4796
        %6062 = vmatprep.subr.bf16.mxu0 %v4781
        %6063 = vmatpush2.bf16.msra.mxu0 %v4780
        %6064 = vmatprep.subr.bf16.mxu0 %v4765
        %6065 = vmatpush2.bf16.msra.mxu0 %v4764
        %6066 = vmatprep.subr.bf16.mxu0 %v4749
        %6067 = vmatpush2.bf16.msra.mxu0 %v4748
        %6068 = vmatprep.mubr.bf16.mxu0 %v5131
        %6069 = vmatmul.mubr.bf16.gmra.mxu0 %v5130
        %v6070 = vpop.f32.mrf.mxu0
        %v6071 = vadd.f32 %v6030, %v6070
        %v6072 = vpop.f32.mrf.mxu0
        %v6073 = vadd.f32 %v6032, %v6072
        %v6074 = vpop.f32.mrf.mxu0
        %v6075 = vpop.f32.mrf.mxu0
        %6076 = vdwg.mxu0
        %6077 = vmatprep.subr.bf16.mxu0 %v4989
        %6078 = vmatpush1.bf16.msra.mxu0 %v4988
        %6079 = vmatprep.subr.bf16.mxu0 %v4973
        %6080 = vmatpush1.bf16.msra.mxu0 %v4972
        %6081 = vmatprep.subr.bf16.mxu0 %v4957
        %6082 = vmatpush1.bf16.msra.mxu0 %v4956
        %6083 = vmatprep.subr.bf16.mxu0 %v4941
        %6084 = vmatpush1.bf16.msra.mxu0 %v4940
        %6085 = vmatprep.subr.bf16.mxu0 %v4925
        %6086 = vmatpush1.bf16.msra.mxu0 %v4924
        %6087 = vmatprep.subr.bf16.mxu0 %v4909
        %6088 = vmatpush1.bf16.msra.mxu0 %v4908
        %6089 = vmatprep.subr.bf16.mxu0 %v4893
        %6090 = vmatpush1.bf16.msra.mxu0 %v4892
        %6091 = vmatprep.subr.bf16.mxu0 %v4877
        %6092 = vmatpush1.bf16.msra.mxu0 %v4876
        %6093 = vmatprep.subr.bf16.mxu0 %v5117
        %6094 = vmatpush2.bf16.msra.mxu0 %v5116
        %6095 = vmatprep.subr.bf16.mxu0 %v5101
        %6096 = vmatpush2.bf16.msra.mxu0 %v5100
        %6097 = vmatprep.subr.bf16.mxu0 %v5085
        %6098 = vmatpush2.bf16.msra.mxu0 %v5084
        %6099 = vmatprep.subr.bf16.mxu0 %v5069
        %6100 = vmatpush2.bf16.msra.mxu0 %v5068
        %6101 = vmatprep.subr.bf16.mxu0 %v5053
        %6102 = vmatpush2.bf16.msra.mxu0 %v5052
        %6103 = vmatprep.subr.bf16.mxu0 %v5037
        %6104 = vmatpush2.bf16.msra.mxu0 %v5036
        %6105 = vmatprep.subr.bf16.mxu0 %v5021
        %6106 = vmatpush2.bf16.msra.mxu0 %v5020
        %6107 = vmatprep.subr.bf16.mxu0 %v5005
        %6108 = vmatpush2.bf16.msra.mxu0 %v5004
        %6109 = vmatprep.mubr.bf16.mxu0 %v5133
        %6110 = vmatmul.mubr.bf16.gmra.mxu0 %v5132
        %v6111 = vpop.f32.mrf.mxu0
        %v6112 = vadd.f32 %v6071, %v6111
        %v6113 = vpop.f32.mrf.mxu0
        %v6114 = vadd.f32 %v6073, %v6113
        %v6115 = vpop.f32.mrf.mxu0
        %v6116 = vpop.f32.mrf.mxu0
        %6117 = vdwg.mxu0
        %6118 = vmatprep.subr.bf16.mxu0 %v4223
        %6119 = vmatpush1.bf16.msra.mxu0 %v4222
        %6120 = vmatprep.subr.bf16.mxu0 %v4207
        %6121 = vmatpush1.bf16.msra.mxu0 %v4206
        %6122 = vmatprep.subr.bf16.mxu0 %v4191
        %6123 = vmatpush1.bf16.msra.mxu0 %v4190
        %6124 = vmatprep.subr.bf16.mxu0 %v4175
        %6125 = vmatpush1.bf16.msra.mxu0 %v4174
        %6126 = vmatprep.subr.bf16.mxu0 %v4159
        %6127 = vmatpush1.bf16.msra.mxu0 %v4158
        %6128 = vmatprep.subr.bf16.mxu0 %v4143
        %6129 = vmatpush1.bf16.msra.mxu0 %v4142
        %6130 = vmatprep.subr.bf16.mxu0 %v4127
        %6131 = vmatpush1.bf16.msra.mxu0 %v4126
        %6132 = vmatprep.subr.bf16.mxu0 %v4111
        %6133 = vmatpush1.bf16.msra.mxu0 %v4110
        %6134 = vmatprep.subr.bf16.mxu0 %v4351
        %6135 = vmatpush2.bf16.msra.mxu0 %v4350
        %6136 = vmatprep.subr.bf16.mxu0 %v4335
        %6137 = vmatpush2.bf16.msra.mxu0 %v4334
        %6138 = vmatprep.subr.bf16.mxu0 %v4319
        %6139 = vmatpush2.bf16.msra.mxu0 %v4318
        %6140 = vmatprep.subr.bf16.mxu0 %v4303
        %6141 = vmatpush2.bf16.msra.mxu0 %v4302
        %6142 = vmatprep.subr.bf16.mxu0 %v4287
        %6143 = vmatpush2.bf16.msra.mxu0 %v4286
        %6144 = vmatprep.subr.bf16.mxu0 %v4271
        %6145 = vmatpush2.bf16.msra.mxu0 %v4270
        %6146 = vmatprep.subr.bf16.mxu0 %v4255
        %6147 = vmatpush2.bf16.msra.mxu0 %v4254
        %6148 = vmatprep.subr.bf16.mxu0 %v4239
        %6149 = vmatpush2.bf16.msra.mxu0 %v4238
        %6150 = vmatprep.mubr.bf16.mxu0 %v5127
        %6151 = vmatmul.mubr.bf16.gmra.mxu0 %v5126
        %v6152 = vpop.f32.mrf.mxu0
        %v6153 = vadd.f32 0.0, %v6152
        %v6154 = vpop.f32.mrf.mxu0
        %v6155 = vadd.f32 0.0, %v6154
        %v6156 = vpop.f32.mrf.mxu0
        %v6157 = vpop.f32.mrf.mxu0
        %6158 = vdwg.mxu0
        %6159 = vmatprep.subr.bf16.mxu0 %v4479
        %6160 = vmatpush1.bf16.msra.mxu0 %v4478
        %6161 = vmatprep.subr.bf16.mxu0 %v4463
        %6162 = vmatpush1.bf16.msra.mxu0 %v4462
        %6163 = vmatprep.subr.bf16.mxu0 %v4447
        %6164 = vmatpush1.bf16.msra.mxu0 %v4446
        %6165 = vmatprep.subr.bf16.mxu0 %v4431
        %6166 = vmatpush1.bf16.msra.mxu0 %v4430
        %6167 = vmatprep.subr.bf16.mxu0 %v4415
        %6168 = vmatpush1.bf16.msra.mxu0 %v4414
        %6169 = vmatprep.subr.bf16.mxu0 %v4399
        %6170 = vmatpush1.bf16.msra.mxu0 %v4398
        %6171 = vmatprep.subr.bf16.mxu0 %v4383
        %6172 = vmatpush1.bf16.msra.mxu0 %v4382
        %6173 = vmatprep.subr.bf16.mxu0 %v4367
        %6174 = vmatpush1.bf16.msra.mxu0 %v4366
        %6175 = vmatprep.subr.bf16.mxu0 %v4607
        %6176 = vmatpush2.bf16.msra.mxu0 %v4606
        %6177 = vmatprep.subr.bf16.mxu0 %v4591
        %6178 = vmatpush2.bf16.msra.mxu0 %v4590
        %6179 = vmatprep.subr.bf16.mxu0 %v4575
        %6180 = vmatpush2.bf16.msra.mxu0 %v4574
        %6181 = vmatprep.subr.bf16.mxu0 %v4559
        %6182 = vmatpush2.bf16.msra.mxu0 %v4558
        %6183 = vmatprep.subr.bf16.mxu0 %v4543
        %6184 = vmatpush2.bf16.msra.mxu0 %v4542
        %6185 = vmatprep.subr.bf16.mxu0 %v4527
        %6186 = vmatpush2.bf16.msra.mxu0 %v4526
        %6187 = vmatprep.subr.bf16.mxu0 %v4511
        %6188 = vmatpush2.bf16.msra.mxu0 %v4510
        %6189 = vmatprep.subr.bf16.mxu0 %v4495
        %6190 = vmatpush2.bf16.msra.mxu0 %v4494
        %6191 = vmatprep.mubr.bf16.mxu0 %v5129
        %6192 = vmatmul.mubr.bf16.gmra.mxu0 %v5128
        %v6193 = vpop.f32.mrf.mxu0
        %v6194 = vadd.f32 %v6153, %v6193
        %v6195 = vpop.f32.mrf.mxu0
        %v6196 = vadd.f32 %v6155, %v6195
        %v6197 = vpop.f32.mrf.mxu0
        %v6198 = vpop.f32.mrf.mxu0
        %6199 = vdwg.mxu0
        %6200 = vmatprep.subr.bf16.mxu0 %v4735
        %6201 = vmatpush1.bf16.msra.mxu0 %v4734
        %6202 = vmatprep.subr.bf16.mxu0 %v4719
        %6203 = vmatpush1.bf16.msra.mxu0 %v4718
        %6204 = vmatprep.subr.bf16.mxu0 %v4703
        %6205 = vmatpush1.bf16.msra.mxu0 %v4702
        %6206 = vmatprep.subr.bf16.mxu0 %v4687
        %6207 = vmatpush1.bf16.msra.mxu0 %v4686
        %6208 = vmatprep.subr.bf16.mxu0 %v4671
        %6209 = vmatpush1.bf16.msra.mxu0 %v4670
        %6210 = vmatprep.subr.bf16.mxu0 %v4655
        %6211 = vmatpush1.bf16.msra.mxu0 %v4654
        %6212 = vmatprep.subr.bf16.mxu0 %v4639
        %6213 = vmatpush1.bf16.msra.mxu0 %v4638
        %6214 = vmatprep.subr.bf16.mxu0 %v4623
        %6215 = vmatpush1.bf16.msra.mxu0 %v4622
        %6216 = vmatprep.subr.bf16.mxu0 %v4863
        %6217 = vmatpush2.bf16.msra.mxu0 %v4862
        %6218 = vmatprep.subr.bf16.mxu0 %v4847
        %6219 = vmatpush2.bf16.msra.mxu0 %v4846
        %6220 = vmatprep.subr.bf16.mxu0 %v4831
        %6221 = vmatpush2.bf16.msra.mxu0 %v4830
        %6222 = vmatprep.subr.bf16.mxu0 %v4815
        %6223 = vmatpush2.bf16.msra.mxu0 %v4814
        %6224 = vmatprep.subr.bf16.mxu0 %v4799
        %6225 = vmatpush2.bf16.msra.mxu0 %v4798
        %6226 = vmatprep.subr.bf16.mxu0 %v4783
        %6227 = vmatpush2.bf16.msra.mxu0 %v4782
        %6228 = vmatprep.subr.bf16.mxu0 %v4767
        %6229 = vmatpush2.bf16.msra.mxu0 %v4766
        %6230 = vmatprep.subr.bf16.mxu0 %v4751
        %6231 = vmatpush2.bf16.msra.mxu0 %v4750
        %6232 = vmatprep.mubr.bf16.mxu0 %v5131
        %6233 = vmatmul.mubr.bf16.gmra.mxu0 %v5130
        %v6234 = vpop.f32.mrf.mxu0
        %v6235 = vadd.f32 %v6194, %v6234
        %v6236 = vpop.f32.mrf.mxu0
        %v6237 = vadd.f32 %v6196, %v6236
        %v6238 = vpop.f32.mrf.mxu0
        %v6239 = vpop.f32.mrf.mxu0
        %6240 = vdwg.mxu0
        %6241 = vmatprep.subr.bf16.mxu0 %v4991
        %6242 = vmatpush1.bf16.msra.mxu0 %v4990
        %6243 = vmatprep.subr.bf16.mxu0 %v4975
        %6244 = vmatpush1.bf16.msra.mxu0 %v4974
        %6245 = vmatprep.subr.bf16.mxu0 %v4959
        %6246 = vmatpush1.bf16.msra.mxu0 %v4958
        %6247 = vmatprep.subr.bf16.mxu0 %v4943
        %6248 = vmatpush1.bf16.msra.mxu0 %v4942
        %6249 = vmatprep.subr.bf16.mxu0 %v4927
        %6250 = vmatpush1.bf16.msra.mxu0 %v4926
        %6251 = vmatprep.subr.bf16.mxu0 %v4911
        %6252 = vmatpush1.bf16.msra.mxu0 %v4910
        %6253 = vmatprep.subr.bf16.mxu0 %v4895
        %6254 = vmatpush1.bf16.msra.mxu0 %v4894
        %6255 = vmatprep.subr.bf16.mxu0 %v4879
        %6256 = vmatpush1.bf16.msra.mxu0 %v4878
        %6257 = vmatprep.subr.bf16.mxu0 %v5119
        %6258 = vmatpush2.bf16.msra.mxu0 %v5118
        %6259 = vmatprep.subr.bf16.mxu0 %v5103
        %6260 = vmatpush2.bf16.msra.mxu0 %v5102
        %6261 = vmatprep.subr.bf16.mxu0 %v5087
        %6262 = vmatpush2.bf16.msra.mxu0 %v5086
        %6263 = vmatprep.subr.bf16.mxu0 %v5071
        %6264 = vmatpush2.bf16.msra.mxu0 %v5070
        %6265 = vmatprep.subr.bf16.mxu0 %v5055
        %6266 = vmatpush2.bf16.msra.mxu0 %v5054
        %6267 = vmatprep.subr.bf16.mxu0 %v5039
        %6268 = vmatpush2.bf16.msra.mxu0 %v5038
        %6269 = vmatprep.subr.bf16.mxu0 %v5023
        %6270 = vmatpush2.bf16.msra.mxu0 %v5022
        %6271 = vmatprep.subr.bf16.mxu0 %v5007
        %6272 = vmatpush2.bf16.msra.mxu0 %v5006
        %6273 = vmatprep.mubr.bf16.mxu0 %v5133
        %6274 = vmatmul.mubr.bf16.gmra.mxu0 %v5132
        %v6275 = vpop.f32.mrf.mxu0
        %v6276 = vadd.f32 %v6235, %v6275
        %v6277 = vpop.f32.mrf.mxu0
        %v6278 = vadd.f32 %v6237, %v6277
        %v6279 = vpop.f32.mrf.mxu0
        %v6280 = vpop.f32.mrf.mxu0
        %6281 = vdwg.mxu0
        %6282 = vmatprep.subr.bf16.mxu0 %v4225
        %6283 = vmatpush1.bf16.msra.mxu0 %v4224
        %6284 = vmatprep.subr.bf16.mxu0 %v4209
        %6285 = vmatpush1.bf16.msra.mxu0 %v4208
        %6286 = vmatprep.subr.bf16.mxu0 %v4193
        %6287 = vmatpush1.bf16.msra.mxu0 %v4192
        %6288 = vmatprep.subr.bf16.mxu0 %v4177
        %6289 = vmatpush1.bf16.msra.mxu0 %v4176
        %6290 = vmatprep.subr.bf16.mxu0 %v4161
        %6291 = vmatpush1.bf16.msra.mxu0 %v4160
        %6292 = vmatprep.subr.bf16.mxu0 %v4145
        %6293 = vmatpush1.bf16.msra.mxu0 %v4144
        %6294 = vmatprep.subr.bf16.mxu0 %v4129
        %6295 = vmatpush1.bf16.msra.mxu0 %v4128
        %6296 = vmatprep.subr.bf16.mxu0 %v4113
        %6297 = vmatpush1.bf16.msra.mxu0 %v4112
        %6298 = vmatprep.subr.bf16.mxu0 %v4353
        %6299 = vmatpush2.bf16.msra.mxu0 %v4352
        %6300 = vmatprep.subr.bf16.mxu0 %v4337
        %6301 = vmatpush2.bf16.msra.mxu0 %v4336
        %6302 = vmatprep.subr.bf16.mxu0 %v4321
        %6303 = vmatpush2.bf16.msra.mxu0 %v4320
        %6304 = vmatprep.subr.bf16.mxu0 %v4305
        %6305 = vmatpush2.bf16.msra.mxu0 %v4304
        %6306 = vmatprep.subr.bf16.mxu0 %v4289
        %6307 = vmatpush2.bf16.msra.mxu0 %v4288
        %6308 = vmatprep.subr.bf16.mxu0 %v4273
        %6309 = vmatpush2.bf16.msra.mxu0 %v4272
        %6310 = vmatprep.subr.bf16.mxu0 %v4257
        %6311 = vmatpush2.bf16.msra.mxu0 %v4256
        %6312 = vmatprep.subr.bf16.mxu0 %v4241
        %6313 = vmatpush2.bf16.msra.mxu0 %v4240
        %6314 = vmatprep.mubr.bf16.mxu0 %v5127
        %6315 = vmatmul.mubr.bf16.gmra.mxu0 %v5126
        %v6316 = vpop.f32.mrf.mxu0
        %v6317 = vadd.f32 0.0, %v6316
        %v6318 = vpop.f32.mrf.mxu0
        %v6319 = vadd.f32 0.0, %v6318
        %v6320 = vpop.f32.mrf.mxu0
        %v6321 = vpop.f32.mrf.mxu0
        %6322 = vdwg.mxu0
        %6323 = vmatprep.subr.bf16.mxu0 %v4481
        %6324 = vmatpush1.bf16.msra.mxu0 %v4480
        %6325 = vmatprep.subr.bf16.mxu0 %v4465
        %6326 = vmatpush1.bf16.msra.mxu0 %v4464
        %6327 = vmatprep.subr.bf16.mxu0 %v4449
        %6328 = vmatpush1.bf16.msra.mxu0 %v4448
        %6329 = vmatprep.subr.bf16.mxu0 %v4433
        %6330 = vmatpush1.bf16.msra.mxu0 %v4432
        %6331 = vmatprep.subr.bf16.mxu0 %v4417
        %6332 = vmatpush1.bf16.msra.mxu0 %v4416
        %6333 = vmatprep.subr.bf16.mxu0 %v4401
        %6334 = vmatpush1.bf16.msra.mxu0 %v4400
        %6335 = vmatprep.subr.bf16.mxu0 %v4385
        %6336 = vmatpush1.bf16.msra.mxu0 %v4384
        %6337 = vmatprep.subr.bf16.mxu0 %v4369
        %6338 = vmatpush1.bf16.msra.mxu0 %v4368
        %6339 = vmatprep.subr.bf16.mxu0 %v4609
        %6340 = vmatpush2.bf16.msra.mxu0 %v4608
        %6341 = vmatprep.subr.bf16.mxu0 %v4593
        %6342 = vmatpush2.bf16.msra.mxu0 %v4592
        %6343 = vmatprep.subr.bf16.mxu0 %v4577
        %6344 = vmatpush2.bf16.msra.mxu0 %v4576
        %6345 = vmatprep.subr.bf16.mxu0 %v4561
        %6346 = vmatpush2.bf16.msra.mxu0 %v4560
        %6347 = vmatprep.subr.bf16.mxu0 %v4545
        %6348 = vmatpush2.bf16.msra.mxu0 %v4544
        %6349 = vmatprep.subr.bf16.mxu0 %v4529
        %6350 = vmatpush2.bf16.msra.mxu0 %v4528
        %6351 = vmatprep.subr.bf16.mxu0 %v4513
        %6352 = vmatpush2.bf16.msra.mxu0 %v4512
        %6353 = vmatprep.subr.bf16.mxu0 %v4497
        %6354 = vmatpush2.bf16.msra.mxu0 %v4496
        %6355 = vmatprep.mubr.bf16.mxu0 %v5129
        %6356 = vmatmul.mubr.bf16.gmra.mxu0 %v5128
        %v6357 = vpop.f32.mrf.mxu0
        %v6358 = vadd.f32 %v6317, %v6357
        %v6359 = vpop.f32.mrf.mxu0
        %v6360 = vadd.f32 %v6319, %v6359
        %v6361 = vpop.f32.mrf.mxu0
        %v6362 = vpop.f32.mrf.mxu0
        %6363 = vdwg.mxu0
        %6364 = vmatprep.subr.bf16.mxu0 %v4737
        %6365 = vmatpush1.bf16.msra.mxu0 %v4736
        %6366 = vmatprep.subr.bf16.mxu0 %v4721
        %6367 = vmatpush1.bf16.msra.mxu0 %v4720
        %6368 = vmatprep.subr.bf16.mxu0 %v4705
        %6369 = vmatpush1.bf16.msra.mxu0 %v4704
        %6370 = vmatprep.subr.bf16.mxu0 %v4689
        %6371 = vmatpush1.bf16.msra.mxu0 %v4688
        %6372 = vmatprep.subr.bf16.mxu0 %v4673
        %6373 = vmatpush1.bf16.msra.mxu0 %v4672
        %6374 = vmatprep.subr.bf16.mxu0 %v4657
        %6375 = vmatpush1.bf16.msra.mxu0 %v4656
        %6376 = vmatprep.subr.bf16.mxu0 %v4641
        %6377 = vmatpush1.bf16.msra.mxu0 %v4640
        %6378 = vmatprep.subr.bf16.mxu0 %v4625
        %6379 = vmatpush1.bf16.msra.mxu0 %v4624
        %6380 = vmatprep.subr.bf16.mxu0 %v4865
        %6381 = vmatpush2.bf16.msra.mxu0 %v4864
        %6382 = vmatprep.subr.bf16.mxu0 %v4849
        %6383 = vmatpush2.bf16.msra.mxu0 %v4848
        %6384 = vmatprep.subr.bf16.mxu0 %v4833
        %6385 = vmatpush2.bf16.msra.mxu0 %v4832
        %6386 = vmatprep.subr.bf16.mxu0 %v4817
        %6387 = vmatpush2.bf16.msra.mxu0 %v4816
        %6388 = vmatprep.subr.bf16.mxu0 %v4801
        %6389 = vmatpush2.bf16.msra.mxu0 %v4800
        %6390 = vmatprep.subr.bf16.mxu0 %v4785
        %6391 = vmatpush2.bf16.msra.mxu0 %v4784
        %6392 = vmatprep.subr.bf16.mxu0 %v4769
        %6393 = vmatpush2.bf16.msra.mxu0 %v4768
        %6394 = vmatprep.subr.bf16.mxu0 %v4753
        %6395 = vmatpush2.bf16.msra.mxu0 %v4752
        %6396 = vmatprep.mubr.bf16.mxu0 %v5131
        %6397 = vmatmul.mubr.bf16.gmra.mxu0 %v5130
        %v6398 = vpop.f32.mrf.mxu0
        %v6399 = vadd.f32 %v6358, %v6398
        %v6400 = vpop.f32.mrf.mxu0
        %v6401 = vadd.f32 %v6360, %v6400
        %v6402 = vpop.f32.mrf.mxu0
        %v6403 = vpop.f32.mrf.mxu0
        %6404 = vdwg.mxu0
        %6405 = vmatprep.subr.bf16.mxu0 %v4993
        %6406 = vmatpush1.bf16.msra.mxu0 %v4992
        %6407 = vmatprep.subr.bf16.mxu0 %v4977
        %6408 = vmatpush1.bf16.msra.mxu0 %v4976
        %6409 = vmatprep.subr.bf16.mxu0 %v4961
        %6410 = vmatpush1.bf16.msra.mxu0 %v4960
        %6411 = vmatprep.subr.bf16.mxu0 %v4945
        %6412 = vmatpush1.bf16.msra.mxu0 %v4944
        %6413 = vmatprep.subr.bf16.mxu0 %v4929
        %6414 = vmatpush1.bf16.msra.mxu0 %v4928
        %6415 = vmatprep.subr.bf16.mxu0 %v4913
        %6416 = vmatpush1.bf16.msra.mxu0 %v4912
        %6417 = vmatprep.subr.bf16.mxu0 %v4897
        %6418 = vmatpush1.bf16.msra.mxu0 %v4896
        %6419 = vmatprep.subr.bf16.mxu0 %v4881
        %6420 = vmatpush1.bf16.msra.mxu0 %v4880
        %6421 = vmatprep.subr.bf16.mxu0 %v5121
        %6422 = vmatpush2.bf16.msra.mxu0 %v5120
        %6423 = vmatprep.subr.bf16.mxu0 %v5105
        %6424 = vmatpush2.bf16.msra.mxu0 %v5104
        %6425 = vmatprep.subr.bf16.mxu0 %v5089
        %6426 = vmatpush2.bf16.msra.mxu0 %v5088
        %6427 = vmatprep.subr.bf16.mxu0 %v5073
        %6428 = vmatpush2.bf16.msra.mxu0 %v5072
        %6429 = vmatprep.subr.bf16.mxu0 %v5057
        %6430 = vmatpush2.bf16.msra.mxu0 %v5056
        %6431 = vmatprep.subr.bf16.mxu0 %v5041
        %6432 = vmatpush2.bf16.msra.mxu0 %v5040
        %6433 = vmatprep.subr.bf16.mxu0 %v5025
        %6434 = vmatpush2.bf16.msra.mxu0 %v5024
        %6435 = vmatprep.subr.bf16.mxu0 %v5009
        %6436 = vmatpush2.bf16.msra.mxu0 %v5008
        %6437 = vmatprep.mubr.bf16.mxu0 %v5133
        %6438 = vmatmul.mubr.bf16.gmra.mxu0 %v5132
        %v6439 = vpop.f32.mrf.mxu0
        %v6440 = vadd.f32 %v6399, %v6439
        %v6441 = vpop.f32.mrf.mxu0
        %v6442 = vadd.f32 %v6401, %v6441
        %v6443 = vpop.f32.mrf.mxu0
        %v6444 = vpop.f32.mrf.mxu0
        %6445 = vdwg.mxu0
        %v6462 = vcombine.low %v5292, %v5294
        %v6463 = vcombine.low %v5456, %v5458
        %v6465 = vunpack.c.l.s4 1983009808
        %v6466 = vunpack.c.0.s8 %v6465
        %v6467 = vlaneseq
        %v6468 = vshrl.u32 %v6467, 7
        %v6469 = vsub.s32 %v6466, %v6468
        %v6470 = vrot.slane %v6462, %v6469
        %v6472 = vunpack.c.l.s4 1983009808
        %v6473 = vunpack.c.0.s8 %v6472
        %v6474 = vlaneseq
        %v6475 = vshrl.u32 %v6474, 7
        %v6476 = vsub.s32 %v6473, %v6475
        %v6477 = vrot.slane %v6463, %v6476
        %v6478 = vcombine.low %v6470, %v6477
        %v6479 = vcombine.low %v5620, %v5622
        %v6480 = vcombine.low %v5784, %v5786
        %v6482 = vunpack.c.l.s4 1983009808
        %v6483 = vunpack.c.0.s8 %v6482
        %v6484 = vlaneseq
        %v6485 = vshrl.u32 %v6484, 7
        %v6486 = vsub.s32 %v6483, %v6485
        %v6487 = vrot.slane %v6479, %v6486
        %v6489 = vunpack.c.l.s4 1983009808
        %v6490 = vunpack.c.0.s8 %v6489
        %v6491 = vlaneseq
        %v6492 = vshrl.u32 %v6491, 7
        %v6493 = vsub.s32 %v6490, %v6492
        %v6494 = vrot.slane %v6480, %v6493
        %v6495 = vcombine.low %v6487, %v6494
        %v6496 = vcombine.low %v5948, %v5950
        %v6497 = vcombine.low %v6112, %v6114
        %v6499 = vunpack.c.l.s4 1983009808
        %v6500 = vunpack.c.0.s8 %v6499
        %v6501 = vlaneseq
        %v6502 = vshrl.u32 %v6501, 7
        %v6503 = vsub.s32 %v6500, %v6502
        %v6504 = vrot.slane %v6496, %v6503
        %v6506 = vunpack.c.l.s4 1983009808
        %v6507 = vunpack.c.0.s8 %v6506
        %v6508 = vlaneseq
        %v6509 = vshrl.u32 %v6508, 7
        %v6510 = vsub.s32 %v6507, %v6509
        %v6511 = vrot.slane %v6497, %v6510
        %v6512 = vcombine.low %v6504, %v6511
        %v6513 = vcombine.low %v6276, %v6278
        %v6514 = vcombine.low %v6440, %v6442
        %v6516 = vunpack.c.l.s4 1983009808
        %v6517 = vunpack.c.0.s8 %v6516
        %v6518 = vlaneseq
        %v6519 = vshrl.u32 %v6518, 7
        %v6520 = vsub.s32 %v6517, %v6519
        %v6521 = vrot.slane %v6513, %v6520
        %v6523 = vunpack.c.l.s4 1983009808
        %v6524 = vunpack.c.0.s8 %v6523
        %v6525 = vlaneseq
        %v6526 = vshrl.u32 %v6525, 7
        %v6527 = vsub.s32 %v6524, %v6526
        %v6528 = vrot.slane %v6514, %v6527
        %v6529 = vcombine.low %v6521, %v6528
        %v6534 = vadd.f32 %v5122, %v6478
        %v6535 = vadd.f32 %v5123, %v6495
        %v6536 = vadd.f32 %v5124, %v6512
        %v6537 = vadd.f32 %v5125, %v6529
        %6538 = vst [vmem:[#allocation2] sm:$0xff] %v6534
        %6539 = vst [vmem:[#allocation2 + $0x8] sm:$0xff] %v6535
        %6540 = vst [vmem:[#allocation2 + $0x10] sm:$0xff] %v6536
        %6541 = vst [vmem:[#allocation2 + $0x18] sm:$0xff] %v6537
        %p6542 = scmp.eq.s32.totalorder %s31, 1
        // Predicated region
        $region77: #{fcnet_forward.1} parent=47 // pred_check
          %p6543 = pneg %p6542
        $region78: #{fcnet_forward.1} parent=47 // pred_check_branch
          %6545 = sbr.rel (%p6543) target = $region80
        $region79: #{fcnet_forward.1} parent=47 // pred_region
          %v6546 = vld [vmem:[#allocation2] sm:$0xff]
          %v6547 = vld [vmem:[#allocation2 + $0x8] sm:$0xff]
          %v6548 = vld [vmem:[#allocation2 + $0x10] sm:$0xff]
          %v6549 = vld [vmem:[#allocation2 + $0x18] sm:$0xff]
          %v6550 = vld [vmem:[#allocation8] sm:$0xff]
          %v6551 = vld [vmem:[#allocation8 + $0x8] sm:$0xff]
          %v6554 = vlaneseq
          %v6555 = vshrl.u32 %v6554, 7
          %v6556 = vsub.s32 0, %v6555
          %v6557 = vrot.slane %v6550, %v6556
          %v6558 = vlaneseq
          %v6559 = vshrl.u32 %v6558, 7
          %v6560 = vsub.s32 1, %v6559
          %v6561 = vrot.slane %v6550, %v6560
          %v6562 = vlaneseq
          %v6563 = vshrl.u32 %v6562, 7
          %v6564 = vsub.s32 2, %v6563
          %v6565 = vrot.slane %v6550, %v6564
          %v6566 = vlaneseq
          %v6567 = vshrl.u32 %v6566, 7
          %v6568 = vsub.s32 3, %v6567
          %v6569 = vrot.slane %v6550, %v6568
          %v6570 = vlaneseq
          %v6571 = vshrl.u32 %v6570, 7
          %v6572 = vsub.s32 4, %v6571
          %v6573 = vrot.slane %v6550, %v6572
          %v6574 = vlaneseq
          %v6575 = vshrl.u32 %v6574, 7
          %v6576 = vsub.s32 5, %v6575
          %v6577 = vrot.slane %v6550, %v6576
          %v6578 = vlaneseq
          %v6579 = vshrl.u32 %v6578, 7
          %v6580 = vsub.s32 6, %v6579
          %v6581 = vrot.slane %v6550, %v6580
          %v6582 = vlaneseq
          %v6583 = vshrl.u32 %v6582, 7
          %v6584 = vsub.s32 7, %v6583
          %v6585 = vrot.slane %v6550, %v6584
          %v6586 = vlaneseq
          %v6587 = vshrl.u32 %v6586, 7
          %v6588 = vsub.s32 0, %v6587
          %v6589 = vrot.slane %v6551, %v6588
          %v6590 = vlaneseq
          %v6591 = vshrl.u32 %v6590, 7
          %v6592 = vsub.s32 1, %v6591
          %v6593 = vrot.slane %v6551, %v6592
          %v6594 = vlaneseq
          %v6595 = vshrl.u32 %v6594, 7
          %v6596 = vsub.s32 2, %v6595
          %v6597 = vrot.slane %v6551, %v6596
          %v6598 = vlaneseq
          %v6599 = vshrl.u32 %v6598, 7
          %v6600 = vsub.s32 3, %v6599
          %v6601 = vrot.slane %v6551, %v6600
          %v6602 = vlaneseq
          %v6603 = vshrl.u32 %v6602, 7
          %v6604 = vsub.s32 4, %v6603
          %v6605 = vrot.slane %v6551, %v6604
          %v6606 = vlaneseq
          %v6607 = vshrl.u32 %v6606, 7
          %v6608 = vsub.s32 5, %v6607
          %v6609 = vrot.slane %v6551, %v6608
          %v6610 = vlaneseq
          %v6611 = vshrl.u32 %v6610, 7
          %v6612 = vsub.s32 6, %v6611
          %v6613 = vrot.slane %v6551, %v6612
          %v6614 = vlaneseq
          %v6615 = vshrl.u32 %v6614, 7
          %v6616 = vsub.s32 7, %v6615
          %v6617 = vrot.slane %v6551, %v6616
          %v6618 = vcombine.low %v6557, %v6561
          %v6619 = vcombine.low %v6565, %v6569
          %v6621 = vunpack.c.l.s4 1983009808
          %v6622 = vunpack.c.0.s8 %v6621
          %v6623 = vlaneseq
          %v6624 = vshrl.u32 %v6623, 7
          %v6625 = vsub.s32 %v6622, %v6624
          %v6626 = vrot.slane %v6618, %v6625
          %v6628 = vunpack.c.l.s4 1983009808
          %v6629 = vunpack.c.0.s8 %v6628
          %v6630 = vlaneseq
          %v6631 = vshrl.u32 %v6630, 7
          %v6632 = vsub.s32 %v6629, %v6631
          %v6633 = vrot.slane %v6619, %v6632
          %v6634 = vcombine.low %v6626, %v6633
          %v6635 = vcombine.low %v6573, %v6577
          %v6636 = vcombine.low %v6581, %v6585
          %v6638 = vunpack.c.l.s4 1983009808
          %v6639 = vunpack.c.0.s8 %v6638
          %v6640 = vlaneseq
          %v6641 = vshrl.u32 %v6640, 7
          %v6642 = vsub.s32 %v6639, %v6641
          %v6643 = vrot.slane %v6635, %v6642
          %v6645 = vunpack.c.l.s4 1983009808
          %v6646 = vunpack.c.0.s8 %v6645
          %v6647 = vlaneseq
          %v6648 = vshrl.u32 %v6647, 7
          %v6649 = vsub.s32 %v6646, %v6648
          %v6650 = vrot.slane %v6636, %v6649
          %v6651 = vcombine.low %v6643, %v6650
          %v6652 = vcombine.low %v6589, %v6593
          %v6653 = vcombine.low %v6597, %v6601
          %v6655 = vunpack.c.l.s4 1983009808
          %v6656 = vunpack.c.0.s8 %v6655
          %v6657 = vlaneseq
          %v6658 = vshrl.u32 %v6657, 7
          %v6659 = vsub.s32 %v6656, %v6658
          %v6660 = vrot.slane %v6652, %v6659
          %v6662 = vunpack.c.l.s4 1983009808
          %v6663 = vunpack.c.0.s8 %v6662
          %v6664 = vlaneseq
          %v6665 = vshrl.u32 %v6664, 7
          %v6666 = vsub.s32 %v6663, %v6665
          %v6667 = vrot.slane %v6653, %v6666
          %v6668 = vcombine.low %v6660, %v6667
          %v6669 = vcombine.low %v6605, %v6609
          %v6670 = vcombine.low %v6613, %v6617
          %v6672 = vunpack.c.l.s4 1983009808
          %v6673 = vunpack.c.0.s8 %v6672
          %v6674 = vlaneseq
          %v6675 = vshrl.u32 %v6674, 7
          %v6676 = vsub.s32 %v6673, %v6675
          %v6677 = vrot.slane %v6669, %v6676
          %v6679 = vunpack.c.l.s4 1983009808
          %v6680 = vunpack.c.0.s8 %v6679
          %v6681 = vlaneseq
          %v6682 = vshrl.u32 %v6681, 7
          %v6683 = vsub.s32 %v6680, %v6682
          %v6684 = vrot.slane %v6670, %v6683
          %v6685 = vcombine.low %v6677, %v6684
          %v6690 = vmul.f32 %v6546, %v6634
          %v6691 = vmul.f32 %v6547, %v6651
          %v6692 = vmul.f32 %v6548, %v6668
          %v6693 = vmul.f32 %v6549, %v6685
          %v6694 = vld [vmem:[#allocation10] sm:$0xff]
          %v6695 = vld [vmem:[#allocation10 + $0x8] sm:$0xff]
          %v6698 = vlaneseq
          %v6699 = vshrl.u32 %v6698, 7
          %v6700 = vsub.s32 0, %v6699
          %v6701 = vrot.slane %v6694, %v6700
          %v6702 = vlaneseq
          %v6703 = vshrl.u32 %v6702, 7
          %v6704 = vsub.s32 1, %v6703
          %v6705 = vrot.slane %v6694, %v6704
          %v6706 = vlaneseq
          %v6707 = vshrl.u32 %v6706, 7
          %v6708 = vsub.s32 2, %v6707
          %v6709 = vrot.slane %v6694, %v6708
          %v6710 = vlaneseq
          %v6711 = vshrl.u32 %v6710, 7
          %v6712 = vsub.s32 3, %v6711
          %v6713 = vrot.slane %v6694, %v6712
          %v6714 = vlaneseq
          %v6715 = vshrl.u32 %v6714, 7
          %v6716 = vsub.s32 4, %v6715
          %v6717 = vrot.slane %v6694, %v6716
          %v6718 = vlaneseq
          %v6719 = vshrl.u32 %v6718, 7
          %v6720 = vsub.s32 5, %v6719
          %v6721 = vrot.slane %v6694, %v6720
          %v6722 = vlaneseq
          %v6723 = vshrl.u32 %v6722, 7
          %v6724 = vsub.s32 6, %v6723
          %v6725 = vrot.slane %v6694, %v6724
          %v6726 = vlaneseq
          %v6727 = vshrl.u32 %v6726, 7
          %v6728 = vsub.s32 7, %v6727
          %v6729 = vrot.slane %v6694, %v6728
          %v6730 = vlaneseq
          %v6731 = vshrl.u32 %v6730, 7
          %v6732 = vsub.s32 0, %v6731
          %v6733 = vrot.slane %v6695, %v6732
          %v6734 = vlaneseq
          %v6735 = vshrl.u32 %v6734, 7
          %v6736 = vsub.s32 1, %v6735
          %v6737 = vrot.slane %v6695, %v6736
          %v6738 = vlaneseq
          %v6739 = vshrl.u32 %v6738, 7
          %v6740 = vsub.s32 2, %v6739
          %v6741 = vrot.slane %v6695, %v6740
          %v6742 = vlaneseq
          %v6743 = vshrl.u32 %v6742, 7
          %v6744 = vsub.s32 3, %v6743
          %v6745 = vrot.slane %v6695, %v6744
          %v6746 = vlaneseq
          %v6747 = vshrl.u32 %v6746, 7
          %v6748 = vsub.s32 4, %v6747
          %v6749 = vrot.slane %v6695, %v6748
          %v6750 = vlaneseq
          %v6751 = vshrl.u32 %v6750, 7
          %v6752 = vsub.s32 5, %v6751
          %v6753 = vrot.slane %v6695, %v6752
          %v6754 = vlaneseq
          %v6755 = vshrl.u32 %v6754, 7
          %v6756 = vsub.s32 6, %v6755
          %v6757 = vrot.slane %v6695, %v6756
          %v6758 = vlaneseq
          %v6759 = vshrl.u32 %v6758, 7
          %v6760 = vsub.s32 7, %v6759
          %v6761 = vrot.slane %v6695, %v6760
          %v6762 = vcombine.low %v6701, %v6705
          %v6763 = vcombine.low %v6709, %v6713
          %v6765 = vunpack.c.l.s4 1983009808
          %v6766 = vunpack.c.0.s8 %v6765
          %v6767 = vlaneseq
          %v6768 = vshrl.u32 %v6767, 7
          %v6769 = vsub.s32 %v6766, %v6768
          %v6770 = vrot.slane %v6762, %v6769
          %v6772 = vunpack.c.l.s4 1983009808
          %v6773 = vunpack.c.0.s8 %v6772
          %v6774 = vlaneseq
          %v6775 = vshrl.u32 %v6774, 7
          %v6776 = vsub.s32 %v6773, %v6775
          %v6777 = vrot.slane %v6763, %v6776
          %v6778 = vcombine.low %v6770, %v6777
          %v6779 = vcombine.low %v6717, %v6721
          %v6780 = vcombine.low %v6725, %v6729
          %v6782 = vunpack.c.l.s4 1983009808
          %v6783 = vunpack.c.0.s8 %v6782
          %v6784 = vlaneseq
          %v6785 = vshrl.u32 %v6784, 7
          %v6786 = vsub.s32 %v6783, %v6785
          %v6787 = vrot.slane %v6779, %v6786
          %v6789 = vunpack.c.l.s4 1983009808
          %v6790 = vunpack.c.0.s8 %v6789
          %v6791 = vlaneseq
          %v6792 = vshrl.u32 %v6791, 7
          %v6793 = vsub.s32 %v6790, %v6792
          %v6794 = vrot.slane %v6780, %v6793
          %v6795 = vcombine.low %v6787, %v6794
          %v6796 = vcombine.low %v6733, %v6737
          %v6797 = vcombine.low %v6741, %v6745
          %v6799 = vunpack.c.l.s4 1983009808
          %v6800 = vunpack.c.0.s8 %v6799
          %v6801 = vlaneseq
          %v6802 = vshrl.u32 %v6801, 7
          %v6803 = vsub.s32 %v6800, %v6802
          %v6804 = vrot.slane %v6796, %v6803
          %v6806 = vunpack.c.l.s4 1983009808
          %v6807 = vunpack.c.0.s8 %v6806
          %v6808 = vlaneseq
          %v6809 = vshrl.u32 %v6808, 7
          %v6810 = vsub.s32 %v6807, %v6809
          %v6811 = vrot.slane %v6797, %v6810
          %v6812 = vcombine.low %v6804, %v6811
          %v6813 = vcombine.low %v6749, %v6753
          %v6814 = vcombine.low %v6757, %v6761
          %v6816 = vunpack.c.l.s4 1983009808
          %v6817 = vunpack.c.0.s8 %v6816
          %v6818 = vlaneseq
          %v6819 = vshrl.u32 %v6818, 7
          %v6820 = vsub.s32 %v6817, %v6819
          %v6821 = vrot.slane %v6813, %v6820
          %v6823 = vunpack.c.l.s4 1983009808
          %v6824 = vunpack.c.0.s8 %v6823
          %v6825 = vlaneseq
          %v6826 = vshrl.u32 %v6825, 7
          %v6827 = vsub.s32 %v6824, %v6826
          %v6828 = vrot.slane %v6814, %v6827
          %v6829 = vcombine.low %v6821, %v6828
          %v6834 = vadd.f32 %v6690, %v6778
          %v6835 = vadd.f32 %v6691, %v6795
          %v6836 = vadd.f32 %v6692, %v6812
          %v6837 = vadd.f32 %v6693, %v6829
          %v6838 = vmax.f32 %v6834, 0.0
          %v6839 = vmax.f32 %v6835, 0.0
          %v6840 = vmax.f32 %v6836, 0.0
          %v6841 = vmax.f32 %v6837, 0.0
          %v6846 = vcombine.high %v6838, %v6838
          %v6848 = vunpack.c.l.s4 1983009808
          %v6849 = vunpack.c.0.s8 %v6848
          %v6850 = vlaneseq
          %v6851 = vshrl.u32 %v6850, 7
          %v6852 = vsub.s32 %v6849, %v6851
          %v6853 = vrot.slane %v6838, %v6852
          %v6855 = vunpack.c.l.s4 1983009808
          %v6856 = vunpack.c.0.s8 %v6855
          %v6857 = vlaneseq
          %v6858 = vshrl.u32 %v6857, 7
          %v6859 = vsub.s32 %v6856, %v6858
          %v6860 = vrot.slane %v6846, %v6859
          %v6861 = vcombine.high %v6853, %v6853
          %v6862 = vcombine.high %v6860, %v6860
          %v6863 = vcombine.high %v6839, %v6839
          %v6865 = vunpack.c.l.s4 1983009808
          %v6866 = vunpack.c.0.s8 %v6865
          %v6867 = vlaneseq
          %v6868 = vshrl.u32 %v6867, 7
          %v6869 = vsub.s32 %v6866, %v6868
          %v6870 = vrot.slane %v6839, %v6869
          %v6872 = vunpack.c.l.s4 1983009808
          %v6873 = vunpack.c.0.s8 %v6872
          %v6874 = vlaneseq
          %v6875 = vshrl.u32 %v6874, 7
          %v6876 = vsub.s32 %v6873, %v6875
          %v6877 = vrot.slane %v6863, %v6876
          %v6878 = vcombine.high %v6870, %v6870
          %v6879 = vcombine.high %v6877, %v6877
          %v6880 = vcombine.high %v6840, %v6840
          %v6882 = vunpack.c.l.s4 1983009808
          %v6883 = vunpack.c.0.s8 %v6882
          %v6884 = vlaneseq
          %v6885 = vshrl.u32 %v6884, 7
          %v6886 = vsub.s32 %v6883, %v6885
          %v6887 = vrot.slane %v6840, %v6886
          %v6889 = vunpack.c.l.s4 1983009808
          %v6890 = vunpack.c.0.s8 %v6889
          %v6891 = vlaneseq
          %v6892 = vshrl.u32 %v6891, 7
          %v6893 = vsub.s32 %v6890, %v6892
          %v6894 = vrot.slane %v6880, %v6893
          %v6895 = vcombine.high %v6887, %v6887
          %v6896 = vcombine.high %v6894, %v6894
          %v6897 = vcombine.high %v6841, %v6841
          %v6899 = vunpack.c.l.s4 1983009808
          %v6900 = vunpack.c.0.s8 %v6899
          %v6901 = vlaneseq
          %v6902 = vshrl.u32 %v6901, 7
          %v6903 = vsub.s32 %v6900, %v6902
          %v6904 = vrot.slane %v6841, %v6903
          %v6906 = vunpack.c.l.s4 1983009808
          %v6907 = vunpack.c.0.s8 %v6906
          %v6908 = vlaneseq
          %v6909 = vshrl.u32 %v6908, 7
          %v6910 = vsub.s32 %v6907, %v6909
          %v6911 = vrot.slane %v6897, %v6910
          %v6912 = vcombine.high %v6904, %v6904
          %v6913 = vcombine.high %v6911, %v6911
          %v6930 = vpack.c.bf16 %v6853, %v6853
          %v6931 = vpack.c.bf16 %v6861, %v6861
          %v6932 = vpack.c.bf16 %v6860, %v6860
          %v6933 = vpack.c.bf16 %v6862, %v6862
          %v6934 = vpack.c.bf16 %v6870, %v6870
          %v6935 = vpack.c.bf16 %v6878, %v6878
          %v6936 = vpack.c.bf16 %v6877, %v6877
          %v6937 = vpack.c.bf16 %v6879, %v6879
          %v6938 = vpack.c.bf16 %v6887, %v6887
          %v6939 = vpack.c.bf16 %v6895, %v6895
          %v6940 = vpack.c.bf16 %v6894, %v6894
          %v6941 = vpack.c.bf16 %v6896, %v6896
          %v6942 = vpack.c.bf16 %v6904, %v6904
          %v6943 = vpack.c.bf16 %v6912, %v6912
          %v6944 = vpack.c.bf16 %v6911, %v6911
          %v6945 = vpack.c.bf16 %v6913, %v6913
          %v6946 = vld [vmem:[#allocation11] sm:$0xf]
          %v6947 = vld [vmem:[#allocation11 + $0x4] sm:$0xf]
          %v6948 = vld [vmem:[#allocation11 + $0x8] sm:$0xf]
          %v6949 = vld [vmem:[#allocation11 + $0xc] sm:$0xf]
          %v6950 = vld [vmem:[#allocation11 + $0x10] sm:$0xf]
          %v6951 = vld [vmem:[#allocation11 + $0x14] sm:$0xf]
          %v6952 = vld [vmem:[#allocation11 + $0x18] sm:$0xf]
          %v6953 = vld [vmem:[#allocation11 + $0x1c] sm:$0xf]
          %v6954 = vld [vmem:[#allocation11 + $0x20] sm:$0xf]
          %v6955 = vld [vmem:[#allocation11 + $0x24] sm:$0xf]
          %v6956 = vld [vmem:[#allocation11 + $0x28] sm:$0xf]
          %v6957 = vld [vmem:[#allocation11 + $0x2c] sm:$0xf]
          %v6958 = vld [vmem:[#allocation11 + $0x30] sm:$0xf]
          %v6959 = vld [vmem:[#allocation11 + $0x34] sm:$0xf]
          %v6960 = vld [vmem:[#allocation11 + $0x38] sm:$0xf]
          %v6961 = vld [vmem:[#allocation11 + $0x3c] sm:$0xf]
          %v6962 = vld [vmem:[#allocation11 + $0x40] sm:$0xf]
          %v6963 = vld [vmem:[#allocation11 + $0x44] sm:$0xf]
          %v6964 = vld [vmem:[#allocation11 + $0x48] sm:$0xf]
          %v6965 = vld [vmem:[#allocation11 + $0x4c] sm:$0xf]
          %v6966 = vld [vmem:[#allocation11 + $0x50] sm:$0xf]
          %v6967 = vld [vmem:[#allocation11 + $0x54] sm:$0xf]
          %v6968 = vld [vmem:[#allocation11 + $0x58] sm:$0xf]
          %v6969 = vld [vmem:[#allocation11 + $0x5c] sm:$0xf]
          %v6970 = vld [vmem:[#allocation11 + $0x60] sm:$0xf]
          %v6971 = vld [vmem:[#allocation11 + $0x64] sm:$0xf]
          %v6972 = vld [vmem:[#allocation11 + $0x68] sm:$0xf]
          %v6973 = vld [vmem:[#allocation11 + $0x6c] sm:$0xf]
          %v6974 = vld [vmem:[#allocation11 + $0x70] sm:$0xf]
          %v6975 = vld [vmem:[#allocation11 + $0x74] sm:$0xf]
          %v6976 = vld [vmem:[#allocation11 + $0x78] sm:$0xf]
          %v6977 = vld [vmem:[#allocation11 + $0x7c] sm:$0xf]
          %v6978 = vld [vmem:[#allocation11 + $0x80] sm:$0xf]
          %v6979 = vld [vmem:[#allocation11 + $0x84] sm:$0xf]
          %v6980 = vld [vmem:[#allocation11 + $0x88] sm:$0xf]
          %v6981 = vld [vmem:[#allocation11 + $0x8c] sm:$0xf]
          %v6982 = vld [vmem:[#allocation11 + $0x90] sm:$0xf]
          %v6983 = vld [vmem:[#allocation11 + $0x94] sm:$0xf]
          %v6984 = vld [vmem:[#allocation11 + $0x98] sm:$0xf]
          %v6985 = vld [vmem:[#allocation11 + $0x9c] sm:$0xf]
          %v6986 = vld [vmem:[#allocation11 + $0xa0] sm:$0xf]
          %v6987 = vld [vmem:[#allocation11 + $0xa4] sm:$0xf]
          %v6988 = vld [vmem:[#allocation11 + $0xa8] sm:$0xf]
          %v6989 = vld [vmem:[#allocation11 + $0xac] sm:$0xf]
          %v6990 = vld [vmem:[#allocation11 + $0xb0] sm:$0xf]
          %v6991 = vld [vmem:[#allocation11 + $0xb4] sm:$0xf]
          %v6992 = vld [vmem:[#allocation11 + $0xb8] sm:$0xf]
          %v6993 = vld [vmem:[#allocation11 + $0xbc] sm:$0xf]
          %v6994 = vld [vmem:[#allocation11 + $0xc0] sm:$0xf]
          %v6995 = vld [vmem:[#allocation11 + $0xc4] sm:$0xf]
          %v6996 = vld [vmem:[#allocation11 + $0xc8] sm:$0xf]
          %v6997 = vld [vmem:[#allocation11 + $0xcc] sm:$0xf]
          %v6998 = vld [vmem:[#allocation11 + $0xd0] sm:$0xf]
          %v6999 = vld [vmem:[#allocation11 + $0xd4] sm:$0xf]
          %v7000 = vld [vmem:[#allocation11 + $0xd8] sm:$0xf]
          %v7001 = vld [vmem:[#allocation11 + $0xdc] sm:$0xf]
          %v7002 = vld [vmem:[#allocation11 + $0xe0] sm:$0xf]
          %v7003 = vld [vmem:[#allocation11 + $0xe4] sm:$0xf]
          %v7004 = vld [vmem:[#allocation11 + $0xe8] sm:$0xf]
          %v7005 = vld [vmem:[#allocation11 + $0xec] sm:$0xf]
          %v7006 = vld [vmem:[#allocation11 + $0xf0] sm:$0xf]
          %v7007 = vld [vmem:[#allocation11 + $0xf4] sm:$0xf]
          %v7008 = vld [vmem:[#allocation11 + $0xf8] sm:$0xf]
          %v7009 = vld [vmem:[#allocation11 + $0xfc] sm:$0xf]
          %v7010 = vld [vmem:[#allocation11 + $0x100] sm:$0xf]
          %v7011 = vld [vmem:[#allocation11 + $0x104] sm:$0xf]
          %v7012 = vld [vmem:[#allocation11 + $0x108] sm:$0xf]
          %v7013 = vld [vmem:[#allocation11 + $0x10c] sm:$0xf]
          %v7014 = vld [vmem:[#allocation11 + $0x110] sm:$0xf]
          %v7015 = vld [vmem:[#allocation11 + $0x114] sm:$0xf]
          %v7016 = vld [vmem:[#allocation11 + $0x118] sm:$0xf]
          %v7017 = vld [vmem:[#allocation11 + $0x11c] sm:$0xf]
          %v7018 = vld [vmem:[#allocation11 + $0x120] sm:$0xf]
          %v7019 = vld [vmem:[#allocation11 + $0x124] sm:$0xf]
          %v7020 = vld [vmem:[#allocation11 + $0x128] sm:$0xf]
          %v7021 = vld [vmem:[#allocation11 + $0x12c] sm:$0xf]
          %v7022 = vld [vmem:[#allocation11 + $0x130] sm:$0xf]
          %v7023 = vld [vmem:[#allocation11 + $0x134] sm:$0xf]
          %v7024 = vld [vmem:[#allocation11 + $0x138] sm:$0xf]
          %v7025 = vld [vmem:[#allocation11 + $0x13c] sm:$0xf]
          %v7026 = vld [vmem:[#allocation11 + $0x140] sm:$0xf]
          %v7027 = vld [vmem:[#allocation11 + $0x144] sm:$0xf]
          %v7028 = vld [vmem:[#allocation11 + $0x148] sm:$0xf]
          %v7029 = vld [vmem:[#allocation11 + $0x14c] sm:$0xf]
          %v7030 = vld [vmem:[#allocation11 + $0x150] sm:$0xf]
          %v7031 = vld [vmem:[#allocation11 + $0x154] sm:$0xf]
          %v7032 = vld [vmem:[#allocation11 + $0x158] sm:$0xf]
          %v7033 = vld [vmem:[#allocation11 + $0x15c] sm:$0xf]
          %v7034 = vld [vmem:[#allocation11 + $0x160] sm:$0xf]
          %v7035 = vld [vmem:[#allocation11 + $0x164] sm:$0xf]
          %v7036 = vld [vmem:[#allocation11 + $0x168] sm:$0xf]
          %v7037 = vld [vmem:[#allocation11 + $0x16c] sm:$0xf]
          %v7038 = vld [vmem:[#allocation11 + $0x170] sm:$0xf]
          %v7039 = vld [vmem:[#allocation11 + $0x174] sm:$0xf]
          %v7040 = vld [vmem:[#allocation11 + $0x178] sm:$0xf]
          %v7041 = vld [vmem:[#allocation11 + $0x17c] sm:$0xf]
          %v7042 = vld [vmem:[#allocation11 + $0x180] sm:$0xf]
          %v7043 = vld [vmem:[#allocation11 + $0x184] sm:$0xf]
          %v7044 = vld [vmem:[#allocation11 + $0x188] sm:$0xf]
          %v7045 = vld [vmem:[#allocation11 + $0x18c] sm:$0xf]
          %v7046 = vld [vmem:[#allocation11 + $0x190] sm:$0xf]
          %v7047 = vld [vmem:[#allocation11 + $0x194] sm:$0xf]
          %v7048 = vld [vmem:[#allocation11 + $0x198] sm:$0xf]
          %v7049 = vld [vmem:[#allocation11 + $0x19c] sm:$0xf]
          %v7050 = vld [vmem:[#allocation11 + $0x1a0] sm:$0xf]
          %v7051 = vld [vmem:[#allocation11 + $0x1a4] sm:$0xf]
          %v7052 = vld [vmem:[#allocation11 + $0x1a8] sm:$0xf]
          %v7053 = vld [vmem:[#allocation11 + $0x1ac] sm:$0xf]
          %v7054 = vld [vmem:[#allocation11 + $0x1b0] sm:$0xf]
          %v7055 = vld [vmem:[#allocation11 + $0x1b4] sm:$0xf]
          %v7056 = vld [vmem:[#allocation11 + $0x1b8] sm:$0xf]
          %v7057 = vld [vmem:[#allocation11 + $0x1bc] sm:$0xf]
          %v7058 = vld [vmem:[#allocation11 + $0x1c0] sm:$0xf]
          %v7059 = vld [vmem:[#allocation11 + $0x1c4] sm:$0xf]
          %v7060 = vld [vmem:[#allocation11 + $0x1c8] sm:$0xf]
          %v7061 = vld [vmem:[#allocation11 + $0x1cc] sm:$0xf]
          %v7062 = vld [vmem:[#allocation11 + $0x1d0] sm:$0xf]
          %v7063 = vld [vmem:[#allocation11 + $0x1d4] sm:$0xf]
          %v7064 = vld [vmem:[#allocation11 + $0x1d8] sm:$0xf]
          %v7065 = vld [vmem:[#allocation11 + $0x1dc] sm:$0xf]
          %v7066 = vld [vmem:[#allocation11 + $0x1e0] sm:$0xf]
          %v7067 = vld [vmem:[#allocation11 + $0x1e4] sm:$0xf]
          %v7068 = vld [vmem:[#allocation11 + $0x1e8] sm:$0xf]
          %v7069 = vld [vmem:[#allocation11 + $0x1ec] sm:$0xf]
          %v7070 = vld [vmem:[#allocation11 + $0x1f0] sm:$0xf]
          %v7071 = vld [vmem:[#allocation11 + $0x1f4] sm:$0xf]
          %v7072 = vld [vmem:[#allocation11 + $0x1f8] sm:$0xf]
          %v7073 = vld [vmem:[#allocation11 + $0x1fc] sm:$0xf]
          %v7074 = vld [vmem:[#allocation11 + $0x200] sm:$0xf]
          %v7075 = vld [vmem:[#allocation11 + $0x204] sm:$0xf]
          %v7076 = vld [vmem:[#allocation11 + $0x208] sm:$0xf]
          %v7077 = vld [vmem:[#allocation11 + $0x20c] sm:$0xf]
          %v7078 = vld [vmem:[#allocation11 + $0x210] sm:$0xf]
          %v7079 = vld [vmem:[#allocation11 + $0x214] sm:$0xf]
          %v7080 = vld [vmem:[#allocation11 + $0x218] sm:$0xf]
          %v7081 = vld [vmem:[#allocation11 + $0x21c] sm:$0xf]
          %v7082 = vld [vmem:[#allocation11 + $0x220] sm:$0xf]
          %v7083 = vld [vmem:[#allocation11 + $0x224] sm:$0xf]
          %v7084 = vld [vmem:[#allocation11 + $0x228] sm:$0xf]
          %v7085 = vld [vmem:[#allocation11 + $0x22c] sm:$0xf]
          %v7086 = vld [vmem:[#allocation11 + $0x230] sm:$0xf]
          %v7087 = vld [vmem:[#allocation11 + $0x234] sm:$0xf]
          %v7088 = vld [vmem:[#allocation11 + $0x238] sm:$0xf]
          %v7089 = vld [vmem:[#allocation11 + $0x23c] sm:$0xf]
          %v7090 = vld [vmem:[#allocation11 + $0x240] sm:$0xf]
          %v7091 = vld [vmem:[#allocation11 + $0x244] sm:$0xf]
          %v7092 = vld [vmem:[#allocation11 + $0x248] sm:$0xf]
          %v7093 = vld [vmem:[#allocation11 + $0x24c] sm:$0xf]
          %v7094 = vld [vmem:[#allocation11 + $0x250] sm:$0xf]
          %v7095 = vld [vmem:[#allocation11 + $0x254] sm:$0xf]
          %v7096 = vld [vmem:[#allocation11 + $0x258] sm:$0xf]
          %v7097 = vld [vmem:[#allocation11 + $0x25c] sm:$0xf]
          %v7098 = vld [vmem:[#allocation11 + $0x260] sm:$0xf]
          %v7099 = vld [vmem:[#allocation11 + $0x264] sm:$0xf]
          %v7100 = vld [vmem:[#allocation11 + $0x268] sm:$0xf]
          %v7101 = vld [vmem:[#allocation11 + $0x26c] sm:$0xf]
          %v7102 = vld [vmem:[#allocation11 + $0x270] sm:$0xf]
          %v7103 = vld [vmem:[#allocation11 + $0x274] sm:$0xf]
          %v7104 = vld [vmem:[#allocation11 + $0x278] sm:$0xf]
          %v7105 = vld [vmem:[#allocation11 + $0x27c] sm:$0xf]
          %v7106 = vld [vmem:[#allocation11 + $0x280] sm:$0xf]
          %v7107 = vld [vmem:[#allocation11 + $0x284] sm:$0xf]
          %v7108 = vld [vmem:[#allocation11 + $0x288] sm:$0xf]
          %v7109 = vld [vmem:[#allocation11 + $0x28c] sm:$0xf]
          %v7110 = vld [vmem:[#allocation11 + $0x290] sm:$0xf]
          %v7111 = vld [vmem:[#allocation11 + $0x294] sm:$0xf]
          %v7112 = vld [vmem:[#allocation11 + $0x298] sm:$0xf]
          %v7113 = vld [vmem:[#allocation11 + $0x29c] sm:$0xf]
          %v7114 = vld [vmem:[#allocation11 + $0x2a0] sm:$0xf]
          %v7115 = vld [vmem:[#allocation11 + $0x2a4] sm:$0xf]
          %v7116 = vld [vmem:[#allocation11 + $0x2a8] sm:$0xf]
          %v7117 = vld [vmem:[#allocation11 + $0x2ac] sm:$0xf]
          %v7118 = vld [vmem:[#allocation11 + $0x2b0] sm:$0xf]
          %v7119 = vld [vmem:[#allocation11 + $0x2b4] sm:$0xf]
          %v7120 = vld [vmem:[#allocation11 + $0x2b8] sm:$0xf]
          %v7121 = vld [vmem:[#allocation11 + $0x2bc] sm:$0xf]
          %v7122 = vld [vmem:[#allocation11 + $0x2c0] sm:$0xf]
          %v7123 = vld [vmem:[#allocation11 + $0x2c4] sm:$0xf]
          %v7124 = vld [vmem:[#allocation11 + $0x2c8] sm:$0xf]
          %v7125 = vld [vmem:[#allocation11 + $0x2cc] sm:$0xf]
          %v7126 = vld [vmem:[#allocation11 + $0x2d0] sm:$0xf]
          %v7127 = vld [vmem:[#allocation11 + $0x2d4] sm:$0xf]
          %v7128 = vld [vmem:[#allocation11 + $0x2d8] sm:$0xf]
          %v7129 = vld [vmem:[#allocation11 + $0x2dc] sm:$0xf]
          %v7130 = vld [vmem:[#allocation11 + $0x2e0] sm:$0xf]
          %v7131 = vld [vmem:[#allocation11 + $0x2e4] sm:$0xf]
          %v7132 = vld [vmem:[#allocation11 + $0x2e8] sm:$0xf]
          %v7133 = vld [vmem:[#allocation11 + $0x2ec] sm:$0xf]
          %v7134 = vld [vmem:[#allocation11 + $0x2f0] sm:$0xf]
          %v7135 = vld [vmem:[#allocation11 + $0x2f4] sm:$0xf]
          %v7136 = vld [vmem:[#allocation11 + $0x2f8] sm:$0xf]
          %v7137 = vld [vmem:[#allocation11 + $0x2fc] sm:$0xf]
          %v7138 = vld [vmem:[#allocation11 + $0x300] sm:$0xf]
          %v7139 = vld [vmem:[#allocation11 + $0x304] sm:$0xf]
          %v7140 = vld [vmem:[#allocation11 + $0x308] sm:$0xf]
          %v7141 = vld [vmem:[#allocation11 + $0x30c] sm:$0xf]
          %v7142 = vld [vmem:[#allocation11 + $0x310] sm:$0xf]
          %v7143 = vld [vmem:[#allocation11 + $0x314] sm:$0xf]
          %v7144 = vld [vmem:[#allocation11 + $0x318] sm:$0xf]
          %v7145 = vld [vmem:[#allocation11 + $0x31c] sm:$0xf]
          %v7146 = vld [vmem:[#allocation11 + $0x320] sm:$0xf]
          %v7147 = vld [vmem:[#allocation11 + $0x324] sm:$0xf]
          %v7148 = vld [vmem:[#allocation11 + $0x328] sm:$0xf]
          %v7149 = vld [vmem:[#allocation11 + $0x32c] sm:$0xf]
          %v7150 = vld [vmem:[#allocation11 + $0x330] sm:$0xf]
          %v7151 = vld [vmem:[#allocation11 + $0x334] sm:$0xf]
          %v7152 = vld [vmem:[#allocation11 + $0x338] sm:$0xf]
          %v7153 = vld [vmem:[#allocation11 + $0x33c] sm:$0xf]
          %v7154 = vld [vmem:[#allocation11 + $0x340] sm:$0xf]
          %v7155 = vld [vmem:[#allocation11 + $0x344] sm:$0xf]
          %v7156 = vld [vmem:[#allocation11 + $0x348] sm:$0xf]
          %v7157 = vld [vmem:[#allocation11 + $0x34c] sm:$0xf]
          %v7158 = vld [vmem:[#allocation11 + $0x350] sm:$0xf]
          %v7159 = vld [vmem:[#allocation11 + $0x354] sm:$0xf]
          %v7160 = vld [vmem:[#allocation11 + $0x358] sm:$0xf]
          %v7161 = vld [vmem:[#allocation11 + $0x35c] sm:$0xf]
          %v7162 = vld [vmem:[#allocation11 + $0x360] sm:$0xf]
          %v7163 = vld [vmem:[#allocation11 + $0x364] sm:$0xf]
          %v7164 = vld [vmem:[#allocation11 + $0x368] sm:$0xf]
          %v7165 = vld [vmem:[#allocation11 + $0x36c] sm:$0xf]
          %v7166 = vld [vmem:[#allocation11 + $0x370] sm:$0xf]
          %v7167 = vld [vmem:[#allocation11 + $0x374] sm:$0xf]
          %v7168 = vld [vmem:[#allocation11 + $0x378] sm:$0xf]
          %v7169 = vld [vmem:[#allocation11 + $0x37c] sm:$0xf]
          %v7170 = vld [vmem:[#allocation11 + $0x380] sm:$0xf]
          %v7171 = vld [vmem:[#allocation11 + $0x384] sm:$0xf]
          %v7172 = vld [vmem:[#allocation11 + $0x388] sm:$0xf]
          %v7173 = vld [vmem:[#allocation11 + $0x38c] sm:$0xf]
          %v7174 = vld [vmem:[#allocation11 + $0x390] sm:$0xf]
          %v7175 = vld [vmem:[#allocation11 + $0x394] sm:$0xf]
          %v7176 = vld [vmem:[#allocation11 + $0x398] sm:$0xf]
          %v7177 = vld [vmem:[#allocation11 + $0x39c] sm:$0xf]
          %v7178 = vld [vmem:[#allocation11 + $0x3a0] sm:$0xf]
          %v7179 = vld [vmem:[#allocation11 + $0x3a4] sm:$0xf]
          %v7180 = vld [vmem:[#allocation11 + $0x3a8] sm:$0xf]
          %v7181 = vld [vmem:[#allocation11 + $0x3ac] sm:$0xf]
          %v7182 = vld [vmem:[#allocation11 + $0x3b0] sm:$0xf]
          %v7183 = vld [vmem:[#allocation11 + $0x3b4] sm:$0xf]
          %v7184 = vld [vmem:[#allocation11 + $0x3b8] sm:$0xf]
          %v7185 = vld [vmem:[#allocation11 + $0x3bc] sm:$0xf]
          %v7186 = vld [vmem:[#allocation11 + $0x3c0] sm:$0xf]
          %v7187 = vld [vmem:[#allocation11 + $0x3c4] sm:$0xf]
          %v7188 = vld [vmem:[#allocation11 + $0x3c8] sm:$0xf]
          %v7189 = vld [vmem:[#allocation11 + $0x3cc] sm:$0xf]
          %v7190 = vld [vmem:[#allocation11 + $0x3d0] sm:$0xf]
          %v7191 = vld [vmem:[#allocation11 + $0x3d4] sm:$0xf]
          %v7192 = vld [vmem:[#allocation11 + $0x3d8] sm:$0xf]
          %v7193 = vld [vmem:[#allocation11 + $0x3dc] sm:$0xf]
          %v7194 = vld [vmem:[#allocation11 + $0x3e0] sm:$0xf]
          %v7195 = vld [vmem:[#allocation11 + $0x3e4] sm:$0xf]
          %v7196 = vld [vmem:[#allocation11 + $0x3e8] sm:$0xf]
          %v7197 = vld [vmem:[#allocation11 + $0x3ec] sm:$0xf]
          %v7198 = vld [vmem:[#allocation11 + $0x3f0] sm:$0xf]
          %v7199 = vld [vmem:[#allocation11 + $0x3f4] sm:$0xf]
          %v7200 = vld [vmem:[#allocation11 + $0x3f8] sm:$0xf]
          %v7201 = vld [vmem:[#allocation11 + $0x3fc] sm:$0xf]
          %v7458 = vunpack.c.l.b16 %v6946
          %v7459 = vunpack.c.l.b16 %v6947
          %v7460 = vunpack.c.l.b16 %v6948
          %v7461 = vunpack.c.l.b16 %v6949
          %v7462 = vunpack.c.l.b16 %v6950
          %v7463 = vunpack.c.l.b16 %v6951
          %v7464 = vunpack.c.l.b16 %v6952
          %v7465 = vunpack.c.l.b16 %v6953
          %v7466 = vunpack.c.l.b16 %v6954
          %v7467 = vunpack.c.l.b16 %v6955
          %v7468 = vunpack.c.l.b16 %v6956
          %v7469 = vunpack.c.l.b16 %v6957
          %v7470 = vunpack.c.l.b16 %v6958
          %v7471 = vunpack.c.l.b16 %v6959
          %v7472 = vunpack.c.l.b16 %v6960
          %v7473 = vunpack.c.l.b16 %v6961
          %v7474 = vunpack.c.l.b16 %v6962
          %v7475 = vunpack.c.l.b16 %v6963
          %v7476 = vunpack.c.l.b16 %v6964
          %v7477 = vunpack.c.l.b16 %v6965
          %v7478 = vunpack.c.l.b16 %v6966
          %v7479 = vunpack.c.l.b16 %v6967
          %v7480 = vunpack.c.l.b16 %v6968
          %v7481 = vunpack.c.l.b16 %v6969
          %v7482 = vunpack.c.l.b16 %v6970
          %v7483 = vunpack.c.l.b16 %v6971
          %v7484 = vunpack.c.l.b16 %v6972
          %v7485 = vunpack.c.l.b16 %v6973
          %v7486 = vunpack.c.l.b16 %v6974
          %v7487 = vunpack.c.l.b16 %v6975
          %v7488 = vunpack.c.l.b16 %v6976
          %v7489 = vunpack.c.l.b16 %v6977
          %v7490 = vunpack.c.l.b16 %v6978
          %v7491 = vunpack.c.l.b16 %v6979
          %v7492 = vunpack.c.l.b16 %v6980
          %v7493 = vunpack.c.l.b16 %v6981
          %v7494 = vunpack.c.l.b16 %v6982
          %v7495 = vunpack.c.l.b16 %v6983
          %v7496 = vunpack.c.l.b16 %v6984
          %v7497 = vunpack.c.l.b16 %v6985
          %v7498 = vunpack.c.l.b16 %v6986
          %v7499 = vunpack.c.l.b16 %v6987
          %v7500 = vunpack.c.l.b16 %v6988
          %v7501 = vunpack.c.l.b16 %v6989
          %v7502 = vunpack.c.l.b16 %v6990
          %v7503 = vunpack.c.l.b16 %v6991
          %v7504 = vunpack.c.l.b16 %v6992
          %v7505 = vunpack.c.l.b16 %v6993
          %v7506 = vunpack.c.l.b16 %v6994
          %v7507 = vunpack.c.l.b16 %v6995
          %v7508 = vunpack.c.l.b16 %v6996
          %v7509 = vunpack.c.l.b16 %v6997
          %v7510 = vunpack.c.l.b16 %v6998
          %v7511 = vunpack.c.l.b16 %v6999
          %v7512 = vunpack.c.l.b16 %v7000
          %v7513 = vunpack.c.l.b16 %v7001
          %v7514 = vunpack.c.l.b16 %v7002
          %v7515 = vunpack.c.l.b16 %v7003
          %v7516 = vunpack.c.l.b16 %v7004
          %v7517 = vunpack.c.l.b16 %v7005
          %v7518 = vunpack.c.l.b16 %v7006
          %v7519 = vunpack.c.l.b16 %v7007
          %v7520 = vunpack.c.l.b16 %v7008
          %v7521 = vunpack.c.l.b16 %v7009
          %v7522 = vunpack.c.l.b16 %v7010
          %v7523 = vunpack.c.l.b16 %v7011
          %v7524 = vunpack.c.l.b16 %v7012
          %v7525 = vunpack.c.l.b16 %v7013
          %v7526 = vunpack.c.l.b16 %v7014
          %v7527 = vunpack.c.l.b16 %v7015
          %v7528 = vunpack.c.l.b16 %v7016
          %v7529 = vunpack.c.l.b16 %v7017
          %v7530 = vunpack.c.l.b16 %v7018
          %v7531 = vunpack.c.l.b16 %v7019
          %v7532 = vunpack.c.l.b16 %v7020
          %v7533 = vunpack.c.l.b16 %v7021
          %v7534 = vunpack.c.l.b16 %v7022
          %v7535 = vunpack.c.l.b16 %v7023
          %v7536 = vunpack.c.l.b16 %v7024
          %v7537 = vunpack.c.l.b16 %v7025
          %v7538 = vunpack.c.l.b16 %v7026
          %v7539 = vunpack.c.l.b16 %v7027
          %v7540 = vunpack.c.l.b16 %v7028
          %v7541 = vunpack.c.l.b16 %v7029
          %v7542 = vunpack.c.l.b16 %v7030
          %v7543 = vunpack.c.l.b16 %v7031
          %v7544 = vunpack.c.l.b16 %v7032
          %v7545 = vunpack.c.l.b16 %v7033
          %v7546 = vunpack.c.l.b16 %v7034
          %v7547 = vunpack.c.l.b16 %v7035
          %v7548 = vunpack.c.l.b16 %v7036
          %v7549 = vunpack.c.l.b16 %v7037
          %v7550 = vunpack.c.l.b16 %v7038
          %v7551 = vunpack.c.l.b16 %v7039
          %v7552 = vunpack.c.l.b16 %v7040
          %v7553 = vunpack.c.l.b16 %v7041
          %v7554 = vunpack.c.l.b16 %v7042
          %v7555 = vunpack.c.l.b16 %v7043
          %v7556 = vunpack.c.l.b16 %v7044
          %v7557 = vunpack.c.l.b16 %v7045
          %v7558 = vunpack.c.l.b16 %v7046
          %v7559 = vunpack.c.l.b16 %v7047
          %v7560 = vunpack.c.l.b16 %v7048
          %v7561 = vunpack.c.l.b16 %v7049
          %v7562 = vunpack.c.l.b16 %v7050
          %v7563 = vunpack.c.l.b16 %v7051
          %v7564 = vunpack.c.l.b16 %v7052
          %v7565 = vunpack.c.l.b16 %v7053
          %v7566 = vunpack.c.l.b16 %v7054
          %v7567 = vunpack.c.l.b16 %v7055
          %v7568 = vunpack.c.l.b16 %v7056
          %v7569 = vunpack.c.l.b16 %v7057
          %v7570 = vunpack.c.l.b16 %v7058
          %v7571 = vunpack.c.l.b16 %v7059
          %v7572 = vunpack.c.l.b16 %v7060
          %v7573 = vunpack.c.l.b16 %v7061
          %v7574 = vunpack.c.l.b16 %v7062
          %v7575 = vunpack.c.l.b16 %v7063
          %v7576 = vunpack.c.l.b16 %v7064
          %v7577 = vunpack.c.l.b16 %v7065
          %v7578 = vunpack.c.l.b16 %v7066
          %v7579 = vunpack.c.l.b16 %v7067
          %v7580 = vunpack.c.l.b16 %v7068
          %v7581 = vunpack.c.l.b16 %v7069
          %v7582 = vunpack.c.l.b16 %v7070
          %v7583 = vunpack.c.l.b16 %v7071
          %v7584 = vunpack.c.l.b16 %v7072
          %v7585 = vunpack.c.l.b16 %v7073
          %v7586 = vunpack.c.l.b16 %v7074
          %v7587 = vunpack.c.l.b16 %v7075
          %v7588 = vunpack.c.l.b16 %v7076
          %v7589 = vunpack.c.l.b16 %v7077
          %v7590 = vunpack.c.l.b16 %v7078
          %v7591 = vunpack.c.l.b16 %v7079
          %v7592 = vunpack.c.l.b16 %v7080
          %v7593 = vunpack.c.l.b16 %v7081
          %v7594 = vunpack.c.l.b16 %v7082
          %v7595 = vunpack.c.l.b16 %v7083
          %v7596 = vunpack.c.l.b16 %v7084
          %v7597 = vunpack.c.l.b16 %v7085
          %v7598 = vunpack.c.l.b16 %v7086
          %v7599 = vunpack.c.l.b16 %v7087
          %v7600 = vunpack.c.l.b16 %v7088
          %v7601 = vunpack.c.l.b16 %v7089
          %v7602 = vunpack.c.l.b16 %v7090
          %v7603 = vunpack.c.l.b16 %v7091
          %v7604 = vunpack.c.l.b16 %v7092
          %v7605 = vunpack.c.l.b16 %v7093
          %v7606 = vunpack.c.l.b16 %v7094
          %v7607 = vunpack.c.l.b16 %v7095
          %v7608 = vunpack.c.l.b16 %v7096
          %v7609 = vunpack.c.l.b16 %v7097
          %v7610 = vunpack.c.l.b16 %v7098
          %v7611 = vunpack.c.l.b16 %v7099
          %v7612 = vunpack.c.l.b16 %v7100
          %v7613 = vunpack.c.l.b16 %v7101
          %v7614 = vunpack.c.l.b16 %v7102
          %v7615 = vunpack.c.l.b16 %v7103
          %v7616 = vunpack.c.l.b16 %v7104
          %v7617 = vunpack.c.l.b16 %v7105
          %v7618 = vunpack.c.l.b16 %v7106
          %v7619 = vunpack.c.l.b16 %v7107
          %v7620 = vunpack.c.l.b16 %v7108
          %v7621 = vunpack.c.l.b16 %v7109
          %v7622 = vunpack.c.l.b16 %v7110
          %v7623 = vunpack.c.l.b16 %v7111
          %v7624 = vunpack.c.l.b16 %v7112
          %v7625 = vunpack.c.l.b16 %v7113
          %v7626 = vunpack.c.l.b16 %v7114
          %v7627 = vunpack.c.l.b16 %v7115
          %v7628 = vunpack.c.l.b16 %v7116
          %v7629 = vunpack.c.l.b16 %v7117
          %v7630 = vunpack.c.l.b16 %v7118
          %v7631 = vunpack.c.l.b16 %v7119
          %v7632 = vunpack.c.l.b16 %v7120
          %v7633 = vunpack.c.l.b16 %v7121
          %v7634 = vunpack.c.l.b16 %v7122
          %v7635 = vunpack.c.l.b16 %v7123
          %v7636 = vunpack.c.l.b16 %v7124
          %v7637 = vunpack.c.l.b16 %v7125
          %v7638 = vunpack.c.l.b16 %v7126
          %v7639 = vunpack.c.l.b16 %v7127
          %v7640 = vunpack.c.l.b16 %v7128
          %v7641 = vunpack.c.l.b16 %v7129
          %v7642 = vunpack.c.l.b16 %v7130
          %v7643 = vunpack.c.l.b16 %v7131
          %v7644 = vunpack.c.l.b16 %v7132
          %v7645 = vunpack.c.l.b16 %v7133
          %v7646 = vunpack.c.l.b16 %v7134
          %v7647 = vunpack.c.l.b16 %v7135
          %v7648 = vunpack.c.l.b16 %v7136
          %v7649 = vunpack.c.l.b16 %v7137
          %v7650 = vunpack.c.l.b16 %v7138
          %v7651 = vunpack.c.l.b16 %v7139
          %v7652 = vunpack.c.l.b16 %v7140
          %v7653 = vunpack.c.l.b16 %v7141
          %v7654 = vunpack.c.l.b16 %v7142
          %v7655 = vunpack.c.l.b16 %v7143
          %v7656 = vunpack.c.l.b16 %v7144
          %v7657 = vunpack.c.l.b16 %v7145
          %v7658 = vunpack.c.l.b16 %v7146
          %v7659 = vunpack.c.l.b16 %v7147
          %v7660 = vunpack.c.l.b16 %v7148
          %v7661 = vunpack.c.l.b16 %v7149
          %v7662 = vunpack.c.l.b16 %v7150
          %v7663 = vunpack.c.l.b16 %v7151
          %v7664 = vunpack.c.l.b16 %v7152
          %v7665 = vunpack.c.l.b16 %v7153
          %v7666 = vunpack.c.l.b16 %v7154
          %v7667 = vunpack.c.l.b16 %v7155
          %v7668 = vunpack.c.l.b16 %v7156
          %v7669 = vunpack.c.l.b16 %v7157
          %v7670 = vunpack.c.l.b16 %v7158
          %v7671 = vunpack.c.l.b16 %v7159
          %v7672 = vunpack.c.l.b16 %v7160
          %v7673 = vunpack.c.l.b16 %v7161
          %v7674 = vunpack.c.l.b16 %v7162
          %v7675 = vunpack.c.l.b16 %v7163
          %v7676 = vunpack.c.l.b16 %v7164
          %v7677 = vunpack.c.l.b16 %v7165
          %v7678 = vunpack.c.l.b16 %v7166
          %v7679 = vunpack.c.l.b16 %v7167
          %v7680 = vunpack.c.l.b16 %v7168
          %v7681 = vunpack.c.l.b16 %v7169
          %v7682 = vunpack.c.l.b16 %v7170
          %v7683 = vunpack.c.l.b16 %v7171
          %v7684 = vunpack.c.l.b16 %v7172
          %v7685 = vunpack.c.l.b16 %v7173
          %v7686 = vunpack.c.l.b16 %v7174
          %v7687 = vunpack.c.l.b16 %v7175
          %v7688 = vunpack.c.l.b16 %v7176
          %v7689 = vunpack.c.l.b16 %v7177
          %v7690 = vunpack.c.l.b16 %v7178
          %v7691 = vunpack.c.l.b16 %v7179
          %v7692 = vunpack.c.l.b16 %v7180
          %v7693 = vunpack.c.l.b16 %v7181
          %v7694 = vunpack.c.l.b16 %v7182
          %v7695 = vunpack.c.l.b16 %v7183
          %v7696 = vunpack.c.l.b16 %v7184
          %v7697 = vunpack.c.l.b16 %v7185
          %v7698 = vunpack.c.l.b16 %v7186
          %v7699 = vunpack.c.l.b16 %v7187
          %v7700 = vunpack.c.l.b16 %v7188
          %v7701 = vunpack.c.l.b16 %v7189
          %v7702 = vunpack.c.l.b16 %v7190
          %v7703 = vunpack.c.l.b16 %v7191
          %v7704 = vunpack.c.l.b16 %v7192
          %v7705 = vunpack.c.l.b16 %v7193
          %v7706 = vunpack.c.l.b16 %v7194
          %v7707 = vunpack.c.l.b16 %v7195
          %v7708 = vunpack.c.l.b16 %v7196
          %v7709 = vunpack.c.l.b16 %v7197
          %v7710 = vunpack.c.l.b16 %v7198
          %v7711 = vunpack.c.l.b16 %v7199
          %v7712 = vunpack.c.l.b16 %v7200
          %v7713 = vunpack.c.l.b16 %v7201
          %v7714 = vpack.c.b16 %v7459, %v7458
          %v7715 = vpack.c.b16 %v7461, %v7460
          %v7716 = vpack.c.b16 %v7463, %v7462
          %v7717 = vpack.c.b16 %v7465, %v7464
          %v7718 = vpack.c.b16 %v7467, %v7466
          %v7719 = vpack.c.b16 %v7469, %v7468
          %v7720 = vpack.c.b16 %v7471, %v7470
          %v7721 = vpack.c.b16 %v7473, %v7472
          %v7722 = vpack.c.b16 %v7475, %v7474
          %v7723 = vpack.c.b16 %v7477, %v7476
          %v7724 = vpack.c.b16 %v7479, %v7478
          %v7725 = vpack.c.b16 %v7481, %v7480
          %v7726 = vpack.c.b16 %v7483, %v7482
          %v7727 = vpack.c.b16 %v7485, %v7484
          %v7728 = vpack.c.b16 %v7487, %v7486
          %v7729 = vpack.c.b16 %v7489, %v7488
          %v7730 = vpack.c.b16 %v7491, %v7490
          %v7731 = vpack.c.b16 %v7493, %v7492
          %v7732 = vpack.c.b16 %v7495, %v7494
          %v7733 = vpack.c.b16 %v7497, %v7496
          %v7734 = vpack.c.b16 %v7499, %v7498
          %v7735 = vpack.c.b16 %v7501, %v7500
          %v7736 = vpack.c.b16 %v7503, %v7502
          %v7737 = vpack.c.b16 %v7505, %v7504
          %v7738 = vpack.c.b16 %v7507, %v7506
          %v7739 = vpack.c.b16 %v7509, %v7508
          %v7740 = vpack.c.b16 %v7511, %v7510
          %v7741 = vpack.c.b16 %v7513, %v7512
          %v7742 = vpack.c.b16 %v7515, %v7514
          %v7743 = vpack.c.b16 %v7517, %v7516
          %v7744 = vpack.c.b16 %v7519, %v7518
          %v7745 = vpack.c.b16 %v7521, %v7520
          %v7746 = vpack.c.b16 %v7523, %v7522
          %v7747 = vpack.c.b16 %v7525, %v7524
          %v7748 = vpack.c.b16 %v7527, %v7526
          %v7749 = vpack.c.b16 %v7529, %v7528
          %v7750 = vpack.c.b16 %v7531, %v7530
          %v7751 = vpack.c.b16 %v7533, %v7532
          %v7752 = vpack.c.b16 %v7535, %v7534
          %v7753 = vpack.c.b16 %v7537, %v7536
          %v7754 = vpack.c.b16 %v7539, %v7538
          %v7755 = vpack.c.b16 %v7541, %v7540
          %v7756 = vpack.c.b16 %v7543, %v7542
          %v7757 = vpack.c.b16 %v7545, %v7544
          %v7758 = vpack.c.b16 %v7547, %v7546
          %v7759 = vpack.c.b16 %v7549, %v7548
          %v7760 = vpack.c.b16 %v7551, %v7550
          %v7761 = vpack.c.b16 %v7553, %v7552
          %v7762 = vpack.c.b16 %v7555, %v7554
          %v7763 = vpack.c.b16 %v7557, %v7556
          %v7764 = vpack.c.b16 %v7559, %v7558
          %v7765 = vpack.c.b16 %v7561, %v7560
          %v7766 = vpack.c.b16 %v7563, %v7562
          %v7767 = vpack.c.b16 %v7565, %v7564
          %v7768 = vpack.c.b16 %v7567, %v7566
          %v7769 = vpack.c.b16 %v7569, %v7568
          %v7770 = vpack.c.b16 %v7571, %v7570
          %v7771 = vpack.c.b16 %v7573, %v7572
          %v7772 = vpack.c.b16 %v7575, %v7574
          %v7773 = vpack.c.b16 %v7577, %v7576
          %v7774 = vpack.c.b16 %v7579, %v7578
          %v7775 = vpack.c.b16 %v7581, %v7580
          %v7776 = vpack.c.b16 %v7583, %v7582
          %v7777 = vpack.c.b16 %v7585, %v7584
          %v7778 = vpack.c.b16 %v7587, %v7586
          %v7779 = vpack.c.b16 %v7589, %v7588
          %v7780 = vpack.c.b16 %v7591, %v7590
          %v7781 = vpack.c.b16 %v7593, %v7592
          %v7782 = vpack.c.b16 %v7595, %v7594
          %v7783 = vpack.c.b16 %v7597, %v7596
          %v7784 = vpack.c.b16 %v7599, %v7598
          %v7785 = vpack.c.b16 %v7601, %v7600
          %v7786 = vpack.c.b16 %v7603, %v7602
          %v7787 = vpack.c.b16 %v7605, %v7604
          %v7788 = vpack.c.b16 %v7607, %v7606
          %v7789 = vpack.c.b16 %v7609, %v7608
          %v7790 = vpack.c.b16 %v7611, %v7610
          %v7791 = vpack.c.b16 %v7613, %v7612
          %v7792 = vpack.c.b16 %v7615, %v7614
          %v7793 = vpack.c.b16 %v7617, %v7616
          %v7794 = vpack.c.b16 %v7619, %v7618
          %v7795 = vpack.c.b16 %v7621, %v7620
          %v7796 = vpack.c.b16 %v7623, %v7622
          %v7797 = vpack.c.b16 %v7625, %v7624
          %v7798 = vpack.c.b16 %v7627, %v7626
          %v7799 = vpack.c.b16 %v7629, %v7628
          %v7800 = vpack.c.b16 %v7631, %v7630
          %v7801 = vpack.c.b16 %v7633, %v7632
          %v7802 = vpack.c.b16 %v7635, %v7634
          %v7803 = vpack.c.b16 %v7637, %v7636
          %v7804 = vpack.c.b16 %v7639, %v7638
          %v7805 = vpack.c.b16 %v7641, %v7640
          %v7806 = vpack.c.b16 %v7643, %v7642
          %v7807 = vpack.c.b16 %v7645, %v7644
          %v7808 = vpack.c.b16 %v7647, %v7646
          %v7809 = vpack.c.b16 %v7649, %v7648
          %v7810 = vpack.c.b16 %v7651, %v7650
          %v7811 = vpack.c.b16 %v7653, %v7652
          %v7812 = vpack.c.b16 %v7655, %v7654
          %v7813 = vpack.c.b16 %v7657, %v7656
          %v7814 = vpack.c.b16 %v7659, %v7658
          %v7815 = vpack.c.b16 %v7661, %v7660
          %v7816 = vpack.c.b16 %v7663, %v7662
          %v7817 = vpack.c.b16 %v7665, %v7664
          %v7818 = vpack.c.b16 %v7667, %v7666
          %v7819 = vpack.c.b16 %v7669, %v7668
          %v7820 = vpack.c.b16 %v7671, %v7670
          %v7821 = vpack.c.b16 %v7673, %v7672
          %v7822 = vpack.c.b16 %v7675, %v7674
          %v7823 = vpack.c.b16 %v7677, %v7676
          %v7824 = vpack.c.b16 %v7679, %v7678
          %v7825 = vpack.c.b16 %v7681, %v7680
          %v7826 = vpack.c.b16 %v7683, %v7682
          %v7827 = vpack.c.b16 %v7685, %v7684
          %v7828 = vpack.c.b16 %v7687, %v7686
          %v7829 = vpack.c.b16 %v7689, %v7688
          %v7830 = vpack.c.b16 %v7691, %v7690
          %v7831 = vpack.c.b16 %v7693, %v7692
          %v7832 = vpack.c.b16 %v7695, %v7694
          %v7833 = vpack.c.b16 %v7697, %v7696
          %v7834 = vpack.c.b16 %v7699, %v7698
          %v7835 = vpack.c.b16 %v7701, %v7700
          %v7836 = vpack.c.b16 %v7703, %v7702
          %v7837 = vpack.c.b16 %v7705, %v7704
          %v7838 = vpack.c.b16 %v7707, %v7706
          %v7839 = vpack.c.b16 %v7709, %v7708
          %v7840 = vpack.c.b16 %v7711, %v7710
          %v7841 = vpack.c.b16 %v7713, %v7712
          %7970 = vmatprep.subr.bf16.mxu0 0
          %7971 = vmatpush1.bf16.msra.mxu0 %v7721
          %7972 = vmatprep.subr.bf16.mxu0 0
          %7973 = vmatpush1.bf16.msra.mxu0 %v7720
          %7974 = vmatprep.subr.bf16.mxu0 0
          %7975 = vmatpush1.bf16.msra.mxu0 %v7719
          %7976 = vmatprep.subr.bf16.mxu0 0
          %7977 = vmatpush1.bf16.msra.mxu0 %v7718
          %7978 = vmatprep.subr.bf16.mxu0 0
          %7979 = vmatpush1.bf16.msra.mxu0 %v7717
          %7980 = vmatprep.subr.bf16.mxu0 0
          %7981 = vmatpush1.bf16.msra.mxu0 %v7716
          %7982 = vmatprep.subr.bf16.mxu0 0
          %7983 = vmatpush1.bf16.msra.mxu0 %v7715
          %7984 = vmatprep.subr.bf16.mxu0 0
          %7985 = vmatpush1.bf16.msra.mxu0 %v7714
          %7986 = vmatprep.subr.bf16.mxu0 0
          %7987 = vmatpush2.bf16.msra.mxu0 %v7729
          %7988 = vmatprep.subr.bf16.mxu0 0
          %7989 = vmatpush2.bf16.msra.mxu0 %v7728
          %7990 = vmatprep.subr.bf16.mxu0 0
          %7991 = vmatpush2.bf16.msra.mxu0 %v7727
          %7992 = vmatprep.subr.bf16.mxu0 0
          %7993 = vmatpush2.bf16.msra.mxu0 %v7726
          %7994 = vmatprep.subr.bf16.mxu0 0
          %7995 = vmatpush2.bf16.msra.mxu0 %v7725
          %7996 = vmatprep.subr.bf16.mxu0 0
          %7997 = vmatpush2.bf16.msra.mxu0 %v7724
          %7998 = vmatprep.subr.bf16.mxu0 0
          %7999 = vmatpush2.bf16.msra.mxu0 %v7723
          %8000 = vmatprep.subr.bf16.mxu0 0
          %8001 = vmatpush2.bf16.msra.mxu0 %v7722
          %8002 = vmatprep.mubr.bf16.mxu0 %v6931
          %8003 = vmatmul.mubr.bf16.gmra.mxu0 %v6930
          %v8004 = vpop.f32.mrf.mxu0
          %v8005 = vadd.f32 0.0, %v8004
          %v8006 = vpop.f32.mrf.mxu0
          %v8007 = vpop.f32.mrf.mxu0
          %v8008 = vpop.f32.mrf.mxu0
          %8009 = vdwg.mxu0
          %8010 = vmatprep.subr.bf16.mxu0 0
          %8011 = vmatpush1.bf16.msra.mxu0 %v7737
          %8012 = vmatprep.subr.bf16.mxu0 0
          %8013 = vmatpush1.bf16.msra.mxu0 %v7736
          %8014 = vmatprep.subr.bf16.mxu0 0
          %8015 = vmatpush1.bf16.msra.mxu0 %v7735
          %8016 = vmatprep.subr.bf16.mxu0 0
          %8017 = vmatpush1.bf16.msra.mxu0 %v7734
          %8018 = vmatprep.subr.bf16.mxu0 0
          %8019 = vmatpush1.bf16.msra.mxu0 %v7733
          %8020 = vmatprep.subr.bf16.mxu0 0
          %8021 = vmatpush1.bf16.msra.mxu0 %v7732
          %8022 = vmatprep.subr.bf16.mxu0 0
          %8023 = vmatpush1.bf16.msra.mxu0 %v7731
          %8024 = vmatprep.subr.bf16.mxu0 0
          %8025 = vmatpush1.bf16.msra.mxu0 %v7730
          %8026 = vmatprep.subr.bf16.mxu0 0
          %8027 = vmatpush2.bf16.msra.mxu0 %v7745
          %8028 = vmatprep.subr.bf16.mxu0 0
          %8029 = vmatpush2.bf16.msra.mxu0 %v7744
          %8030 = vmatprep.subr.bf16.mxu0 0
          %8031 = vmatpush2.bf16.msra.mxu0 %v7743
          %8032 = vmatprep.subr.bf16.mxu0 0
          %8033 = vmatpush2.bf16.msra.mxu0 %v7742
          %8034 = vmatprep.subr.bf16.mxu0 0
          %8035 = vmatpush2.bf16.msra.mxu0 %v7741
          %8036 = vmatprep.subr.bf16.mxu0 0
          %8037 = vmatpush2.bf16.msra.mxu0 %v7740
          %8038 = vmatprep.subr.bf16.mxu0 0
          %8039 = vmatpush2.bf16.msra.mxu0 %v7739
          %8040 = vmatprep.subr.bf16.mxu0 0
          %8041 = vmatpush2.bf16.msra.mxu0 %v7738
          %8042 = vmatprep.mubr.bf16.mxu0 %v6933
          %8043 = vmatmul.mubr.bf16.gmra.mxu0 %v6932
          %v8044 = vpop.f32.mrf.mxu0
          %v8045 = vadd.f32 %v8005, %v8044
          %v8046 = vpop.f32.mrf.mxu0
          %v8047 = vpop.f32.mrf.mxu0
          %v8048 = vpop.f32.mrf.mxu0
          %8049 = vdwg.mxu0
          %8050 = vmatprep.subr.bf16.mxu0 0
          %8051 = vmatpush1.bf16.msra.mxu0 %v7753
          %8052 = vmatprep.subr.bf16.mxu0 0
          %8053 = vmatpush1.bf16.msra.mxu0 %v7752
          %8054 = vmatprep.subr.bf16.mxu0 0
          %8055 = vmatpush1.bf16.msra.mxu0 %v7751
          %8056 = vmatprep.subr.bf16.mxu0 0
          %8057 = vmatpush1.bf16.msra.mxu0 %v7750
          %8058 = vmatprep.subr.bf16.mxu0 0
          %8059 = vmatpush1.bf16.msra.mxu0 %v7749
          %8060 = vmatprep.subr.bf16.mxu0 0
          %8061 = vmatpush1.bf16.msra.mxu0 %v7748
          %8062 = vmatprep.subr.bf16.mxu0 0
          %8063 = vmatpush1.bf16.msra.mxu0 %v7747
          %8064 = vmatprep.subr.bf16.mxu0 0
          %8065 = vmatpush1.bf16.msra.mxu0 %v7746
          %8066 = vmatprep.subr.bf16.mxu0 0
          %8067 = vmatpush2.bf16.msra.mxu0 %v7761
          %8068 = vmatprep.subr.bf16.mxu0 0
          %8069 = vmatpush2.bf16.msra.mxu0 %v7760
          %8070 = vmatprep.subr.bf16.mxu0 0
          %8071 = vmatpush2.bf16.msra.mxu0 %v7759
          %8072 = vmatprep.subr.bf16.mxu0 0
          %8073 = vmatpush2.bf16.msra.mxu0 %v7758
          %8074 = vmatprep.subr.bf16.mxu0 0
          %8075 = vmatpush2.bf16.msra.mxu0 %v7757
          %8076 = vmatprep.subr.bf16.mxu0 0
          %8077 = vmatpush2.bf16.msra.mxu0 %v7756
          %8078 = vmatprep.subr.bf16.mxu0 0
          %8079 = vmatpush2.bf16.msra.mxu0 %v7755
          %8080 = vmatprep.subr.bf16.mxu0 0
          %8081 = vmatpush2.bf16.msra.mxu0 %v7754
          %8082 = vmatprep.mubr.bf16.mxu0 %v6935
          %8083 = vmatmul.mubr.bf16.gmra.mxu0 %v6934
          %v8084 = vpop.f32.mrf.mxu0
          %v8085 = vadd.f32 %v8045, %v8084
          %v8086 = vpop.f32.mrf.mxu0
          %v8087 = vpop.f32.mrf.mxu0
          %v8088 = vpop.f32.mrf.mxu0
          %8089 = vdwg.mxu0
          %8090 = vmatprep.subr.bf16.mxu0 0
          %8091 = vmatpush1.bf16.msra.mxu0 %v7769
          %8092 = vmatprep.subr.bf16.mxu0 0
          %8093 = vmatpush1.bf16.msra.mxu0 %v7768
          %8094 = vmatprep.subr.bf16.mxu0 0
          %8095 = vmatpush1.bf16.msra.mxu0 %v7767
          %8096 = vmatprep.subr.bf16.mxu0 0
          %8097 = vmatpush1.bf16.msra.mxu0 %v7766
          %8098 = vmatprep.subr.bf16.mxu0 0
          %8099 = vmatpush1.bf16.msra.mxu0 %v7765
          %8100 = vmatprep.subr.bf16.mxu0 0
          %8101 = vmatpush1.bf16.msra.mxu0 %v7764
          %8102 = vmatprep.subr.bf16.mxu0 0
          %8103 = vmatpush1.bf16.msra.mxu0 %v7763
          %8104 = vmatprep.subr.bf16.mxu0 0
          %8105 = vmatpush1.bf16.msra.mxu0 %v7762
          %8106 = vmatprep.subr.bf16.mxu0 0
          %8107 = vmatpush2.bf16.msra.mxu0 %v7777
          %8108 = vmatprep.subr.bf16.mxu0 0
          %8109 = vmatpush2.bf16.msra.mxu0 %v7776
          %8110 = vmatprep.subr.bf16.mxu0 0
          %8111 = vmatpush2.bf16.msra.mxu0 %v7775
          %8112 = vmatprep.subr.bf16.mxu0 0
          %8113 = vmatpush2.bf16.msra.mxu0 %v7774
          %8114 = vmatprep.subr.bf16.mxu0 0
          %8115 = vmatpush2.bf16.msra.mxu0 %v7773
          %8116 = vmatprep.subr.bf16.mxu0 0
          %8117 = vmatpush2.bf16.msra.mxu0 %v7772
          %8118 = vmatprep.subr.bf16.mxu0 0
          %8119 = vmatpush2.bf16.msra.mxu0 %v7771
          %8120 = vmatprep.subr.bf16.mxu0 0
          %8121 = vmatpush2.bf16.msra.mxu0 %v7770
          %8122 = vmatprep.mubr.bf16.mxu0 %v6937
          %8123 = vmatmul.mubr.bf16.gmra.mxu0 %v6936
          %v8124 = vpop.f32.mrf.mxu0
          %v8125 = vadd.f32 %v8085, %v8124
          %v8126 = vpop.f32.mrf.mxu0
          %v8127 = vpop.f32.mrf.mxu0
          %v8128 = vpop.f32.mrf.mxu0
          %8129 = vdwg.mxu0
          %8130 = vmatprep.subr.bf16.mxu0 0
          %8131 = vmatpush1.bf16.msra.mxu0 %v7785
          %8132 = vmatprep.subr.bf16.mxu0 0
          %8133 = vmatpush1.bf16.msra.mxu0 %v7784
          %8134 = vmatprep.subr.bf16.mxu0 0
          %8135 = vmatpush1.bf16.msra.mxu0 %v7783
          %8136 = vmatprep.subr.bf16.mxu0 0
          %8137 = vmatpush1.bf16.msra.mxu0 %v7782
          %8138 = vmatprep.subr.bf16.mxu0 0
          %8139 = vmatpush1.bf16.msra.mxu0 %v7781
          %8140 = vmatprep.subr.bf16.mxu0 0
          %8141 = vmatpush1.bf16.msra.mxu0 %v7780
          %8142 = vmatprep.subr.bf16.mxu0 0
          %8143 = vmatpush1.bf16.msra.mxu0 %v7779
          %8144 = vmatprep.subr.bf16.mxu0 0
          %8145 = vmatpush1.bf16.msra.mxu0 %v7778
          %8146 = vmatprep.subr.bf16.mxu0 0
          %8147 = vmatpush2.bf16.msra.mxu0 %v7793
          %8148 = vmatprep.subr.bf16.mxu0 0
          %8149 = vmatpush2.bf16.msra.mxu0 %v7792
          %8150 = vmatprep.subr.bf16.mxu0 0
          %8151 = vmatpush2.bf16.msra.mxu0 %v7791
          %8152 = vmatprep.subr.bf16.mxu0 0
          %8153 = vmatpush2.bf16.msra.mxu0 %v7790
          %8154 = vmatprep.subr.bf16.mxu0 0
          %8155 = vmatpush2.bf16.msra.mxu0 %v7789
          %8156 = vmatprep.subr.bf16.mxu0 0
          %8157 = vmatpush2.bf16.msra.mxu0 %v7788
          %8158 = vmatprep.subr.bf16.mxu0 0
          %8159 = vmatpush2.bf16.msra.mxu0 %v7787
          %8160 = vmatprep.subr.bf16.mxu0 0
          %8161 = vmatpush2.bf16.msra.mxu0 %v7786
          %8162 = vmatprep.mubr.bf16.mxu0 %v6939
          %8163 = vmatmul.mubr.bf16.gmra.mxu0 %v6938
          %v8164 = vpop.f32.mrf.mxu0
          %v8165 = vadd.f32 %v8125, %v8164
          %v8166 = vpop.f32.mrf.mxu0
          %v8167 = vpop.f32.mrf.mxu0
          %v8168 = vpop.f32.mrf.mxu0
          %8169 = vdwg.mxu0
          %8170 = vmatprep.subr.bf16.mxu0 0
          %8171 = vmatpush1.bf16.msra.mxu0 %v7801
          %8172 = vmatprep.subr.bf16.mxu0 0
          %8173 = vmatpush1.bf16.msra.mxu0 %v7800
          %8174 = vmatprep.subr.bf16.mxu0 0
          %8175 = vmatpush1.bf16.msra.mxu0 %v7799
          %8176 = vmatprep.subr.bf16.mxu0 0
          %8177 = vmatpush1.bf16.msra.mxu0 %v7798
          %8178 = vmatprep.subr.bf16.mxu0 0
          %8179 = vmatpush1.bf16.msra.mxu0 %v7797
          %8180 = vmatprep.subr.bf16.mxu0 0
          %8181 = vmatpush1.bf16.msra.mxu0 %v7796
          %8182 = vmatprep.subr.bf16.mxu0 0
          %8183 = vmatpush1.bf16.msra.mxu0 %v7795
          %8184 = vmatprep.subr.bf16.mxu0 0
          %8185 = vmatpush1.bf16.msra.mxu0 %v7794
          %8186 = vmatprep.subr.bf16.mxu0 0
          %8187 = vmatpush2.bf16.msra.mxu0 %v7809
          %8188 = vmatprep.subr.bf16.mxu0 0
          %8189 = vmatpush2.bf16.msra.mxu0 %v7808
          %8190 = vmatprep.subr.bf16.mxu0 0
          %8191 = vmatpush2.bf16.msra.mxu0 %v7807
          %8192 = vmatprep.subr.bf16.mxu0 0
          %8193 = vmatpush2.bf16.msra.mxu0 %v7806
          %8194 = vmatprep.subr.bf16.mxu0 0
          %8195 = vmatpush2.bf16.msra.mxu0 %v7805
          %8196 = vmatprep.subr.bf16.mxu0 0
          %8197 = vmatpush2.bf16.msra.mxu0 %v7804
          %8198 = vmatprep.subr.bf16.mxu0 0
          %8199 = vmatpush2.bf16.msra.mxu0 %v7803
          %8200 = vmatprep.subr.bf16.mxu0 0
          %8201 = vmatpush2.bf16.msra.mxu0 %v7802
          %8202 = vmatprep.mubr.bf16.mxu0 %v6941
          %8203 = vmatmul.mubr.bf16.gmra.mxu0 %v6940
          %v8204 = vpop.f32.mrf.mxu0
          %v8205 = vadd.f32 %v8165, %v8204
          %v8206 = vpop.f32.mrf.mxu0
          %v8207 = vpop.f32.mrf.mxu0
          %v8208 = vpop.f32.mrf.mxu0
          %8209 = vdwg.mxu0
          %8210 = vmatprep.subr.bf16.mxu0 0
          %8211 = vmatpush1.bf16.msra.mxu0 %v7817
          %8212 = vmatprep.subr.bf16.mxu0 0
          %8213 = vmatpush1.bf16.msra.mxu0 %v7816
          %8214 = vmatprep.subr.bf16.mxu0 0
          %8215 = vmatpush1.bf16.msra.mxu0 %v7815
          %8216 = vmatprep.subr.bf16.mxu0 0
          %8217 = vmatpush1.bf16.msra.mxu0 %v7814
          %8218 = vmatprep.subr.bf16.mxu0 0
          %8219 = vmatpush1.bf16.msra.mxu0 %v7813
          %8220 = vmatprep.subr.bf16.mxu0 0
          %8221 = vmatpush1.bf16.msra.mxu0 %v7812
          %8222 = vmatprep.subr.bf16.mxu0 0
          %8223 = vmatpush1.bf16.msra.mxu0 %v7811
          %8224 = vmatprep.subr.bf16.mxu0 0
          %8225 = vmatpush1.bf16.msra.mxu0 %v7810
          %8226 = vmatprep.subr.bf16.mxu0 0
          %8227 = vmatpush2.bf16.msra.mxu0 %v7825
          %8228 = vmatprep.subr.bf16.mxu0 0
          %8229 = vmatpush2.bf16.msra.mxu0 %v7824
          %8230 = vmatprep.subr.bf16.mxu0 0
          %8231 = vmatpush2.bf16.msra.mxu0 %v7823
          %8232 = vmatprep.subr.bf16.mxu0 0
          %8233 = vmatpush2.bf16.msra.mxu0 %v7822
          %8234 = vmatprep.subr.bf16.mxu0 0
          %8235 = vmatpush2.bf16.msra.mxu0 %v7821
          %8236 = vmatprep.subr.bf16.mxu0 0
          %8237 = vmatpush2.bf16.msra.mxu0 %v7820
          %8238 = vmatprep.subr.bf16.mxu0 0
          %8239 = vmatpush2.bf16.msra.mxu0 %v7819
          %8240 = vmatprep.subr.bf16.mxu0 0
          %8241 = vmatpush2.bf16.msra.mxu0 %v7818
          %8242 = vmatprep.mubr.bf16.mxu0 %v6943
          %8243 = vmatmul.mubr.bf16.gmra.mxu0 %v6942
          %v8244 = vpop.f32.mrf.mxu0
          %v8245 = vadd.f32 %v8205, %v8244
          %v8246 = vpop.f32.mrf.mxu0
          %v8247 = vpop.f32.mrf.mxu0
          %v8248 = vpop.f32.mrf.mxu0
          %8249 = vdwg.mxu0
          %8250 = vmatprep.subr.bf16.mxu0 0
          %8251 = vmatpush1.bf16.msra.mxu0 %v7833
          %8252 = vmatprep.subr.bf16.mxu0 0
          %8253 = vmatpush1.bf16.msra.mxu0 %v7832
          %8254 = vmatprep.subr.bf16.mxu0 0
          %8255 = vmatpush1.bf16.msra.mxu0 %v7831
          %8256 = vmatprep.subr.bf16.mxu0 0
          %8257 = vmatpush1.bf16.msra.mxu0 %v7830
          %8258 = vmatprep.subr.bf16.mxu0 0
          %8259 = vmatpush1.bf16.msra.mxu0 %v7829
          %8260 = vmatprep.subr.bf16.mxu0 0
          %8261 = vmatpush1.bf16.msra.mxu0 %v7828
          %8262 = vmatprep.subr.bf16.mxu0 0
          %8263 = vmatpush1.bf16.msra.mxu0 %v7827
          %8264 = vmatprep.subr.bf16.mxu0 0
          %8265 = vmatpush1.bf16.msra.mxu0 %v7826
          %8266 = vmatprep.subr.bf16.mxu0 0
          %8267 = vmatpush2.bf16.msra.mxu0 %v7841
          %8268 = vmatprep.subr.bf16.mxu0 0
          %8269 = vmatpush2.bf16.msra.mxu0 %v7840
          %8270 = vmatprep.subr.bf16.mxu0 0
          %8271 = vmatpush2.bf16.msra.mxu0 %v7839
          %8272 = vmatprep.subr.bf16.mxu0 0
          %8273 = vmatpush2.bf16.msra.mxu0 %v7838
          %8274 = vmatprep.subr.bf16.mxu0 0
          %8275 = vmatpush2.bf16.msra.mxu0 %v7837
          %8276 = vmatprep.subr.bf16.mxu0 0
          %8277 = vmatpush2.bf16.msra.mxu0 %v7836
          %8278 = vmatprep.subr.bf16.mxu0 0
          %8279 = vmatpush2.bf16.msra.mxu0 %v7835
          %8280 = vmatprep.subr.bf16.mxu0 0
          %8281 = vmatpush2.bf16.msra.mxu0 %v7834
          %8282 = vmatprep.mubr.bf16.mxu0 %v6945
          %8283 = vmatmul.mubr.bf16.gmra.mxu0 %v6944
          %v8284 = vpop.f32.mrf.mxu0
          %v8285 = vadd.f32 %v8245, %v8284
          %v8286 = vpop.f32.mrf.mxu0
          %v8287 = vpop.f32.mrf.mxu0
          %v8288 = vpop.f32.mrf.mxu0
          %8289 = vdwg.mxu0
          %8290 = vst [vmem:[%s458] sm:$0x3] %v8285
        $region80: #{fcnet_forward.1} parent=47 // pred_fallthru
          _
        %p8291 = scmp.lt.s32.totalorder %s30, 0
        %s8292 = scalar_select %p8291, %s30, 0
        %s8293 = smul.addr %s8292, 2
        %s8294 = scalar_lea.vmem %s7, %s8293
        // Predicated region
        $region81: #{fcnet_forward.1} parent=47 // pred_check
          %p8295 = pneg %p235
        $region82: #{fcnet_forward.1} parent=47 // pred_check_branch
          %8297 = sbr.rel (%p8295) target = $region84
        $region83: #{fcnet_forward.1} parent=47 // pred_region
          _
        $region84: #{fcnet_forward.1} parent=47 // pred_fallthru
          _
        // Predicated region
        $region85: #{fcnet_forward.1} parent=47 // pred_check
          %p8298 = pneg %p235
        $region86: #{fcnet_forward.1} parent=47 // pred_check_branch
          %8300 = sbr.rel (%p8298) target = $region88
        $region87: #{fcnet_forward.1} parent=47 // pred_region
          %p8301 = scmp.lt.s32.totalorder %s30, 0
          %s8302 = scalar_select %p8301, %s30, 0
          %s8303 = smul.addr %s8302, 2
          %s8304 = scalar_lea.vmem %s7, %s8303
        $region88: #{fcnet_forward.1} parent=47 // pred_fallthru
          _
      $region48: #{fcnet_forward.1} parent=5 // pred_fallthru
        _
      %p8305 = scmp.le.s32.totalorder 2, %s21
      // Predicated region
      $region89: #{fcnet_forward.1} parent=5 // pred_check
        %p8306 = pneg %p8305
      $region90: #{fcnet_forward.1} parent=5 // pred_check_branch
        %8308 = sbr.rel (%p8306) target = $region92
      $region91: #{fcnet_forward.1} parent=5 // pred_region
        %s8309 = ssub.s32 %s21, 2
      $region92: #{fcnet_forward.1} parent=5 // pred_fallthru
        _
    $region6: #{fcnet_forward.1} parent=1 // loop_footer
      %s25 = sadd.s32 1, %s21
    $region7: #{fcnet_forward.1} parent=1 // loop_footer_branch
      %20 = sbr.rel target = $region3
    $region8: #{fcnet_forward.1} parent=1 // loop_exit
      _
    %8310 = vsyncpa [#allocation4], 1
    %s8311 = scalar_lea.sflag [#allocation4], 1
    %8312 = vsyncpa %s8311, 1
    %8313 = vsyncpa [#allocation6], 1
    %s8314 = scalar_lea.sflag [#allocation6], 1
    %8315 = vsyncpa %s8314, 1
    %8316 = vsyncpa [#allocation9], 1
    %8317 = vsyncpa [#allocation12], 1

</llo_original>
